<compile_context>
chip_gen: v6e
topology: v6e:2x2x1
jax: 0.10.0
libtpu: 0.0.40
codegen_flags: <defaults>
</compile_context>

<pallas_src>
import math

import jax
import jax.numpy as jnp
from jax.experimental import pallas as pl
from jax.experimental.pallas import tpu as pltpu


# ---------------------------------------------------------------------------
# Fused Pallas kernel: the entire GCN_H forward for one batch element.
# ---------------------------------------------------------------------------
def _gcn_h_fused_kernel(sdf_ref, ctx_ref,
                        w1s_ref, w1c_ref, att1_ref, b1_ref, s1_ref, sh1_ref,
                        wb_ref, ab_ref, bb_ref, sb_ref, shb_ref,
                        w7_ref, att7_ref, b7_ref,
                        o_ref):
    x0 = sdf_ref[0]                 # (N, dct_n)   resident activation
    ctx = ctx_ref[0]                # (1, ctx_dim) fs|fh|beta row for this batch

    # ---- gc1: support = [sdf | ctx_bcast] @ W1 = sdf@W_sdf + (ctx@W_ctx) ----
    ctx_c = jnp.dot(ctx, w1c_ref[...], preferred_element_type=jnp.float32)   # (1, H)
    support = jnp.dot(x0, w1s_ref[...], preferred_element_type=jnp.float32) + ctx_c
    y = jnp.dot(att1_ref[...], support, preferred_element_type=jnp.float32) + b1_ref[...]
    y = jnp.tanh(y * s1_ref[...] + sh1_ref[...])                             # (N, H)

    # ---- 12 residual GC_Blocks (2 graphconv->BN->tanh stages + skip) -------
    num_stage = wb_ref.shape[0] // 2
    for i in range(num_stage):
        t = y
        for j in (2 * i, 2 * i + 1):               # static indices -> static slices
            s = jnp.dot(t, wb_ref[j], preferred_element_type=jnp.float32)
            t = jnp.dot(ab_ref[j], s, preferred_element_type=jnp.float32) + bb_ref[j]
            t = jnp.tanh(t * sb_ref[j] + shb_ref[j])
        y = t + y

    # ---- gc7 + final residual (+ sdf_in) folded into the epilogue ----------
    s7 = jnp.dot(y, w7_ref[...], preferred_element_type=jnp.float32)
    out = jnp.dot(att7_ref[...], s7, preferred_element_type=jnp.float32) + b7_ref[...]
    o_ref[0] = (out + x0).astype(o_ref.dtype)


def _full(shape):
    nd = len(shape)
    return pl.BlockSpec(shape, lambda b, _nd=nd: (0,) * _nd)


def gcn_h_fused(sdf_in, ctx,
                w1_sdf, w1_ctx, att1, b1, s1, sh1,
                wb, ab, bb, sb, shb,
                w7, att7, b7):
    """Single pallas_call over the whole network; grid over batch only."""
    B, N, dct_n = sdf_in.shape
    H = w1_sdf.shape[1]
    ctx_dim = ctx.shape[-1]
    S2 = wb.shape[0]
    ctx3 = ctx.reshape(B, 1, ctx_dim)

    return pl.pallas_call(
        _gcn_h_fused_kernel,
        out_shape=jax.ShapeDtypeStruct((B, N, dct_n), jnp.float32),
        grid=(B,),
        in_specs=[
            pl.BlockSpec((1, N, dct_n), lambda b: (b, 0, 0)),     # sdf_in
            pl.BlockSpec((1, 1, ctx_dim), lambda b: (b, 0, 0)),   # ctx row
            _full((dct_n, H)),                                    # W1 (sdf part)
            _full((ctx_dim, H)),                                  # W1 (ctx part)
            _full((N, N)), _full((1, H)),                         # att1, bias1
            _full((N, H)), _full((N, H)),                         # bn1 scale/shift
            _full((S2, H, H)), _full((S2, N, N)), _full((S2, 1, H)),
            _full((S2, N, H)), _full((S2, N, H)),                 # stacked blocks
            _full((H, dct_n)), _full((N, N)), _full((1, dct_n)),  # gc7
        ],
        out_specs=pl.BlockSpec((1, N, dct_n), lambda b: (b, 0, 0)),
        compiler_params=pltpu.CompilerParams(
            dimension_semantics=("parallel",)),   # B shards across v7x TCs
    )(sdf_in, ctx3, w1_sdf, w1_ctx, att1, b1, s1, sh1,
      wb, ab, bb, sb, shb, w7, att7, b7)


# ---------------------------------------------------------------------------
# Parameter initialization (deterministic, mirrors the PyTorch __init__)
# ---------------------------------------------------------------------------
def init_graph_conv(key, in_f, out_f, node_n):
    stdv = 1.0 / math.sqrt(out_f)
    k1, k2, k3 = jax.random.split(key, 3)
    w = jax.random.uniform(k1, (in_f, out_f), jnp.float32, -stdv, stdv)
    att = jax.random.uniform(k2, (node_n, node_n), jnp.float32, -stdv, stdv)
    b = jax.random.uniform(k3, (1, out_f), jnp.float32, -stdv, stdv)
    return w, att, b


def init_bn_folded(node_n, out_f, eps=1e-5):
    # nn.BatchNorm1d(node_n*out_f) defaults: gamma=1, beta=0, rm=0, rv=1 (eval)
    gamma = jnp.ones((node_n, out_f), jnp.float32)
    beta = jnp.zeros((node_n, out_f), jnp.float32)
    rm = jnp.zeros((node_n, out_f), jnp.float32)
    rv = jnp.ones((node_n, out_f), jnp.float32)
    scale = gamma / jnp.sqrt(rv + eps)
    shift = beta - rm * scale
    return scale, shift


def init_gcn_h(key, dct_n, hidden, node_n, num_stage):
    input_feature = dct_n + 128 + 128 + 10
    keys = jax.random.split(key, 2 + 2 * num_stage)
    params = {}
    params["gc1"] = init_graph_conv(keys[0], input_feature, hidden, node_n)
    params["bn1"] = init_bn_folded(node_n, hidden)
    blocks = []
    for i in range(num_stage):
        w1, a1, b1 = init_graph_conv(keys[1 + 2 * i], hidden, hidden, node_n)
        s1, sh1 = init_bn_folded(node_n, hidden)
        w2, a2, b2 = init_graph_conv(keys[2 + 2 * i], hidden, hidden, node_n)
        s2, sh2 = init_bn_folded(node_n, hidden)
        blocks.append((w1, a1, b1, s1, sh1, w2, a2, b2, s2, sh2))
    params["gcbs"] = blocks
    params["gc7"] = init_graph_conv(keys[-1], hidden, dct_n, node_n)
    return params


# ---------------------------------------------------------------------------
# GCN_H forward (fused Pallas) + pure-JAX reference
# ---------------------------------------------------------------------------
def gcn_h_forward(params, sdf_in, fs, fh, beta):
    B, N, dct_n = sdf_in.shape

    # Context features are identical across the N graph nodes -> keep as one
    # row per batch element instead of materializing the (B, N, 274) concat.
    ctx = jnp.concatenate([fs, fh, beta], axis=-1)            # (B, 266)

    w1, a1, b1 = params["gc1"]
    s1, sh1 = params["bn1"]
    w1_sdf = w1[:dct_n]                                       # (dct_n, H)
    w1_ctx = w1[dct_n:]                                       # (266, H)

    # Stack the 2*num_stage per-block graphconv params along a leading axis.
    wb = jnp.stack([w for blk in params["gcbs"] for w in (blk[0], blk[5])])
    ab = jnp.stack([a for blk in params["gcbs"] for a in (blk[1], blk[6])])
    bb = jnp.stack([b for blk in params["gcbs"] for b in (blk[2], blk[7])])
    sb = jnp.stack([s for blk in params["gcbs"] for s in (blk[3], blk[8])])
    shb = jnp.stack([s for blk in params["gcbs"] for s in (blk[4], blk[9])])

    w7, a7, b7 = params["gc7"]

    return gcn_h_fused(sdf_in, ctx,
                       w1_sdf, w1_ctx, a1, b1, s1, sh1,
                       wb, ab, bb, sb, shb,
                       w7, a7, b7)


def gcn_h_reference(params, sdf_in, fs, fh, beta):
    B, N, L = sdf_in.shape

    def gconv(x, w, att, b):
        support = jnp.einsum("bnf,fo->bno", x, w)
        return jnp.einsum("nm,bmo->bno", att, support) + b[0]

    fs_r = jnp.broadcast_to(fs[:, None, :], (B, N, fs.shape[-1]))
    fh_r = jnp.broadcast_to(fh[:, None, :], (B, N, fh.shape[-1]))
    beta_r = jnp.broadcast_to(beta[:, None, :], (B, N, beta.shape[-1]))
    x_in = jnp.concatenate([sdf_in, fs_r, fh_r, beta_r], axis=-1)

    w1, a1, b1 = params["gc1"]
    s1, sh1 = params["bn1"]
    y = jnp.tanh(gconv(x_in, w1, a1, b1) * s1 + sh1)
    for (w1_, a1_, b1_, s1_, sh1_, w2_, a2_, b2_, s2_, sh2_) in params["gcbs"]:
        t = jnp.tanh(gconv(y, w1_, a1_, b1_) * s1_ + sh1_)
        t = jnp.tanh(gconv(t, w2_, a2_, b2_) * s2_ + sh2_)
        y = t + y
    w7, a7, b7 = params["gc7"]
    y = gconv(y, w7, a7, b7)
    return y + sdf_in


# ---------------------------------------------------------------------------
if __name__ == "__main__":
    # Small config consistent with GCN_H.__init__:
    #   input_feature = dct_n + 128 + 128 + 10, node_n = hsdf_in
    B = 2
    dct_n = 8
    hidden = 32
    node_n = 16
    num_stage = 12

    key = jax.random.PRNGKey(0)
    kp, k1, k2, k3, k4 = jax.random.split(key, 5)
    params = init_gcn_h(kp, dct_n, hidden, node_n, num_stage)

    sdf_in = jax.random.normal(k1, (B, node_n, dct_n), jnp.float32)
    fs = jax.random.normal(k2, (B, 128), jnp.float32)
    fh = jax.random.normal(k3, (B, 128), jnp.float32)
    beta = jax.random.normal(k4, (B, 10), jnp.float32)

    out = jax.jit(gcn_h_forward)(params, sdf_in, fs, fh, beta)
    out = jax.block_until_ready(out)

    ref = gcn_h_reference(params, sdf_in, fs, fh, beta)
    assert out.shape == (B, node_n, dct_n)
    assert jnp.allclose(out, ref, atol=1e-4, rtol=1e-4), float(jnp.abs(out - ref).max())

    print("KERNEL_OK")
</pallas_src>

<mosaic_0001>
module attributes {stable_mosaic.version = 11 : i64} {
  func.func @_gcn_h_fused_kernel(%arg0: i32, %arg1: memref<1x16x8xf32, #tpu.memory_space<vmem>>, %arg2: memref<1x1x266xf32, #tpu.memory_space<vmem>>, %arg3: memref<8x32xf32, #tpu.memory_space<vmem>>, %arg4: memref<266x32xf32, #tpu.memory_space<vmem>>, %arg5: memref<16x16xf32, #tpu.memory_space<vmem>>, %arg6: memref<1x32xf32, #tpu.memory_space<vmem>>, %arg7: memref<16x32xf32, #tpu.memory_space<vmem>>, %arg8: memref<16x32xf32, #tpu.memory_space<vmem>>, %arg9: memref<24x32x32xf32, #tpu.memory_space<vmem>>, %arg10: memref<24x16x16xf32, #tpu.memory_space<vmem>>, %arg11: memref<24x1x32xf32, #tpu.memory_space<vmem>>, %arg12: memref<24x16x32xf32, #tpu.memory_space<vmem>>, %arg13: memref<24x16x32xf32, #tpu.memory_space<vmem>>, %arg14: memref<32x8xf32, #tpu.memory_space<vmem>>, %arg15: memref<16x16xf32, #tpu.memory_space<vmem>>, %arg16: memref<1x8xf32, #tpu.memory_space<vmem>>, %arg17: memref<1x16x8xf32, #tpu.memory_space<vmem>>) attributes {dimension_semantics = [#tpu.dimension_semantics<parallel>], iteration_bounds = array<i64: 2>, scalar_prefetch = 0 : i64, scratch_operands = 0 : i64, tpu.core_type = #tpu.core_type<tc>, window_params = [{transform_indices = @transform_0, window_bounds = array<i64: 1, 16, 8>}, {transform_indices = @transform_1, window_bounds = array<i64: 1, 1, 266>}, {pipeline_mode = #tpu.pipeline_mode<synchronous>, transform_indices = @transform_2, window_bounds = array<i64: 8, 32>}, {pipeline_mode = #tpu.pipeline_mode<synchronous>, transform_indices = @transform_3, window_bounds = array<i64: 266, 32>}, {pipeline_mode = #tpu.pipeline_mode<synchronous>, transform_indices = @transform_4, window_bounds = array<i64: 16, 16>}, {pipeline_mode = #tpu.pipeline_mode<synchronous>, transform_indices = @transform_5, window_bounds = array<i64: 1, 32>}, {pipeline_mode = #tpu.pipeline_mode<synchronous>, transform_indices = @transform_6, window_bounds = array<i64: 16, 32>}, {pipeline_mode = #tpu.pipeline_mode<synchronous>, transform_indices = @transform_7, window_bounds = array<i64: 16, 32>}, {pipeline_mode = #tpu.pipeline_mode<synchronous>, transform_indices = @transform_8, window_bounds = array<i64: 24, 32, 32>}, {pipeline_mode = #tpu.pipeline_mode<synchronous>, transform_indices = @transform_9, window_bounds = array<i64: 24, 16, 16>}, {pipeline_mode = #tpu.pipeline_mode<synchronous>, transform_indices = @transform_10, window_bounds = array<i64: 24, 1, 32>}, {pipeline_mode = #tpu.pipeline_mode<synchronous>, transform_indices = @transform_11, window_bounds = array<i64: 24, 16, 32>}, {pipeline_mode = #tpu.pipeline_mode<synchronous>, transform_indices = @transform_12, window_bounds = array<i64: 24, 16, 32>}, {pipeline_mode = #tpu.pipeline_mode<synchronous>, transform_indices = @transform_13, window_bounds = array<i64: 32, 8>}, {pipeline_mode = #tpu.pipeline_mode<synchronous>, transform_indices = @transform_14, window_bounds = array<i64: 16, 16>}, {pipeline_mode = #tpu.pipeline_mode<synchronous>, transform_indices = @transform_15, window_bounds = array<i64: 1, 8>}, {transform_indices = @transform_16, window_bounds = array<i64: 1, 16, 8>}]} {
    %c0 = arith.constant 0 : index
    %c0_0 = arith.constant 0 : index
    %c0_1 = arith.constant 0 : index
    %0 = vector.load %arg1[%c0, %c0_0, %c0_1] : memref<1x16x8xf32, #tpu.memory_space<vmem>>, vector<1x16x8xf32>
    %1 = vector.shape_cast %0 : vector<1x16x8xf32> to vector<16x8xf32>
    %c0_2 = arith.constant 0 : index
    %c0_3 = arith.constant 0 : index
    %c0_4 = arith.constant 0 : index
    %2 = vector.load %arg2[%c0_2, %c0_3, %c0_4] : memref<1x1x266xf32, #tpu.memory_space<vmem>>, vector<1x1x266xf32>
    %3 = vector.shape_cast %2 : vector<1x1x266xf32> to vector<1x266xf32>
    %c0_5 = arith.constant 0 : index
    %c0_6 = arith.constant 0 : index
    %4 = vector.load %arg4[%c0_5, %c0_6] : memref<266x32xf32, #tpu.memory_space<vmem>>, vector<266x32xf32>
    %cst = arith.constant dense<0.000000e+00> : vector<1x32xf32>
    %5 = tpu.matmul %3, %4, %cst {dimension_numbers = #tpu.dot_dimension_numbers<[1], [0], [0], [1], [0, 0, 1, 1], [], []>} : vector<1x266xf32>, vector<266x32xf32>, vector<1x32xf32> -> vector<1x32xf32>
    %c0_7 = arith.constant 0 : index
    %c0_8 = arith.constant 0 : index
    %6 = vector.load %arg3[%c0_7, %c0_8] : memref<8x32xf32, #tpu.memory_space<vmem>>, vector<8x32xf32>
    %cst_9 = arith.constant dense<0.000000e+00> : vector<16x32xf32>
    %7 = tpu.matmul %1, %6, %cst_9 {dimension_numbers = #tpu.dot_dimension_numbers<[1], [0], [0], [1], [0, 0, 1, 1], [], []>} : vector<16x8xf32>, vector<8x32xf32>, vector<16x32xf32> -> vector<16x32xf32>
    %8 = vector.broadcast %5 : vector<1x32xf32> to vector<16x32xf32>
    %9 = arith.addf %7, %8 : vector<16x32xf32>
    %c0_10 = arith.constant 0 : index
    %c0_11 = arith.constant 0 : index
    %10 = vector.load %arg5[%c0_10, %c0_11] : memref<16x16xf32, #tpu.memory_space<vmem>>, vector<16x16xf32>
    %cst_12 = arith.constant dense<0.000000e+00> : vector<16x32xf32>
    %11 = tpu.matmul %10, %9, %cst_12 {dimension_numbers = #tpu.dot_dimension_numbers<[1], [0], [0], [1], [0, 0, 1, 1], [], []>} : vector<16x16xf32>, vector<16x32xf32>, vector<16x32xf32> -> vector<16x32xf32>
    %c0_13 = arith.constant 0 : index
    %c0_14 = arith.constant 0 : index
    %12 = vector.load %arg6[%c0_13, %c0_14] : memref<1x32xf32, #tpu.memory_space<vmem>>, vector<1x32xf32>
    %13 = vector.broadcast %12 : vector<1x32xf32> to vector<16x32xf32>
    %14 = arith.addf %11, %13 : vector<16x32xf32>
    %c0_15 = arith.constant 0 : index
    %c0_16 = arith.constant 0 : index
    %15 = vector.load %arg7[%c0_15, %c0_16] : memref<16x32xf32, #tpu.memory_space<vmem>>, vector<16x32xf32>
    %16 = arith.mulf %14, %15 : vector<16x32xf32>
    %c0_17 = arith.constant 0 : index
    %c0_18 = arith.constant 0 : index
    %17 = vector.load %arg8[%c0_17, %c0_18] : memref<16x32xf32, #tpu.memory_space<vmem>>, vector<16x32xf32>
    %18 = arith.addf %16, %17 : vector<16x32xf32>
    %19 = math.tanh %18 : vector<16x32xf32>
    %c0_19 = arith.constant 0 : index
    %c0_20 = arith.constant 0 : index
    %c0_21 = arith.constant 0 : index
    %20 = vector.load %arg9[%c0_19, %c0_20, %c0_21] : memref<24x32x32xf32, #tpu.memory_space<vmem>>, vector<1x32x32xf32>
    %21 = vector.shape_cast %20 : vector<1x32x32xf32> to vector<32x32xf32>
    %cst_22 = arith.constant dense<0.000000e+00> : vector<16x32xf32>
    %22 = tpu.matmul %19, %21, %cst_22 {dimension_numbers = #tpu.dot_dimension_numbers<[1], [0], [0], [1], [0, 0, 1, 1], [], []>} : vector<16x32xf32>, vector<32x32xf32>, vector<16x32xf32> -> vector<16x32xf32>
    %c0_23 = arith.constant 0 : index
    %c0_24 = arith.constant 0 : index
    %c0_25 = arith.constant 0 : index
    %23 = vector.load %arg10[%c0_23, %c0_24, %c0_25] : memref<24x16x16xf32, #tpu.memory_space<vmem>>, vector<1x16x16xf32>
    %24 = vector.shape_cast %23 : vector<1x16x16xf32> to vector<16x16xf32>
    %cst_26 = arith.constant dense<0.000000e+00> : vector<16x32xf32>
    %25 = tpu.matmul %24, %22, %cst_26 {dimension_numbers = #tpu.dot_dimension_numbers<[1], [0], [0], [1], [0, 0, 1, 1], [], []>} : vector<16x16xf32>, vector<16x32xf32>, vector<16x32xf32> -> vector<16x32xf32>
    %c0_27 = arith.constant 0 : index
    %c0_28 = arith.constant 0 : index
    %c0_29 = arith.constant 0 : index
    %26 = vector.load %arg11[%c0_27, %c0_28, %c0_29] : memref<24x1x32xf32, #tpu.memory_space<vmem>>, vector<1x1x32xf32>
    %27 = vector.shape_cast %26 : vector<1x1x32xf32> to vector<1x32xf32>
    %28 = vector.broadcast %27 : vector<1x32xf32> to vector<16x32xf32>
    %29 = arith.addf %25, %28 : vector<16x32xf32>
    %c0_30 = arith.constant 0 : index
    %c0_31 = arith.constant 0 : index
    %c0_32 = arith.constant 0 : index
    %30 = vector.load %arg12[%c0_30, %c0_31, %c0_32] : memref<24x16x32xf32, #tpu.memory_space<vmem>>, vector<1x16x32xf32>
    %31 = vector.shape_cast %30 : vector<1x16x32xf32> to vector<16x32xf32>
    %32 = arith.mulf %29, %31 : vector<16x32xf32>
    %c0_33 = arith.constant 0 : index
    %c0_34 = arith.constant 0 : index
    %c0_35 = arith.constant 0 : index
    %33 = vector.load %arg13[%c0_33, %c0_34, %c0_35] : memref<24x16x32xf32, #tpu.memory_space<vmem>>, vector<1x16x32xf32>
    %34 = vector.shape_cast %33 : vector<1x16x32xf32> to vector<16x32xf32>
    %35 = arith.addf %32, %34 : vector<16x32xf32>
    %36 = math.tanh %35 : vector<16x32xf32>
    %c1 = arith.constant 1 : index
    %c0_36 = arith.constant 0 : index
    %c0_37 = arith.constant 0 : index
    %37 = vector.load %arg9[%c1, %c0_36, %c0_37] : memref<24x32x32xf32, #tpu.memory_space<vmem>>, vector<1x32x32xf32>
    %38 = vector.shape_cast %37 : vector<1x32x32xf32> to vector<32x32xf32>
    %cst_38 = arith.constant dense<0.000000e+00> : vector<16x32xf32>
    %39 = tpu.matmul %36, %38, %cst_38 {dimension_numbers = #tpu.dot_dimension_numbers<[1], [0], [0], [1], [0, 0, 1, 1], [], []>} : vector<16x32xf32>, vector<32x32xf32>, vector<16x32xf32> -> vector<16x32xf32>
    %c1_39 = arith.constant 1 : index
    %c0_40 = arith.constant 0 : index
    %c0_41 = arith.constant 0 : index
    %40 = vector.load %arg10[%c1_39, %c0_40, %c0_41] : memref<24x16x16xf32, #tpu.memory_space<vmem>>, vector<1x16x16xf32>
    %41 = vector.shape_cast %40 : vector<1x16x16xf32> to vector<16x16xf32>
    %cst_42 = arith.constant dense<0.000000e+00> : vector<16x32xf32>
    %42 = tpu.matmul %41, %39, %cst_42 {dimension_numbers = #tpu.dot_dimension_numbers<[1], [0], [0], [1], [0, 0, 1, 1], [], []>} : vector<16x16xf32>, vector<16x32xf32>, vector<16x32xf32> -> vector<16x32xf32>
    %c1_43 = arith.constant 1 : index
    %c0_44 = arith.constant 0 : index
    %c0_45 = arith.constant 0 : index
    %43 = vector.load %arg11[%c1_43, %c0_44, %c0_45] : memref<24x1x32xf32, #tpu.memory_space<vmem>>, vector<1x1x32xf32>
    %44 = vector.shape_cast %43 : vector<1x1x32xf32> to vector<1x32xf32>
    %45 = vector.broadcast %44 : vector<1x32xf32> to vector<16x32xf32>
    %46 = arith.addf %42, %45 : vector<16x32xf32>
    %c1_46 = arith.constant 1 : index
    %c0_47 = arith.constant 0 : index
    %c0_48 = arith.constant 0 : index
    %47 = vector.load %arg12[%c1_46, %c0_47, %c0_48] : memref<24x16x32xf32, #tpu.memory_space<vmem>>, vector<1x16x32xf32>
    %48 = vector.shape_cast %47 : vector<1x16x32xf32> to vector<16x32xf32>
    %49 = arith.mulf %46, %48 : vector<16x32xf32>
    %c1_49 = arith.constant 1 : index
    %c0_50 = arith.constant 0 : index
    %c0_51 = arith.constant 0 : index
    %50 = vector.load %arg13[%c1_49, %c0_50, %c0_51] : memref<24x16x32xf32, #tpu.memory_space<vmem>>, vector<1x16x32xf32>
    %51 = vector.shape_cast %50 : vector<1x16x32xf32> to vector<16x32xf32>
    %52 = arith.addf %49, %51 : vector<16x32xf32>
    %53 = math.tanh %52 : vector<16x32xf32>
    %54 = arith.addf %53, %19 : vector<16x32xf32>
    %c2 = arith.constant 2 : index
    %c0_52 = arith.constant 0 : index
    %c0_53 = arith.constant 0 : index
    %55 = vector.load %arg9[%c2, %c0_52, %c0_53] : memref<24x32x32xf32, #tpu.memory_space<vmem>>, vector<1x32x32xf32>
    %56 = vector.shape_cast %55 : vector<1x32x32xf32> to vector<32x32xf32>
    %cst_54 = arith.constant dense<0.000000e+00> : vector<16x32xf32>
    %57 = tpu.matmul %54, %56, %cst_54 {dimension_numbers = #tpu.dot_dimension_numbers<[1], [0], [0], [1], [0, 0, 1, 1], [], []>} : vector<16x32xf32>, vector<32x32xf32>, vector<16x32xf32> -> vector<16x32xf32>
    %c2_55 = arith.constant 2 : index
    %c0_56 = arith.constant 0 : index
    %c0_57 = arith.constant 0 : index
    %58 = vector.load %arg10[%c2_55, %c0_56, %c0_57] : memref<24x16x16xf32, #tpu.memory_space<vmem>>, vector<1x16x16xf32>
    %59 = vector.shape_cast %58 : vector<1x16x16xf32> to vector<16x16xf32>
    %cst_58 = arith.constant dense<0.000000e+00> : vector<16x32xf32>
    %60 = tpu.matmul %59, %57, %cst_58 {dimension_numbers = #tpu.dot_dimension_numbers<[1], [0], [0], [1], [0, 0, 1, 1], [], []>} : vector<16x16xf32>, vector<16x32xf32>, vector<16x32xf32> -> vector<16x32xf32>
    %c2_59 = arith.constant 2 : index
    %c0_60 = arith.constant 0 : index
    %c0_61 = arith.constant 0 : index
    %61 = vector.load %arg11[%c2_59, %c0_60, %c0_61] : memref<24x1x32xf32, #tpu.memory_space<vmem>>, vector<1x1x32xf32>
    %62 = vector.shape_cast %61 : vector<1x1x32xf32> to vector<1x32xf32>
    %63 = vector.broadcast %62 : vector<1x32xf32> to vector<16x32xf32>
    %64 = arith.addf %60, %63 : vector<16x32xf32>
    %c2_62 = arith.constant 2 : index
    %c0_63 = arith.constant 0 : index
    %c0_64 = arith.constant 0 : index
    %65 = vector.load %arg12[%c2_62, %c0_63, %c0_64] : memref<24x16x32xf32, #tpu.memory_space<vmem>>, vector<1x16x32xf32>
    %66 = vector.shape_cast %65 : vector<1x16x32xf32> to vector<16x32xf32>
    %67 = arith.mulf %64, %66 : vector<16x32xf32>
    %c2_65 = arith.constant 2 : index
    %c0_66 = arith.constant 0 : index
    %c0_67 = arith.constant 0 : index
    %68 = vector.load %arg13[%c2_65, %c0_66, %c0_67] : memref<24x16x32xf32, #tpu.memory_space<vmem>>, vector<1x16x32xf32>
    %69 = vector.shape_cast %68 : vector<1x16x32xf32> to vector<16x32xf32>
    %70 = arith.addf %67, %69 : vector<16x32xf32>
    %71 = math.tanh %70 : vector<16x32xf32>
    %c3 = arith.constant 3 : index
    %c0_68 = arith.constant 0 : index
    %c0_69 = arith.constant 0 : index
    %72 = vector.load %arg9[%c3, %c0_68, %c0_69] : memref<24x32x32xf32, #tpu.memory_space<vmem>>, vector<1x32x32xf32>
    %73 = vector.shape_cast %72 : vector<1x32x32xf32> to vector<32x32xf32>
    %cst_70 = arith.constant dense<0.000000e+00> : vector<16x32xf32>
    %74 = tpu.matmul %71, %73, %cst_70 {dimension_numbers = #tpu.dot_dimension_numbers<[1], [0], [0], [1], [0, 0, 1, 1], [], []>} : vector<16x32xf32>, vector<32x32xf32>, vector<16x32xf32> -> vector<16x32xf32>
    %c3_71 = arith.constant 3 : index
    %c0_72 = arith.constant 0 : index
    %c0_73 = arith.constant 0 : index
    %75 = vector.load %arg10[%c3_71, %c0_72, %c0_73] : memref<24x16x16xf32, #tpu.memory_space<vmem>>, vector<1x16x16xf32>
    %76 = vector.shape_cast %75 : vector<1x16x16xf32> to vector<16x16xf32>
    %cst_74 = arith.constant dense<0.000000e+00> : vector<16x32xf32>
    %77 = tpu.matmul %76, %74, %cst_74 {dimension_numbers = #tpu.dot_dimension_numbers<[1], [0], [0], [1], [0, 0, 1, 1], [], []>} : vector<16x16xf32>, vector<16x32xf32>, vector<16x32xf32> -> vector<16x32xf32>
    %c3_75 = arith.constant 3 : index
    %c0_76 = arith.constant 0 : index
    %c0_77 = arith.constant 0 : index
    %78 = vector.load %arg11[%c3_75, %c0_76, %c0_77] : memref<24x1x32xf32, #tpu.memory_space<vmem>>, vector<1x1x32xf32>
    %79 = vector.shape_cast %78 : vector<1x1x32xf32> to vector<1x32xf32>
    %80 = vector.broadcast %79 : vector<1x32xf32> to vector<16x32xf32>
    %81 = arith.addf %77, %80 : vector<16x32xf32>
    %c3_78 = arith.constant 3 : index
    %c0_79 = arith.constant 0 : index
    %c0_80 = arith.constant 0 : index
    %82 = vector.load %arg12[%c3_78, %c0_79, %c0_80] : memref<24x16x32xf32, #tpu.memory_space<vmem>>, vector<1x16x32xf32>
    %83 = vector.shape_cast %82 : vector<1x16x32xf32> to vector<16x32xf32>
    %84 = arith.mulf %81, %83 : vector<16x32xf32>
    %c3_81 = arith.constant 3 : index
    %c0_82 = arith.constant 0 : index
    %c0_83 = arith.constant 0 : index
    %85 = vector.load %arg13[%c3_81, %c0_82, %c0_83] : memref<24x16x32xf32, #tpu.memory_space<vmem>>, vector<1x16x32xf32>
    %86 = vector.shape_cast %85 : vector<1x16x32xf32> to vector<16x32xf32>
    %87 = arith.addf %84, %86 : vector<16x32xf32>
    %88 = math.tanh %87 : vector<16x32xf32>
    %89 = arith.addf %88, %54 : vector<16x32xf32>
    %c4 = arith.constant 4 : index
    %c0_84 = arith.constant 0 : index
    %c0_85 = arith.constant 0 : index
    %90 = vector.load %arg9[%c4, %c0_84, %c0_85] : memref<24x32x32xf32, #tpu.memory_space<vmem>>, vector<1x32x32xf32>
    %91 = vector.shape_cast %90 : vector<1x32x32xf32> to vector<32x32xf32>
    %cst_86 = arith.constant dense<0.000000e+00> : vector<16x32xf32>
    %92 = tpu.matmul %89, %91, %cst_86 {dimension_numbers = #tpu.dot_dimension_numbers<[1], [0], [0], [1], [0, 0, 1, 1], [], []>} : vector<16x32xf32>, vector<32x32xf32>, vector<16x32xf32> -> vector<16x32xf32>
    %c4_87 = arith.constant 4 : index
    %c0_88 = arith.constant 0 : index
    %c0_89 = arith.constant 0 : index
    %93 = vector.load %arg10[%c4_87, %c0_88, %c0_89] : memref<24x16x16xf32, #tpu.memory_space<vmem>>, vector<1x16x16xf32>
    %94 = vector.shape_cast %93 : vector<1x16x16xf32> to vector<16x16xf32>
    %cst_90 = arith.constant dense<0.000000e+00> : vector<16x32xf32>
    %95 = tpu.matmul %94, %92, %cst_90 {dimension_numbers = #tpu.dot_dimension_numbers<[1], [0], [0], [1], [0, 0, 1, 1], [], []>} : vector<16x16xf32>, vector<16x32xf32>, vector<16x32xf32> -> vector<16x32xf32>
    %c4_91 = arith.constant 4 : index
    %c0_92 = arith.constant 0 : index
    %c0_93 = arith.constant 0 : index
    %96 = vector.load %arg11[%c4_91, %c0_92, %c0_93] : memref<24x1x32xf32, #tpu.memory_space<vmem>>, vector<1x1x32xf32>
    %97 = vector.shape_cast %96 : vector<1x1x32xf32> to vector<1x32xf32>
    %98 = vector.broadcast %97 : vector<1x32xf32> to vector<16x32xf32>
    %99 = arith.addf %95, %98 : vector<16x32xf32>
    %c4_94 = arith.constant 4 : index
    %c0_95 = arith.constant 0 : index
    %c0_96 = arith.constant 0 : index
    %100 = vector.load %arg12[%c4_94, %c0_95, %c0_96] : memref<24x16x32xf32, #tpu.memory_space<vmem>>, vector<1x16x32xf32>
    %101 = vector.shape_cast %100 : vector<1x16x32xf32> to vector<16x32xf32>
    %102 = arith.mulf %99, %101 : vector<16x32xf32>
    %c4_97 = arith.constant 4 : index
    %c0_98 = arith.constant 0 : index
    %c0_99 = arith.constant 0 : index
    %103 = vector.load %arg13[%c4_97, %c0_98, %c0_99] : memref<24x16x32xf32, #tpu.memory_space<vmem>>, vector<1x16x32xf32>
    %104 = vector.shape_cast %103 : vector<1x16x32xf32> to vector<16x32xf32>
    %105 = arith.addf %102, %104 : vector<16x32xf32>
    %106 = math.tanh %105 : vector<16x32xf32>
    %c5 = arith.constant 5 : index
    %c0_100 = arith.constant 0 : index
    %c0_101 = arith.constant 0 : index
    %107 = vector.load %arg9[%c5, %c0_100, %c0_101] : memref<24x32x32xf32, #tpu.memory_space<vmem>>, vector<1x32x32xf32>
    %108 = vector.shape_cast %107 : vector<1x32x32xf32> to vector<32x32xf32>
    %cst_102 = arith.constant dense<0.000000e+00> : vector<16x32xf32>
    %109 = tpu.matmul %106, %108, %cst_102 {dimension_numbers = #tpu.dot_dimension_numbers<[1], [0], [0], [1], [0, 0, 1, 1], [], []>} : vector<16x32xf32>, vector<32x32xf32>, vector<16x32xf32> -> vector<16x32xf32>
    %c5_103 = arith.constant 5 : index
    %c0_104 = arith.constant 0 : index
    %c0_105 = arith.constant 0 : index
    %110 = vector.load %arg10[%c5_103, %c0_104, %c0_105] : memref<24x16x16xf32, #tpu.memory_space<vmem>>, vector<1x16x16xf32>
    %111 = vector.shape_cast %110 : vector<1x16x16xf32> to vector<16x16xf32>
    %cst_106 = arith.constant dense<0.000000e+00> : vector<16x32xf32>
    %112 = tpu.matmul %111, %109, %cst_106 {dimension_numbers = #tpu.dot_dimension_numbers<[1], [0], [0], [1], [0, 0, 1, 1], [], []>} : vector<16x16xf32>, vector<16x32xf32>, vector<16x32xf32> -> vector<16x32xf32>
    %c5_107 = arith.constant 5 : index
    %c0_108 = arith.constant 0 : index
    %c0_109 = arith.constant 0 : index
    %113 = vector.load %arg11[%c5_107, %c0_108, %c0_109] : memref<24x1x32xf32, #tpu.memory_space<vmem>>, vector<1x1x32xf32>
    %114 = vector.shape_cast %113 : vector<1x1x32xf32> to vector<1x32xf32>
    %115 = vector.broadcast %114 : vector<1x32xf32> to vector<16x32xf32>
    %116 = arith.addf %112, %115 : vector<16x32xf32>
    %c5_110 = arith.constant 5 : index
    %c0_111 = arith.constant 0 : index
    %c0_112 = arith.constant 0 : index
    %117 = vector.load %arg12[%c5_110, %c0_111, %c0_112] : memref<24x16x32xf32, #tpu.memory_space<vmem>>, vector<1x16x32xf32>
    %118 = vector.shape_cast %117 : vector<1x16x32xf32> to vector<16x32xf32>
    %119 = arith.mulf %116, %118 : vector<16x32xf32>
    %c5_113 = arith.constant 5 : index
    %c0_114 = arith.constant 0 : index
    %c0_115 = arith.constant 0 : index
    %120 = vector.load %arg13[%c5_113, %c0_114, %c0_115] : memref<24x16x32xf32, #tpu.memory_space<vmem>>, vector<1x16x32xf32>
    %121 = vector.shape_cast %120 : vector<1x16x32xf32> to vector<16x32xf32>
    %122 = arith.addf %119, %121 : vector<16x32xf32>
    %123 = math.tanh %122 : vector<16x32xf32>
    %124 = arith.addf %123, %89 : vector<16x32xf32>
    %c6 = arith.constant 6 : index
    %c0_116 = arith.constant 0 : index
    %c0_117 = arith.constant 0 : index
    %125 = vector.load %arg9[%c6, %c0_116, %c0_117] : memref<24x32x32xf32, #tpu.memory_space<vmem>>, vector<1x32x32xf32>
    %126 = vector.shape_cast %125 : vector<1x32x32xf32> to vector<32x32xf32>
    %cst_118 = arith.constant dense<0.000000e+00> : vector<16x32xf32>
    %127 = tpu.matmul %124, %126, %cst_118 {dimension_numbers = #tpu.dot_dimension_numbers<[1], [0], [0], [1], [0, 0, 1, 1], [], []>} : vector<16x32xf32>, vector<32x32xf32>, vector<16x32xf32> -> vector<16x32xf32>
    %c6_119 = arith.constant 6 : index
    %c0_120 = arith.constant 0 : index
    %c0_121 = arith.constant 0 : index
    %128 = vector.load %arg10[%c6_119, %c0_120, %c0_121] : memref<24x16x16xf32, #tpu.memory_space<vmem>>, vector<1x16x16xf32>
    %129 = vector.shape_cast %128 : vector<1x16x16xf32> to vector<16x16xf32>
    %cst_122 = arith.constant dense<0.000000e+00> : vector<16x32xf32>
    %130 = tpu.matmul %129, %127, %cst_122 {dimension_numbers = #tpu.dot_dimension_numbers<[1], [0], [0], [1], [0, 0, 1, 1], [], []>} : vector<16x16xf32>, vector<16x32xf32>, vector<16x32xf32> -> vector<16x32xf32>
    %c6_123 = arith.constant 6 : index
    %c0_124 = arith.constant 0 : index
    %c0_125 = arith.constant 0 : index
    %131 = vector.load %arg11[%c6_123, %c0_124, %c0_125] : memref<24x1x32xf32, #tpu.memory_space<vmem>>, vector<1x1x32xf32>
    %132 = vector.shape_cast %131 : vector<1x1x32xf32> to vector<1x32xf32>
    %133 = vector.broadcast %132 : vector<1x32xf32> to vector<16x32xf32>
    %134 = arith.addf %130, %133 : vector<16x32xf32>
    %c6_126 = arith.constant 6 : index
    %c0_127 = arith.constant 0 : index
    %c0_128 = arith.constant 0 : index
    %135 = vector.load %arg12[%c6_126, %c0_127, %c0_128] : memref<24x16x32xf32, #tpu.memory_space<vmem>>, vector<1x16x32xf32>
    %136 = vector.shape_cast %135 : vector<1x16x32xf32> to vector<16x32xf32>
    %137 = arith.mulf %134, %136 : vector<16x32xf32>
    %c6_129 = arith.constant 6 : index
    %c0_130 = arith.constant 0 : index
    %c0_131 = arith.constant 0 : index
    %138 = vector.load %arg13[%c6_129, %c0_130, %c0_131] : memref<24x16x32xf32, #tpu.memory_space<vmem>>, vector<1x16x32xf32>
    %139 = vector.shape_cast %138 : vector<1x16x32xf32> to vector<16x32xf32>
    %140 = arith.addf %137, %139 : vector<16x32xf32>
    %141 = math.tanh %140 : vector<16x32xf32>
    %c7 = arith.constant 7 : index
    %c0_132 = arith.constant 0 : index
    %c0_133 = arith.constant 0 : index
    %142 = vector.load %arg9[%c7, %c0_132, %c0_133] : memref<24x32x32xf32, #tpu.memory_space<vmem>>, vector<1x32x32xf32>
    %143 = vector.shape_cast %142 : vector<1x32x32xf32> to vector<32x32xf32>
    %cst_134 = arith.constant dense<0.000000e+00> : vector<16x32xf32>
    %144 = tpu.matmul %141, %143, %cst_134 {dimension_numbers = #tpu.dot_dimension_numbers<[1], [0], [0], [1], [0, 0, 1, 1], [], []>} : vector<16x32xf32>, vector<32x32xf32>, vector<16x32xf32> -> vector<16x32xf32>
    %c7_135 = arith.constant 7 : index
    %c0_136 = arith.constant 0 : index
    %c0_137 = arith.constant 0 : index
    %145 = vector.load %arg10[%c7_135, %c0_136, %c0_137] : memref<24x16x16xf32, #tpu.memory_space<vmem>>, vector<1x16x16xf32>
    %146 = vector.shape_cast %145 : vector<1x16x16xf32> to vector<16x16xf32>
    %cst_138 = arith.constant dense<0.000000e+00> : vector<16x32xf32>
    %147 = tpu.matmul %146, %144, %cst_138 {dimension_numbers = #tpu.dot_dimension_numbers<[1], [0], [0], [1], [0, 0, 1, 1], [], []>} : vector<16x16xf32>, vector<16x32xf32>, vector<16x32xf32> -> vector<16x32xf32>
    %c7_139 = arith.constant 7 : index
    %c0_140 = arith.constant 0 : index
    %c0_141 = arith.constant 0 : index
    %148 = vector.load %arg11[%c7_139, %c0_140, %c0_141] : memref<24x1x32xf32, #tpu.memory_space<vmem>>, vector<1x1x32xf32>
    %149 = vector.shape_cast %148 : vector<1x1x32xf32> to vector<1x32xf32>
    %150 = vector.broadcast %149 : vector<1x32xf32> to vector<16x32xf32>
    %151 = arith.addf %147, %150 : vector<16x32xf32>
    %c7_142 = arith.constant 7 : index
    %c0_143 = arith.constant 0 : index
    %c0_144 = arith.constant 0 : index
    %152 = vector.load %arg12[%c7_142, %c0_143, %c0_144] : memref<24x16x32xf32, #tpu.memory_space<vmem>>, vector<1x16x32xf32>
    %153 = vector.shape_cast %152 : vector<1x16x32xf32> to vector<16x32xf32>
    %154 = arith.mulf %151, %153 : vector<16x32xf32>
    %c7_145 = arith.constant 7 : index
    %c0_146 = arith.constant 0 : index
    %c0_147 = arith.constant 0 : index
    %155 = vector.load %arg13[%c7_145, %c0_146, %c0_147] : memref<24x16x32xf32, #tpu.memory_space<vmem>>, vector<1x16x32xf32>
    %156 = vector.shape_cast %155 : vector<1x16x32xf32> to vector<16x32xf32>
    %157 = arith.addf %154, %156 : vector<16x32xf32>
    %158 = math.tanh %157 : vector<16x32xf32>
    %159 = arith.addf %158, %124 : vector<16x32xf32>
    %c8 = arith.constant 8 : index
    %c0_148 = arith.constant 0 : index
    %c0_149 = arith.constant 0 : index
    %160 = vector.load %arg9[%c8, %c0_148, %c0_149] : memref<24x32x32xf32, #tpu.memory_space<vmem>>, vector<1x32x32xf32>
    %161 = vector.shape_cast %160 : vector<1x32x32xf32> to vector<32x32xf32>
    %cst_150 = arith.constant dense<0.000000e+00> : vector<16x32xf32>
    %162 = tpu.matmul %159, %161, %cst_150 {dimension_numbers = #tpu.dot_dimension_numbers<[1], [0], [0], [1], [0, 0, 1, 1], [], []>} : vector<16x32xf32>, vector<32x32xf32>, vector<16x32xf32> -> vector<16x32xf32>
    %c8_151 = arith.constant 8 : index
    %c0_152 = arith.constant 0 : index
    %c0_153 = arith.constant 0 : index
    %163 = vector.load %arg10[%c8_151, %c0_152, %c0_153] : memref<24x16x16xf32, #tpu.memory_space<vmem>>, vector<1x16x16xf32>
    %164 = vector.shape_cast %163 : vector<1x16x16xf32> to vector<16x16xf32>
    %cst_154 = arith.constant dense<0.000000e+00> : vector<16x32xf32>
    %165 = tpu.matmul %164, %162, %cst_154 {dimension_numbers = #tpu.dot_dimension_numbers<[1], [0], [0], [1], [0, 0, 1, 1], [], []>} : vector<16x16xf32>, vector<16x32xf32>, vector<16x32xf32> -> vector<16x32xf32>
    %c8_155 = arith.constant 8 : index
    %c0_156 = arith.constant 0 : index
    %c0_157 = arith.constant 0 : index
    %166 = vector.load %arg11[%c8_155, %c0_156, %c0_157] : memref<24x1x32xf32, #tpu.memory_space<vmem>>, vector<1x1x32xf32>
    %167 = vector.shape_cast %166 : vector<1x1x32xf32> to vector<1x32xf32>
    %168 = vector.broadcast %167 : vector<1x32xf32> to vector<16x32xf32>
    %169 = arith.addf %165, %168 : vector<16x32xf32>
    %c8_158 = arith.constant 8 : index
    %c0_159 = arith.constant 0 : index
    %c0_160 = arith.constant 0 : index
    %170 = vector.load %arg12[%c8_158, %c0_159, %c0_160] : memref<24x16x32xf32, #tpu.memory_space<vmem>>, vector<1x16x32xf32>
    %171 = vector.shape_cast %170 : vector<1x16x32xf32> to vector<16x32xf32>
    %172 = arith.mulf %169, %171 : vector<16x32xf32>
    %c8_161 = arith.constant 8 : index
    %c0_162 = arith.constant 0 : index
    %c0_163 = arith.constant 0 : index
    %173 = vector.load %arg13[%c8_161, %c0_162, %c0_163] : memref<24x16x32xf32, #tpu.memory_space<vmem>>, vector<1x16x32xf32>
    %174 = vector.shape_cast %173 : vector<1x16x32xf32> to vector<16x32xf32>
    %175 = arith.addf %172, %174 : vector<16x32xf32>
    %176 = math.tanh %175 : vector<16x32xf32>
    %c9 = arith.constant 9 : index
    %c0_164 = arith.constant 0 : index
    %c0_165 = arith.constant 0 : index
    %177 = vector.load %arg9[%c9, %c0_164, %c0_165] : memref<24x32x32xf32, #tpu.memory_space<vmem>>, vector<1x32x32xf32>
    %178 = vector.shape_cast %177 : vector<1x32x32xf32> to vector<32x32xf32>
    %cst_166 = arith.constant dense<0.000000e+00> : vector<16x32xf32>
    %179 = tpu.matmul %176, %178, %cst_166 {dimension_numbers = #tpu.dot_dimension_numbers<[1], [0], [0], [1], [0, 0, 1, 1], [], []>} : vector<16x32xf32>, vector<32x32xf32>, vector<16x32xf32> -> vector<16x32xf32>
    %c9_167 = arith.constant 9 : index
    %c0_168 = arith.constant 0 : index
    %c0_169 = arith.constant 0 : index
    %180 = vector.load %arg10[%c9_167, %c0_168, %c0_169] : memref<24x16x16xf32, #tpu.memory_space<vmem>>, vector<1x16x16xf32>
    %181 = vector.shape_cast %180 : vector<1x16x16xf32> to vector<16x16xf32>
    %cst_170 = arith.constant dense<0.000000e+00> : vector<16x32xf32>
    %182 = tpu.matmul %181, %179, %cst_170 {dimension_numbers = #tpu.dot_dimension_numbers<[1], [0], [0], [1], [0, 0, 1, 1], [], []>} : vector<16x16xf32>, vector<16x32xf32>, vector<16x32xf32> -> vector<16x32xf32>
    %c9_171 = arith.constant 9 : index
    %c0_172 = arith.constant 0 : index
    %c0_173 = arith.constant 0 : index
    %183 = vector.load %arg11[%c9_171, %c0_172, %c0_173] : memref<24x1x32xf32, #tpu.memory_space<vmem>>, vector<1x1x32xf32>
    %184 = vector.shape_cast %183 : vector<1x1x32xf32> to vector<1x32xf32>
    %185 = vector.broadcast %184 : vector<1x32xf32> to vector<16x32xf32>
    %186 = arith.addf %182, %185 : vector<16x32xf32>
    %c9_174 = arith.constant 9 : index
    %c0_175 = arith.constant 0 : index
    %c0_176 = arith.constant 0 : index
    %187 = vector.load %arg12[%c9_174, %c0_175, %c0_176] : memref<24x16x32xf32, #tpu.memory_space<vmem>>, vector<1x16x32xf32>
    %188 = vector.shape_cast %187 : vector<1x16x32xf32> to vector<16x32xf32>
    %189 = arith.mulf %186, %188 : vector<16x32xf32>
    %c9_177 = arith.constant 9 : index
    %c0_178 = arith.constant 0 : index
    %c0_179 = arith.constant 0 : index
    %190 = vector.load %arg13[%c9_177, %c0_178, %c0_179] : memref<24x16x32xf32, #tpu.memory_space<vmem>>, vector<1x16x32xf32>
    %191 = vector.shape_cast %190 : vector<1x16x32xf32> to vector<16x32xf32>
    %192 = arith.addf %189, %191 : vector<16x32xf32>
    %193 = math.tanh %192 : vector<16x32xf32>
    %194 = arith.addf %193, %159 : vector<16x32xf32>
    %c10 = arith.constant 10 : index
    %c0_180 = arith.constant 0 : index
    %c0_181 = arith.constant 0 : index
    %195 = vector.load %arg9[%c10, %c0_180, %c0_181] : memref<24x32x32xf32, #tpu.memory_space<vmem>>, vector<1x32x32xf32>
    %196 = vector.shape_cast %195 : vector<1x32x32xf32> to vector<32x32xf32>
    %cst_182 = arith.constant dense<0.000000e+00> : vector<16x32xf32>
    %197 = tpu.matmul %194, %196, %cst_182 {dimension_numbers = #tpu.dot_dimension_numbers<[1], [0], [0], [1], [0, 0, 1, 1], [], []>} : vector<16x32xf32>, vector<32x32xf32>, vector<16x32xf32> -> vector<16x32xf32>
    %c10_183 = arith.constant 10 : index
    %c0_184 = arith.constant 0 : index
    %c0_185 = arith.constant 0 : index
    %198 = vector.load %arg10[%c10_183, %c0_184, %c0_185] : memref<24x16x16xf32, #tpu.memory_space<vmem>>, vector<1x16x16xf32>
    %199 = vector.shape_cast %198 : vector<1x16x16xf32> to vector<16x16xf32>
    %cst_186 = arith.constant dense<0.000000e+00> : vector<16x32xf32>
    %200 = tpu.matmul %199, %197, %cst_186 {dimension_numbers = #tpu.dot_dimension_numbers<[1], [0], [0], [1], [0, 0, 1, 1], [], []>} : vector<16x16xf32>, vector<16x32xf32>, vector<16x32xf32> -> vector<16x32xf32>
    %c10_187 = arith.constant 10 : index
    %c0_188 = arith.constant 0 : index
    %c0_189 = arith.constant 0 : index
    %201 = vector.load %arg11[%c10_187, %c0_188, %c0_189] : memref<24x1x32xf32, #tpu.memory_space<vmem>>, vector<1x1x32xf32>
    %202 = vector.shape_cast %201 : vector<1x1x32xf32> to vector<1x32xf32>
    %203 = vector.broadcast %202 : vector<1x32xf32> to vector<16x32xf32>
    %204 = arith.addf %200, %203 : vector<16x32xf32>
    %c10_190 = arith.constant 10 : index
    %c0_191 = arith.constant 0 : index
    %c0_192 = arith.constant 0 : index
    %205 = vector.load %arg12[%c10_190, %c0_191, %c0_192] : memref<24x16x32xf32, #tpu.memory_space<vmem>>, vector<1x16x32xf32>
    %206 = vector.shape_cast %205 : vector<1x16x32xf32> to vector<16x32xf32>
    %207 = arith.mulf %204, %206 : vector<16x32xf32>
    %c10_193 = arith.constant 10 : index
    %c0_194 = arith.constant 0 : index
    %c0_195 = arith.constant 0 : index
    %208 = vector.load %arg13[%c10_193, %c0_194, %c0_195] : memref<24x16x32xf32, #tpu.memory_space<vmem>>, vector<1x16x32xf32>
    %209 = vector.shape_cast %208 : vector<1x16x32xf32> to vector<16x32xf32>
    %210 = arith.addf %207, %209 : vector<16x32xf32>
    %211 = math.tanh %210 : vector<16x32xf32>
    %c11 = arith.constant 11 : index
    %c0_196 = arith.constant 0 : index
    %c0_197 = arith.constant 0 : index
    %212 = vector.load %arg9[%c11, %c0_196, %c0_197] : memref<24x32x32xf32, #tpu.memory_space<vmem>>, vector<1x32x32xf32>
    %213 = vector.shape_cast %212 : vector<1x32x32xf32> to vector<32x32xf32>
    %cst_198 = arith.constant dense<0.000000e+00> : vector<16x32xf32>
    %214 = tpu.matmul %211, %213, %cst_198 {dimension_numbers = #tpu.dot_dimension_numbers<[1], [0], [0], [1], [0, 0, 1, 1], [], []>} : vector<16x32xf32>, vector<32x32xf32>, vector<16x32xf32> -> vector<16x32xf32>
    %c11_199 = arith.constant 11 : index
    %c0_200 = arith.constant 0 : index
    %c0_201 = arith.constant 0 : index
    %215 = vector.load %arg10[%c11_199, %c0_200, %c0_201] : memref<24x16x16xf32, #tpu.memory_space<vmem>>, vector<1x16x16xf32>
    %216 = vector.shape_cast %215 : vector<1x16x16xf32> to vector<16x16xf32>
    %cst_202 = arith.constant dense<0.000000e+00> : vector<16x32xf32>
    %217 = tpu.matmul %216, %214, %cst_202 {dimension_numbers = #tpu.dot_dimension_numbers<[1], [0], [0], [1], [0, 0, 1, 1], [], []>} : vector<16x16xf32>, vector<16x32xf32>, vector<16x32xf32> -> vector<16x32xf32>
    %c11_203 = arith.constant 11 : index
    %c0_204 = arith.constant 0 : index
    %c0_205 = arith.constant 0 : index
    %218 = vector.load %arg11[%c11_203, %c0_204, %c0_205] : memref<24x1x32xf32, #tpu.memory_space<vmem>>, vector<1x1x32xf32>
    %219 = vector.shape_cast %218 : vector<1x1x32xf32> to vector<1x32xf32>
    %220 = vector.broadcast %219 : vector<1x32xf32> to vector<16x32xf32>
    %221 = arith.addf %217, %220 : vector<16x32xf32>
    %c11_206 = arith.constant 11 : index
    %c0_207 = arith.constant 0 : index
    %c0_208 = arith.constant 0 : index
    %222 = vector.load %arg12[%c11_206, %c0_207, %c0_208] : memref<24x16x32xf32, #tpu.memory_space<vmem>>, vector<1x16x32xf32>
    %223 = vector.shape_cast %222 : vector<1x16x32xf32> to vector<16x32xf32>
    %224 = arith.mulf %221, %223 : vector<16x32xf32>
    %c11_209 = arith.constant 11 : index
    %c0_210 = arith.constant 0 : index
    %c0_211 = arith.constant 0 : index
    %225 = vector.load %arg13[%c11_209, %c0_210, %c0_211] : memref<24x16x32xf32, #tpu.memory_space<vmem>>, vector<1x16x32xf32>
    %226 = vector.shape_cast %225 : vector<1x16x32xf32> to vector<16x32xf32>
    %227 = arith.addf %224, %226 : vector<16x32xf32>
    %228 = math.tanh %227 : vector<16x32xf32>
    %229 = arith.addf %228, %194 : vector<16x32xf32>
    %c12 = arith.constant 12 : index
    %c0_212 = arith.constant 0 : index
    %c0_213 = arith.constant 0 : index
    %230 = vector.load %arg9[%c12, %c0_212, %c0_213] : memref<24x32x32xf32, #tpu.memory_space<vmem>>, vector<1x32x32xf32>
    %231 = vector.shape_cast %230 : vector<1x32x32xf32> to vector<32x32xf32>
    %cst_214 = arith.constant dense<0.000000e+00> : vector<16x32xf32>
    %232 = tpu.matmul %229, %231, %cst_214 {dimension_numbers = #tpu.dot_dimension_numbers<[1], [0], [0], [1], [0, 0, 1, 1], [], []>} : vector<16x32xf32>, vector<32x32xf32>, vector<16x32xf32> -> vector<16x32xf32>
    %c12_215 = arith.constant 12 : index
    %c0_216 = arith.constant 0 : index
    %c0_217 = arith.constant 0 : index
    %233 = vector.load %arg10[%c12_215, %c0_216, %c0_217] : memref<24x16x16xf32, #tpu.memory_space<vmem>>, vector<1x16x16xf32>
    %234 = vector.shape_cast %233 : vector<1x16x16xf32> to vector<16x16xf32>
    %cst_218 = arith.constant dense<0.000000e+00> : vector<16x32xf32>
    %235 = tpu.matmul %234, %232, %cst_218 {dimension_numbers = #tpu.dot_dimension_numbers<[1], [0], [0], [1], [0, 0, 1, 1], [], []>} : vector<16x16xf32>, vector<16x32xf32>, vector<16x32xf32> -> vector<16x32xf32>
    %c12_219 = arith.constant 12 : index
    %c0_220 = arith.constant 0 : index
    %c0_221 = arith.constant 0 : index
    %236 = vector.load %arg11[%c12_219, %c0_220, %c0_221] : memref<24x1x32xf32, #tpu.memory_space<vmem>>, vector<1x1x32xf32>
    %237 = vector.shape_cast %236 : vector<1x1x32xf32> to vector<1x32xf32>
    %238 = vector.broadcast %237 : vector<1x32xf32> to vector<16x32xf32>
    %239 = arith.addf %235, %238 : vector<16x32xf32>
    %c12_222 = arith.constant 12 : index
    %c0_223 = arith.constant 0 : index
    %c0_224 = arith.constant 0 : index
    %240 = vector.load %arg12[%c12_222, %c0_223, %c0_224] : memref<24x16x32xf32, #tpu.memory_space<vmem>>, vector<1x16x32xf32>
    %241 = vector.shape_cast %240 : vector<1x16x32xf32> to vector<16x32xf32>
    %242 = arith.mulf %239, %241 : vector<16x32xf32>
    %c12_225 = arith.constant 12 : index
    %c0_226 = arith.constant 0 : index
    %c0_227 = arith.constant 0 : index
    %243 = vector.load %arg13[%c12_225, %c0_226, %c0_227] : memref<24x16x32xf32, #tpu.memory_space<vmem>>, vector<1x16x32xf32>
    %244 = vector.shape_cast %243 : vector<1x16x32xf32> to vector<16x32xf32>
    %245 = arith.addf %242, %244 : vector<16x32xf32>
    %246 = math.tanh %245 : vector<16x32xf32>
    %c13 = arith.constant 13 : index
    %c0_228 = arith.constant 0 : index
    %c0_229 = arith.constant 0 : index
    %247 = vector.load %arg9[%c13, %c0_228, %c0_229] : memref<24x32x32xf32, #tpu.memory_space<vmem>>, vector<1x32x32xf32>
    %248 = vector.shape_cast %247 : vector<1x32x32xf32> to vector<32x32xf32>
    %cst_230 = arith.constant dense<0.000000e+00> : vector<16x32xf32>
    %249 = tpu.matmul %246, %248, %cst_230 {dimension_numbers = #tpu.dot_dimension_numbers<[1], [0], [0], [1], [0, 0, 1, 1], [], []>} : vector<16x32xf32>, vector<32x32xf32>, vector<16x32xf32> -> vector<16x32xf32>
    %c13_231 = arith.constant 13 : index
    %c0_232 = arith.constant 0 : index
    %c0_233 = arith.constant 0 : index
    %250 = vector.load %arg10[%c13_231, %c0_232, %c0_233] : memref<24x16x16xf32, #tpu.memory_space<vmem>>, vector<1x16x16xf32>
    %251 = vector.shape_cast %250 : vector<1x16x16xf32> to vector<16x16xf32>
    %cst_234 = arith.constant dense<0.000000e+00> : vector<16x32xf32>
    %252 = tpu.matmul %251, %249, %cst_234 {dimension_numbers = #tpu.dot_dimension_numbers<[1], [0], [0], [1], [0, 0, 1, 1], [], []>} : vector<16x16xf32>, vector<16x32xf32>, vector<16x32xf32> -> vector<16x32xf32>
    %c13_235 = arith.constant 13 : index
    %c0_236 = arith.constant 0 : index
    %c0_237 = arith.constant 0 : index
    %253 = vector.load %arg11[%c13_235, %c0_236, %c0_237] : memref<24x1x32xf32, #tpu.memory_space<vmem>>, vector<1x1x32xf32>
    %254 = vector.shape_cast %253 : vector<1x1x32xf32> to vector<1x32xf32>
    %255 = vector.broadcast %254 : vector<1x32xf32> to vector<16x32xf32>
    %256 = arith.addf %252, %255 : vector<16x32xf32>
    %c13_238 = arith.constant 13 : index
    %c0_239 = arith.constant 0 : index
    %c0_240 = arith.constant 0 : index
    %257 = vector.load %arg12[%c13_238, %c0_239, %c0_240] : memref<24x16x32xf32, #tpu.memory_space<vmem>>, vector<1x16x32xf32>
    %258 = vector.shape_cast %257 : vector<1x16x32xf32> to vector<16x32xf32>
    %259 = arith.mulf %256, %258 : vector<16x32xf32>
    %c13_241 = arith.constant 13 : index
    %c0_242 = arith.constant 0 : index
    %c0_243 = arith.constant 0 : index
    %260 = vector.load %arg13[%c13_241, %c0_242, %c0_243] : memref<24x16x32xf32, #tpu.memory_space<vmem>>, vector<1x16x32xf32>
    %261 = vector.shape_cast %260 : vector<1x16x32xf32> to vector<16x32xf32>
    %262 = arith.addf %259, %261 : vector<16x32xf32>
    %263 = math.tanh %262 : vector<16x32xf32>
    %264 = arith.addf %263, %229 : vector<16x32xf32>
    %c14 = arith.constant 14 : index
    %c0_244 = arith.constant 0 : index
    %c0_245 = arith.constant 0 : index
    %265 = vector.load %arg9[%c14, %c0_244, %c0_245] : memref<24x32x32xf32, #tpu.memory_space<vmem>>, vector<1x32x32xf32>
    %266 = vector.shape_cast %265 : vector<1x32x32xf32> to vector<32x32xf32>
    %cst_246 = arith.constant dense<0.000000e+00> : vector<16x32xf32>
    %267 = tpu.matmul %264, %266, %cst_246 {dimension_numbers = #tpu.dot_dimension_numbers<[1], [0], [0], [1], [0, 0, 1, 1], [], []>} : vector<16x32xf32>, vector<32x32xf32>, vector<16x32xf32> -> vector<16x32xf32>
    %c14_247 = arith.constant 14 : index
    %c0_248 = arith.constant 0 : index
    %c0_249 = arith.constant 0 : index
    %268 = vector.load %arg10[%c14_247, %c0_248, %c0_249] : memref<24x16x16xf32, #tpu.memory_space<vmem>>, vector<1x16x16xf32>
    %269 = vector.shape_cast %268 : vector<1x16x16xf32> to vector<16x16xf32>
    %cst_250 = arith.constant dense<0.000000e+00> : vector<16x32xf32>
    %270 = tpu.matmul %269, %267, %cst_250 {dimension_numbers = #tpu.dot_dimension_numbers<[1], [0], [0], [1], [0, 0, 1, 1], [], []>} : vector<16x16xf32>, vector<16x32xf32>, vector<16x32xf32> -> vector<16x32xf32>
    %c14_251 = arith.constant 14 : index
    %c0_252 = arith.constant 0 : index
    %c0_253 = arith.constant 0 : index
    %271 = vector.load %arg11[%c14_251, %c0_252, %c0_253] : memref<24x1x32xf32, #tpu.memory_space<vmem>>, vector<1x1x32xf32>
    %272 = vector.shape_cast %271 : vector<1x1x32xf32> to vector<1x32xf32>
    %273 = vector.broadcast %272 : vector<1x32xf32> to vector<16x32xf32>
    %274 = arith.addf %270, %273 : vector<16x32xf32>
    %c14_254 = arith.constant 14 : index
    %c0_255 = arith.constant 0 : index
    %c0_256 = arith.constant 0 : index
    %275 = vector.load %arg12[%c14_254, %c0_255, %c0_256] : memref<24x16x32xf32, #tpu.memory_space<vmem>>, vector<1x16x32xf32>
    %276 = vector.shape_cast %275 : vector<1x16x32xf32> to vector<16x32xf32>
    %277 = arith.mulf %274, %276 : vector<16x32xf32>
    %c14_257 = arith.constant 14 : index
    %c0_258 = arith.constant 0 : index
    %c0_259 = arith.constant 0 : index
    %278 = vector.load %arg13[%c14_257, %c0_258, %c0_259] : memref<24x16x32xf32, #tpu.memory_space<vmem>>, vector<1x16x32xf32>
    %279 = vector.shape_cast %278 : vector<1x16x32xf32> to vector<16x32xf32>
    %280 = arith.addf %277, %279 : vector<16x32xf32>
    %281 = math.tanh %280 : vector<16x32xf32>
    %c15 = arith.constant 15 : index
    %c0_260 = arith.constant 0 : index
    %c0_261 = arith.constant 0 : index
    %282 = vector.load %arg9[%c15, %c0_260, %c0_261] : memref<24x32x32xf32, #tpu.memory_space<vmem>>, vector<1x32x32xf32>
    %283 = vector.shape_cast %282 : vector<1x32x32xf32> to vector<32x32xf32>
    %cst_262 = arith.constant dense<0.000000e+00> : vector<16x32xf32>
    %284 = tpu.matmul %281, %283, %cst_262 {dimension_numbers = #tpu.dot_dimension_numbers<[1], [0], [0], [1], [0, 0, 1, 1], [], []>} : vector<16x32xf32>, vector<32x32xf32>, vector<16x32xf32> -> vector<16x32xf32>
    %c15_263 = arith.constant 15 : index
    %c0_264 = arith.constant 0 : index
    %c0_265 = arith.constant 0 : index
    %285 = vector.load %arg10[%c15_263, %c0_264, %c0_265] : memref<24x16x16xf32, #tpu.memory_space<vmem>>, vector<1x16x16xf32>
    %286 = vector.shape_cast %285 : vector<1x16x16xf32> to vector<16x16xf32>
    %cst_266 = arith.constant dense<0.000000e+00> : vector<16x32xf32>
    %287 = tpu.matmul %286, %284, %cst_266 {dimension_numbers = #tpu.dot_dimension_numbers<[1], [0], [0], [1], [0, 0, 1, 1], [], []>} : vector<16x16xf32>, vector<16x32xf32>, vector<16x32xf32> -> vector<16x32xf32>
    %c15_267 = arith.constant 15 : index
    %c0_268 = arith.constant 0 : index
    %c0_269 = arith.constant 0 : index
    %288 = vector.load %arg11[%c15_267, %c0_268, %c0_269] : memref<24x1x32xf32, #tpu.memory_space<vmem>>, vector<1x1x32xf32>
    %289 = vector.shape_cast %288 : vector<1x1x32xf32> to vector<1x32xf32>
    %290 = vector.broadcast %289 : vector<1x32xf32> to vector<16x32xf32>
    %291 = arith.addf %287, %290 : vector<16x32xf32>
    %c15_270 = arith.constant 15 : index
    %c0_271 = arith.constant 0 : index
    %c0_272 = arith.constant 0 : index
    %292 = vector.load %arg12[%c15_270, %c0_271, %c0_272] : memref<24x16x32xf32, #tpu.memory_space<vmem>>, vector<1x16x32xf32>
    %293 = vector.shape_cast %292 : vector<1x16x32xf32> to vector<16x32xf32>
    %294 = arith.mulf %291, %293 : vector<16x32xf32>
    %c15_273 = arith.constant 15 : index
    %c0_274 = arith.constant 0 : index
    %c0_275 = arith.constant 0 : index
    %295 = vector.load %arg13[%c15_273, %c0_274, %c0_275] : memref<24x16x32xf32, #tpu.memory_space<vmem>>, vector<1x16x32xf32>
    %296 = vector.shape_cast %295 : vector<1x16x32xf32> to vector<16x32xf32>
    %297 = arith.addf %294, %296 : vector<16x32xf32>
    %298 = math.tanh %297 : vector<16x32xf32>
    %299 = arith.addf %298, %264 : vector<16x32xf32>
    %c16 = arith.constant 16 : index
    %c0_276 = arith.constant 0 : index
    %c0_277 = arith.constant 0 : index
    %300 = vector.load %arg9[%c16, %c0_276, %c0_277] : memref<24x32x32xf32, #tpu.memory_space<vmem>>, vector<1x32x32xf32>
    %301 = vector.shape_cast %300 : vector<1x32x32xf32> to vector<32x32xf32>
    %cst_278 = arith.constant dense<0.000000e+00> : vector<16x32xf32>
    %302 = tpu.matmul %299, %301, %cst_278 {dimension_numbers = #tpu.dot_dimension_numbers<[1], [0], [0], [1], [0, 0, 1, 1], [], []>} : vector<16x32xf32>, vector<32x32xf32>, vector<16x32xf32> -> vector<16x32xf32>
    %c16_279 = arith.constant 16 : index
    %c0_280 = arith.constant 0 : index
    %c0_281 = arith.constant 0 : index
    %303 = vector.load %arg10[%c16_279, %c0_280, %c0_281] : memref<24x16x16xf32, #tpu.memory_space<vmem>>, vector<1x16x16xf32>
    %304 = vector.shape_cast %303 : vector<1x16x16xf32> to vector<16x16xf32>
    %cst_282 = arith.constant dense<0.000000e+00> : vector<16x32xf32>
    %305 = tpu.matmul %304, %302, %cst_282 {dimension_numbers = #tpu.dot_dimension_numbers<[1], [0], [0], [1], [0, 0, 1, 1], [], []>} : vector<16x16xf32>, vector<16x32xf32>, vector<16x32xf32> -> vector<16x32xf32>
    %c16_283 = arith.constant 16 : index
    %c0_284 = arith.constant 0 : index
    %c0_285 = arith.constant 0 : index
    %306 = vector.load %arg11[%c16_283, %c0_284, %c0_285] : memref<24x1x32xf32, #tpu.memory_space<vmem>>, vector<1x1x32xf32>
    %307 = vector.shape_cast %306 : vector<1x1x32xf32> to vector<1x32xf32>
    %308 = vector.broadcast %307 : vector<1x32xf32> to vector<16x32xf32>
    %309 = arith.addf %305, %308 : vector<16x32xf32>
    %c16_286 = arith.constant 16 : index
    %c0_287 = arith.constant 0 : index
    %c0_288 = arith.constant 0 : index
    %310 = vector.load %arg12[%c16_286, %c0_287, %c0_288] : memref<24x16x32xf32, #tpu.memory_space<vmem>>, vector<1x16x32xf32>
    %311 = vector.shape_cast %310 : vector<1x16x32xf32> to vector<16x32xf32>
    %312 = arith.mulf %309, %311 : vector<16x32xf32>
    %c16_289 = arith.constant 16 : index
    %c0_290 = arith.constant 0 : index
    %c0_291 = arith.constant 0 : index
    %313 = vector.load %arg13[%c16_289, %c0_290, %c0_291] : memref<24x16x32xf32, #tpu.memory_space<vmem>>, vector<1x16x32xf32>
    %314 = vector.shape_cast %313 : vector<1x16x32xf32> to vector<16x32xf32>
    %315 = arith.addf %312, %314 : vector<16x32xf32>
    %316 = math.tanh %315 : vector<16x32xf32>
    %c17 = arith.constant 17 : index
    %c0_292 = arith.constant 0 : index
    %c0_293 = arith.constant 0 : index
    %317 = vector.load %arg9[%c17, %c0_292, %c0_293] : memref<24x32x32xf32, #tpu.memory_space<vmem>>, vector<1x32x32xf32>
    %318 = vector.shape_cast %317 : vector<1x32x32xf32> to vector<32x32xf32>
    %cst_294 = arith.constant dense<0.000000e+00> : vector<16x32xf32>
    %319 = tpu.matmul %316, %318, %cst_294 {dimension_numbers = #tpu.dot_dimension_numbers<[1], [0], [0], [1], [0, 0, 1, 1], [], []>} : vector<16x32xf32>, vector<32x32xf32>, vector<16x32xf32> -> vector<16x32xf32>
    %c17_295 = arith.constant 17 : index
    %c0_296 = arith.constant 0 : index
    %c0_297 = arith.constant 0 : index
    %320 = vector.load %arg10[%c17_295, %c0_296, %c0_297] : memref<24x16x16xf32, #tpu.memory_space<vmem>>, vector<1x16x16xf32>
    %321 = vector.shape_cast %320 : vector<1x16x16xf32> to vector<16x16xf32>
    %cst_298 = arith.constant dense<0.000000e+00> : vector<16x32xf32>
    %322 = tpu.matmul %321, %319, %cst_298 {dimension_numbers = #tpu.dot_dimension_numbers<[1], [0], [0], [1], [0, 0, 1, 1], [], []>} : vector<16x16xf32>, vector<16x32xf32>, vector<16x32xf32> -> vector<16x32xf32>
    %c17_299 = arith.constant 17 : index
    %c0_300 = arith.constant 0 : index
    %c0_301 = arith.constant 0 : index
    %323 = vector.load %arg11[%c17_299, %c0_300, %c0_301] : memref<24x1x32xf32, #tpu.memory_space<vmem>>, vector<1x1x32xf32>
    %324 = vector.shape_cast %323 : vector<1x1x32xf32> to vector<1x32xf32>
    %325 = vector.broadcast %324 : vector<1x32xf32> to vector<16x32xf32>
    %326 = arith.addf %322, %325 : vector<16x32xf32>
    %c17_302 = arith.constant 17 : index
    %c0_303 = arith.constant 0 : index
    %c0_304 = arith.constant 0 : index
    %327 = vector.load %arg12[%c17_302, %c0_303, %c0_304] : memref<24x16x32xf32, #tpu.memory_space<vmem>>, vector<1x16x32xf32>
    %328 = vector.shape_cast %327 : vector<1x16x32xf32> to vector<16x32xf32>
    %329 = arith.mulf %326, %328 : vector<16x32xf32>
    %c17_305 = arith.constant 17 : index
    %c0_306 = arith.constant 0 : index
    %c0_307 = arith.constant 0 : index
    %330 = vector.load %arg13[%c17_305, %c0_306, %c0_307] : memref<24x16x32xf32, #tpu.memory_space<vmem>>, vector<1x16x32xf32>
    %331 = vector.shape_cast %330 : vector<1x16x32xf32> to vector<16x32xf32>
    %332 = arith.addf %329, %331 : vector<16x32xf32>
    %333 = math.tanh %332 : vector<16x32xf32>
    %334 = arith.addf %333, %299 : vector<16x32xf32>
    %c18 = arith.constant 18 : index
    %c0_308 = arith.constant 0 : index
    %c0_309 = arith.constant 0 : index
    %335 = vector.load %arg9[%c18, %c0_308, %c0_309] : memref<24x32x32xf32, #tpu.memory_space<vmem>>, vector<1x32x32xf32>
    %336 = vector.shape_cast %335 : vector<1x32x32xf32> to vector<32x32xf32>
    %cst_310 = arith.constant dense<0.000000e+00> : vector<16x32xf32>
    %337 = tpu.matmul %334, %336, %cst_310 {dimension_numbers = #tpu.dot_dimension_numbers<[1], [0], [0], [1], [0, 0, 1, 1], [], []>} : vector<16x32xf32>, vector<32x32xf32>, vector<16x32xf32> -> vector<16x32xf32>
    %c18_311 = arith.constant 18 : index
    %c0_312 = arith.constant 0 : index
    %c0_313 = arith.constant 0 : index
    %338 = vector.load %arg10[%c18_311, %c0_312, %c0_313] : memref<24x16x16xf32, #tpu.memory_space<vmem>>, vector<1x16x16xf32>
    %339 = vector.shape_cast %338 : vector<1x16x16xf32> to vector<16x16xf32>
    %cst_314 = arith.constant dense<0.000000e+00> : vector<16x32xf32>
    %340 = tpu.matmul %339, %337, %cst_314 {dimension_numbers = #tpu.dot_dimension_numbers<[1], [0], [0], [1], [0, 0, 1, 1], [], []>} : vector<16x16xf32>, vector<16x32xf32>, vector<16x32xf32> -> vector<16x32xf32>
    %c18_315 = arith.constant 18 : index
    %c0_316 = arith.constant 0 : index
    %c0_317 = arith.constant 0 : index
    %341 = vector.load %arg11[%c18_315, %c0_316, %c0_317] : memref<24x1x32xf32, #tpu.memory_space<vmem>>, vector<1x1x32xf32>
    %342 = vector.shape_cast %341 : vector<1x1x32xf32> to vector<1x32xf32>
    %343 = vector.broadcast %342 : vector<1x32xf32> to vector<16x32xf32>
    %344 = arith.addf %340, %343 : vector<16x32xf32>
    %c18_318 = arith.constant 18 : index
    %c0_319 = arith.constant 0 : index
    %c0_320 = arith.constant 0 : index
    %345 = vector.load %arg12[%c18_318, %c0_319, %c0_320] : memref<24x16x32xf32, #tpu.memory_space<vmem>>, vector<1x16x32xf32>
    %346 = vector.shape_cast %345 : vector<1x16x32xf32> to vector<16x32xf32>
    %347 = arith.mulf %344, %346 : vector<16x32xf32>
    %c18_321 = arith.constant 18 : index
    %c0_322 = arith.constant 0 : index
    %c0_323 = arith.constant 0 : index
    %348 = vector.load %arg13[%c18_321, %c0_322, %c0_323] : memref<24x16x32xf32, #tpu.memory_space<vmem>>, vector<1x16x32xf32>
    %349 = vector.shape_cast %348 : vector<1x16x32xf32> to vector<16x32xf32>
    %350 = arith.addf %347, %349 : vector<16x32xf32>
    %351 = math.tanh %350 : vector<16x32xf32>
    %c19 = arith.constant 19 : index
    %c0_324 = arith.constant 0 : index
    %c0_325 = arith.constant 0 : index
    %352 = vector.load %arg9[%c19, %c0_324, %c0_325] : memref<24x32x32xf32, #tpu.memory_space<vmem>>, vector<1x32x32xf32>
    %353 = vector.shape_cast %352 : vector<1x32x32xf32> to vector<32x32xf32>
    %cst_326 = arith.constant dense<0.000000e+00> : vector<16x32xf32>
    %354 = tpu.matmul %351, %353, %cst_326 {dimension_numbers = #tpu.dot_dimension_numbers<[1], [0], [0], [1], [0, 0, 1, 1], [], []>} : vector<16x32xf32>, vector<32x32xf32>, vector<16x32xf32> -> vector<16x32xf32>
    %c19_327 = arith.constant 19 : index
    %c0_328 = arith.constant 0 : index
    %c0_329 = arith.constant 0 : index
    %355 = vector.load %arg10[%c19_327, %c0_328, %c0_329] : memref<24x16x16xf32, #tpu.memory_space<vmem>>, vector<1x16x16xf32>
    %356 = vector.shape_cast %355 : vector<1x16x16xf32> to vector<16x16xf32>
    %cst_330 = arith.constant dense<0.000000e+00> : vector<16x32xf32>
    %357 = tpu.matmul %356, %354, %cst_330 {dimension_numbers = #tpu.dot_dimension_numbers<[1], [0], [0], [1], [0, 0, 1, 1], [], []>} : vector<16x16xf32>, vector<16x32xf32>, vector<16x32xf32> -> vector<16x32xf32>
    %c19_331 = arith.constant 19 : index
    %c0_332 = arith.constant 0 : index
    %c0_333 = arith.constant 0 : index
    %358 = vector.load %arg11[%c19_331, %c0_332, %c0_333] : memref<24x1x32xf32, #tpu.memory_space<vmem>>, vector<1x1x32xf32>
    %359 = vector.shape_cast %358 : vector<1x1x32xf32> to vector<1x32xf32>
    %360 = vector.broadcast %359 : vector<1x32xf32> to vector<16x32xf32>
    %361 = arith.addf %357, %360 : vector<16x32xf32>
    %c19_334 = arith.constant 19 : index
    %c0_335 = arith.constant 0 : index
    %c0_336 = arith.constant 0 : index
    %362 = vector.load %arg12[%c19_334, %c0_335, %c0_336] : memref<24x16x32xf32, #tpu.memory_space<vmem>>, vector<1x16x32xf32>
    %363 = vector.shape_cast %362 : vector<1x16x32xf32> to vector<16x32xf32>
    %364 = arith.mulf %361, %363 : vector<16x32xf32>
    %c19_337 = arith.constant 19 : index
    %c0_338 = arith.constant 0 : index
    %c0_339 = arith.constant 0 : index
    %365 = vector.load %arg13[%c19_337, %c0_338, %c0_339] : memref<24x16x32xf32, #tpu.memory_space<vmem>>, vector<1x16x32xf32>
    %366 = vector.shape_cast %365 : vector<1x16x32xf32> to vector<16x32xf32>
    %367 = arith.addf %364, %366 : vector<16x32xf32>
    %368 = math.tanh %367 : vector<16x32xf32>
    %369 = arith.addf %368, %334 : vector<16x32xf32>
    %c20 = arith.constant 20 : index
    %c0_340 = arith.constant 0 : index
    %c0_341 = arith.constant 0 : index
    %370 = vector.load %arg9[%c20, %c0_340, %c0_341] : memref<24x32x32xf32, #tpu.memory_space<vmem>>, vector<1x32x32xf32>
    %371 = vector.shape_cast %370 : vector<1x32x32xf32> to vector<32x32xf32>
    %cst_342 = arith.constant dense<0.000000e+00> : vector<16x32xf32>
    %372 = tpu.matmul %369, %371, %cst_342 {dimension_numbers = #tpu.dot_dimension_numbers<[1], [0], [0], [1], [0, 0, 1, 1], [], []>} : vector<16x32xf32>, vector<32x32xf32>, vector<16x32xf32> -> vector<16x32xf32>
    %c20_343 = arith.constant 20 : index
    %c0_344 = arith.constant 0 : index
    %c0_345 = arith.constant 0 : index
    %373 = vector.load %arg10[%c20_343, %c0_344, %c0_345] : memref<24x16x16xf32, #tpu.memory_space<vmem>>, vector<1x16x16xf32>
    %374 = vector.shape_cast %373 : vector<1x16x16xf32> to vector<16x16xf32>
    %cst_346 = arith.constant dense<0.000000e+00> : vector<16x32xf32>
    %375 = tpu.matmul %374, %372, %cst_346 {dimension_numbers = #tpu.dot_dimension_numbers<[1], [0], [0], [1], [0, 0, 1, 1], [], []>} : vector<16x16xf32>, vector<16x32xf32>, vector<16x32xf32> -> vector<16x32xf32>
    %c20_347 = arith.constant 20 : index
    %c0_348 = arith.constant 0 : index
    %c0_349 = arith.constant 0 : index
    %376 = vector.load %arg11[%c20_347, %c0_348, %c0_349] : memref<24x1x32xf32, #tpu.memory_space<vmem>>, vector<1x1x32xf32>
    %377 = vector.shape_cast %376 : vector<1x1x32xf32> to vector<1x32xf32>
    %378 = vector.broadcast %377 : vector<1x32xf32> to vector<16x32xf32>
    %379 = arith.addf %375, %378 : vector<16x32xf32>
    %c20_350 = arith.constant 20 : index
    %c0_351 = arith.constant 0 : index
    %c0_352 = arith.constant 0 : index
    %380 = vector.load %arg12[%c20_350, %c0_351, %c0_352] : memref<24x16x32xf32, #tpu.memory_space<vmem>>, vector<1x16x32xf32>
    %381 = vector.shape_cast %380 : vector<1x16x32xf32> to vector<16x32xf32>
    %382 = arith.mulf %379, %381 : vector<16x32xf32>
    %c20_353 = arith.constant 20 : index
    %c0_354 = arith.constant 0 : index
    %c0_355 = arith.constant 0 : index
    %383 = vector.load %arg13[%c20_353, %c0_354, %c0_355] : memref<24x16x32xf32, #tpu.memory_space<vmem>>, vector<1x16x32xf32>
    %384 = vector.shape_cast %383 : vector<1x16x32xf32> to vector<16x32xf32>
    %385 = arith.addf %382, %384 : vector<16x32xf32>
    %386 = math.tanh %385 : vector<16x32xf32>
    %c21 = arith.constant 21 : index
    %c0_356 = arith.constant 0 : index
    %c0_357 = arith.constant 0 : index
    %387 = vector.load %arg9[%c21, %c0_356, %c0_357] : memref<24x32x32xf32, #tpu.memory_space<vmem>>, vector<1x32x32xf32>
    %388 = vector.shape_cast %387 : vector<1x32x32xf32> to vector<32x32xf32>
    %cst_358 = arith.constant dense<0.000000e+00> : vector<16x32xf32>
    %389 = tpu.matmul %386, %388, %cst_358 {dimension_numbers = #tpu.dot_dimension_numbers<[1], [0], [0], [1], [0, 0, 1, 1], [], []>} : vector<16x32xf32>, vector<32x32xf32>, vector<16x32xf32> -> vector<16x32xf32>
    %c21_359 = arith.constant 21 : index
    %c0_360 = arith.constant 0 : index
    %c0_361 = arith.constant 0 : index
    %390 = vector.load %arg10[%c21_359, %c0_360, %c0_361] : memref<24x16x16xf32, #tpu.memory_space<vmem>>, vector<1x16x16xf32>
    %391 = vector.shape_cast %390 : vector<1x16x16xf32> to vector<16x16xf32>
    %cst_362 = arith.constant dense<0.000000e+00> : vector<16x32xf32>
    %392 = tpu.matmul %391, %389, %cst_362 {dimension_numbers = #tpu.dot_dimension_numbers<[1], [0], [0], [1], [0, 0, 1, 1], [], []>} : vector<16x16xf32>, vector<16x32xf32>, vector<16x32xf32> -> vector<16x32xf32>
    %c21_363 = arith.constant 21 : index
    %c0_364 = arith.constant 0 : index
    %c0_365 = arith.constant 0 : index
    %393 = vector.load %arg11[%c21_363, %c0_364, %c0_365] : memref<24x1x32xf32, #tpu.memory_space<vmem>>, vector<1x1x32xf32>
    %394 = vector.shape_cast %393 : vector<1x1x32xf32> to vector<1x32xf32>
    %395 = vector.broadcast %394 : vector<1x32xf32> to vector<16x32xf32>
    %396 = arith.addf %392, %395 : vector<16x32xf32>
    %c21_366 = arith.constant 21 : index
    %c0_367 = arith.constant 0 : index
    %c0_368 = arith.constant 0 : index
    %397 = vector.load %arg12[%c21_366, %c0_367, %c0_368] : memref<24x16x32xf32, #tpu.memory_space<vmem>>, vector<1x16x32xf32>
    %398 = vector.shape_cast %397 : vector<1x16x32xf32> to vector<16x32xf32>
    %399 = arith.mulf %396, %398 : vector<16x32xf32>
    %c21_369 = arith.constant 21 : index
    %c0_370 = arith.constant 0 : index
    %c0_371 = arith.constant 0 : index
    %400 = vector.load %arg13[%c21_369, %c0_370, %c0_371] : memref<24x16x32xf32, #tpu.memory_space<vmem>>, vector<1x16x32xf32>
    %401 = vector.shape_cast %400 : vector<1x16x32xf32> to vector<16x32xf32>
    %402 = arith.addf %399, %401 : vector<16x32xf32>
    %403 = math.tanh %402 : vector<16x32xf32>
    %404 = arith.addf %403, %369 : vector<16x32xf32>
    %c22 = arith.constant 22 : index
    %c0_372 = arith.constant 0 : index
    %c0_373 = arith.constant 0 : index
    %405 = vector.load %arg9[%c22, %c0_372, %c0_373] : memref<24x32x32xf32, #tpu.memory_space<vmem>>, vector<1x32x32xf32>
    %406 = vector.shape_cast %405 : vector<1x32x32xf32> to vector<32x32xf32>
    %cst_374 = arith.constant dense<0.000000e+00> : vector<16x32xf32>
    %407 = tpu.matmul %404, %406, %cst_374 {dimension_numbers = #tpu.dot_dimension_numbers<[1], [0], [0], [1], [0, 0, 1, 1], [], []>} : vector<16x32xf32>, vector<32x32xf32>, vector<16x32xf32> -> vector<16x32xf32>
    %c22_375 = arith.constant 22 : index
    %c0_376 = arith.constant 0 : index
    %c0_377 = arith.constant 0 : index
    %408 = vector.load %arg10[%c22_375, %c0_376, %c0_377] : memref<24x16x16xf32, #tpu.memory_space<vmem>>, vector<1x16x16xf32>
    %409 = vector.shape_cast %408 : vector<1x16x16xf32> to vector<16x16xf32>
    %cst_378 = arith.constant dense<0.000000e+00> : vector<16x32xf32>
    %410 = tpu.matmul %409, %407, %cst_378 {dimension_numbers = #tpu.dot_dimension_numbers<[1], [0], [0], [1], [0, 0, 1, 1], [], []>} : vector<16x16xf32>, vector<16x32xf32>, vector<16x32xf32> -> vector<16x32xf32>
    %c22_379 = arith.constant 22 : index
    %c0_380 = arith.constant 0 : index
    %c0_381 = arith.constant 0 : index
    %411 = vector.load %arg11[%c22_379, %c0_380, %c0_381] : memref<24x1x32xf32, #tpu.memory_space<vmem>>, vector<1x1x32xf32>
    %412 = vector.shape_cast %411 : vector<1x1x32xf32> to vector<1x32xf32>
    %413 = vector.broadcast %412 : vector<1x32xf32> to vector<16x32xf32>
    %414 = arith.addf %410, %413 : vector<16x32xf32>
    %c22_382 = arith.constant 22 : index
    %c0_383 = arith.constant 0 : index
    %c0_384 = arith.constant 0 : index
    %415 = vector.load %arg12[%c22_382, %c0_383, %c0_384] : memref<24x16x32xf32, #tpu.memory_space<vmem>>, vector<1x16x32xf32>
    %416 = vector.shape_cast %415 : vector<1x16x32xf32> to vector<16x32xf32>
    %417 = arith.mulf %414, %416 : vector<16x32xf32>
    %c22_385 = arith.constant 22 : index
    %c0_386 = arith.constant 0 : index
    %c0_387 = arith.constant 0 : index
    %418 = vector.load %arg13[%c22_385, %c0_386, %c0_387] : memref<24x16x32xf32, #tpu.memory_space<vmem>>, vector<1x16x32xf32>
    %419 = vector.shape_cast %418 : vector<1x16x32xf32> to vector<16x32xf32>
    %420 = arith.addf %417, %419 : vector<16x32xf32>
    %421 = math.tanh %420 : vector<16x32xf32>
    %c23 = arith.constant 23 : index
    %c0_388 = arith.constant 0 : index
    %c0_389 = arith.constant 0 : index
    %422 = vector.load %arg9[%c23, %c0_388, %c0_389] : memref<24x32x32xf32, #tpu.memory_space<vmem>>, vector<1x32x32xf32>
    %423 = vector.shape_cast %422 : vector<1x32x32xf32> to vector<32x32xf32>
    %cst_390 = arith.constant dense<0.000000e+00> : vector<16x32xf32>
    %424 = tpu.matmul %421, %423, %cst_390 {dimension_numbers = #tpu.dot_dimension_numbers<[1], [0], [0], [1], [0, 0, 1, 1], [], []>} : vector<16x32xf32>, vector<32x32xf32>, vector<16x32xf32> -> vector<16x32xf32>
    %c23_391 = arith.constant 23 : index
    %c0_392 = arith.constant 0 : index
    %c0_393 = arith.constant 0 : index
    %425 = vector.load %arg10[%c23_391, %c0_392, %c0_393] : memref<24x16x16xf32, #tpu.memory_space<vmem>>, vector<1x16x16xf32>
    %426 = vector.shape_cast %425 : vector<1x16x16xf32> to vector<16x16xf32>
    %cst_394 = arith.constant dense<0.000000e+00> : vector<16x32xf32>
    %427 = tpu.matmul %426, %424, %cst_394 {dimension_numbers = #tpu.dot_dimension_numbers<[1], [0], [0], [1], [0, 0, 1, 1], [], []>} : vector<16x16xf32>, vector<16x32xf32>, vector<16x32xf32> -> vector<16x32xf32>
    %c23_395 = arith.constant 23 : index
    %c0_396 = arith.constant 0 : index
    %c0_397 = arith.constant 0 : index
    %428 = vector.load %arg11[%c23_395, %c0_396, %c0_397] : memref<24x1x32xf32, #tpu.memory_space<vmem>>, vector<1x1x32xf32>
    %429 = vector.shape_cast %428 : vector<1x1x32xf32> to vector<1x32xf32>
    %430 = vector.broadcast %429 : vector<1x32xf32> to vector<16x32xf32>
    %431 = arith.addf %427, %430 : vector<16x32xf32>
    %c23_398 = arith.constant 23 : index
    %c0_399 = arith.constant 0 : index
    %c0_400 = arith.constant 0 : index
    %432 = vector.load %arg12[%c23_398, %c0_399, %c0_400] : memref<24x16x32xf32, #tpu.memory_space<vmem>>, vector<1x16x32xf32>
    %433 = vector.shape_cast %432 : vector<1x16x32xf32> to vector<16x32xf32>
    %434 = arith.mulf %431, %433 : vector<16x32xf32>
    %c23_401 = arith.constant 23 : index
    %c0_402 = arith.constant 0 : index
    %c0_403 = arith.constant 0 : index
    %435 = vector.load %arg13[%c23_401, %c0_402, %c0_403] : memref<24x16x32xf32, #tpu.memory_space<vmem>>, vector<1x16x32xf32>
    %436 = vector.shape_cast %435 : vector<1x16x32xf32> to vector<16x32xf32>
    %437 = arith.addf %434, %436 : vector<16x32xf32>
    %438 = math.tanh %437 : vector<16x32xf32>
    %439 = arith.addf %438, %404 : vector<16x32xf32>
    %c0_404 = arith.constant 0 : index
    %c0_405 = arith.constant 0 : index
    %440 = vector.load %arg14[%c0_404, %c0_405] : memref<32x8xf32, #tpu.memory_space<vmem>>, vector<32x8xf32>
    %cst_406 = arith.constant dense<0.000000e+00> : vector<16x8xf32>
    %441 = tpu.matmul %439, %440, %cst_406 {dimension_numbers = #tpu.dot_dimension_numbers<[1], [0], [0], [1], [0, 0, 1, 1], [], []>} : vector<16x32xf32>, vector<32x8xf32>, vector<16x8xf32> -> vector<16x8xf32>
    %c0_407 = arith.constant 0 : index
    %c0_408 = arith.constant 0 : index
    %442 = vector.load %arg15[%c0_407, %c0_408] : memref<16x16xf32, #tpu.memory_space<vmem>>, vector<16x16xf32>
    %cst_409 = arith.constant dense<0.000000e+00> : vector<16x8xf32>
    %443 = tpu.matmul %442, %441, %cst_409 {dimension_numbers = #tpu.dot_dimension_numbers<[1], [0], [0], [1], [0, 0, 1, 1], [], []>} : vector<16x16xf32>, vector<16x8xf32>, vector<16x8xf32> -> vector<16x8xf32>
    %c0_410 = arith.constant 0 : index
    %c0_411 = arith.constant 0 : index
    %444 = vector.load %arg16[%c0_410, %c0_411] : memref<1x8xf32, #tpu.memory_space<vmem>>, vector<1x8xf32>
    %445 = vector.broadcast %444 : vector<1x8xf32> to vector<16x8xf32>
    %446 = arith.addf %443, %445 : vector<16x8xf32>
    %447 = arith.addf %446, %1 : vector<16x8xf32>
    %c0_412 = arith.constant 0 : index
    %c0_413 = arith.constant 0 : index
    %c0_414 = arith.constant 0 : index
    %448 = vector.load %arg17[%c0_412, %c0_413, %c0_414] : memref<1x16x8xf32, #tpu.memory_space<vmem>>, vector<1x16x8xf32>
    %449 = vector.shape_cast %448 : vector<1x16x8xf32> to vector<16x8xf32>
    %450 = vector.shape_cast %447 : vector<16x8xf32> to vector<1x16x8xf32>
    tpu.vector_store %arg17[%c0_412, %c0_413, %c0_414], %450 {strides = array<i32>} : memref<1x16x8xf32, #tpu.memory_space<vmem>>, vector<1x16x8xf32>,
    return
  }
  func.func @transform_0(%arg0: i32) -> (i32, i32, i32) {
    %c0_i32 = arith.constant 0 : i32
    %c0_i32_0 = arith.constant 0 : i32
    %c0_i32_1 = arith.constant 0 : i32
    return %arg0, %c0_i32, %c0_i32_0 : i32, i32, i32
  }
  func.func @transform_1(%arg0: i32) -> (i32, i32, i32) {
    %c0_i32 = arith.constant 0 : i32
    %c0_i32_0 = arith.constant 0 : i32
    %c0_i32_1 = arith.constant 0 : i32
    return %arg0, %c0_i32, %c0_i32_0 : i32, i32, i32
  }
  func.func @transform_2(%arg0: i32) -> (i32, i32) {
    %c0_i32 = arith.constant 0 : i32
    %c0_i32_0 = arith.constant 0 : i32
    %c0_i32_1 = arith.constant 0 : i32
    return %c0_i32, %c0_i32_0 : i32, i32
  }
  func.func @transform_3(%arg0: i32) -> (i32, i32) {
    %c0_i32 = arith.constant 0 : i32
    %c0_i32_0 = arith.constant 0 : i32
    %c0_i32_1 = arith.constant 0 : i32
    return %c0_i32, %c0_i32_0 : i32, i32
  }
  func.func @transform_4(%arg0: i32) -> (i32, i32) {
    %c0_i32 = arith.constant 0 : i32
    %c0_i32_0 = arith.constant 0 : i32
    %c0_i32_1 = arith.constant 0 : i32
    return %c0_i32, %c0_i32_0 : i32, i32
  }
  func.func @transform_5(%arg0: i32) -> (i32, i32) {
    %c0_i32 = arith.constant 0 : i32
    %c0_i32_0 = arith.constant 0 : i32
    %c0_i32_1 = arith.constant 0 : i32
    return %c0_i32, %c0_i32_0 : i32, i32
  }
  func.func @transform_6(%arg0: i32) -> (i32, i32) {
    %c0_i32 = arith.constant 0 : i32
    %c0_i32_0 = arith.constant 0 : i32
    %c0_i32_1 = arith.constant 0 : i32
    return %c0_i32, %c0_i32_0 : i32, i32
  }
  func.func @transform_7(%arg0: i32) -> (i32, i32) {
    %c0_i32 = arith.constant 0 : i32
    %c0_i32_0 = arith.constant 0 : i32
    %c0_i32_1 = arith.constant 0 : i32
    return %c0_i32, %c0_i32_0 : i32, i32
  }
  func.func @transform_8(%arg0: i32) -> (i32, i32, i32) {
    %c0_i32 = arith.constant 0 : i32
    %c0_i32_0 = arith.constant 0 : i32
    %c0_i32_1 = arith.constant 0 : i32
    %c0_i32_2 = arith.constant 0 : i32
    return %c0_i32, %c0_i32_0, %c0_i32_1 : i32, i32, i32
  }
  func.func @transform_9(%arg0: i32) -> (i32, i32, i32) {
    %c0_i32 = arith.constant 0 : i32
    %c0_i32_0 = arith.constant 0 : i32
    %c0_i32_1 = arith.constant 0 : i32
    %c0_i32_2 = arith.constant 0 : i32
    return %c0_i32, %c0_i32_0, %c0_i32_1 : i32, i32, i32
  }
  func.func @transform_10(%arg0: i32) -> (i32, i32, i32) {
    %c0_i32 = arith.constant 0 : i32
    %c0_i32_0 = arith.constant 0 : i32
    %c0_i32_1 = arith.constant 0 : i32
    %c0_i32_2 = arith.constant 0 : i32
    return %c0_i32, %c0_i32_0, %c0_i32_1 : i32, i32, i32
  }
  func.func @transform_11(%arg0: i32) -> (i32, i32, i32) {
    %c0_i32 = arith.constant 0 : i32
    %c0_i32_0 = arith.constant 0 : i32
    %c0_i32_1 = arith.constant 0 : i32
    %c0_i32_2 = arith.constant 0 : i32
    return %c0_i32, %c0_i32_0, %c0_i32_1 : i32, i32, i32
  }
  func.func @transform_12(%arg0: i32) -> (i32, i32, i32) {
    %c0_i32 = arith.constant 0 : i32
    %c0_i32_0 = arith.constant 0 : i32
    %c0_i32_1 = arith.constant 0 : i32
    %c0_i32_2 = arith.constant 0 : i32
    return %c0_i32, %c0_i32_0, %c0_i32_1 : i32, i32, i32
  }
  func.func @transform_13(%arg0: i32) -> (i32, i32) {
    %c0_i32 = arith.constant 0 : i32
    %c0_i32_0 = arith.constant 0 : i32
    %c0_i32_1 = arith.constant 0 : i32
    return %c0_i32, %c0_i32_0 : i32, i32
  }
  func.func @transform_14(%arg0: i32) -> (i32, i32) {
    %c0_i32 = arith.constant 0 : i32
    %c0_i32_0 = arith.constant 0 : i32
    %c0_i32_1 = arith.constant 0 : i32
    return %c0_i32, %c0_i32_0 : i32, i32
  }
  func.func @transform_15(%arg0: i32) -> (i32, i32) {
    %c0_i32 = arith.constant 0 : i32
    %c0_i32_0 = arith.constant 0 : i32
    %c0_i32_1 = arith.constant 0 : i32
    return %c0_i32, %c0_i32_0 : i32, i32
  }
  func.func @transform_16(%arg0: i32) -> (i32, i32, i32) {
    %c0_i32 = arith.constant 0 : i32
    %c0_i32_0 = arith.constant 0 : i32
    %c0_i32_1 = arith.constant 0 : i32
    return %arg0, %c0_i32, %c0_i32_0 : i32, i32, i32
  }
}

</mosaic_0001>

<llo_original>
// kernel: gcn_h_forward.1
$region0: #{gcn_h_forward.1}
  #allocation0 [shape = 'u32[]', space=smem, size = 0x4, offset = 0x4, fixed_abs, tag = 'smem constant byte address 0x4 - core index']
  #allocation1 [shape = 'u32[144,128]{1,0:T(1,128)}', space=vmem, size = 0x12000, scoped, tag = 'internal scratch']
  %s0 = inlined_call_operand.vmem [shape: f32[2,16,8], index: 0, kind: input, shape index: {}]
  %s1 = inlined_call_operand.vmem [shape: f32[2,1,266], index: 1, kind: input, shape index: {}]
  %s2 = inlined_call_operand.vmem [shape: f32[8,32], index: 2, kind: input, shape index: {}]
  %s3 = inlined_call_operand.vmem [shape: f32[266,32], index: 3, kind: input, shape index: {}]
  %s4 = inlined_call_operand.vmem [shape: f32[16,16], index: 4, kind: input, shape index: {}]
  %s5 = inlined_call_operand.vmem [shape: f32[1,32], index: 5, kind: input, shape index: {}]
  %s6 = inlined_call_operand.vmem [shape: f32[16,32], index: 6, kind: input, shape index: {}]
  %s7 = inlined_call_operand.vmem [shape: f32[16,32], index: 7, kind: input, shape index: {}]
  %s8 = inlined_call_operand.vmem [shape: f32[24,32,32], index: 8, kind: input, shape index: {}]
  %s9 = inlined_call_operand.vmem [shape: f32[24,16,16], index: 9, kind: input, shape index: {}]
  %s10 = inlined_call_operand.vmem [shape: f32[24,1,32], index: 10, kind: input, shape index: {}]
  %s11 = inlined_call_operand.vmem [shape: f32[24,16,32], index: 11, kind: input, shape index: {}]
  %s12 = inlined_call_operand.vmem [shape: f32[24,16,32], index: 12, kind: input, shape index: {}]
  %s13 = inlined_call_operand.vmem [shape: f32[32,8], index: 13, kind: input, shape index: {}]
  %s14 = inlined_call_operand.vmem [shape: f32[16,16], index: 14, kind: input, shape index: {}]
  %s15 = inlined_call_operand.vmem [shape: f32[1,8], index: 15, kind: input, shape index: {}]
  %s16 = inlined_call_operand.vmem [shape: f32[2,16,8], index: 16, kind: output, shape index: {}]
  %s17 = sld [smem:[#allocation0]]
  $region97: #{gcn_h_forward.1} parent=0
    _
  %s19 = ssub.s32 1, %s17
  %s20 = scalar_select 0, %s19, %s17
  loop: start=0, step=1, limit=4
  $region2: #{gcn_h_forward.1} parent=0 // loop_pre_header
    _
  $region3: #{gcn_h_forward.1} parent=0 // loop_header
    %s22 = sphi 0, %s26
    %p23 = scmp.ge.s32.totalorder %s22, 4
    %s32 = sphi 0, %s34
    %s35 = sphi 0, %s32
    %s36 = sphi 0, %s35
    %s52 = sphi 0, %s36
    %s58 = sphi 0, %s60
    %s61 = sphi 0, %s58
    %s62 = sphi 0, %s61
    %s78 = sphi 0, %s62
    %s82 = sphi 0, %s82
    %s84 = sphi 0, %s82
    %s85 = sphi 0, %s84
    %s99 = sphi 0, %s85
    %s103 = sphi 0, %s103
    %s105 = sphi 0, %s103
    %s106 = sphi 0, %s105
    %s120 = sphi 0, %s106
    %s124 = sphi 0, %s124
    %s126 = sphi 0, %s124
    %s127 = sphi 0, %s126
    %s141 = sphi 0, %s127
    %s145 = sphi 0, %s145
    %s147 = sphi 0, %s145
    %s148 = sphi 0, %s147
    %s162 = sphi 0, %s148
    %s166 = sphi 0, %s166
    %s168 = sphi 0, %s166
    %s169 = sphi 0, %s168
    %s183 = sphi 0, %s169
    %s187 = sphi 0, %s187
    %s189 = sphi 0, %s187
    %s190 = sphi 0, %s189
    %s204 = sphi 0, %s190
    %s208 = sphi 0, %s208
    %s210 = sphi 0, %s208
    %s211 = sphi 0, %s210
    %s225 = sphi 0, %s211
    %s229 = sphi 0, %s229
    %s231 = sphi 0, %s229
    %s232 = sphi 0, %s231
    %s246 = sphi 0, %s232
    %s250 = sphi 0, %s250
    %s252 = sphi 0, %s250
    %s253 = sphi 0, %s252
    %s267 = sphi 0, %s253
    %s271 = sphi 0, %s271
    %s273 = sphi 0, %s271
    %s274 = sphi 0, %s273
    %s288 = sphi 0, %s274
    %s292 = sphi 0, %s292
    %s294 = sphi 0, %s292
    %s295 = sphi 0, %s294
    %s309 = sphi 0, %s295
    %s313 = sphi 0, %s313
    %s315 = sphi 0, %s313
    %s316 = sphi 0, %s315
    %s330 = sphi 0, %s316
    %s334 = sphi 0, %s334
    %s336 = sphi 0, %s334
    %s337 = sphi 0, %s336
    %s351 = sphi 0, %s337
    %s355 = sphi 0, %s355
    %s357 = sphi 0, %s355
    %s358 = sphi 0, %s357
    %s372 = sphi 0, %s358
    %s378 = sphi 0, %s380
    %s381 = sphi 0, %s378
    %s382 = sphi 0, %s381
    %s398 = sphi 0, %s382
  $region4: #{gcn_h_forward.1} parent=0 // loop_header_branch
    %25 = sbr.rel (%p23) target = $region8
  $region5: #{gcn_h_forward.1} parent=0 // loop_body
    %s27 = ssub.s32 %s22, 1
    %s28 = ssub.s32 %s22, 2
    %s29 = sadd.s32 %s22, 1
    %s30 = ssub.s32 %s22, %s29
    %p31 = scmp.eq.s32.totalorder %s30, 0
    %s33 = sadd.s32 %s32, 1
    %s34 = scalar_select %p31, %s32, %s33
    %p37 = pneg %p31
    %p38 = scmp.eq.s32.totalorder %s22, 1
    %p39 = por %p37, %p38
    %p40 = scmp.ne.s32.totalorder %s32, %s35
    %p41 = scmp.eq.s32.totalorder %s22, 0
    %p42 = por %p40, %p41
    %p43 = scmp.ne.s32.totalorder %s32, %s35
    %p44 = scmp.eq.s32.totalorder %s27, 1
    %p45 = por %p43, %p44
    %p46 = scmp.ne.s32.totalorder %s35, %s36
    %p47 = scmp.eq.s32.totalorder %s27, 0
    %p48 = por %p46, %p47
    %p49 = scmp.ne.s32.totalorder %s35, %s36
    %p50 = scmp.eq.s32.totalorder %s28, 1
    %p51 = por %p49, %p50
    %p53 = scmp.ne.s32.totalorder %s36, %s52
    %p54 = scmp.eq.s32.totalorder %s28, 0
    %p55 = por %p53, %p54
    %s56 = ssub.s32 %s22, %s29
    %p57 = scmp.eq.s32.totalorder %s56, 0
    %s59 = sadd.s32 %s58, 1
    %s60 = scalar_select %p57, %s58, %s59
    %p63 = pneg %p57
    %p64 = scmp.eq.s32.totalorder %s22, 1
    %p65 = por %p63, %p64
    %p66 = scmp.ne.s32.totalorder %s58, %s61
    %p67 = scmp.eq.s32.totalorder %s22, 0
    %p68 = por %p66, %p67
    %p69 = scmp.ne.s32.totalorder %s58, %s61
    %p70 = scmp.eq.s32.totalorder %s27, 1
    %p71 = por %p69, %p70
    %p72 = scmp.ne.s32.totalorder %s61, %s62
    %p73 = scmp.eq.s32.totalorder %s27, 0
    %p74 = por %p72, %p73
    %p75 = scmp.ne.s32.totalorder %s61, %s62
    %p76 = scmp.eq.s32.totalorder %s28, 1
    %p77 = por %p75, %p76
    %p79 = scmp.ne.s32.totalorder %s62, %s78
    %p80 = scmp.eq.s32.totalorder %s28, 0
    %p81 = por %p79, %p80
    %s83 = sadd.s32 %s82, 1
    %p86 = scmp.eq.s32.totalorder %s22, 1
    %p87 = scmp.ne.s32.totalorder %s82, %s84
    %p88 = scmp.eq.s32.totalorder %s22, 0
    %p89 = por %p87, %p88
    %p90 = scmp.ne.s32.totalorder %s82, %s84
    %p91 = scmp.eq.s32.totalorder %s27, 1
    %p92 = por %p90, %p91
    %p93 = scmp.ne.s32.totalorder %s84, %s85
    %p94 = scmp.eq.s32.totalorder %s27, 0
    %p95 = por %p93, %p94
    %p96 = scmp.ne.s32.totalorder %s84, %s85
    %p97 = scmp.eq.s32.totalorder %s28, 1
    %p98 = por %p96, %p97
    %p100 = scmp.ne.s32.totalorder %s85, %s99
    %p101 = scmp.eq.s32.totalorder %s28, 0
    %p102 = por %p100, %p101
    %s104 = sadd.s32 %s103, 1
    %p107 = scmp.eq.s32.totalorder %s22, 1
    %p108 = scmp.ne.s32.totalorder %s103, %s105
    %p109 = scmp.eq.s32.totalorder %s22, 0
    %p110 = por %p108, %p109
    %p111 = scmp.ne.s32.totalorder %s103, %s105
    %p112 = scmp.eq.s32.totalorder %s27, 1
    %p113 = por %p111, %p112
    %p114 = scmp.ne.s32.totalorder %s105, %s106
    %p115 = scmp.eq.s32.totalorder %s27, 0
    %p116 = por %p114, %p115
    %p117 = scmp.ne.s32.totalorder %s105, %s106
    %p118 = scmp.eq.s32.totalorder %s28, 1
    %p119 = por %p117, %p118
    %p121 = scmp.ne.s32.totalorder %s106, %s120
    %p122 = scmp.eq.s32.totalorder %s28, 0
    %p123 = por %p121, %p122
    %s125 = sadd.s32 %s124, 1
    %p128 = scmp.eq.s32.totalorder %s22, 1
    %p129 = scmp.ne.s32.totalorder %s124, %s126
    %p130 = scmp.eq.s32.totalorder %s22, 0
    %p131 = por %p129, %p130
    %p132 = scmp.ne.s32.totalorder %s124, %s126
    %p133 = scmp.eq.s32.totalorder %s27, 1
    %p134 = por %p132, %p133
    %p135 = scmp.ne.s32.totalorder %s126, %s127
    %p136 = scmp.eq.s32.totalorder %s27, 0
    %p137 = por %p135, %p136
    %p138 = scmp.ne.s32.totalorder %s126, %s127
    %p139 = scmp.eq.s32.totalorder %s28, 1
    %p140 = por %p138, %p139
    %p142 = scmp.ne.s32.totalorder %s127, %s141
    %p143 = scmp.eq.s32.totalorder %s28, 0
    %p144 = por %p142, %p143
    %s146 = sadd.s32 %s145, 1
    %p149 = scmp.eq.s32.totalorder %s22, 1
    %p150 = scmp.ne.s32.totalorder %s145, %s147
    %p151 = scmp.eq.s32.totalorder %s22, 0
    %p152 = por %p150, %p151
    %p153 = scmp.ne.s32.totalorder %s145, %s147
    %p154 = scmp.eq.s32.totalorder %s27, 1
    %p155 = por %p153, %p154
    %p156 = scmp.ne.s32.totalorder %s147, %s148
    %p157 = scmp.eq.s32.totalorder %s27, 0
    %p158 = por %p156, %p157
    %p159 = scmp.ne.s32.totalorder %s147, %s148
    %p160 = scmp.eq.s32.totalorder %s28, 1
    %p161 = por %p159, %p160
    %p163 = scmp.ne.s32.totalorder %s148, %s162
    %p164 = scmp.eq.s32.totalorder %s28, 0
    %p165 = por %p163, %p164
    %s167 = sadd.s32 %s166, 1
    %p170 = scmp.eq.s32.totalorder %s22, 1
    %p171 = scmp.ne.s32.totalorder %s166, %s168
    %p172 = scmp.eq.s32.totalorder %s22, 0
    %p173 = por %p171, %p172
    %p174 = scmp.ne.s32.totalorder %s166, %s168
    %p175 = scmp.eq.s32.totalorder %s27, 1
    %p176 = por %p174, %p175
    %p177 = scmp.ne.s32.totalorder %s168, %s169
    %p178 = scmp.eq.s32.totalorder %s27, 0
    %p179 = por %p177, %p178
    %p180 = scmp.ne.s32.totalorder %s168, %s169
    %p181 = scmp.eq.s32.totalorder %s28, 1
    %p182 = por %p180, %p181
    %p184 = scmp.ne.s32.totalorder %s169, %s183
    %p185 = scmp.eq.s32.totalorder %s28, 0
    %p186 = por %p184, %p185
    %s188 = sadd.s32 %s187, 1
    %p191 = scmp.eq.s32.totalorder %s22, 1
    %p192 = scmp.ne.s32.totalorder %s187, %s189
    %p193 = scmp.eq.s32.totalorder %s22, 0
    %p194 = por %p192, %p193
    %p195 = scmp.ne.s32.totalorder %s187, %s189
    %p196 = scmp.eq.s32.totalorder %s27, 1
    %p197 = por %p195, %p196
    %p198 = scmp.ne.s32.totalorder %s189, %s190
    %p199 = scmp.eq.s32.totalorder %s27, 0
    %p200 = por %p198, %p199
    %p201 = scmp.ne.s32.totalorder %s189, %s190
    %p202 = scmp.eq.s32.totalorder %s28, 1
    %p203 = por %p201, %p202
    %p205 = scmp.ne.s32.totalorder %s190, %s204
    %p206 = scmp.eq.s32.totalorder %s28, 0
    %p207 = por %p205, %p206
    %s209 = sadd.s32 %s208, 1
    %p212 = scmp.eq.s32.totalorder %s22, 1
    %p213 = scmp.ne.s32.totalorder %s208, %s210
    %p214 = scmp.eq.s32.totalorder %s22, 0
    %p215 = por %p213, %p214
    %p216 = scmp.ne.s32.totalorder %s208, %s210
    %p217 = scmp.eq.s32.totalorder %s27, 1
    %p218 = por %p216, %p217
    %p219 = scmp.ne.s32.totalorder %s210, %s211
    %p220 = scmp.eq.s32.totalorder %s27, 0
    %p221 = por %p219, %p220
    %p222 = scmp.ne.s32.totalorder %s210, %s211
    %p223 = scmp.eq.s32.totalorder %s28, 1
    %p224 = por %p222, %p223
    %p226 = scmp.ne.s32.totalorder %s211, %s225
    %p227 = scmp.eq.s32.totalorder %s28, 0
    %p228 = por %p226, %p227
    %s230 = sadd.s32 %s229, 1
    %p233 = scmp.eq.s32.totalorder %s22, 1
    %p234 = scmp.ne.s32.totalorder %s229, %s231
    %p235 = scmp.eq.s32.totalorder %s22, 0
    %p236 = por %p234, %p235
    %p237 = scmp.ne.s32.totalorder %s229, %s231
    %p238 = scmp.eq.s32.totalorder %s27, 1
    %p239 = por %p237, %p238
    %p240 = scmp.ne.s32.totalorder %s231, %s232
    %p241 = scmp.eq.s32.totalorder %s27, 0
    %p242 = por %p240, %p241
    %p243 = scmp.ne.s32.totalorder %s231, %s232
    %p244 = scmp.eq.s32.totalorder %s28, 1
    %p245 = por %p243, %p244
    %p247 = scmp.ne.s32.totalorder %s232, %s246
    %p248 = scmp.eq.s32.totalorder %s28, 0
    %p249 = por %p247, %p248
    %s251 = sadd.s32 %s250, 1
    %p254 = scmp.eq.s32.totalorder %s22, 1
    %p255 = scmp.ne.s32.totalorder %s250, %s252
    %p256 = scmp.eq.s32.totalorder %s22, 0
    %p257 = por %p255, %p256
    %p258 = scmp.ne.s32.totalorder %s250, %s252
    %p259 = scmp.eq.s32.totalorder %s27, 1
    %p260 = por %p258, %p259
    %p261 = scmp.ne.s32.totalorder %s252, %s253
    %p262 = scmp.eq.s32.totalorder %s27, 0
    %p263 = por %p261, %p262
    %p264 = scmp.ne.s32.totalorder %s252, %s253
    %p265 = scmp.eq.s32.totalorder %s28, 1
    %p266 = por %p264, %p265
    %p268 = scmp.ne.s32.totalorder %s253, %s267
    %p269 = scmp.eq.s32.totalorder %s28, 0
    %p270 = por %p268, %p269
    %s272 = sadd.s32 %s271, 1
    %p275 = scmp.eq.s32.totalorder %s22, 1
    %p276 = scmp.ne.s32.totalorder %s271, %s273
    %p277 = scmp.eq.s32.totalorder %s22, 0
    %p278 = por %p276, %p277
    %p279 = scmp.ne.s32.totalorder %s271, %s273
    %p280 = scmp.eq.s32.totalorder %s27, 1
    %p281 = por %p279, %p280
    %p282 = scmp.ne.s32.totalorder %s273, %s274
    %p283 = scmp.eq.s32.totalorder %s27, 0
    %p284 = por %p282, %p283
    %p285 = scmp.ne.s32.totalorder %s273, %s274
    %p286 = scmp.eq.s32.totalorder %s28, 1
    %p287 = por %p285, %p286
    %p289 = scmp.ne.s32.totalorder %s274, %s288
    %p290 = scmp.eq.s32.totalorder %s28, 0
    %p291 = por %p289, %p290
    %s293 = sadd.s32 %s292, 1
    %p296 = scmp.eq.s32.totalorder %s22, 1
    %p297 = scmp.ne.s32.totalorder %s292, %s294
    %p298 = scmp.eq.s32.totalorder %s22, 0
    %p299 = por %p297, %p298
    %p300 = scmp.ne.s32.totalorder %s292, %s294
    %p301 = scmp.eq.s32.totalorder %s27, 1
    %p302 = por %p300, %p301
    %p303 = scmp.ne.s32.totalorder %s294, %s295
    %p304 = scmp.eq.s32.totalorder %s27, 0
    %p305 = por %p303, %p304
    %p306 = scmp.ne.s32.totalorder %s294, %s295
    %p307 = scmp.eq.s32.totalorder %s28, 1
    %p308 = por %p306, %p307
    %p310 = scmp.ne.s32.totalorder %s295, %s309
    %p311 = scmp.eq.s32.totalorder %s28, 0
    %p312 = por %p310, %p311
    %s314 = sadd.s32 %s313, 1
    %p317 = scmp.eq.s32.totalorder %s22, 1
    %p318 = scmp.ne.s32.totalorder %s313, %s315
    %p319 = scmp.eq.s32.totalorder %s22, 0
    %p320 = por %p318, %p319
    %p321 = scmp.ne.s32.totalorder %s313, %s315
    %p322 = scmp.eq.s32.totalorder %s27, 1
    %p323 = por %p321, %p322
    %p324 = scmp.ne.s32.totalorder %s315, %s316
    %p325 = scmp.eq.s32.totalorder %s27, 0
    %p326 = por %p324, %p325
    %p327 = scmp.ne.s32.totalorder %s315, %s316
    %p328 = scmp.eq.s32.totalorder %s28, 1
    %p329 = por %p327, %p328
    %p331 = scmp.ne.s32.totalorder %s316, %s330
    %p332 = scmp.eq.s32.totalorder %s28, 0
    %p333 = por %p331, %p332
    %s335 = sadd.s32 %s334, 1
    %p338 = scmp.eq.s32.totalorder %s22, 1
    %p339 = scmp.ne.s32.totalorder %s334, %s336
    %p340 = scmp.eq.s32.totalorder %s22, 0
    %p341 = por %p339, %p340
    %p342 = scmp.ne.s32.totalorder %s334, %s336
    %p343 = scmp.eq.s32.totalorder %s27, 1
    %p344 = por %p342, %p343
    %p345 = scmp.ne.s32.totalorder %s336, %s337
    %p346 = scmp.eq.s32.totalorder %s27, 0
    %p347 = por %p345, %p346
    %p348 = scmp.ne.s32.totalorder %s336, %s337
    %p349 = scmp.eq.s32.totalorder %s28, 1
    %p350 = por %p348, %p349
    %p352 = scmp.ne.s32.totalorder %s337, %s351
    %p353 = scmp.eq.s32.totalorder %s28, 0
    %p354 = por %p352, %p353
    %s356 = sadd.s32 %s355, 1
    %p359 = scmp.eq.s32.totalorder %s22, 1
    %p360 = scmp.ne.s32.totalorder %s355, %s357
    %p361 = scmp.eq.s32.totalorder %s22, 0
    %p362 = por %p360, %p361
    %p363 = scmp.ne.s32.totalorder %s355, %s357
    %p364 = scmp.eq.s32.totalorder %s27, 1
    %p365 = por %p363, %p364
    %p366 = scmp.ne.s32.totalorder %s357, %s358
    %p367 = scmp.eq.s32.totalorder %s27, 0
    %p368 = por %p366, %p367
    %p369 = scmp.ne.s32.totalorder %s357, %s358
    %p370 = scmp.eq.s32.totalorder %s28, 1
    %p371 = por %p369, %p370
    %p373 = scmp.ne.s32.totalorder %s358, %s372
    %p374 = scmp.eq.s32.totalorder %s28, 0
    %p375 = por %p373, %p374
    %s376 = ssub.s32 %s22, %s29
    %p377 = scmp.eq.s32.totalorder %s376, 0
    %s379 = sadd.s32 %s378, 1
    %s380 = scalar_select %p377, %s378, %s379
    %p383 = pneg %p377
    %p384 = scmp.eq.s32.totalorder %s22, 1
    %p385 = por %p383, %p384
    %p386 = scmp.ne.s32.totalorder %s378, %s381
    %p387 = scmp.eq.s32.totalorder %s22, 0
    %p388 = por %p386, %p387
    %p389 = scmp.ne.s32.totalorder %s378, %s381
    %p390 = scmp.eq.s32.totalorder %s27, 1
    %p391 = por %p389, %p390
    %p392 = scmp.ne.s32.totalorder %s381, %s382
    %p393 = scmp.eq.s32.totalorder %s27, 0
    %p394 = por %p392, %p393
    %p395 = scmp.ne.s32.totalorder %s381, %s382
    %p396 = scmp.eq.s32.totalorder %s28, 1
    %p397 = por %p395, %p396
    %p399 = scmp.ne.s32.totalorder %s382, %s398
    %p400 = scmp.eq.s32.totalorder %s28, 0
    %p401 = por %p399, %p400
    %p402 = scmp.le.s32.totalorder 1, %s22
    %p403 = scmp.lt.s32.totalorder %s22, 3
    %p404 = pnand %p402, %p403
    %p405 = pneg %p404
    // Predicated region
    $region9: #{gcn_h_forward.1} parent=5 // pred_check
      _
    $region10: #{gcn_h_forward.1} parent=5 // pred_check_branch
      %407 = sbr.rel (%p404) target = $region12
    $region11: #{gcn_h_forward.1} parent=5 // pred_region
      %s408 = ssub.s32 %s22, 1
      // Predicated region
      $region13: #{gcn_h_forward.1} parent=11 // pred_check
        %p409 = pneg %p95
      $region14: #{gcn_h_forward.1} parent=11 // pred_check_branch
        %411 = sbr.rel (%p409) target = $region16
      $region15: #{gcn_h_forward.1} parent=11 // pred_region
        _
      $region16: #{gcn_h_forward.1} parent=11 // pred_fallthru
        _
      // Predicated region
      $region17: #{gcn_h_forward.1} parent=11 // pred_check
        %p412 = pneg %p116
      $region18: #{gcn_h_forward.1} parent=11 // pred_check_branch
        %414 = sbr.rel (%p412) target = $region20
      $region19: #{gcn_h_forward.1} parent=11 // pred_region
        _
      $region20: #{gcn_h_forward.1} parent=11 // pred_fallthru
        _
      // Predicated region
      $region21: #{gcn_h_forward.1} parent=11 // pred_check
        %p415 = pneg %p137
      $region22: #{gcn_h_forward.1} parent=11 // pred_check_branch
        %417 = sbr.rel (%p415) target = $region24
      $region23: #{gcn_h_forward.1} parent=11 // pred_region
        _
      $region24: #{gcn_h_forward.1} parent=11 // pred_fallthru
        _
      // Predicated region
      $region25: #{gcn_h_forward.1} parent=11 // pred_check
        %p418 = pneg %p158
      $region26: #{gcn_h_forward.1} parent=11 // pred_check_branch
        %420 = sbr.rel (%p418) target = $region28
      $region27: #{gcn_h_forward.1} parent=11 // pred_region
        _
      $region28: #{gcn_h_forward.1} parent=11 // pred_fallthru
        _
      // Predicated region
      $region29: #{gcn_h_forward.1} parent=11 // pred_check
        %p421 = pneg %p179
      $region30: #{gcn_h_forward.1} parent=11 // pred_check_branch
        %423 = sbr.rel (%p421) target = $region32
      $region31: #{gcn_h_forward.1} parent=11 // pred_region
        _
      $region32: #{gcn_h_forward.1} parent=11 // pred_fallthru
        _
      // Predicated region
      $region33: #{gcn_h_forward.1} parent=11 // pred_check
        %p424 = pneg %p200
      $region34: #{gcn_h_forward.1} parent=11 // pred_check_branch
        %426 = sbr.rel (%p424) target = $region36
      $region35: #{gcn_h_forward.1} parent=11 // pred_region
        _
      $region36: #{gcn_h_forward.1} parent=11 // pred_fallthru
        _
      // Predicated region
      $region37: #{gcn_h_forward.1} parent=11 // pred_check
        %p427 = pneg %p221
      $region38: #{gcn_h_forward.1} parent=11 // pred_check_branch
        %429 = sbr.rel (%p427) target = $region40
      $region39: #{gcn_h_forward.1} parent=11 // pred_region
        _
      $region40: #{gcn_h_forward.1} parent=11 // pred_fallthru
        _
      // Predicated region
      $region41: #{gcn_h_forward.1} parent=11 // pred_check
        %p430 = pneg %p242
      $region42: #{gcn_h_forward.1} parent=11 // pred_check_branch
        %432 = sbr.rel (%p430) target = $region44
      $region43: #{gcn_h_forward.1} parent=11 // pred_region
        _
      $region44: #{gcn_h_forward.1} parent=11 // pred_fallthru
        _
      // Predicated region
      $region45: #{gcn_h_forward.1} parent=11 // pred_check
        %p433 = pneg %p263
      $region46: #{gcn_h_forward.1} parent=11 // pred_check_branch
        %435 = sbr.rel (%p433) target = $region48
      $region47: #{gcn_h_forward.1} parent=11 // pred_region
        _
      $region48: #{gcn_h_forward.1} parent=11 // pred_fallthru
        _
      // Predicated region
      $region49: #{gcn_h_forward.1} parent=11 // pred_check
        %p436 = pneg %p284
      $region50: #{gcn_h_forward.1} parent=11 // pred_check_branch
        %438 = sbr.rel (%p436) target = $region52
      $region51: #{gcn_h_forward.1} parent=11 // pred_region
        _
      $region52: #{gcn_h_forward.1} parent=11 // pred_fallthru
        _
      // Predicated region
      $region53: #{gcn_h_forward.1} parent=11 // pred_check
        %p439 = pneg %p305
      $region54: #{gcn_h_forward.1} parent=11 // pred_check_branch
        %441 = sbr.rel (%p439) target = $region56
      $region55: #{gcn_h_forward.1} parent=11 // pred_region
        _
      $region56: #{gcn_h_forward.1} parent=11 // pred_fallthru
        _
      // Predicated region
      $region57: #{gcn_h_forward.1} parent=11 // pred_check
        %p442 = pneg %p326
      $region58: #{gcn_h_forward.1} parent=11 // pred_check_branch
        %444 = sbr.rel (%p442) target = $region60
      $region59: #{gcn_h_forward.1} parent=11 // pred_region
        _
      $region60: #{gcn_h_forward.1} parent=11 // pred_fallthru
        _
      // Predicated region
      $region61: #{gcn_h_forward.1} parent=11 // pred_check
        %p445 = pneg %p347
      $region62: #{gcn_h_forward.1} parent=11 // pred_check_branch
        %447 = sbr.rel (%p445) target = $region64
      $region63: #{gcn_h_forward.1} parent=11 // pred_region
        _
      $region64: #{gcn_h_forward.1} parent=11 // pred_fallthru
        _
      // Predicated region
      $region65: #{gcn_h_forward.1} parent=11 // pred_check
        %p448 = pneg %p368
      $region66: #{gcn_h_forward.1} parent=11 // pred_check_branch
        %450 = sbr.rel (%p448) target = $region68
      $region67: #{gcn_h_forward.1} parent=11 // pred_region
        _
      $region68: #{gcn_h_forward.1} parent=11 // pred_fallthru
        _
    $region12: #{gcn_h_forward.1} parent=5 // pred_fallthru
      _
    %p451 = scmp.lt.s32.totalorder %s22, 2
    // Predicated region
    $region69: #{gcn_h_forward.1} parent=5 // pred_check
      %p452 = pneg %p451
    $region70: #{gcn_h_forward.1} parent=5 // pred_check_branch
      %454 = sbr.rel (%p452) target = $region72
    $region71: #{gcn_h_forward.1} parent=5 // pred_region
      // Predicated region
      $region73: #{gcn_h_forward.1} parent=71 // pred_check
        %p455 = pneg %p42
      $region74: #{gcn_h_forward.1} parent=71 // pred_check_branch
        %457 = sbr.rel (%p455) target = $region76
      $region75: #{gcn_h_forward.1} parent=71 // pred_region
        %p458 = scmp.lt.s32.totalorder %s22, 1
        %s459 = scalar_select %p458, %s22, 1
        %s460 = smul.addr %s459, 2
        %s461 = smul.addr %s460, 8
        %s462 = scalar_lea.vmem %s0, %s461
      $region76: #{gcn_h_forward.1} parent=71 // pred_fallthru
        _
      // Predicated region
      $region77: #{gcn_h_forward.1} parent=71 // pred_check
        %p463 = pneg %p68
      $region78: #{gcn_h_forward.1} parent=71 // pred_check_branch
        %465 = sbr.rel (%p463) target = $region80
      $region79: #{gcn_h_forward.1} parent=71 // pred_region
        %p466 = scmp.lt.s32.totalorder %s22, 1
        %s467 = scalar_select %p466, %s22, 1
        %s468 = smul.addr %s467, 3
        %s469 = scalar_lea.vmem %s1, %s468
      $region80: #{gcn_h_forward.1} parent=71 // pred_fallthru
        _
    $region72: #{gcn_h_forward.1} parent=5 // pred_fallthru
      _
    %p470 = scmp.le.s32.totalorder 1, %s22
    %p471 = scmp.lt.s32.totalorder %s22, 3
    %p472 = pnand %p470, %p471
    %p473 = pneg %p472
    // Predicated region
    $region81: #{gcn_h_forward.1} parent=5 // pred_check
      _
    $region82: #{gcn_h_forward.1} parent=5 // pred_check_branch
      %475 = sbr.rel (%p472) target = $region84
    $region83: #{gcn_h_forward.1} parent=5 // pred_region
      %s476 = ssub.s32 %s22, 1
      %p477 = scmp.lt.s32.totalorder %s27, 1
      %s478 = scalar_select %p477, %s27, 1
      %s479 = smul.addr %s478, 2
      %s480 = smul.addr %s479, 8
      %s481 = scalar_lea.vmem %s0, %s480
      %p482 = pneg %p48
      %p483 = pneg %p45
      %p484 = scmp.lt.s32.totalorder %s27, 1
      %s485 = scalar_select %p484, %s27, 1
      %s486 = smul.addr %s485, 3
      %s487 = scalar_lea.vmem %s1, %s486
      %p488 = pneg %p74
      %p489 = pneg %p71
      %p490 = pneg %p95
      %p491 = pneg %p92
      %p492 = pneg %p116
      %p493 = pneg %p113
      %p494 = pneg %p137
      %p495 = pneg %p134
      %p496 = pneg %p158
      %p497 = pneg %p155
      %p498 = pneg %p179
      %p499 = pneg %p176
      %p500 = pneg %p200
      %p501 = pneg %p197
      %p502 = pneg %p221
      %p503 = pneg %p218
      %p504 = pneg %p242
      %p505 = pneg %p239
      %p506 = pneg %p263
      %p507 = pneg %p260
      %p508 = pneg %p284
      %p509 = pneg %p281
      %p510 = pneg %p305
      %p511 = pneg %p302
      %p512 = pneg %p326
      %p513 = pneg %p323
      %p514 = pneg %p347
      %p515 = pneg %p344
      %p516 = pneg %p368
      %p517 = pneg %p365
      %p518 = pneg %p394
      %p519 = pneg %p391
      %p520 = scmp.lt.s32.totalorder %s27, 1
      %s521 = scalar_select %p520, %s27, 1
      %s522 = smul.addr %s521, 2
      %s523 = smul.addr %s522, 8
      %s524 = scalar_lea.vmem %s16, %s523
      %p525 = scmp.lt.s32.totalorder %s27, 1
      %s526 = scalar_select %p525, %s27, 1
      %s527 = smul.addr %s526, 2
      %s528 = smul.addr %s527, 8
      %s529 = scalar_lea.vmem %s0, %s528
      %p530 = scmp.lt.s32.totalorder %s27, 1
      %s531 = scalar_select %p530, %s27, 1
      %s532 = smul.addr %s531, 3
      %s533 = scalar_lea.vmem %s1, %s532
      %p534 = scmp.lt.s32.totalorder %s27, 1
      %s535 = scalar_select %p534, %s27, 1
      %s536 = smul.addr %s535, 2
      %s537 = smul.addr %s536, 8
      %s538 = scalar_lea.vmem %s16, %s537
      %v539 = vld [vmem:[%s529] sm:$0xff]
      %v540 = vld [vmem:[%s529 + $0x8] sm:$0xff]
      %v541 = vld [vmem:[%s533] sm:$0x7]
      %v542 = vld [vmem:[%s3] sm:$0xff]
      %v543 = vld [vmem:[%s3 + $0x8] sm:$0xff]
      %v544 = vld [vmem:[%s3 + $0x10] sm:$0xff]
      %v545 = vld [vmem:[%s3 + $0x18] sm:$0xff]
      %v546 = vld [vmem:[%s3 + $0x20] sm:$0xff]
      %v547 = vld [vmem:[%s3 + $0x28] sm:$0xff]
      %v548 = vld [vmem:[%s3 + $0x30] sm:$0xff]
      %v549 = vld [vmem:[%s3 + $0x38] sm:$0xff]
      %v550 = vld [vmem:[%s3 + $0x40] sm:$0xff]
      %v551 = vld [vmem:[%s3 + $0x48] sm:$0xff]
      %v552 = vld [vmem:[%s3 + $0x50] sm:$0xff]
      %v553 = vld [vmem:[%s3 + $0x58] sm:$0xff]
      %v554 = vld [vmem:[%s3 + $0x60] sm:$0xff]
      %v555 = vld [vmem:[%s3 + $0x68] sm:$0xff]
      %v556 = vld [vmem:[%s3 + $0x70] sm:$0xff]
      %v557 = vld [vmem:[%s3 + $0x78] sm:$0xff]
      %v558 = vld [vmem:[%s3 + $0x80] sm:$0xff]
      %v559 = vld [vmem:[%s3 + $0x88] sm:$0xff]
      %v560 = vld [vmem:[%s3 + $0x90] sm:$0xff]
      %v561 = vld [vmem:[%s3 + $0x98] sm:$0xff]
      %v562 = vld [vmem:[%s3 + $0xa0] sm:$0xff]
      %v563 = vld [vmem:[%s3 + $0xa8] sm:$0xff]
      %v564 = vld [vmem:[%s3 + $0xb0] sm:$0xff]
      %v565 = vld [vmem:[%s3 + $0xb8] sm:$0xff]
      %v566 = vld [vmem:[%s3 + $0xc0] sm:$0xff]
      %v567 = vld [vmem:[%s3 + $0xc8] sm:$0xff]
      %v568 = vld [vmem:[%s3 + $0xd0] sm:$0xff]
      %v569 = vld [vmem:[%s3 + $0xd8] sm:$0xff]
      %v570 = vld [vmem:[%s3 + $0xe0] sm:$0xff]
      %v571 = vld [vmem:[%s3 + $0xe8] sm:$0xff]
      %v572 = vld [vmem:[%s3 + $0xf0] sm:$0xff]
      %v573 = vld [vmem:[%s3 + $0xf8] sm:$0xff]
      %v574 = vld [vmem:[%s3 + $0x100] sm:$0xff]
      %v575 = vld [vmem:[%s3 + $0x108] sm:$0x3]
      %v577 = vlaneseq
      %v578 = vshrl.u32 %v577, 7
      %v579 = vsub.s32 0, %v578
      %v580 = vrot.slane %v541, %v579
      %v581 = vlaneseq
      %v582 = vshrl.u32 %v581, 7
      %v583 = vsub.s32 1, %v582
      %v584 = vrot.slane %v541, %v583
      %v585 = vlaneseq
      %v586 = vshrl.u32 %v585, 7
      %v587 = vsub.s32 2, %v586
      %v588 = vrot.slane %v541, %v587
      %vm591 = vcmask 80896
      %v592 = vsel %vm591, %v588, 0
      %vm594 = vcmask 1041408
      %v596 = vsel %vm594, %v575, 0
      %598 = vmatprep.subr.mxu0 0.0
      %599 = vmatpush1.msra.mxu0 %v557
      %600 = vmatprep.subr.mxu0 0.0
      %601 = vmatpush1.msra.mxu0 %v556
      %602 = vmatprep.subr.mxu0 0.0
      %603 = vmatpush1.msra.mxu0 %v555
      %604 = vmatprep.subr.mxu0 0.0
      %605 = vmatpush1.msra.mxu0 %v554
      %606 = vmatprep.subr.mxu0 0.0
      %607 = vmatpush1.msra.mxu0 %v553
      %608 = vmatprep.subr.mxu0 0.0
      %609 = vmatpush1.msra.mxu0 %v552
      %610 = vmatprep.subr.mxu0 0.0
      %611 = vmatpush1.msra.mxu0 %v551
      %612 = vmatprep.subr.mxu0 0.0
      %613 = vmatpush1.msra.mxu0 %v550
      %614 = vmatprep.subr.mxu0 0.0
      %615 = vmatpush1.msra.mxu0 %v549
      %616 = vmatprep.subr.mxu0 0.0
      %617 = vmatpush1.msra.mxu0 %v548
      %618 = vmatprep.subr.mxu0 0.0
      %619 = vmatpush1.msra.mxu0 %v547
      %620 = vmatprep.subr.mxu0 0.0
      %621 = vmatpush1.msra.mxu0 %v546
      %622 = vmatprep.subr.mxu0 0.0
      %623 = vmatpush1.msra.mxu0 %v545
      %624 = vmatprep.subr.mxu0 0.0
      %625 = vmatpush1.msra.mxu0 %v544
      %626 = vmatprep.subr.mxu0 0.0
      %627 = vmatpush1.msra.mxu0 %v543
      %628 = vmatprep.subr.mxu0 0.0
      %629 = vmatpush1.msra.mxu0 %v542
      %630 = vmatprep.subr.mxu0 0.0
      %631 = vmatpush2.msra.mxu0 %v573
      %632 = vmatprep.subr.mxu0 0.0
      %633 = vmatpush2.msra.mxu0 %v572
      %634 = vmatprep.subr.mxu0 0.0
      %635 = vmatpush2.msra.mxu0 %v571
      %636 = vmatprep.subr.mxu0 0.0
      %637 = vmatpush2.msra.mxu0 %v570
      %638 = vmatprep.subr.mxu0 0.0
      %639 = vmatpush2.msra.mxu0 %v569
      %640 = vmatprep.subr.mxu0 0.0
      %641 = vmatpush2.msra.mxu0 %v568
      %642 = vmatprep.subr.mxu0 0.0
      %643 = vmatpush2.msra.mxu0 %v567
      %644 = vmatprep.subr.mxu0 0.0
      %645 = vmatpush2.msra.mxu0 %v566
      %646 = vmatprep.subr.mxu0 0.0
      %647 = vmatpush2.msra.mxu0 %v565
      %648 = vmatprep.subr.mxu0 0.0
      %649 = vmatpush2.msra.mxu0 %v564
      %650 = vmatprep.subr.mxu0 0.0
      %651 = vmatpush2.msra.mxu0 %v563
      %652 = vmatprep.subr.mxu0 0.0
      %653 = vmatpush2.msra.mxu0 %v562
      %654 = vmatprep.subr.mxu0 0.0
      %655 = vmatpush2.msra.mxu0 %v561
      %656 = vmatprep.subr.mxu0 0.0
      %657 = vmatpush2.msra.mxu0 %v560
      %658 = vmatprep.subr.mxu0 0.0
      %659 = vmatpush2.msra.mxu0 %v559
      %660 = vmatprep.subr.mxu0 0.0
      %661 = vmatpush2.msra.mxu0 %v558
      %662 = vmatprep.mubr.f32.mxu0 %v584
      %663 = vmatmul.mubr.f32.gmra.mxu0 %v580
      %v664 = vpop.f32.mrf.mxu0
      %v665 = vadd.f32 0.0, %v664
      %v666 = vpop.f32.mrf.mxu0
      %667 = vdwg.mxu0
      %668 = vmatprep.subr.mxu0 0.0
      %669 = vmatpush1.msra.mxu0 0.0
      %670 = vmatprep.subr.mxu0 0.0
      %671 = vmatpush1.msra.mxu0 0.0
      %672 = vmatprep.subr.mxu0 0.0
      %673 = vmatpush1.msra.mxu0 0.0
      %674 = vmatprep.subr.mxu0 0.0
      %675 = vmatpush1.msra.mxu0 0.0
      %676 = vmatprep.subr.mxu0 0.0
      %677 = vmatpush1.msra.mxu0 0.0
      %678 = vmatprep.subr.mxu0 0.0
      %679 = vmatpush1.msra.mxu0 0.0
      %680 = vmatprep.subr.mxu0 0.0
      %681 = vmatpush1.msra.mxu0 0.0
      %682 = vmatprep.subr.mxu0 0.0
      %683 = vmatpush1.msra.mxu0 0.0
      %684 = vmatprep.subr.mxu0 0.0
      %685 = vmatpush1.msra.mxu0 0.0
      %686 = vmatprep.subr.mxu0 0.0
      %687 = vmatpush1.msra.mxu0 0.0
      %688 = vmatprep.subr.mxu0 0.0
      %689 = vmatpush1.msra.mxu0 0.0
      %690 = vmatprep.subr.mxu0 0.0
      %691 = vmatpush1.msra.mxu0 0.0
      %692 = vmatprep.subr.mxu0 0.0
      %693 = vmatpush1.msra.mxu0 0.0
      %694 = vmatprep.subr.mxu0 0.0
      %695 = vmatpush1.msra.mxu0 0.0
      %696 = vmatprep.subr.mxu0 0.0
      %697 = vmatpush1.msra.mxu0 %v596
      %698 = vmatprep.subr.mxu0 0.0
      %699 = vmatpush1.msra.mxu0 %v574
      %700 = vmatprep.subr.mxu0 0.0
      %701 = vmatpush2.msra.mxu0 0.0
      %702 = vmatprep.subr.mxu0 0.0
      %703 = vmatpush2.msra.mxu0 0.0
      %704 = vmatprep.subr.mxu0 0.0
      %705 = vmatpush2.msra.mxu0 0.0
      %706 = vmatprep.subr.mxu0 0.0
      %707 = vmatpush2.msra.mxu0 0.0
      %708 = vmatprep.subr.mxu0 0.0
      %709 = vmatpush2.msra.mxu0 0.0
      %710 = vmatprep.subr.mxu0 0.0
      %711 = vmatpush2.msra.mxu0 0.0
      %712 = vmatprep.subr.mxu0 0.0
      %713 = vmatpush2.msra.mxu0 0.0
      %714 = vmatprep.subr.mxu0 0.0
      %715 = vmatpush2.msra.mxu0 0.0
      %716 = vmatprep.subr.mxu0 0.0
      %717 = vmatpush2.msra.mxu0 0.0
      %718 = vmatprep.subr.mxu0 0.0
      %719 = vmatpush2.msra.mxu0 0.0
      %720 = vmatprep.subr.mxu0 0.0
      %721 = vmatpush2.msra.mxu0 0.0
      %722 = vmatprep.subr.mxu0 0.0
      %723 = vmatpush2.msra.mxu0 0.0
      %724 = vmatprep.subr.mxu0 0.0
      %725 = vmatpush2.msra.mxu0 0.0
      %726 = vmatprep.subr.mxu0 0.0
      %727 = vmatpush2.msra.mxu0 0.0
      %728 = vmatprep.subr.mxu0 0.0
      %729 = vmatpush2.msra.mxu0 0.0
      %730 = vmatprep.subr.mxu0 0.0
      %731 = vmatpush2.msra.mxu0 0.0
      %732 = vmatprep.mubr.f32.mxu0 0.0
      %733 = vmatmul.mubr.f32.gmra.mxu0 %v592
      %v734 = vpop.f32.mrf.mxu0
      %v735 = vadd.f32 %v665, %v734
      %v736 = vpop.f32.mrf.mxu0
      %737 = vdwg.mxu0
      %v738 = vld [vmem:[%s2] sm:$0xff]
      %v739 = vlaneseq
      %v740 = vshrl.u32 %v739, 7
      %v741 = vsub.s32 0, %v740
      %v742 = vrot.slane %v735, %v741
      %vm743 = vcmask 64512
      %v745 = vsel %vm743, %v539, 0
      %v748 = vsel %vm743, %v540, 0
      %750 = vmatprep.subr.mxu0 0.0
      %751 = vmatpush1.msra.mxu0 0.0
      %752 = vmatprep.subr.mxu0 0.0
      %753 = vmatpush1.msra.mxu0 0.0
      %754 = vmatprep.subr.mxu0 0.0
      %755 = vmatpush1.msra.mxu0 0.0
      %756 = vmatprep.subr.mxu0 0.0
      %757 = vmatpush1.msra.mxu0 0.0
      %758 = vmatprep.subr.mxu0 0.0
      %759 = vmatpush1.msra.mxu0 0.0
      %760 = vmatprep.subr.mxu0 0.0
      %761 = vmatpush1.msra.mxu0 0.0
      %762 = vmatprep.subr.mxu0 0.0
      %763 = vmatpush1.msra.mxu0 0.0
      %764 = vmatprep.subr.mxu0 0.0
      %765 = vmatpush1.msra.mxu0 0.0
      %766 = vmatprep.subr.mxu0 0.0
      %767 = vmatpush1.msra.mxu0 0.0
      %768 = vmatprep.subr.mxu0 0.0
      %769 = vmatpush1.msra.mxu0 0.0
      %770 = vmatprep.subr.mxu0 0.0
      %771 = vmatpush1.msra.mxu0 0.0
      %772 = vmatprep.subr.mxu0 0.0
      %773 = vmatpush1.msra.mxu0 0.0
      %774 = vmatprep.subr.mxu0 0.0
      %775 = vmatpush1.msra.mxu0 0.0
      %776 = vmatprep.subr.mxu0 0.0
      %777 = vmatpush1.msra.mxu0 0.0
      %778 = vmatprep.subr.mxu0 0.0
      %779 = vmatpush1.msra.mxu0 0.0
      %780 = vmatprep.subr.mxu0 0.0
      %781 = vmatpush1.msra.mxu0 %v738
      %782 = vmatprep.subr.mxu0 0.0
      %783 = vmatpush2.msra.mxu0 0.0
      %784 = vmatprep.subr.mxu0 0.0
      %785 = vmatpush2.msra.mxu0 0.0
      %786 = vmatprep.subr.mxu0 0.0
      %787 = vmatpush2.msra.mxu0 0.0
      %788 = vmatprep.subr.mxu0 0.0
      %789 = vmatpush2.msra.mxu0 0.0
      %790 = vmatprep.subr.mxu0 0.0
      %791 = vmatpush2.msra.mxu0 0.0
      %792 = vmatprep.subr.mxu0 0.0
      %793 = vmatpush2.msra.mxu0 0.0
      %794 = vmatprep.subr.mxu0 0.0
      %795 = vmatpush2.msra.mxu0 0.0
      %796 = vmatprep.subr.mxu0 0.0
      %797 = vmatpush2.msra.mxu0 0.0
      %798 = vmatprep.subr.mxu0 0.0
      %799 = vmatpush2.msra.mxu0 0.0
      %800 = vmatprep.subr.mxu0 0.0
      %801 = vmatpush2.msra.mxu0 0.0
      %802 = vmatprep.subr.mxu0 0.0
      %803 = vmatpush2.msra.mxu0 0.0
      %804 = vmatprep.subr.mxu0 0.0
      %805 = vmatpush2.msra.mxu0 0.0
      %806 = vmatprep.subr.mxu0 0.0
      %807 = vmatpush2.msra.mxu0 0.0
      %808 = vmatprep.subr.mxu0 0.0
      %809 = vmatpush2.msra.mxu0 0.0
      %810 = vmatprep.subr.mxu0 0.0
      %811 = vmatpush2.msra.mxu0 0.0
      %812 = vmatprep.subr.mxu0 0.0
      %813 = vmatpush2.msra.mxu0 0.0
      %814 = vmatprep.mubr.f32.mxu0 0.0
      %815 = vmatmul.mubr.f32.gmra.mxu0 %v745
      %v816 = vpop.f32.mrf.mxu0
      %v817 = vadd.f32 %v742, %v816
      %v818 = vpop.f32.mrf.mxu0
      %819 = vmatprep.mubr.f32.mxu0 0.0
      %820 = vmatmul.mubr.f32.gmra.mxu0 %v748
      %v821 = vpop.f32.mrf.mxu0
      %v822 = vadd.f32 %v742, %v821
      %v823 = vpop.f32.mrf.mxu0
      %824 = vdwg.mxu0
      %v825 = vld [vmem:[%s4] sm:$0xff]
      %v826 = vld [vmem:[%s4 + $0x8] sm:$0xff]
      %v827 = vld [vmem:[%s5] sm:$0x1]
      %v829 = vlaneseq
      %v830 = vshrl.u32 %v829, 7
      %v831 = vsub.s32 0, %v830
      %v832 = vrot.slane %v827, %v831
      %vm834 = vcmask 130048
      %v836 = vsel %vm834, %v825, 0
      %v839 = vsel %vm834, %v826, 0
      %841 = vmatprep.subr.mxu0 0.0
      %842 = vmatpush1.msra.mxu0 0.0
      %843 = vmatprep.subr.mxu0 0.0
      %844 = vmatpush1.msra.mxu0 0.0
      %845 = vmatprep.subr.mxu0 0.0
      %846 = vmatpush1.msra.mxu0 0.0
      %847 = vmatprep.subr.mxu0 0.0
      %848 = vmatpush1.msra.mxu0 0.0
      %849 = vmatprep.subr.mxu0 0.0
      %850 = vmatpush1.msra.mxu0 0.0
      %851 = vmatprep.subr.mxu0 0.0
      %852 = vmatpush1.msra.mxu0 0.0
      %853 = vmatprep.subr.mxu0 0.0
      %854 = vmatpush1.msra.mxu0 0.0
      %855 = vmatprep.subr.mxu0 0.0
      %856 = vmatpush1.msra.mxu0 0.0
      %857 = vmatprep.subr.mxu0 0.0
      %858 = vmatpush1.msra.mxu0 0.0
      %859 = vmatprep.subr.mxu0 0.0
      %860 = vmatpush1.msra.mxu0 0.0
      %861 = vmatprep.subr.mxu0 0.0
      %862 = vmatpush1.msra.mxu0 0.0
      %863 = vmatprep.subr.mxu0 0.0
      %864 = vmatpush1.msra.mxu0 0.0
      %865 = vmatprep.subr.mxu0 0.0
      %866 = vmatpush1.msra.mxu0 0.0
      %867 = vmatprep.subr.mxu0 0.0
      %868 = vmatpush1.msra.mxu0 0.0
      %869 = vmatprep.subr.mxu0 0.0
      %870 = vmatpush1.msra.mxu0 %v822
      %871 = vmatprep.subr.mxu0 0.0
      %872 = vmatpush1.msra.mxu0 %v817
      %873 = vmatprep.subr.mxu0 0.0
      %874 = vmatpush2.msra.mxu0 0.0
      %875 = vmatprep.subr.mxu0 0.0
      %876 = vmatpush2.msra.mxu0 0.0
      %877 = vmatprep.subr.mxu0 0.0
      %878 = vmatpush2.msra.mxu0 0.0
      %879 = vmatprep.subr.mxu0 0.0
      %880 = vmatpush2.msra.mxu0 0.0
      %881 = vmatprep.subr.mxu0 0.0
      %882 = vmatpush2.msra.mxu0 0.0
      %883 = vmatprep.subr.mxu0 0.0
      %884 = vmatpush2.msra.mxu0 0.0
      %885 = vmatprep.subr.mxu0 0.0
      %886 = vmatpush2.msra.mxu0 0.0
      %887 = vmatprep.subr.mxu0 0.0
      %888 = vmatpush2.msra.mxu0 0.0
      %889 = vmatprep.subr.mxu0 0.0
      %890 = vmatpush2.msra.mxu0 0.0
      %891 = vmatprep.subr.mxu0 0.0
      %892 = vmatpush2.msra.mxu0 0.0
      %893 = vmatprep.subr.mxu0 0.0
      %894 = vmatpush2.msra.mxu0 0.0
      %895 = vmatprep.subr.mxu0 0.0
      %896 = vmatpush2.msra.mxu0 0.0
      %897 = vmatprep.subr.mxu0 0.0
      %898 = vmatpush2.msra.mxu0 0.0
      %899 = vmatprep.subr.mxu0 0.0
      %900 = vmatpush2.msra.mxu0 0.0
      %901 = vmatprep.subr.mxu0 0.0
      %902 = vmatpush2.msra.mxu0 0.0
      %903 = vmatprep.subr.mxu0 0.0
      %904 = vmatpush2.msra.mxu0 0.0
      %905 = vmatprep.mubr.f32.mxu0 0.0
      %906 = vmatmul.mubr.f32.gmra.mxu0 %v836
      %v907 = vpop.f32.mrf.mxu0
      %v908 = vadd.f32 %v832, %v907
      %v909 = vpop.f32.mrf.mxu0
      %910 = vmatprep.mubr.f32.mxu0 0.0
      %911 = vmatmul.mubr.f32.gmra.mxu0 %v839
      %v912 = vpop.f32.mrf.mxu0
      %v913 = vadd.f32 %v832, %v912
      %v914 = vpop.f32.mrf.mxu0
      %915 = vdwg.mxu0
      %v916 = vld [vmem:[%s6] sm:$0xff]
      %v917 = vld [vmem:[%s6 + $0x8] sm:$0xff]
      %v918 = vmul.f32 %v908, %v916
      %v919 = vmul.f32 %v913, %v917
      %v920 = vld [vmem:[%s7] sm:$0xff]
      %v921 = vld [vmem:[%s7 + $0x8] sm:$0xff]
      %v922 = vadd.f32 %v918, %v920
      %v923 = vadd.f32 %v919, %v921
      %v924 = vtanh.pop %v922
      %v925 = vtanh.pop %v923
      %v926 = vld [vmem:[%s8] sm:$0xff]
      %v927 = vld [vmem:[%s8 + $0x8] sm:$0xff]
      %v928 = vld [vmem:[%s8 + $0x10] sm:$0xff]
      %v929 = vld [vmem:[%s8 + $0x18] sm:$0xff]
      %vm930 = vcmask 261120
      %v932 = vsel %vm930, %v924, 0
      %v935 = vsel %vm930, %v925, 0
      %937 = vmatprep.subr.mxu0 0.0
      %938 = vmatpush1.msra.mxu0 0.0
      %939 = vmatprep.subr.mxu0 0.0
      %940 = vmatpush1.msra.mxu0 0.0
      %941 = vmatprep.subr.mxu0 0.0
      %942 = vmatpush1.msra.mxu0 0.0
      %943 = vmatprep.subr.mxu0 0.0
      %944 = vmatpush1.msra.mxu0 0.0
      %945 = vmatprep.subr.mxu0 0.0
      %946 = vmatpush1.msra.mxu0 0.0
      %947 = vmatprep.subr.mxu0 0.0
      %948 = vmatpush1.msra.mxu0 0.0
      %949 = vmatprep.subr.mxu0 0.0
      %950 = vmatpush1.msra.mxu0 0.0
      %951 = vmatprep.subr.mxu0 0.0
      %952 = vmatpush1.msra.mxu0 0.0
      %953 = vmatprep.subr.mxu0 0.0
      %954 = vmatpush1.msra.mxu0 0.0
      %955 = vmatprep.subr.mxu0 0.0
      %956 = vmatpush1.msra.mxu0 0.0
      %957 = vmatprep.subr.mxu0 0.0
      %958 = vmatpush1.msra.mxu0 0.0
      %959 = vmatprep.subr.mxu0 0.0
      %960 = vmatpush1.msra.mxu0 0.0
      %961 = vmatprep.subr.mxu0 0.0
      %962 = vmatpush1.msra.mxu0 %v929
      %963 = vmatprep.subr.mxu0 0.0
      %964 = vmatpush1.msra.mxu0 %v928
      %965 = vmatprep.subr.mxu0 0.0
      %966 = vmatpush1.msra.mxu0 %v927
      %967 = vmatprep.subr.mxu0 0.0
      %968 = vmatpush1.msra.mxu0 %v926
      %969 = vmatprep.subr.mxu0 0.0
      %970 = vmatpush2.msra.mxu0 0.0
      %971 = vmatprep.subr.mxu0 0.0
      %972 = vmatpush2.msra.mxu0 0.0
      %973 = vmatprep.subr.mxu0 0.0
      %974 = vmatpush2.msra.mxu0 0.0
      %975 = vmatprep.subr.mxu0 0.0
      %976 = vmatpush2.msra.mxu0 0.0
      %977 = vmatprep.subr.mxu0 0.0
      %978 = vmatpush2.msra.mxu0 0.0
      %979 = vmatprep.subr.mxu0 0.0
      %980 = vmatpush2.msra.mxu0 0.0
      %981 = vmatprep.subr.mxu0 0.0
      %982 = vmatpush2.msra.mxu0 0.0
      %983 = vmatprep.subr.mxu0 0.0
      %984 = vmatpush2.msra.mxu0 0.0
      %985 = vmatprep.subr.mxu0 0.0
      %986 = vmatpush2.msra.mxu0 0.0
      %987 = vmatprep.subr.mxu0 0.0
      %988 = vmatpush2.msra.mxu0 0.0
      %989 = vmatprep.subr.mxu0 0.0
      %990 = vmatpush2.msra.mxu0 0.0
      %991 = vmatprep.subr.mxu0 0.0
      %992 = vmatpush2.msra.mxu0 0.0
      %993 = vmatprep.subr.mxu0 0.0
      %994 = vmatpush2.msra.mxu0 0.0
      %995 = vmatprep.subr.mxu0 0.0
      %996 = vmatpush2.msra.mxu0 0.0
      %997 = vmatprep.subr.mxu0 0.0
      %998 = vmatpush2.msra.mxu0 0.0
      %999 = vmatprep.subr.mxu0 0.0
      %1000 = vmatpush2.msra.mxu0 0.0
      %1001 = vmatprep.mubr.f32.mxu0 0.0
      %1002 = vmatmul.mubr.f32.gmra.mxu0 %v932
      %v1003 = vpop.f32.mrf.mxu0
      %v1004 = vadd.f32 0.0, %v1003
      %v1005 = vpop.f32.mrf.mxu0
      %1006 = vmatprep.mubr.f32.mxu0 0.0
      %1007 = vmatmul.mubr.f32.gmra.mxu0 %v935
      %v1008 = vpop.f32.mrf.mxu0
      %v1009 = vadd.f32 0.0, %v1008
      %v1010 = vpop.f32.mrf.mxu0
      %1011 = vdwg.mxu0
      %v1012 = vld [vmem:[%s9] sm:$0xff]
      %v1013 = vld [vmem:[%s9 + $0x8] sm:$0xff]
      %v1014 = vld [vmem:[%s10] sm:$0x1]
      %v1016 = vlaneseq
      %v1017 = vshrl.u32 %v1016, 7
      %v1018 = vsub.s32 0, %v1017
      %v1019 = vrot.slane %v1014, %v1018
      %v1022 = vsel %vm834, %v1012, 0
      %v1025 = vsel %vm834, %v1013, 0
      %1027 = vmatprep.subr.mxu0 0.0
      %1028 = vmatpush1.msra.mxu0 0.0
      %1029 = vmatprep.subr.mxu0 0.0
      %1030 = vmatpush1.msra.mxu0 0.0
      %1031 = vmatprep.subr.mxu0 0.0
      %1032 = vmatpush1.msra.mxu0 0.0
      %1033 = vmatprep.subr.mxu0 0.0
      %1034 = vmatpush1.msra.mxu0 0.0
      %1035 = vmatprep.subr.mxu0 0.0
      %1036 = vmatpush1.msra.mxu0 0.0
      %1037 = vmatprep.subr.mxu0 0.0
      %1038 = vmatpush1.msra.mxu0 0.0
      %1039 = vmatprep.subr.mxu0 0.0
      %1040 = vmatpush1.msra.mxu0 0.0
      %1041 = vmatprep.subr.mxu0 0.0
      %1042 = vmatpush1.msra.mxu0 0.0
      %1043 = vmatprep.subr.mxu0 0.0
      %1044 = vmatpush1.msra.mxu0 0.0
      %1045 = vmatprep.subr.mxu0 0.0
      %1046 = vmatpush1.msra.mxu0 0.0
      %1047 = vmatprep.subr.mxu0 0.0
      %1048 = vmatpush1.msra.mxu0 0.0
      %1049 = vmatprep.subr.mxu0 0.0
      %1050 = vmatpush1.msra.mxu0 0.0
      %1051 = vmatprep.subr.mxu0 0.0
      %1052 = vmatpush1.msra.mxu0 0.0
      %1053 = vmatprep.subr.mxu0 0.0
      %1054 = vmatpush1.msra.mxu0 0.0
      %1055 = vmatprep.subr.mxu0 0.0
      %1056 = vmatpush1.msra.mxu0 %v1009
      %1057 = vmatprep.subr.mxu0 0.0
      %1058 = vmatpush1.msra.mxu0 %v1004
      %1059 = vmatprep.subr.mxu0 0.0
      %1060 = vmatpush2.msra.mxu0 0.0
      %1061 = vmatprep.subr.mxu0 0.0
      %1062 = vmatpush2.msra.mxu0 0.0
      %1063 = vmatprep.subr.mxu0 0.0
      %1064 = vmatpush2.msra.mxu0 0.0
      %1065 = vmatprep.subr.mxu0 0.0
      %1066 = vmatpush2.msra.mxu0 0.0
      %1067 = vmatprep.subr.mxu0 0.0
      %1068 = vmatpush2.msra.mxu0 0.0
      %1069 = vmatprep.subr.mxu0 0.0
      %1070 = vmatpush2.msra.mxu0 0.0
      %1071 = vmatprep.subr.mxu0 0.0
      %1072 = vmatpush2.msra.mxu0 0.0
      %1073 = vmatprep.subr.mxu0 0.0
      %1074 = vmatpush2.msra.mxu0 0.0
      %1075 = vmatprep.subr.mxu0 0.0
      %1076 = vmatpush2.msra.mxu0 0.0
      %1077 = vmatprep.subr.mxu0 0.0
      %1078 = vmatpush2.msra.mxu0 0.0
      %1079 = vmatprep.subr.mxu0 0.0
      %1080 = vmatpush2.msra.mxu0 0.0
      %1081 = vmatprep.subr.mxu0 0.0
      %1082 = vmatpush2.msra.mxu0 0.0
      %1083 = vmatprep.subr.mxu0 0.0
      %1084 = vmatpush2.msra.mxu0 0.0
      %1085 = vmatprep.subr.mxu0 0.0
      %1086 = vmatpush2.msra.mxu0 0.0
      %1087 = vmatprep.subr.mxu0 0.0
      %1088 = vmatpush2.msra.mxu0 0.0
      %1089 = vmatprep.subr.mxu0 0.0
      %1090 = vmatpush2.msra.mxu0 0.0
      %1091 = vmatprep.mubr.f32.mxu0 0.0
      %1092 = vmatmul.mubr.f32.gmra.mxu0 %v1022
      %v1093 = vpop.f32.mrf.mxu0
      %v1094 = vadd.f32 %v1019, %v1093
      %v1095 = vpop.f32.mrf.mxu0
      %1096 = vmatprep.mubr.f32.mxu0 0.0
      %1097 = vmatmul.mubr.f32.gmra.mxu0 %v1025
      %v1098 = vpop.f32.mrf.mxu0
      %v1099 = vadd.f32 %v1019, %v1098
      %v1100 = vpop.f32.mrf.mxu0
      %1101 = vdwg.mxu0
      %v1102 = vld [vmem:[%s11] sm:$0xff]
      %v1103 = vld [vmem:[%s11 + $0x8] sm:$0xff]
      %v1104 = vmul.f32 %v1094, %v1102
      %v1105 = vmul.f32 %v1099, %v1103
      %v1106 = vld [vmem:[%s12] sm:$0xff]
      %v1107 = vld [vmem:[%s12 + $0x8] sm:$0xff]
      %v1108 = vadd.f32 %v1104, %v1106
      %v1109 = vadd.f32 %v1105, %v1107
      %v1110 = vtanh.pop %v1108
      %v1111 = vtanh.pop %v1109
      %s1112 = scalar_lea.vmem %s8, 32
      %v1113 = vld [vmem:[%s1112] sm:$0xff]
      %v1114 = vld [vmem:[%s1112 + $0x8] sm:$0xff]
      %v1115 = vld [vmem:[%s1112 + $0x10] sm:$0xff]
      %v1116 = vld [vmem:[%s1112 + $0x18] sm:$0xff]
      %v1118 = vsel %vm930, %v1110, 0
      %v1121 = vsel %vm930, %v1111, 0
      %1123 = vmatprep.subr.mxu0 0.0
      %1124 = vmatpush1.msra.mxu0 0.0
      %1125 = vmatprep.subr.mxu0 0.0
      %1126 = vmatpush1.msra.mxu0 0.0
      %1127 = vmatprep.subr.mxu0 0.0
      %1128 = vmatpush1.msra.mxu0 0.0
      %1129 = vmatprep.subr.mxu0 0.0
      %1130 = vmatpush1.msra.mxu0 0.0
      %1131 = vmatprep.subr.mxu0 0.0
      %1132 = vmatpush1.msra.mxu0 0.0
      %1133 = vmatprep.subr.mxu0 0.0
      %1134 = vmatpush1.msra.mxu0 0.0
      %1135 = vmatprep.subr.mxu0 0.0
      %1136 = vmatpush1.msra.mxu0 0.0
      %1137 = vmatprep.subr.mxu0 0.0
      %1138 = vmatpush1.msra.mxu0 0.0
      %1139 = vmatprep.subr.mxu0 0.0
      %1140 = vmatpush1.msra.mxu0 0.0
      %1141 = vmatprep.subr.mxu0 0.0
      %1142 = vmatpush1.msra.mxu0 0.0
      %1143 = vmatprep.subr.mxu0 0.0
      %1144 = vmatpush1.msra.mxu0 0.0
      %1145 = vmatprep.subr.mxu0 0.0
      %1146 = vmatpush1.msra.mxu0 0.0
      %1147 = vmatprep.subr.mxu0 0.0
      %1148 = vmatpush1.msra.mxu0 %v1116
      %1149 = vmatprep.subr.mxu0 0.0
      %1150 = vmatpush1.msra.mxu0 %v1115
      %1151 = vmatprep.subr.mxu0 0.0
      %1152 = vmatpush1.msra.mxu0 %v1114
      %1153 = vmatprep.subr.mxu0 0.0
      %1154 = vmatpush1.msra.mxu0 %v1113
      %1155 = vmatprep.subr.mxu0 0.0
      %1156 = vmatpush2.msra.mxu0 0.0
      %1157 = vmatprep.subr.mxu0 0.0
      %1158 = vmatpush2.msra.mxu0 0.0
      %1159 = vmatprep.subr.mxu0 0.0
      %1160 = vmatpush2.msra.mxu0 0.0
      %1161 = vmatprep.subr.mxu0 0.0
      %1162 = vmatpush2.msra.mxu0 0.0
      %1163 = vmatprep.subr.mxu0 0.0
      %1164 = vmatpush2.msra.mxu0 0.0
      %1165 = vmatprep.subr.mxu0 0.0
      %1166 = vmatpush2.msra.mxu0 0.0
      %1167 = vmatprep.subr.mxu0 0.0
      %1168 = vmatpush2.msra.mxu0 0.0
      %1169 = vmatprep.subr.mxu0 0.0
      %1170 = vmatpush2.msra.mxu0 0.0
      %1171 = vmatprep.subr.mxu0 0.0
      %1172 = vmatpush2.msra.mxu0 0.0
      %1173 = vmatprep.subr.mxu0 0.0
      %1174 = vmatpush2.msra.mxu0 0.0
      %1175 = vmatprep.subr.mxu0 0.0
      %1176 = vmatpush2.msra.mxu0 0.0
      %1177 = vmatprep.subr.mxu0 0.0
      %1178 = vmatpush2.msra.mxu0 0.0
      %1179 = vmatprep.subr.mxu0 0.0
      %1180 = vmatpush2.msra.mxu0 0.0
      %1181 = vmatprep.subr.mxu0 0.0
      %1182 = vmatpush2.msra.mxu0 0.0
      %1183 = vmatprep.subr.mxu0 0.0
      %1184 = vmatpush2.msra.mxu0 0.0
      %1185 = vmatprep.subr.mxu0 0.0
      %1186 = vmatpush2.msra.mxu0 0.0
      %1187 = vmatprep.mubr.f32.mxu0 0.0
      %1188 = vmatmul.mubr.f32.gmra.mxu0 %v1118
      %v1189 = vpop.f32.mrf.mxu0
      %v1190 = vadd.f32 0.0, %v1189
      %v1191 = vpop.f32.mrf.mxu0
      %1192 = vmatprep.mubr.f32.mxu0 0.0
      %1193 = vmatmul.mubr.f32.gmra.mxu0 %v1121
      %v1194 = vpop.f32.mrf.mxu0
      %v1195 = vadd.f32 0.0, %v1194
      %v1196 = vpop.f32.mrf.mxu0
      %1197 = vdwg.mxu0
      %s1198 = scalar_lea.vmem %s9, 16
      %v1199 = vld [vmem:[%s1198] sm:$0xff]
      %v1200 = vld [vmem:[%s1198 + $0x8] sm:$0xff]
      %s1201 = scalar_lea.vmem %s10, 1
      %v1202 = vld [vmem:[%s1201] sm:$0x1]
      %v1204 = vlaneseq
      %v1205 = vshrl.u32 %v1204, 7
      %v1206 = vsub.s32 0, %v1205
      %v1207 = vrot.slane %v1202, %v1206
      %v1210 = vsel %vm834, %v1199, 0
      %v1213 = vsel %vm834, %v1200, 0
      %1215 = vmatprep.subr.mxu0 0.0
      %1216 = vmatpush1.msra.mxu0 0.0
      %1217 = vmatprep.subr.mxu0 0.0
      %1218 = vmatpush1.msra.mxu0 0.0
      %1219 = vmatprep.subr.mxu0 0.0
      %1220 = vmatpush1.msra.mxu0 0.0
      %1221 = vmatprep.subr.mxu0 0.0
      %1222 = vmatpush1.msra.mxu0 0.0
      %1223 = vmatprep.subr.mxu0 0.0
      %1224 = vmatpush1.msra.mxu0 0.0
      %1225 = vmatprep.subr.mxu0 0.0
      %1226 = vmatpush1.msra.mxu0 0.0
      %1227 = vmatprep.subr.mxu0 0.0
      %1228 = vmatpush1.msra.mxu0 0.0
      %1229 = vmatprep.subr.mxu0 0.0
      %1230 = vmatpush1.msra.mxu0 0.0
      %1231 = vmatprep.subr.mxu0 0.0
      %1232 = vmatpush1.msra.mxu0 0.0
      %1233 = vmatprep.subr.mxu0 0.0
      %1234 = vmatpush1.msra.mxu0 0.0
      %1235 = vmatprep.subr.mxu0 0.0
      %1236 = vmatpush1.msra.mxu0 0.0
      %1237 = vmatprep.subr.mxu0 0.0
      %1238 = vmatpush1.msra.mxu0 0.0
      %1239 = vmatprep.subr.mxu0 0.0
      %1240 = vmatpush1.msra.mxu0 0.0
      %1241 = vmatprep.subr.mxu0 0.0
      %1242 = vmatpush1.msra.mxu0 0.0
      %1243 = vmatprep.subr.mxu0 0.0
      %1244 = vmatpush1.msra.mxu0 %v1195
      %1245 = vmatprep.subr.mxu0 0.0
      %1246 = vmatpush1.msra.mxu0 %v1190
      %1247 = vmatprep.subr.mxu0 0.0
      %1248 = vmatpush2.msra.mxu0 0.0
      %1249 = vmatprep.subr.mxu0 0.0
      %1250 = vmatpush2.msra.mxu0 0.0
      %1251 = vmatprep.subr.mxu0 0.0
      %1252 = vmatpush2.msra.mxu0 0.0
      %1253 = vmatprep.subr.mxu0 0.0
      %1254 = vmatpush2.msra.mxu0 0.0
      %1255 = vmatprep.subr.mxu0 0.0
      %1256 = vmatpush2.msra.mxu0 0.0
      %1257 = vmatprep.subr.mxu0 0.0
      %1258 = vmatpush2.msra.mxu0 0.0
      %1259 = vmatprep.subr.mxu0 0.0
      %1260 = vmatpush2.msra.mxu0 0.0
      %1261 = vmatprep.subr.mxu0 0.0
      %1262 = vmatpush2.msra.mxu0 0.0
      %1263 = vmatprep.subr.mxu0 0.0
      %1264 = vmatpush2.msra.mxu0 0.0
      %1265 = vmatprep.subr.mxu0 0.0
      %1266 = vmatpush2.msra.mxu0 0.0
      %1267 = vmatprep.subr.mxu0 0.0
      %1268 = vmatpush2.msra.mxu0 0.0
      %1269 = vmatprep.subr.mxu0 0.0
      %1270 = vmatpush2.msra.mxu0 0.0
      %1271 = vmatprep.subr.mxu0 0.0
      %1272 = vmatpush2.msra.mxu0 0.0
      %1273 = vmatprep.subr.mxu0 0.0
      %1274 = vmatpush2.msra.mxu0 0.0
      %1275 = vmatprep.subr.mxu0 0.0
      %1276 = vmatpush2.msra.mxu0 0.0
      %1277 = vmatprep.subr.mxu0 0.0
      %1278 = vmatpush2.msra.mxu0 0.0
      %1279 = vmatprep.mubr.f32.mxu0 0.0
      %1280 = vmatmul.mubr.f32.gmra.mxu0 %v1210
      %v1281 = vpop.f32.mrf.mxu0
      %v1282 = vadd.f32 %v1207, %v1281
      %v1283 = vpop.f32.mrf.mxu0
      %1284 = vmatprep.mubr.f32.mxu0 0.0
      %1285 = vmatmul.mubr.f32.gmra.mxu0 %v1213
      %v1286 = vpop.f32.mrf.mxu0
      %v1287 = vadd.f32 %v1207, %v1286
      %v1288 = vpop.f32.mrf.mxu0
      %1289 = vdwg.mxu0
      %s1290 = scalar_lea.vmem %s11, 16
      %v1291 = vld [vmem:[%s1290] sm:$0xff]
      %v1292 = vld [vmem:[%s1290 + $0x8] sm:$0xff]
      %v1293 = vmul.f32 %v1282, %v1291
      %v1294 = vmul.f32 %v1287, %v1292
      %s1295 = scalar_lea.vmem %s12, 16
      %v1296 = vld [vmem:[%s1295] sm:$0xff]
      %v1297 = vld [vmem:[%s1295 + $0x8] sm:$0xff]
      %v1298 = vadd.f32 %v1293, %v1296
      %v1299 = vadd.f32 %v1294, %v1297
      %v1300 = vtanh.pop %v1298
      %v1301 = vtanh.pop %v1299
      %v1302 = vadd.f32 %v1300, %v924
      %v1303 = vadd.f32 %v1301, %v925
      %s1304 = scalar_lea.vmem %s8, 64
      %v1305 = vld [vmem:[%s1304] sm:$0xff]
      %v1306 = vld [vmem:[%s1304 + $0x8] sm:$0xff]
      %v1307 = vld [vmem:[%s1304 + $0x10] sm:$0xff]
      %v1308 = vld [vmem:[%s1304 + $0x18] sm:$0xff]
      %v1310 = vsel %vm930, %v1302, 0
      %v1313 = vsel %vm930, %v1303, 0
      %1315 = vmatprep.subr.mxu0 0.0
      %1316 = vmatpush1.msra.mxu0 0.0
      %1317 = vmatprep.subr.mxu0 0.0
      %1318 = vmatpush1.msra.mxu0 0.0
      %1319 = vmatprep.subr.mxu0 0.0
      %1320 = vmatpush1.msra.mxu0 0.0
      %1321 = vmatprep.subr.mxu0 0.0
      %1322 = vmatpush1.msra.mxu0 0.0
      %1323 = vmatprep.subr.mxu0 0.0
      %1324 = vmatpush1.msra.mxu0 0.0
      %1325 = vmatprep.subr.mxu0 0.0
      %1326 = vmatpush1.msra.mxu0 0.0
      %1327 = vmatprep.subr.mxu0 0.0
      %1328 = vmatpush1.msra.mxu0 0.0
      %1329 = vmatprep.subr.mxu0 0.0
      %1330 = vmatpush1.msra.mxu0 0.0
      %1331 = vmatprep.subr.mxu0 0.0
      %1332 = vmatpush1.msra.mxu0 0.0
      %1333 = vmatprep.subr.mxu0 0.0
      %1334 = vmatpush1.msra.mxu0 0.0
      %1335 = vmatprep.subr.mxu0 0.0
      %1336 = vmatpush1.msra.mxu0 0.0
      %1337 = vmatprep.subr.mxu0 0.0
      %1338 = vmatpush1.msra.mxu0 0.0
      %1339 = vmatprep.subr.mxu0 0.0
      %1340 = vmatpush1.msra.mxu0 %v1308
      %1341 = vmatprep.subr.mxu0 0.0
      %1342 = vmatpush1.msra.mxu0 %v1307
      %1343 = vmatprep.subr.mxu0 0.0
      %1344 = vmatpush1.msra.mxu0 %v1306
      %1345 = vmatprep.subr.mxu0 0.0
      %1346 = vmatpush1.msra.mxu0 %v1305
      %1347 = vmatprep.subr.mxu0 0.0
      %1348 = vmatpush2.msra.mxu0 0.0
      %1349 = vmatprep.subr.mxu0 0.0
      %1350 = vmatpush2.msra.mxu0 0.0
      %1351 = vmatprep.subr.mxu0 0.0
      %1352 = vmatpush2.msra.mxu0 0.0
      %1353 = vmatprep.subr.mxu0 0.0
      %1354 = vmatpush2.msra.mxu0 0.0
      %1355 = vmatprep.subr.mxu0 0.0
      %1356 = vmatpush2.msra.mxu0 0.0
      %1357 = vmatprep.subr.mxu0 0.0
      %1358 = vmatpush2.msra.mxu0 0.0
      %1359 = vmatprep.subr.mxu0 0.0
      %1360 = vmatpush2.msra.mxu0 0.0
      %1361 = vmatprep.subr.mxu0 0.0
      %1362 = vmatpush2.msra.mxu0 0.0
      %1363 = vmatprep.subr.mxu0 0.0
      %1364 = vmatpush2.msra.mxu0 0.0
      %1365 = vmatprep.subr.mxu0 0.0
      %1366 = vmatpush2.msra.mxu0 0.0
      %1367 = vmatprep.subr.mxu0 0.0
      %1368 = vmatpush2.msra.mxu0 0.0
      %1369 = vmatprep.subr.mxu0 0.0
      %1370 = vmatpush2.msra.mxu0 0.0
      %1371 = vmatprep.subr.mxu0 0.0
      %1372 = vmatpush2.msra.mxu0 0.0
      %1373 = vmatprep.subr.mxu0 0.0
      %1374 = vmatpush2.msra.mxu0 0.0
      %1375 = vmatprep.subr.mxu0 0.0
      %1376 = vmatpush2.msra.mxu0 0.0
      %1377 = vmatprep.subr.mxu0 0.0
      %1378 = vmatpush2.msra.mxu0 0.0
      %1379 = vmatprep.mubr.f32.mxu0 0.0
      %1380 = vmatmul.mubr.f32.gmra.mxu0 %v1310
      %v1381 = vpop.f32.mrf.mxu0
      %v1382 = vadd.f32 0.0, %v1381
      %v1383 = vpop.f32.mrf.mxu0
      %1384 = vmatprep.mubr.f32.mxu0 0.0
      %1385 = vmatmul.mubr.f32.gmra.mxu0 %v1313
      %v1386 = vpop.f32.mrf.mxu0
      %v1387 = vadd.f32 0.0, %v1386
      %v1388 = vpop.f32.mrf.mxu0
      %1389 = vdwg.mxu0
      %s1390 = scalar_lea.vmem %s9, 32
      %v1391 = vld [vmem:[%s1390] sm:$0xff]
      %v1392 = vld [vmem:[%s1390 + $0x8] sm:$0xff]
      %s1393 = scalar_lea.vmem %s10, 2
      %v1394 = vld [vmem:[%s1393] sm:$0x1]
      %v1396 = vlaneseq
      %v1397 = vshrl.u32 %v1396, 7
      %v1398 = vsub.s32 0, %v1397
      %v1399 = vrot.slane %v1394, %v1398
      %v1402 = vsel %vm834, %v1391, 0
      %v1405 = vsel %vm834, %v1392, 0
      %1407 = vmatprep.subr.mxu0 0.0
      %1408 = vmatpush1.msra.mxu0 0.0
      %1409 = vmatprep.subr.mxu0 0.0
      %1410 = vmatpush1.msra.mxu0 0.0
      %1411 = vmatprep.subr.mxu0 0.0
      %1412 = vmatpush1.msra.mxu0 0.0
      %1413 = vmatprep.subr.mxu0 0.0
      %1414 = vmatpush1.msra.mxu0 0.0
      %1415 = vmatprep.subr.mxu0 0.0
      %1416 = vmatpush1.msra.mxu0 0.0
      %1417 = vmatprep.subr.mxu0 0.0
      %1418 = vmatpush1.msra.mxu0 0.0
      %1419 = vmatprep.subr.mxu0 0.0
      %1420 = vmatpush1.msra.mxu0 0.0
      %1421 = vmatprep.subr.mxu0 0.0
      %1422 = vmatpush1.msra.mxu0 0.0
      %1423 = vmatprep.subr.mxu0 0.0
      %1424 = vmatpush1.msra.mxu0 0.0
      %1425 = vmatprep.subr.mxu0 0.0
      %1426 = vmatpush1.msra.mxu0 0.0
      %1427 = vmatprep.subr.mxu0 0.0
      %1428 = vmatpush1.msra.mxu0 0.0
      %1429 = vmatprep.subr.mxu0 0.0
      %1430 = vmatpush1.msra.mxu0 0.0
      %1431 = vmatprep.subr.mxu0 0.0
      %1432 = vmatpush1.msra.mxu0 0.0
      %1433 = vmatprep.subr.mxu0 0.0
      %1434 = vmatpush1.msra.mxu0 0.0
      %1435 = vmatprep.subr.mxu0 0.0
      %1436 = vmatpush1.msra.mxu0 %v1387
      %1437 = vmatprep.subr.mxu0 0.0
      %1438 = vmatpush1.msra.mxu0 %v1382
      %1439 = vmatprep.subr.mxu0 0.0
      %1440 = vmatpush2.msra.mxu0 0.0
      %1441 = vmatprep.subr.mxu0 0.0
      %1442 = vmatpush2.msra.mxu0 0.0
      %1443 = vmatprep.subr.mxu0 0.0
      %1444 = vmatpush2.msra.mxu0 0.0
      %1445 = vmatprep.subr.mxu0 0.0
      %1446 = vmatpush2.msra.mxu0 0.0
      %1447 = vmatprep.subr.mxu0 0.0
      %1448 = vmatpush2.msra.mxu0 0.0
      %1449 = vmatprep.subr.mxu0 0.0
      %1450 = vmatpush2.msra.mxu0 0.0
      %1451 = vmatprep.subr.mxu0 0.0
      %1452 = vmatpush2.msra.mxu0 0.0
      %1453 = vmatprep.subr.mxu0 0.0
      %1454 = vmatpush2.msra.mxu0 0.0
      %1455 = vmatprep.subr.mxu0 0.0
      %1456 = vmatpush2.msra.mxu0 0.0
      %1457 = vmatprep.subr.mxu0 0.0
      %1458 = vmatpush2.msra.mxu0 0.0
      %1459 = vmatprep.subr.mxu0 0.0
      %1460 = vmatpush2.msra.mxu0 0.0
      %1461 = vmatprep.subr.mxu0 0.0
      %1462 = vmatpush2.msra.mxu0 0.0
      %1463 = vmatprep.subr.mxu0 0.0
      %1464 = vmatpush2.msra.mxu0 0.0
      %1465 = vmatprep.subr.mxu0 0.0
      %1466 = vmatpush2.msra.mxu0 0.0
      %1467 = vmatprep.subr.mxu0 0.0
      %1468 = vmatpush2.msra.mxu0 0.0
      %1469 = vmatprep.subr.mxu0 0.0
      %1470 = vmatpush2.msra.mxu0 0.0
      %1471 = vmatprep.mubr.f32.mxu0 0.0
      %1472 = vmatmul.mubr.f32.gmra.mxu0 %v1402
      %v1473 = vpop.f32.mrf.mxu0
      %v1474 = vadd.f32 %v1399, %v1473
      %v1475 = vpop.f32.mrf.mxu0
      %1476 = vmatprep.mubr.f32.mxu0 0.0
      %1477 = vmatmul.mubr.f32.gmra.mxu0 %v1405
      %v1478 = vpop.f32.mrf.mxu0
      %v1479 = vadd.f32 %v1399, %v1478
      %v1480 = vpop.f32.mrf.mxu0
      %1481 = vdwg.mxu0
      %s1482 = scalar_lea.vmem %s11, 32
      %v1483 = vld [vmem:[%s1482] sm:$0xff]
      %v1484 = vld [vmem:[%s1482 + $0x8] sm:$0xff]
      %v1485 = vmul.f32 %v1474, %v1483
      %v1486 = vmul.f32 %v1479, %v1484
      %s1487 = scalar_lea.vmem %s12, 32
      %v1488 = vld [vmem:[%s1487] sm:$0xff]
      %v1489 = vld [vmem:[%s1487 + $0x8] sm:$0xff]
      %v1490 = vadd.f32 %v1485, %v1488
      %v1491 = vadd.f32 %v1486, %v1489
      %v1492 = vtanh.pop %v1490
      %v1493 = vtanh.pop %v1491
      %s1494 = scalar_lea.vmem %s8, 96
      %v1495 = vld [vmem:[%s1494] sm:$0xff]
      %v1496 = vld [vmem:[%s1494 + $0x8] sm:$0xff]
      %v1497 = vld [vmem:[%s1494 + $0x10] sm:$0xff]
      %v1498 = vld [vmem:[%s1494 + $0x18] sm:$0xff]
      %v1500 = vsel %vm930, %v1492, 0
      %v1503 = vsel %vm930, %v1493, 0
      %1505 = vmatprep.subr.mxu0 0.0
      %1506 = vmatpush1.msra.mxu0 0.0
      %1507 = vmatprep.subr.mxu0 0.0
      %1508 = vmatpush1.msra.mxu0 0.0
      %1509 = vmatprep.subr.mxu0 0.0
      %1510 = vmatpush1.msra.mxu0 0.0
      %1511 = vmatprep.subr.mxu0 0.0
      %1512 = vmatpush1.msra.mxu0 0.0
      %1513 = vmatprep.subr.mxu0 0.0
      %1514 = vmatpush1.msra.mxu0 0.0
      %1515 = vmatprep.subr.mxu0 0.0
      %1516 = vmatpush1.msra.mxu0 0.0
      %1517 = vmatprep.subr.mxu0 0.0
      %1518 = vmatpush1.msra.mxu0 0.0
      %1519 = vmatprep.subr.mxu0 0.0
      %1520 = vmatpush1.msra.mxu0 0.0
      %1521 = vmatprep.subr.mxu0 0.0
      %1522 = vmatpush1.msra.mxu0 0.0
      %1523 = vmatprep.subr.mxu0 0.0
      %1524 = vmatpush1.msra.mxu0 0.0
      %1525 = vmatprep.subr.mxu0 0.0
      %1526 = vmatpush1.msra.mxu0 0.0
      %1527 = vmatprep.subr.mxu0 0.0
      %1528 = vmatpush1.msra.mxu0 0.0
      %1529 = vmatprep.subr.mxu0 0.0
      %1530 = vmatpush1.msra.mxu0 %v1498
      %1531 = vmatprep.subr.mxu0 0.0
      %1532 = vmatpush1.msra.mxu0 %v1497
      %1533 = vmatprep.subr.mxu0 0.0
      %1534 = vmatpush1.msra.mxu0 %v1496
      %1535 = vmatprep.subr.mxu0 0.0
      %1536 = vmatpush1.msra.mxu0 %v1495
      %1537 = vmatprep.subr.mxu0 0.0
      %1538 = vmatpush2.msra.mxu0 0.0
      %1539 = vmatprep.subr.mxu0 0.0
      %1540 = vmatpush2.msra.mxu0 0.0
      %1541 = vmatprep.subr.mxu0 0.0
      %1542 = vmatpush2.msra.mxu0 0.0
      %1543 = vmatprep.subr.mxu0 0.0
      %1544 = vmatpush2.msra.mxu0 0.0
      %1545 = vmatprep.subr.mxu0 0.0
      %1546 = vmatpush2.msra.mxu0 0.0
      %1547 = vmatprep.subr.mxu0 0.0
      %1548 = vmatpush2.msra.mxu0 0.0
      %1549 = vmatprep.subr.mxu0 0.0
      %1550 = vmatpush2.msra.mxu0 0.0
      %1551 = vmatprep.subr.mxu0 0.0
      %1552 = vmatpush2.msra.mxu0 0.0
      %1553 = vmatprep.subr.mxu0 0.0
      %1554 = vmatpush2.msra.mxu0 0.0
      %1555 = vmatprep.subr.mxu0 0.0
      %1556 = vmatpush2.msra.mxu0 0.0
      %1557 = vmatprep.subr.mxu0 0.0
      %1558 = vmatpush2.msra.mxu0 0.0
      %1559 = vmatprep.subr.mxu0 0.0
      %1560 = vmatpush2.msra.mxu0 0.0
      %1561 = vmatprep.subr.mxu0 0.0
      %1562 = vmatpush2.msra.mxu0 0.0
      %1563 = vmatprep.subr.mxu0 0.0
      %1564 = vmatpush2.msra.mxu0 0.0
      %1565 = vmatprep.subr.mxu0 0.0
      %1566 = vmatpush2.msra.mxu0 0.0
      %1567 = vmatprep.subr.mxu0 0.0
      %1568 = vmatpush2.msra.mxu0 0.0
      %1569 = vmatprep.mubr.f32.mxu0 0.0
      %1570 = vmatmul.mubr.f32.gmra.mxu0 %v1500
      %v1571 = vpop.f32.mrf.mxu0
      %v1572 = vadd.f32 0.0, %v1571
      %v1573 = vpop.f32.mrf.mxu0
      %1574 = vmatprep.mubr.f32.mxu0 0.0
      %1575 = vmatmul.mubr.f32.gmra.mxu0 %v1503
      %v1576 = vpop.f32.mrf.mxu0
      %v1577 = vadd.f32 0.0, %v1576
      %v1578 = vpop.f32.mrf.mxu0
      %1579 = vdwg.mxu0
      %s1580 = scalar_lea.vmem %s9, 48
      %v1581 = vld [vmem:[%s1580] sm:$0xff]
      %v1582 = vld [vmem:[%s1580 + $0x8] sm:$0xff]
      %s1583 = scalar_lea.vmem %s10, 3
      %v1584 = vld [vmem:[%s1583] sm:$0x1]
      %v1586 = vlaneseq
      %v1587 = vshrl.u32 %v1586, 7
      %v1588 = vsub.s32 0, %v1587
      %v1589 = vrot.slane %v1584, %v1588
      %v1592 = vsel %vm834, %v1581, 0
      %v1595 = vsel %vm834, %v1582, 0
      %1597 = vmatprep.subr.mxu0 0.0
      %1598 = vmatpush1.msra.mxu0 0.0
      %1599 = vmatprep.subr.mxu0 0.0
      %1600 = vmatpush1.msra.mxu0 0.0
      %1601 = vmatprep.subr.mxu0 0.0
      %1602 = vmatpush1.msra.mxu0 0.0
      %1603 = vmatprep.subr.mxu0 0.0
      %1604 = vmatpush1.msra.mxu0 0.0
      %1605 = vmatprep.subr.mxu0 0.0
      %1606 = vmatpush1.msra.mxu0 0.0
      %1607 = vmatprep.subr.mxu0 0.0
      %1608 = vmatpush1.msra.mxu0 0.0
      %1609 = vmatprep.subr.mxu0 0.0
      %1610 = vmatpush1.msra.mxu0 0.0
      %1611 = vmatprep.subr.mxu0 0.0
      %1612 = vmatpush1.msra.mxu0 0.0
      %1613 = vmatprep.subr.mxu0 0.0
      %1614 = vmatpush1.msra.mxu0 0.0
      %1615 = vmatprep.subr.mxu0 0.0
      %1616 = vmatpush1.msra.mxu0 0.0
      %1617 = vmatprep.subr.mxu0 0.0
      %1618 = vmatpush1.msra.mxu0 0.0
      %1619 = vmatprep.subr.mxu0 0.0
      %1620 = vmatpush1.msra.mxu0 0.0
      %1621 = vmatprep.subr.mxu0 0.0
      %1622 = vmatpush1.msra.mxu0 0.0
      %1623 = vmatprep.subr.mxu0 0.0
      %1624 = vmatpush1.msra.mxu0 0.0
      %1625 = vmatprep.subr.mxu0 0.0
      %1626 = vmatpush1.msra.mxu0 %v1577
      %1627 = vmatprep.subr.mxu0 0.0
      %1628 = vmatpush1.msra.mxu0 %v1572
      %1629 = vmatprep.subr.mxu0 0.0
      %1630 = vmatpush2.msra.mxu0 0.0
      %1631 = vmatprep.subr.mxu0 0.0
      %1632 = vmatpush2.msra.mxu0 0.0
      %1633 = vmatprep.subr.mxu0 0.0
      %1634 = vmatpush2.msra.mxu0 0.0
      %1635 = vmatprep.subr.mxu0 0.0
      %1636 = vmatpush2.msra.mxu0 0.0
      %1637 = vmatprep.subr.mxu0 0.0
      %1638 = vmatpush2.msra.mxu0 0.0
      %1639 = vmatprep.subr.mxu0 0.0
      %1640 = vmatpush2.msra.mxu0 0.0
      %1641 = vmatprep.subr.mxu0 0.0
      %1642 = vmatpush2.msra.mxu0 0.0
      %1643 = vmatprep.subr.mxu0 0.0
      %1644 = vmatpush2.msra.mxu0 0.0
      %1645 = vmatprep.subr.mxu0 0.0
      %1646 = vmatpush2.msra.mxu0 0.0
      %1647 = vmatprep.subr.mxu0 0.0
      %1648 = vmatpush2.msra.mxu0 0.0
      %1649 = vmatprep.subr.mxu0 0.0
      %1650 = vmatpush2.msra.mxu0 0.0
      %1651 = vmatprep.subr.mxu0 0.0
      %1652 = vmatpush2.msra.mxu0 0.0
      %1653 = vmatprep.subr.mxu0 0.0
      %1654 = vmatpush2.msra.mxu0 0.0
      %1655 = vmatprep.subr.mxu0 0.0
      %1656 = vmatpush2.msra.mxu0 0.0
      %1657 = vmatprep.subr.mxu0 0.0
      %1658 = vmatpush2.msra.mxu0 0.0
      %1659 = vmatprep.subr.mxu0 0.0
      %1660 = vmatpush2.msra.mxu0 0.0
      %1661 = vmatprep.mubr.f32.mxu0 0.0
      %1662 = vmatmul.mubr.f32.gmra.mxu0 %v1592
      %v1663 = vpop.f32.mrf.mxu0
      %v1664 = vadd.f32 %v1589, %v1663
      %v1665 = vpop.f32.mrf.mxu0
      %1666 = vmatprep.mubr.f32.mxu0 0.0
      %1667 = vmatmul.mubr.f32.gmra.mxu0 %v1595
      %v1668 = vpop.f32.mrf.mxu0
      %v1669 = vadd.f32 %v1589, %v1668
      %v1670 = vpop.f32.mrf.mxu0
      %1671 = vdwg.mxu0
      %s1672 = scalar_lea.vmem %s11, 48
      %v1673 = vld [vmem:[%s1672] sm:$0xff]
      %v1674 = vld [vmem:[%s1672 + $0x8] sm:$0xff]
      %v1675 = vmul.f32 %v1664, %v1673
      %v1676 = vmul.f32 %v1669, %v1674
      %s1677 = scalar_lea.vmem %s12, 48
      %v1678 = vld [vmem:[%s1677] sm:$0xff]
      %v1679 = vld [vmem:[%s1677 + $0x8] sm:$0xff]
      %v1680 = vadd.f32 %v1675, %v1678
      %v1681 = vadd.f32 %v1676, %v1679
      %v1682 = vtanh.pop %v1680
      %v1683 = vtanh.pop %v1681
      %v1684 = vadd.f32 %v1682, %v1302
      %v1685 = vadd.f32 %v1683, %v1303
      %s1686 = scalar_lea.vmem %s8, 128
      %v1687 = vld [vmem:[%s1686] sm:$0xff]
      %v1688 = vld [vmem:[%s1686 + $0x8] sm:$0xff]
      %v1689 = vld [vmem:[%s1686 + $0x10] sm:$0xff]
      %v1690 = vld [vmem:[%s1686 + $0x18] sm:$0xff]
      %v1692 = vsel %vm930, %v1684, 0
      %v1695 = vsel %vm930, %v1685, 0
      %1697 = vmatprep.subr.mxu0 0.0
      %1698 = vmatpush1.msra.mxu0 0.0
      %1699 = vmatprep.subr.mxu0 0.0
      %1700 = vmatpush1.msra.mxu0 0.0
      %1701 = vmatprep.subr.mxu0 0.0
      %1702 = vmatpush1.msra.mxu0 0.0
      %1703 = vmatprep.subr.mxu0 0.0
      %1704 = vmatpush1.msra.mxu0 0.0
      %1705 = vmatprep.subr.mxu0 0.0
      %1706 = vmatpush1.msra.mxu0 0.0
      %1707 = vmatprep.subr.mxu0 0.0
      %1708 = vmatpush1.msra.mxu0 0.0
      %1709 = vmatprep.subr.mxu0 0.0
      %1710 = vmatpush1.msra.mxu0 0.0
      %1711 = vmatprep.subr.mxu0 0.0
      %1712 = vmatpush1.msra.mxu0 0.0
      %1713 = vmatprep.subr.mxu0 0.0
      %1714 = vmatpush1.msra.mxu0 0.0
      %1715 = vmatprep.subr.mxu0 0.0
      %1716 = vmatpush1.msra.mxu0 0.0
      %1717 = vmatprep.subr.mxu0 0.0
      %1718 = vmatpush1.msra.mxu0 0.0
      %1719 = vmatprep.subr.mxu0 0.0
      %1720 = vmatpush1.msra.mxu0 0.0
      %1721 = vmatprep.subr.mxu0 0.0
      %1722 = vmatpush1.msra.mxu0 %v1690
      %1723 = vmatprep.subr.mxu0 0.0
      %1724 = vmatpush1.msra.mxu0 %v1689
      %1725 = vmatprep.subr.mxu0 0.0
      %1726 = vmatpush1.msra.mxu0 %v1688
      %1727 = vmatprep.subr.mxu0 0.0
      %1728 = vmatpush1.msra.mxu0 %v1687
      %1729 = vmatprep.subr.mxu0 0.0
      %1730 = vmatpush2.msra.mxu0 0.0
      %1731 = vmatprep.subr.mxu0 0.0
      %1732 = vmatpush2.msra.mxu0 0.0
      %1733 = vmatprep.subr.mxu0 0.0
      %1734 = vmatpush2.msra.mxu0 0.0
      %1735 = vmatprep.subr.mxu0 0.0
      %1736 = vmatpush2.msra.mxu0 0.0
      %1737 = vmatprep.subr.mxu0 0.0
      %1738 = vmatpush2.msra.mxu0 0.0
      %1739 = vmatprep.subr.mxu0 0.0
      %1740 = vmatpush2.msra.mxu0 0.0
      %1741 = vmatprep.subr.mxu0 0.0
      %1742 = vmatpush2.msra.mxu0 0.0
      %1743 = vmatprep.subr.mxu0 0.0
      %1744 = vmatpush2.msra.mxu0 0.0
      %1745 = vmatprep.subr.mxu0 0.0
      %1746 = vmatpush2.msra.mxu0 0.0
      %1747 = vmatprep.subr.mxu0 0.0
      %1748 = vmatpush2.msra.mxu0 0.0
      %1749 = vmatprep.subr.mxu0 0.0
      %1750 = vmatpush2.msra.mxu0 0.0
      %1751 = vmatprep.subr.mxu0 0.0
      %1752 = vmatpush2.msra.mxu0 0.0
      %1753 = vmatprep.subr.mxu0 0.0
      %1754 = vmatpush2.msra.mxu0 0.0
      %1755 = vmatprep.subr.mxu0 0.0
      %1756 = vmatpush2.msra.mxu0 0.0
      %1757 = vmatprep.subr.mxu0 0.0
      %1758 = vmatpush2.msra.mxu0 0.0
      %1759 = vmatprep.subr.mxu0 0.0
      %1760 = vmatpush2.msra.mxu0 0.0
      %1761 = vmatprep.mubr.f32.mxu0 0.0
      %1762 = vmatmul.mubr.f32.gmra.mxu0 %v1692
      %v1763 = vpop.f32.mrf.mxu0
      %v1764 = vadd.f32 0.0, %v1763
      %v1765 = vpop.f32.mrf.mxu0
      %1766 = vmatprep.mubr.f32.mxu0 0.0
      %1767 = vmatmul.mubr.f32.gmra.mxu0 %v1695
      %v1768 = vpop.f32.mrf.mxu0
      %v1769 = vadd.f32 0.0, %v1768
      %v1770 = vpop.f32.mrf.mxu0
      %1771 = vdwg.mxu0
      %s1772 = scalar_lea.vmem %s9, 64
      %v1773 = vld [vmem:[%s1772] sm:$0xff]
      %v1774 = vld [vmem:[%s1772 + $0x8] sm:$0xff]
      %s1775 = scalar_lea.vmem %s10, 4
      %v1776 = vld [vmem:[%s1775] sm:$0x1]
      %v1778 = vlaneseq
      %v1779 = vshrl.u32 %v1778, 7
      %v1780 = vsub.s32 0, %v1779
      %v1781 = vrot.slane %v1776, %v1780
      %v1784 = vsel %vm834, %v1773, 0
      %v1787 = vsel %vm834, %v1774, 0
      %1789 = vmatprep.subr.mxu0 0.0
      %1790 = vmatpush1.msra.mxu0 0.0
      %1791 = vmatprep.subr.mxu0 0.0
      %1792 = vmatpush1.msra.mxu0 0.0
      %1793 = vmatprep.subr.mxu0 0.0
      %1794 = vmatpush1.msra.mxu0 0.0
      %1795 = vmatprep.subr.mxu0 0.0
      %1796 = vmatpush1.msra.mxu0 0.0
      %1797 = vmatprep.subr.mxu0 0.0
      %1798 = vmatpush1.msra.mxu0 0.0
      %1799 = vmatprep.subr.mxu0 0.0
      %1800 = vmatpush1.msra.mxu0 0.0
      %1801 = vmatprep.subr.mxu0 0.0
      %1802 = vmatpush1.msra.mxu0 0.0
      %1803 = vmatprep.subr.mxu0 0.0
      %1804 = vmatpush1.msra.mxu0 0.0
      %1805 = vmatprep.subr.mxu0 0.0
      %1806 = vmatpush1.msra.mxu0 0.0
      %1807 = vmatprep.subr.mxu0 0.0
      %1808 = vmatpush1.msra.mxu0 0.0
      %1809 = vmatprep.subr.mxu0 0.0
      %1810 = vmatpush1.msra.mxu0 0.0
      %1811 = vmatprep.subr.mxu0 0.0
      %1812 = vmatpush1.msra.mxu0 0.0
      %1813 = vmatprep.subr.mxu0 0.0
      %1814 = vmatpush1.msra.mxu0 0.0
      %1815 = vmatprep.subr.mxu0 0.0
      %1816 = vmatpush1.msra.mxu0 0.0
      %1817 = vmatprep.subr.mxu0 0.0
      %1818 = vmatpush1.msra.mxu0 %v1769
      %1819 = vmatprep.subr.mxu0 0.0
      %1820 = vmatpush1.msra.mxu0 %v1764
      %1821 = vmatprep.subr.mxu0 0.0
      %1822 = vmatpush2.msra.mxu0 0.0
      %1823 = vmatprep.subr.mxu0 0.0
      %1824 = vmatpush2.msra.mxu0 0.0
      %1825 = vmatprep.subr.mxu0 0.0
      %1826 = vmatpush2.msra.mxu0 0.0
      %1827 = vmatprep.subr.mxu0 0.0
      %1828 = vmatpush2.msra.mxu0 0.0
      %1829 = vmatprep.subr.mxu0 0.0
      %1830 = vmatpush2.msra.mxu0 0.0
      %1831 = vmatprep.subr.mxu0 0.0
      %1832 = vmatpush2.msra.mxu0 0.0
      %1833 = vmatprep.subr.mxu0 0.0
      %1834 = vmatpush2.msra.mxu0 0.0
      %1835 = vmatprep.subr.mxu0 0.0
      %1836 = vmatpush2.msra.mxu0 0.0
      %1837 = vmatprep.subr.mxu0 0.0
      %1838 = vmatpush2.msra.mxu0 0.0
      %1839 = vmatprep.subr.mxu0 0.0
      %1840 = vmatpush2.msra.mxu0 0.0
      %1841 = vmatprep.subr.mxu0 0.0
      %1842 = vmatpush2.msra.mxu0 0.0
      %1843 = vmatprep.subr.mxu0 0.0
      %1844 = vmatpush2.msra.mxu0 0.0
      %1845 = vmatprep.subr.mxu0 0.0
      %1846 = vmatpush2.msra.mxu0 0.0
      %1847 = vmatprep.subr.mxu0 0.0
      %1848 = vmatpush2.msra.mxu0 0.0
      %1849 = vmatprep.subr.mxu0 0.0
      %1850 = vmatpush2.msra.mxu0 0.0
      %1851 = vmatprep.subr.mxu0 0.0
      %1852 = vmatpush2.msra.mxu0 0.0
      %1853 = vmatprep.mubr.f32.mxu0 0.0
      %1854 = vmatmul.mubr.f32.gmra.mxu0 %v1784
      %v1855 = vpop.f32.mrf.mxu0
      %v1856 = vadd.f32 %v1781, %v1855
      %v1857 = vpop.f32.mrf.mxu0
      %1858 = vmatprep.mubr.f32.mxu0 0.0
      %1859 = vmatmul.mubr.f32.gmra.mxu0 %v1787
      %v1860 = vpop.f32.mrf.mxu0
      %v1861 = vadd.f32 %v1781, %v1860
      %v1862 = vpop.f32.mrf.mxu0
      %1863 = vdwg.mxu0
      %s1864 = scalar_lea.vmem %s11, 64
      %v1865 = vld [vmem:[%s1864] sm:$0xff]
      %v1866 = vld [vmem:[%s1864 + $0x8] sm:$0xff]
      %v1867 = vmul.f32 %v1856, %v1865
      %v1868 = vmul.f32 %v1861, %v1866
      %s1869 = scalar_lea.vmem %s12, 64
      %v1870 = vld [vmem:[%s1869] sm:$0xff]
      %v1871 = vld [vmem:[%s1869 + $0x8] sm:$0xff]
      %v1872 = vadd.f32 %v1867, %v1870
      %v1873 = vadd.f32 %v1868, %v1871
      %v1874 = vtanh.pop %v1872
      %v1875 = vtanh.pop %v1873
      %s1876 = scalar_lea.vmem %s8, 160
      %v1877 = vld [vmem:[%s1876] sm:$0xff]
      %v1878 = vld [vmem:[%s1876 + $0x8] sm:$0xff]
      %v1879 = vld [vmem:[%s1876 + $0x10] sm:$0xff]
      %v1880 = vld [vmem:[%s1876 + $0x18] sm:$0xff]
      %v1882 = vsel %vm930, %v1874, 0
      %v1885 = vsel %vm930, %v1875, 0
      %1887 = vmatprep.subr.mxu0 0.0
      %1888 = vmatpush1.msra.mxu0 0.0
      %1889 = vmatprep.subr.mxu0 0.0
      %1890 = vmatpush1.msra.mxu0 0.0
      %1891 = vmatprep.subr.mxu0 0.0
      %1892 = vmatpush1.msra.mxu0 0.0
      %1893 = vmatprep.subr.mxu0 0.0
      %1894 = vmatpush1.msra.mxu0 0.0
      %1895 = vmatprep.subr.mxu0 0.0
      %1896 = vmatpush1.msra.mxu0 0.0
      %1897 = vmatprep.subr.mxu0 0.0
      %1898 = vmatpush1.msra.mxu0 0.0
      %1899 = vmatprep.subr.mxu0 0.0
      %1900 = vmatpush1.msra.mxu0 0.0
      %1901 = vmatprep.subr.mxu0 0.0
      %1902 = vmatpush1.msra.mxu0 0.0
      %1903 = vmatprep.subr.mxu0 0.0
      %1904 = vmatpush1.msra.mxu0 0.0
      %1905 = vmatprep.subr.mxu0 0.0
      %1906 = vmatpush1.msra.mxu0 0.0
      %1907 = vmatprep.subr.mxu0 0.0
      %1908 = vmatpush1.msra.mxu0 0.0
      %1909 = vmatprep.subr.mxu0 0.0
      %1910 = vmatpush1.msra.mxu0 0.0
      %1911 = vmatprep.subr.mxu0 0.0
      %1912 = vmatpush1.msra.mxu0 %v1880
      %1913 = vmatprep.subr.mxu0 0.0
      %1914 = vmatpush1.msra.mxu0 %v1879
      %1915 = vmatprep.subr.mxu0 0.0
      %1916 = vmatpush1.msra.mxu0 %v1878
      %1917 = vmatprep.subr.mxu0 0.0
      %1918 = vmatpush1.msra.mxu0 %v1877
      %1919 = vmatprep.subr.mxu0 0.0
      %1920 = vmatpush2.msra.mxu0 0.0
      %1921 = vmatprep.subr.mxu0 0.0
      %1922 = vmatpush2.msra.mxu0 0.0
      %1923 = vmatprep.subr.mxu0 0.0
      %1924 = vmatpush2.msra.mxu0 0.0
      %1925 = vmatprep.subr.mxu0 0.0
      %1926 = vmatpush2.msra.mxu0 0.0
      %1927 = vmatprep.subr.mxu0 0.0
      %1928 = vmatpush2.msra.mxu0 0.0
      %1929 = vmatprep.subr.mxu0 0.0
      %1930 = vmatpush2.msra.mxu0 0.0
      %1931 = vmatprep.subr.mxu0 0.0
      %1932 = vmatpush2.msra.mxu0 0.0
      %1933 = vmatprep.subr.mxu0 0.0
      %1934 = vmatpush2.msra.mxu0 0.0
      %1935 = vmatprep.subr.mxu0 0.0
      %1936 = vmatpush2.msra.mxu0 0.0
      %1937 = vmatprep.subr.mxu0 0.0
      %1938 = vmatpush2.msra.mxu0 0.0
      %1939 = vmatprep.subr.mxu0 0.0
      %1940 = vmatpush2.msra.mxu0 0.0
      %1941 = vmatprep.subr.mxu0 0.0
      %1942 = vmatpush2.msra.mxu0 0.0
      %1943 = vmatprep.subr.mxu0 0.0
      %1944 = vmatpush2.msra.mxu0 0.0
      %1945 = vmatprep.subr.mxu0 0.0
      %1946 = vmatpush2.msra.mxu0 0.0
      %1947 = vmatprep.subr.mxu0 0.0
      %1948 = vmatpush2.msra.mxu0 0.0
      %1949 = vmatprep.subr.mxu0 0.0
      %1950 = vmatpush2.msra.mxu0 0.0
      %1951 = vmatprep.mubr.f32.mxu0 0.0
      %1952 = vmatmul.mubr.f32.gmra.mxu0 %v1882
      %v1953 = vpop.f32.mrf.mxu0
      %v1954 = vadd.f32 0.0, %v1953
      %v1955 = vpop.f32.mrf.mxu0
      %1956 = vmatprep.mubr.f32.mxu0 0.0
      %1957 = vmatmul.mubr.f32.gmra.mxu0 %v1885
      %v1958 = vpop.f32.mrf.mxu0
      %v1959 = vadd.f32 0.0, %v1958
      %v1960 = vpop.f32.mrf.mxu0
      %1961 = vdwg.mxu0
      %s1962 = scalar_lea.vmem %s9, 80
      %v1963 = vld [vmem:[%s1962] sm:$0xff]
      %v1964 = vld [vmem:[%s1962 + $0x8] sm:$0xff]
      %s1965 = scalar_lea.vmem %s10, 5
      %v1966 = vld [vmem:[%s1965] sm:$0x1]
      %v1968 = vlaneseq
      %v1969 = vshrl.u32 %v1968, 7
      %v1970 = vsub.s32 0, %v1969
      %v1971 = vrot.slane %v1966, %v1970
      %v1974 = vsel %vm834, %v1963, 0
      %v1977 = vsel %vm834, %v1964, 0
      %1979 = vmatprep.subr.mxu0 0.0
      %1980 = vmatpush1.msra.mxu0 0.0
      %1981 = vmatprep.subr.mxu0 0.0
      %1982 = vmatpush1.msra.mxu0 0.0
      %1983 = vmatprep.subr.mxu0 0.0
      %1984 = vmatpush1.msra.mxu0 0.0
      %1985 = vmatprep.subr.mxu0 0.0
      %1986 = vmatpush1.msra.mxu0 0.0
      %1987 = vmatprep.subr.mxu0 0.0
      %1988 = vmatpush1.msra.mxu0 0.0
      %1989 = vmatprep.subr.mxu0 0.0
      %1990 = vmatpush1.msra.mxu0 0.0
      %1991 = vmatprep.subr.mxu0 0.0
      %1992 = vmatpush1.msra.mxu0 0.0
      %1993 = vmatprep.subr.mxu0 0.0
      %1994 = vmatpush1.msra.mxu0 0.0
      %1995 = vmatprep.subr.mxu0 0.0
      %1996 = vmatpush1.msra.mxu0 0.0
      %1997 = vmatprep.subr.mxu0 0.0
      %1998 = vmatpush1.msra.mxu0 0.0
      %1999 = vmatprep.subr.mxu0 0.0
      %2000 = vmatpush1.msra.mxu0 0.0
      %2001 = vmatprep.subr.mxu0 0.0
      %2002 = vmatpush1.msra.mxu0 0.0
      %2003 = vmatprep.subr.mxu0 0.0
      %2004 = vmatpush1.msra.mxu0 0.0
      %2005 = vmatprep.subr.mxu0 0.0
      %2006 = vmatpush1.msra.mxu0 0.0
      %2007 = vmatprep.subr.mxu0 0.0
      %2008 = vmatpush1.msra.mxu0 %v1959
      %2009 = vmatprep.subr.mxu0 0.0
      %2010 = vmatpush1.msra.mxu0 %v1954
      %2011 = vmatprep.subr.mxu0 0.0
      %2012 = vmatpush2.msra.mxu0 0.0
      %2013 = vmatprep.subr.mxu0 0.0
      %2014 = vmatpush2.msra.mxu0 0.0
      %2015 = vmatprep.subr.mxu0 0.0
      %2016 = vmatpush2.msra.mxu0 0.0
      %2017 = vmatprep.subr.mxu0 0.0
      %2018 = vmatpush2.msra.mxu0 0.0
      %2019 = vmatprep.subr.mxu0 0.0
      %2020 = vmatpush2.msra.mxu0 0.0
      %2021 = vmatprep.subr.mxu0 0.0
      %2022 = vmatpush2.msra.mxu0 0.0
      %2023 = vmatprep.subr.mxu0 0.0
      %2024 = vmatpush2.msra.mxu0 0.0
      %2025 = vmatprep.subr.mxu0 0.0
      %2026 = vmatpush2.msra.mxu0 0.0
      %2027 = vmatprep.subr.mxu0 0.0
      %2028 = vmatpush2.msra.mxu0 0.0
      %2029 = vmatprep.subr.mxu0 0.0
      %2030 = vmatpush2.msra.mxu0 0.0
      %2031 = vmatprep.subr.mxu0 0.0
      %2032 = vmatpush2.msra.mxu0 0.0
      %2033 = vmatprep.subr.mxu0 0.0
      %2034 = vmatpush2.msra.mxu0 0.0
      %2035 = vmatprep.subr.mxu0 0.0
      %2036 = vmatpush2.msra.mxu0 0.0
      %2037 = vmatprep.subr.mxu0 0.0
      %2038 = vmatpush2.msra.mxu0 0.0
      %2039 = vmatprep.subr.mxu0 0.0
      %2040 = vmatpush2.msra.mxu0 0.0
      %2041 = vmatprep.subr.mxu0 0.0
      %2042 = vmatpush2.msra.mxu0 0.0
      %2043 = vmatprep.mubr.f32.mxu0 0.0
      %2044 = vmatmul.mubr.f32.gmra.mxu0 %v1974
      %v2045 = vpop.f32.mrf.mxu0
      %v2046 = vadd.f32 %v1971, %v2045
      %v2047 = vpop.f32.mrf.mxu0
      %2048 = vmatprep.mubr.f32.mxu0 0.0
      %2049 = vmatmul.mubr.f32.gmra.mxu0 %v1977
      %v2050 = vpop.f32.mrf.mxu0
      %v2051 = vadd.f32 %v1971, %v2050
      %v2052 = vpop.f32.mrf.mxu0
      %2053 = vdwg.mxu0
      %s2054 = scalar_lea.vmem %s11, 80
      %v2055 = vld [vmem:[%s2054] sm:$0xff]
      %v2056 = vld [vmem:[%s2054 + $0x8] sm:$0xff]
      %v2057 = vmul.f32 %v2046, %v2055
      %v2058 = vmul.f32 %v2051, %v2056
      %s2059 = scalar_lea.vmem %s12, 80
      %v2060 = vld [vmem:[%s2059] sm:$0xff]
      %v2061 = vld [vmem:[%s2059 + $0x8] sm:$0xff]
      %v2062 = vadd.f32 %v2057, %v2060
      %v2063 = vadd.f32 %v2058, %v2061
      %v2064 = vtanh.pop %v2062
      %v2065 = vtanh.pop %v2063
      %v2066 = vadd.f32 %v2064, %v1684
      %v2067 = vadd.f32 %v2065, %v1685
      %s2068 = scalar_lea.vmem %s8, 192
      %v2069 = vld [vmem:[%s2068] sm:$0xff]
      %v2070 = vld [vmem:[%s2068 + $0x8] sm:$0xff]
      %v2071 = vld [vmem:[%s2068 + $0x10] sm:$0xff]
      %v2072 = vld [vmem:[%s2068 + $0x18] sm:$0xff]
      %v2074 = vsel %vm930, %v2066, 0
      %v2077 = vsel %vm930, %v2067, 0
      %2079 = vmatprep.subr.mxu0 0.0
      %2080 = vmatpush1.msra.mxu0 0.0
      %2081 = vmatprep.subr.mxu0 0.0
      %2082 = vmatpush1.msra.mxu0 0.0
      %2083 = vmatprep.subr.mxu0 0.0
      %2084 = vmatpush1.msra.mxu0 0.0
      %2085 = vmatprep.subr.mxu0 0.0
      %2086 = vmatpush1.msra.mxu0 0.0
      %2087 = vmatprep.subr.mxu0 0.0
      %2088 = vmatpush1.msra.mxu0 0.0
      %2089 = vmatprep.subr.mxu0 0.0
      %2090 = vmatpush1.msra.mxu0 0.0
      %2091 = vmatprep.subr.mxu0 0.0
      %2092 = vmatpush1.msra.mxu0 0.0
      %2093 = vmatprep.subr.mxu0 0.0
      %2094 = vmatpush1.msra.mxu0 0.0
      %2095 = vmatprep.subr.mxu0 0.0
      %2096 = vmatpush1.msra.mxu0 0.0
      %2097 = vmatprep.subr.mxu0 0.0
      %2098 = vmatpush1.msra.mxu0 0.0
      %2099 = vmatprep.subr.mxu0 0.0
      %2100 = vmatpush1.msra.mxu0 0.0
      %2101 = vmatprep.subr.mxu0 0.0
      %2102 = vmatpush1.msra.mxu0 0.0
      %2103 = vmatprep.subr.mxu0 0.0
      %2104 = vmatpush1.msra.mxu0 %v2072
      %2105 = vmatprep.subr.mxu0 0.0
      %2106 = vmatpush1.msra.mxu0 %v2071
      %2107 = vmatprep.subr.mxu0 0.0
      %2108 = vmatpush1.msra.mxu0 %v2070
      %2109 = vmatprep.subr.mxu0 0.0
      %2110 = vmatpush1.msra.mxu0 %v2069
      %2111 = vmatprep.subr.mxu0 0.0
      %2112 = vmatpush2.msra.mxu0 0.0
      %2113 = vmatprep.subr.mxu0 0.0
      %2114 = vmatpush2.msra.mxu0 0.0
      %2115 = vmatprep.subr.mxu0 0.0
      %2116 = vmatpush2.msra.mxu0 0.0
      %2117 = vmatprep.subr.mxu0 0.0
      %2118 = vmatpush2.msra.mxu0 0.0
      %2119 = vmatprep.subr.mxu0 0.0
      %2120 = vmatpush2.msra.mxu0 0.0
      %2121 = vmatprep.subr.mxu0 0.0
      %2122 = vmatpush2.msra.mxu0 0.0
      %2123 = vmatprep.subr.mxu0 0.0
      %2124 = vmatpush2.msra.mxu0 0.0
      %2125 = vmatprep.subr.mxu0 0.0
      %2126 = vmatpush2.msra.mxu0 0.0
      %2127 = vmatprep.subr.mxu0 0.0
      %2128 = vmatpush2.msra.mxu0 0.0
      %2129 = vmatprep.subr.mxu0 0.0
      %2130 = vmatpush2.msra.mxu0 0.0
      %2131 = vmatprep.subr.mxu0 0.0
      %2132 = vmatpush2.msra.mxu0 0.0
      %2133 = vmatprep.subr.mxu0 0.0
      %2134 = vmatpush2.msra.mxu0 0.0
      %2135 = vmatprep.subr.mxu0 0.0
      %2136 = vmatpush2.msra.mxu0 0.0
      %2137 = vmatprep.subr.mxu0 0.0
      %2138 = vmatpush2.msra.mxu0 0.0
      %2139 = vmatprep.subr.mxu0 0.0
      %2140 = vmatpush2.msra.mxu0 0.0
      %2141 = vmatprep.subr.mxu0 0.0
      %2142 = vmatpush2.msra.mxu0 0.0
      %2143 = vmatprep.mubr.f32.mxu0 0.0
      %2144 = vmatmul.mubr.f32.gmra.mxu0 %v2074
      %v2145 = vpop.f32.mrf.mxu0
      %v2146 = vadd.f32 0.0, %v2145
      %v2147 = vpop.f32.mrf.mxu0
      %2148 = vmatprep.mubr.f32.mxu0 0.0
      %2149 = vmatmul.mubr.f32.gmra.mxu0 %v2077
      %v2150 = vpop.f32.mrf.mxu0
      %v2151 = vadd.f32 0.0, %v2150
      %v2152 = vpop.f32.mrf.mxu0
      %2153 = vdwg.mxu0
      %s2154 = scalar_lea.vmem %s9, 96
      %v2155 = vld [vmem:[%s2154] sm:$0xff]
      %v2156 = vld [vmem:[%s2154 + $0x8] sm:$0xff]
      %s2157 = scalar_lea.vmem %s10, 6
      %v2158 = vld [vmem:[%s2157] sm:$0x1]
      %v2160 = vlaneseq
      %v2161 = vshrl.u32 %v2160, 7
      %v2162 = vsub.s32 0, %v2161
      %v2163 = vrot.slane %v2158, %v2162
      %v2166 = vsel %vm834, %v2155, 0
      %v2169 = vsel %vm834, %v2156, 0
      %2171 = vmatprep.subr.mxu0 0.0
      %2172 = vmatpush1.msra.mxu0 0.0
      %2173 = vmatprep.subr.mxu0 0.0
      %2174 = vmatpush1.msra.mxu0 0.0
      %2175 = vmatprep.subr.mxu0 0.0
      %2176 = vmatpush1.msra.mxu0 0.0
      %2177 = vmatprep.subr.mxu0 0.0
      %2178 = vmatpush1.msra.mxu0 0.0
      %2179 = vmatprep.subr.mxu0 0.0
      %2180 = vmatpush1.msra.mxu0 0.0
      %2181 = vmatprep.subr.mxu0 0.0
      %2182 = vmatpush1.msra.mxu0 0.0
      %2183 = vmatprep.subr.mxu0 0.0
      %2184 = vmatpush1.msra.mxu0 0.0
      %2185 = vmatprep.subr.mxu0 0.0
      %2186 = vmatpush1.msra.mxu0 0.0
      %2187 = vmatprep.subr.mxu0 0.0
      %2188 = vmatpush1.msra.mxu0 0.0
      %2189 = vmatprep.subr.mxu0 0.0
      %2190 = vmatpush1.msra.mxu0 0.0
      %2191 = vmatprep.subr.mxu0 0.0
      %2192 = vmatpush1.msra.mxu0 0.0
      %2193 = vmatprep.subr.mxu0 0.0
      %2194 = vmatpush1.msra.mxu0 0.0
      %2195 = vmatprep.subr.mxu0 0.0
      %2196 = vmatpush1.msra.mxu0 0.0
      %2197 = vmatprep.subr.mxu0 0.0
      %2198 = vmatpush1.msra.mxu0 0.0
      %2199 = vmatprep.subr.mxu0 0.0
      %2200 = vmatpush1.msra.mxu0 %v2151
      %2201 = vmatprep.subr.mxu0 0.0
      %2202 = vmatpush1.msra.mxu0 %v2146
      %2203 = vmatprep.subr.mxu0 0.0
      %2204 = vmatpush2.msra.mxu0 0.0
      %2205 = vmatprep.subr.mxu0 0.0
      %2206 = vmatpush2.msra.mxu0 0.0
      %2207 = vmatprep.subr.mxu0 0.0
      %2208 = vmatpush2.msra.mxu0 0.0
      %2209 = vmatprep.subr.mxu0 0.0
      %2210 = vmatpush2.msra.mxu0 0.0
      %2211 = vmatprep.subr.mxu0 0.0
      %2212 = vmatpush2.msra.mxu0 0.0
      %2213 = vmatprep.subr.mxu0 0.0
      %2214 = vmatpush2.msra.mxu0 0.0
      %2215 = vmatprep.subr.mxu0 0.0
      %2216 = vmatpush2.msra.mxu0 0.0
      %2217 = vmatprep.subr.mxu0 0.0
      %2218 = vmatpush2.msra.mxu0 0.0
      %2219 = vmatprep.subr.mxu0 0.0
      %2220 = vmatpush2.msra.mxu0 0.0
      %2221 = vmatprep.subr.mxu0 0.0
      %2222 = vmatpush2.msra.mxu0 0.0
      %2223 = vmatprep.subr.mxu0 0.0
      %2224 = vmatpush2.msra.mxu0 0.0
      %2225 = vmatprep.subr.mxu0 0.0
      %2226 = vmatpush2.msra.mxu0 0.0
      %2227 = vmatprep.subr.mxu0 0.0
      %2228 = vmatpush2.msra.mxu0 0.0
      %2229 = vmatprep.subr.mxu0 0.0
      %2230 = vmatpush2.msra.mxu0 0.0
      %2231 = vmatprep.subr.mxu0 0.0
      %2232 = vmatpush2.msra.mxu0 0.0
      %2233 = vmatprep.subr.mxu0 0.0
      %2234 = vmatpush2.msra.mxu0 0.0
      %2235 = vmatprep.mubr.f32.mxu0 0.0
      %2236 = vmatmul.mubr.f32.gmra.mxu0 %v2166
      %v2237 = vpop.f32.mrf.mxu0
      %v2238 = vadd.f32 %v2163, %v2237
      %v2239 = vpop.f32.mrf.mxu0
      %2240 = vmatprep.mubr.f32.mxu0 0.0
      %2241 = vmatmul.mubr.f32.gmra.mxu0 %v2169
      %v2242 = vpop.f32.mrf.mxu0
      %v2243 = vadd.f32 %v2163, %v2242
      %v2244 = vpop.f32.mrf.mxu0
      %2245 = vdwg.mxu0
      %s2246 = scalar_lea.vmem %s11, 96
      %v2247 = vld [vmem:[%s2246] sm:$0xff]
      %v2248 = vld [vmem:[%s2246 + $0x8] sm:$0xff]
      %v2249 = vmul.f32 %v2238, %v2247
      %v2250 = vmul.f32 %v2243, %v2248
      %s2251 = scalar_lea.vmem %s12, 96
      %v2252 = vld [vmem:[%s2251] sm:$0xff]
      %v2253 = vld [vmem:[%s2251 + $0x8] sm:$0xff]
      %v2254 = vadd.f32 %v2249, %v2252
      %v2255 = vadd.f32 %v2250, %v2253
      %v2256 = vtanh.pop %v2254
      %v2257 = vtanh.pop %v2255
      %s2258 = scalar_lea.vmem %s8, 224
      %v2259 = vld [vmem:[%s2258] sm:$0xff]
      %v2260 = vld [vmem:[%s2258 + $0x8] sm:$0xff]
      %v2261 = vld [vmem:[%s2258 + $0x10] sm:$0xff]
      %v2262 = vld [vmem:[%s2258 + $0x18] sm:$0xff]
      %v2264 = vsel %vm930, %v2256, 0
      %v2267 = vsel %vm930, %v2257, 0
      %2269 = vmatprep.subr.mxu0 0.0
      %2270 = vmatpush1.msra.mxu0 0.0
      %2271 = vmatprep.subr.mxu0 0.0
      %2272 = vmatpush1.msra.mxu0 0.0
      %2273 = vmatprep.subr.mxu0 0.0
      %2274 = vmatpush1.msra.mxu0 0.0
      %2275 = vmatprep.subr.mxu0 0.0
      %2276 = vmatpush1.msra.mxu0 0.0
      %2277 = vmatprep.subr.mxu0 0.0
      %2278 = vmatpush1.msra.mxu0 0.0
      %2279 = vmatprep.subr.mxu0 0.0
      %2280 = vmatpush1.msra.mxu0 0.0
      %2281 = vmatprep.subr.mxu0 0.0
      %2282 = vmatpush1.msra.mxu0 0.0
      %2283 = vmatprep.subr.mxu0 0.0
      %2284 = vmatpush1.msra.mxu0 0.0
      %2285 = vmatprep.subr.mxu0 0.0
      %2286 = vmatpush1.msra.mxu0 0.0
      %2287 = vmatprep.subr.mxu0 0.0
      %2288 = vmatpush1.msra.mxu0 0.0
      %2289 = vmatprep.subr.mxu0 0.0
      %2290 = vmatpush1.msra.mxu0 0.0
      %2291 = vmatprep.subr.mxu0 0.0
      %2292 = vmatpush1.msra.mxu0 0.0
      %2293 = vmatprep.subr.mxu0 0.0
      %2294 = vmatpush1.msra.mxu0 %v2262
      %2295 = vmatprep.subr.mxu0 0.0
      %2296 = vmatpush1.msra.mxu0 %v2261
      %2297 = vmatprep.subr.mxu0 0.0
      %2298 = vmatpush1.msra.mxu0 %v2260
      %2299 = vmatprep.subr.mxu0 0.0
      %2300 = vmatpush1.msra.mxu0 %v2259
      %2301 = vmatprep.subr.mxu0 0.0
      %2302 = vmatpush2.msra.mxu0 0.0
      %2303 = vmatprep.subr.mxu0 0.0
      %2304 = vmatpush2.msra.mxu0 0.0
      %2305 = vmatprep.subr.mxu0 0.0
      %2306 = vmatpush2.msra.mxu0 0.0
      %2307 = vmatprep.subr.mxu0 0.0
      %2308 = vmatpush2.msra.mxu0 0.0
      %2309 = vmatprep.subr.mxu0 0.0
      %2310 = vmatpush2.msra.mxu0 0.0
      %2311 = vmatprep.subr.mxu0 0.0
      %2312 = vmatpush2.msra.mxu0 0.0
      %2313 = vmatprep.subr.mxu0 0.0
      %2314 = vmatpush2.msra.mxu0 0.0
      %2315 = vmatprep.subr.mxu0 0.0
      %2316 = vmatpush2.msra.mxu0 0.0
      %2317 = vmatprep.subr.mxu0 0.0
      %2318 = vmatpush2.msra.mxu0 0.0
      %2319 = vmatprep.subr.mxu0 0.0
      %2320 = vmatpush2.msra.mxu0 0.0
      %2321 = vmatprep.subr.mxu0 0.0
      %2322 = vmatpush2.msra.mxu0 0.0
      %2323 = vmatprep.subr.mxu0 0.0
      %2324 = vmatpush2.msra.mxu0 0.0
      %2325 = vmatprep.subr.mxu0 0.0
      %2326 = vmatpush2.msra.mxu0 0.0
      %2327 = vmatprep.subr.mxu0 0.0
      %2328 = vmatpush2.msra.mxu0 0.0
      %2329 = vmatprep.subr.mxu0 0.0
      %2330 = vmatpush2.msra.mxu0 0.0
      %2331 = vmatprep.subr.mxu0 0.0
      %2332 = vmatpush2.msra.mxu0 0.0
      %2333 = vmatprep.mubr.f32.mxu0 0.0
      %2334 = vmatmul.mubr.f32.gmra.mxu0 %v2264
      %v2335 = vpop.f32.mrf.mxu0
      %v2336 = vadd.f32 0.0, %v2335
      %v2337 = vpop.f32.mrf.mxu0
      %2338 = vmatprep.mubr.f32.mxu0 0.0
      %2339 = vmatmul.mubr.f32.gmra.mxu0 %v2267
      %v2340 = vpop.f32.mrf.mxu0
      %v2341 = vadd.f32 0.0, %v2340
      %v2342 = vpop.f32.mrf.mxu0
      %2343 = vdwg.mxu0
      %s2344 = scalar_lea.vmem %s9, 112
      %v2345 = vld [vmem:[%s2344] sm:$0xff]
      %v2346 = vld [vmem:[%s2344 + $0x8] sm:$0xff]
      %s2347 = scalar_lea.vmem %s10, 7
      %v2348 = vld [vmem:[%s2347] sm:$0x1]
      %v2350 = vlaneseq
      %v2351 = vshrl.u32 %v2350, 7
      %v2352 = vsub.s32 0, %v2351
      %v2353 = vrot.slane %v2348, %v2352
      %v2356 = vsel %vm834, %v2345, 0
      %v2359 = vsel %vm834, %v2346, 0
      %2361 = vmatprep.subr.mxu0 0.0
      %2362 = vmatpush1.msra.mxu0 0.0
      %2363 = vmatprep.subr.mxu0 0.0
      %2364 = vmatpush1.msra.mxu0 0.0
      %2365 = vmatprep.subr.mxu0 0.0
      %2366 = vmatpush1.msra.mxu0 0.0
      %2367 = vmatprep.subr.mxu0 0.0
      %2368 = vmatpush1.msra.mxu0 0.0
      %2369 = vmatprep.subr.mxu0 0.0
      %2370 = vmatpush1.msra.mxu0 0.0
      %2371 = vmatprep.subr.mxu0 0.0
      %2372 = vmatpush1.msra.mxu0 0.0
      %2373 = vmatprep.subr.mxu0 0.0
      %2374 = vmatpush1.msra.mxu0 0.0
      %2375 = vmatprep.subr.mxu0 0.0
      %2376 = vmatpush1.msra.mxu0 0.0
      %2377 = vmatprep.subr.mxu0 0.0
      %2378 = vmatpush1.msra.mxu0 0.0
      %2379 = vmatprep.subr.mxu0 0.0
      %2380 = vmatpush1.msra.mxu0 0.0
      %2381 = vmatprep.subr.mxu0 0.0
      %2382 = vmatpush1.msra.mxu0 0.0
      %2383 = vmatprep.subr.mxu0 0.0
      %2384 = vmatpush1.msra.mxu0 0.0
      %2385 = vmatprep.subr.mxu0 0.0
      %2386 = vmatpush1.msra.mxu0 0.0
      %2387 = vmatprep.subr.mxu0 0.0
      %2388 = vmatpush1.msra.mxu0 0.0
      %2389 = vmatprep.subr.mxu0 0.0
      %2390 = vmatpush1.msra.mxu0 %v2341
      %2391 = vmatprep.subr.mxu0 0.0
      %2392 = vmatpush1.msra.mxu0 %v2336
      %2393 = vmatprep.subr.mxu0 0.0
      %2394 = vmatpush2.msra.mxu0 0.0
      %2395 = vmatprep.subr.mxu0 0.0
      %2396 = vmatpush2.msra.mxu0 0.0
      %2397 = vmatprep.subr.mxu0 0.0
      %2398 = vmatpush2.msra.mxu0 0.0
      %2399 = vmatprep.subr.mxu0 0.0
      %2400 = vmatpush2.msra.mxu0 0.0
      %2401 = vmatprep.subr.mxu0 0.0
      %2402 = vmatpush2.msra.mxu0 0.0
      %2403 = vmatprep.subr.mxu0 0.0
      %2404 = vmatpush2.msra.mxu0 0.0
      %2405 = vmatprep.subr.mxu0 0.0
      %2406 = vmatpush2.msra.mxu0 0.0
      %2407 = vmatprep.subr.mxu0 0.0
      %2408 = vmatpush2.msra.mxu0 0.0
      %2409 = vmatprep.subr.mxu0 0.0
      %2410 = vmatpush2.msra.mxu0 0.0
      %2411 = vmatprep.subr.mxu0 0.0
      %2412 = vmatpush2.msra.mxu0 0.0
      %2413 = vmatprep.subr.mxu0 0.0
      %2414 = vmatpush2.msra.mxu0 0.0
      %2415 = vmatprep.subr.mxu0 0.0
      %2416 = vmatpush2.msra.mxu0 0.0
      %2417 = vmatprep.subr.mxu0 0.0
      %2418 = vmatpush2.msra.mxu0 0.0
      %2419 = vmatprep.subr.mxu0 0.0
      %2420 = vmatpush2.msra.mxu0 0.0
      %2421 = vmatprep.subr.mxu0 0.0
      %2422 = vmatpush2.msra.mxu0 0.0
      %2423 = vmatprep.subr.mxu0 0.0
      %2424 = vmatpush2.msra.mxu0 0.0
      %2425 = vmatprep.mubr.f32.mxu0 0.0
      %2426 = vmatmul.mubr.f32.gmra.mxu0 %v2356
      %v2427 = vpop.f32.mrf.mxu0
      %v2428 = vadd.f32 %v2353, %v2427
      %v2429 = vpop.f32.mrf.mxu0
      %2430 = vmatprep.mubr.f32.mxu0 0.0
      %2431 = vmatmul.mubr.f32.gmra.mxu0 %v2359
      %v2432 = vpop.f32.mrf.mxu0
      %v2433 = vadd.f32 %v2353, %v2432
      %v2434 = vpop.f32.mrf.mxu0
      %2435 = vdwg.mxu0
      %s2436 = scalar_lea.vmem %s11, 112
      %v2437 = vld [vmem:[%s2436] sm:$0xff]
      %v2438 = vld [vmem:[%s2436 + $0x8] sm:$0xff]
      %v2439 = vmul.f32 %v2428, %v2437
      %v2440 = vmul.f32 %v2433, %v2438
      %s2441 = scalar_lea.vmem %s12, 112
      %v2442 = vld [vmem:[%s2441] sm:$0xff]
      %v2443 = vld [vmem:[%s2441 + $0x8] sm:$0xff]
      %v2444 = vadd.f32 %v2439, %v2442
      %v2445 = vadd.f32 %v2440, %v2443
      %v2446 = vtanh.pop %v2444
      %v2447 = vtanh.pop %v2445
      %v2448 = vadd.f32 %v2446, %v2066
      %v2449 = vadd.f32 %v2447, %v2067
      %s2450 = scalar_lea.vmem %s8, 256
      %v2451 = vld [vmem:[%s2450] sm:$0xff]
      %v2452 = vld [vmem:[%s2450 + $0x8] sm:$0xff]
      %v2453 = vld [vmem:[%s2450 + $0x10] sm:$0xff]
      %v2454 = vld [vmem:[%s2450 + $0x18] sm:$0xff]
      %v2456 = vsel %vm930, %v2448, 0
      %v2459 = vsel %vm930, %v2449, 0
      %2461 = vmatprep.subr.mxu0 0.0
      %2462 = vmatpush1.msra.mxu0 0.0
      %2463 = vmatprep.subr.mxu0 0.0
      %2464 = vmatpush1.msra.mxu0 0.0
      %2465 = vmatprep.subr.mxu0 0.0
      %2466 = vmatpush1.msra.mxu0 0.0
      %2467 = vmatprep.subr.mxu0 0.0
      %2468 = vmatpush1.msra.mxu0 0.0
      %2469 = vmatprep.subr.mxu0 0.0
      %2470 = vmatpush1.msra.mxu0 0.0
      %2471 = vmatprep.subr.mxu0 0.0
      %2472 = vmatpush1.msra.mxu0 0.0
      %2473 = vmatprep.subr.mxu0 0.0
      %2474 = vmatpush1.msra.mxu0 0.0
      %2475 = vmatprep.subr.mxu0 0.0
      %2476 = vmatpush1.msra.mxu0 0.0
      %2477 = vmatprep.subr.mxu0 0.0
      %2478 = vmatpush1.msra.mxu0 0.0
      %2479 = vmatprep.subr.mxu0 0.0
      %2480 = vmatpush1.msra.mxu0 0.0
      %2481 = vmatprep.subr.mxu0 0.0
      %2482 = vmatpush1.msra.mxu0 0.0
      %2483 = vmatprep.subr.mxu0 0.0
      %2484 = vmatpush1.msra.mxu0 0.0
      %2485 = vmatprep.subr.mxu0 0.0
      %2486 = vmatpush1.msra.mxu0 %v2454
      %2487 = vmatprep.subr.mxu0 0.0
      %2488 = vmatpush1.msra.mxu0 %v2453
      %2489 = vmatprep.subr.mxu0 0.0
      %2490 = vmatpush1.msra.mxu0 %v2452
      %2491 = vmatprep.subr.mxu0 0.0
      %2492 = vmatpush1.msra.mxu0 %v2451
      %2493 = vmatprep.subr.mxu0 0.0
      %2494 = vmatpush2.msra.mxu0 0.0
      %2495 = vmatprep.subr.mxu0 0.0
      %2496 = vmatpush2.msra.mxu0 0.0
      %2497 = vmatprep.subr.mxu0 0.0
      %2498 = vmatpush2.msra.mxu0 0.0
      %2499 = vmatprep.subr.mxu0 0.0
      %2500 = vmatpush2.msra.mxu0 0.0
      %2501 = vmatprep.subr.mxu0 0.0
      %2502 = vmatpush2.msra.mxu0 0.0
      %2503 = vmatprep.subr.mxu0 0.0
      %2504 = vmatpush2.msra.mxu0 0.0
      %2505 = vmatprep.subr.mxu0 0.0
      %2506 = vmatpush2.msra.mxu0 0.0
      %2507 = vmatprep.subr.mxu0 0.0
      %2508 = vmatpush2.msra.mxu0 0.0
      %2509 = vmatprep.subr.mxu0 0.0
      %2510 = vmatpush2.msra.mxu0 0.0
      %2511 = vmatprep.subr.mxu0 0.0
      %2512 = vmatpush2.msra.mxu0 0.0
      %2513 = vmatprep.subr.mxu0 0.0
      %2514 = vmatpush2.msra.mxu0 0.0
      %2515 = vmatprep.subr.mxu0 0.0
      %2516 = vmatpush2.msra.mxu0 0.0
      %2517 = vmatprep.subr.mxu0 0.0
      %2518 = vmatpush2.msra.mxu0 0.0
      %2519 = vmatprep.subr.mxu0 0.0
      %2520 = vmatpush2.msra.mxu0 0.0
      %2521 = vmatprep.subr.mxu0 0.0
      %2522 = vmatpush2.msra.mxu0 0.0
      %2523 = vmatprep.subr.mxu0 0.0
      %2524 = vmatpush2.msra.mxu0 0.0
      %2525 = vmatprep.mubr.f32.mxu0 0.0
      %2526 = vmatmul.mubr.f32.gmra.mxu0 %v2456
      %v2527 = vpop.f32.mrf.mxu0
      %v2528 = vadd.f32 0.0, %v2527
      %v2529 = vpop.f32.mrf.mxu0
      %2530 = vmatprep.mubr.f32.mxu0 0.0
      %2531 = vmatmul.mubr.f32.gmra.mxu0 %v2459
      %v2532 = vpop.f32.mrf.mxu0
      %v2533 = vadd.f32 0.0, %v2532
      %v2534 = vpop.f32.mrf.mxu0
      %2535 = vdwg.mxu0
      %s2536 = scalar_lea.vmem %s9, 128
      %v2537 = vld [vmem:[%s2536] sm:$0xff]
      %v2538 = vld [vmem:[%s2536 + $0x8] sm:$0xff]
      %s2539 = scalar_lea.vmem %s10, 8
      %v2540 = vld [vmem:[%s2539] sm:$0x1]
      %v2542 = vlaneseq
      %v2543 = vshrl.u32 %v2542, 7
      %v2544 = vsub.s32 0, %v2543
      %v2545 = vrot.slane %v2540, %v2544
      %v2548 = vsel %vm834, %v2537, 0
      %v2551 = vsel %vm834, %v2538, 0
      %2553 = vmatprep.subr.mxu0 0.0
      %2554 = vmatpush1.msra.mxu0 0.0
      %2555 = vmatprep.subr.mxu0 0.0
      %2556 = vmatpush1.msra.mxu0 0.0
      %2557 = vmatprep.subr.mxu0 0.0
      %2558 = vmatpush1.msra.mxu0 0.0
      %2559 = vmatprep.subr.mxu0 0.0
      %2560 = vmatpush1.msra.mxu0 0.0
      %2561 = vmatprep.subr.mxu0 0.0
      %2562 = vmatpush1.msra.mxu0 0.0
      %2563 = vmatprep.subr.mxu0 0.0
      %2564 = vmatpush1.msra.mxu0 0.0
      %2565 = vmatprep.subr.mxu0 0.0
      %2566 = vmatpush1.msra.mxu0 0.0
      %2567 = vmatprep.subr.mxu0 0.0
      %2568 = vmatpush1.msra.mxu0 0.0
      %2569 = vmatprep.subr.mxu0 0.0
      %2570 = vmatpush1.msra.mxu0 0.0
      %2571 = vmatprep.subr.mxu0 0.0
      %2572 = vmatpush1.msra.mxu0 0.0
      %2573 = vmatprep.subr.mxu0 0.0
      %2574 = vmatpush1.msra.mxu0 0.0
      %2575 = vmatprep.subr.mxu0 0.0
      %2576 = vmatpush1.msra.mxu0 0.0
      %2577 = vmatprep.subr.mxu0 0.0
      %2578 = vmatpush1.msra.mxu0 0.0
      %2579 = vmatprep.subr.mxu0 0.0
      %2580 = vmatpush1.msra.mxu0 0.0
      %2581 = vmatprep.subr.mxu0 0.0
      %2582 = vmatpush1.msra.mxu0 %v2533
      %2583 = vmatprep.subr.mxu0 0.0
      %2584 = vmatpush1.msra.mxu0 %v2528
      %2585 = vmatprep.subr.mxu0 0.0
      %2586 = vmatpush2.msra.mxu0 0.0
      %2587 = vmatprep.subr.mxu0 0.0
      %2588 = vmatpush2.msra.mxu0 0.0
      %2589 = vmatprep.subr.mxu0 0.0
      %2590 = vmatpush2.msra.mxu0 0.0
      %2591 = vmatprep.subr.mxu0 0.0
      %2592 = vmatpush2.msra.mxu0 0.0
      %2593 = vmatprep.subr.mxu0 0.0
      %2594 = vmatpush2.msra.mxu0 0.0
      %2595 = vmatprep.subr.mxu0 0.0
      %2596 = vmatpush2.msra.mxu0 0.0
      %2597 = vmatprep.subr.mxu0 0.0
      %2598 = vmatpush2.msra.mxu0 0.0
      %2599 = vmatprep.subr.mxu0 0.0
      %2600 = vmatpush2.msra.mxu0 0.0
      %2601 = vmatprep.subr.mxu0 0.0
      %2602 = vmatpush2.msra.mxu0 0.0
      %2603 = vmatprep.subr.mxu0 0.0
      %2604 = vmatpush2.msra.mxu0 0.0
      %2605 = vmatprep.subr.mxu0 0.0
      %2606 = vmatpush2.msra.mxu0 0.0
      %2607 = vmatprep.subr.mxu0 0.0
      %2608 = vmatpush2.msra.mxu0 0.0
      %2609 = vmatprep.subr.mxu0 0.0
      %2610 = vmatpush2.msra.mxu0 0.0
      %2611 = vmatprep.subr.mxu0 0.0
      %2612 = vmatpush2.msra.mxu0 0.0
      %2613 = vmatprep.subr.mxu0 0.0
      %2614 = vmatpush2.msra.mxu0 0.0
      %2615 = vmatprep.subr.mxu0 0.0
      %2616 = vmatpush2.msra.mxu0 0.0
      %2617 = vmatprep.mubr.f32.mxu0 0.0
      %2618 = vmatmul.mubr.f32.gmra.mxu0 %v2548
      %v2619 = vpop.f32.mrf.mxu0
      %v2620 = vadd.f32 %v2545, %v2619
      %v2621 = vpop.f32.mrf.mxu0
      %2622 = vmatprep.mubr.f32.mxu0 0.0
      %2623 = vmatmul.mubr.f32.gmra.mxu0 %v2551
      %v2624 = vpop.f32.mrf.mxu0
      %v2625 = vadd.f32 %v2545, %v2624
      %v2626 = vpop.f32.mrf.mxu0
      %2627 = vdwg.mxu0
      %s2628 = scalar_lea.vmem %s11, 128
      %v2629 = vld [vmem:[%s2628] sm:$0xff]
      %v2630 = vld [vmem:[%s2628 + $0x8] sm:$0xff]
      %v2631 = vmul.f32 %v2620, %v2629
      %v2632 = vmul.f32 %v2625, %v2630
      %s2633 = scalar_lea.vmem %s12, 128
      %v2634 = vld [vmem:[%s2633] sm:$0xff]
      %v2635 = vld [vmem:[%s2633 + $0x8] sm:$0xff]
      %v2636 = vadd.f32 %v2631, %v2634
      %v2637 = vadd.f32 %v2632, %v2635
      %v2638 = vtanh.pop %v2636
      %v2639 = vtanh.pop %v2637
      %s2640 = scalar_lea.vmem %s8, 288
      %v2641 = vld [vmem:[%s2640] sm:$0xff]
      %v2642 = vld [vmem:[%s2640 + $0x8] sm:$0xff]
      %v2643 = vld [vmem:[%s2640 + $0x10] sm:$0xff]
      %v2644 = vld [vmem:[%s2640 + $0x18] sm:$0xff]
      %v2646 = vsel %vm930, %v2638, 0
      %v2649 = vsel %vm930, %v2639, 0
      %2651 = vmatprep.subr.mxu0 0.0
      %2652 = vmatpush1.msra.mxu0 0.0
      %2653 = vmatprep.subr.mxu0 0.0
      %2654 = vmatpush1.msra.mxu0 0.0
      %2655 = vmatprep.subr.mxu0 0.0
      %2656 = vmatpush1.msra.mxu0 0.0
      %2657 = vmatprep.subr.mxu0 0.0
      %2658 = vmatpush1.msra.mxu0 0.0
      %2659 = vmatprep.subr.mxu0 0.0
      %2660 = vmatpush1.msra.mxu0 0.0
      %2661 = vmatprep.subr.mxu0 0.0
      %2662 = vmatpush1.msra.mxu0 0.0
      %2663 = vmatprep.subr.mxu0 0.0
      %2664 = vmatpush1.msra.mxu0 0.0
      %2665 = vmatprep.subr.mxu0 0.0
      %2666 = vmatpush1.msra.mxu0 0.0
      %2667 = vmatprep.subr.mxu0 0.0
      %2668 = vmatpush1.msra.mxu0 0.0
      %2669 = vmatprep.subr.mxu0 0.0
      %2670 = vmatpush1.msra.mxu0 0.0
      %2671 = vmatprep.subr.mxu0 0.0
      %2672 = vmatpush1.msra.mxu0 0.0
      %2673 = vmatprep.subr.mxu0 0.0
      %2674 = vmatpush1.msra.mxu0 0.0
      %2675 = vmatprep.subr.mxu0 0.0
      %2676 = vmatpush1.msra.mxu0 %v2644
      %2677 = vmatprep.subr.mxu0 0.0
      %2678 = vmatpush1.msra.mxu0 %v2643
      %2679 = vmatprep.subr.mxu0 0.0
      %2680 = vmatpush1.msra.mxu0 %v2642
      %2681 = vmatprep.subr.mxu0 0.0
      %2682 = vmatpush1.msra.mxu0 %v2641
      %2683 = vmatprep.subr.mxu0 0.0
      %2684 = vmatpush2.msra.mxu0 0.0
      %2685 = vmatprep.subr.mxu0 0.0
      %2686 = vmatpush2.msra.mxu0 0.0
      %2687 = vmatprep.subr.mxu0 0.0
      %2688 = vmatpush2.msra.mxu0 0.0
      %2689 = vmatprep.subr.mxu0 0.0
      %2690 = vmatpush2.msra.mxu0 0.0
      %2691 = vmatprep.subr.mxu0 0.0
      %2692 = vmatpush2.msra.mxu0 0.0
      %2693 = vmatprep.subr.mxu0 0.0
      %2694 = vmatpush2.msra.mxu0 0.0
      %2695 = vmatprep.subr.mxu0 0.0
      %2696 = vmatpush2.msra.mxu0 0.0
      %2697 = vmatprep.subr.mxu0 0.0
      %2698 = vmatpush2.msra.mxu0 0.0
      %2699 = vmatprep.subr.mxu0 0.0
      %2700 = vmatpush2.msra.mxu0 0.0
      %2701 = vmatprep.subr.mxu0 0.0
      %2702 = vmatpush2.msra.mxu0 0.0
      %2703 = vmatprep.subr.mxu0 0.0
      %2704 = vmatpush2.msra.mxu0 0.0
      %2705 = vmatprep.subr.mxu0 0.0
      %2706 = vmatpush2.msra.mxu0 0.0
      %2707 = vmatprep.subr.mxu0 0.0
      %2708 = vmatpush2.msra.mxu0 0.0
      %2709 = vmatprep.subr.mxu0 0.0
      %2710 = vmatpush2.msra.mxu0 0.0
      %2711 = vmatprep.subr.mxu0 0.0
      %2712 = vmatpush2.msra.mxu0 0.0
      %2713 = vmatprep.subr.mxu0 0.0
      %2714 = vmatpush2.msra.mxu0 0.0
      %2715 = vmatprep.mubr.f32.mxu0 0.0
      %2716 = vmatmul.mubr.f32.gmra.mxu0 %v2646
      %v2717 = vpop.f32.mrf.mxu0
      %v2718 = vadd.f32 0.0, %v2717
      %v2719 = vpop.f32.mrf.mxu0
      %2720 = vmatprep.mubr.f32.mxu0 0.0
      %2721 = vmatmul.mubr.f32.gmra.mxu0 %v2649
      %v2722 = vpop.f32.mrf.mxu0
      %v2723 = vadd.f32 0.0, %v2722
      %v2724 = vpop.f32.mrf.mxu0
      %2725 = vdwg.mxu0
      %s2726 = scalar_lea.vmem %s9, 144
      %v2727 = vld [vmem:[%s2726] sm:$0xff]
      %v2728 = vld [vmem:[%s2726 + $0x8] sm:$0xff]
      %s2729 = scalar_lea.vmem %s10, 9
      %v2730 = vld [vmem:[%s2729] sm:$0x1]
      %v2732 = vlaneseq
      %v2733 = vshrl.u32 %v2732, 7
      %v2734 = vsub.s32 0, %v2733
      %v2735 = vrot.slane %v2730, %v2734
      %v2738 = vsel %vm834, %v2727, 0
      %v2741 = vsel %vm834, %v2728, 0
      %2743 = vmatprep.subr.mxu0 0.0
      %2744 = vmatpush1.msra.mxu0 0.0
      %2745 = vmatprep.subr.mxu0 0.0
      %2746 = vmatpush1.msra.mxu0 0.0
      %2747 = vmatprep.subr.mxu0 0.0
      %2748 = vmatpush1.msra.mxu0 0.0
      %2749 = vmatprep.subr.mxu0 0.0
      %2750 = vmatpush1.msra.mxu0 0.0
      %2751 = vmatprep.subr.mxu0 0.0
      %2752 = vmatpush1.msra.mxu0 0.0
      %2753 = vmatprep.subr.mxu0 0.0
      %2754 = vmatpush1.msra.mxu0 0.0
      %2755 = vmatprep.subr.mxu0 0.0
      %2756 = vmatpush1.msra.mxu0 0.0
      %2757 = vmatprep.subr.mxu0 0.0
      %2758 = vmatpush1.msra.mxu0 0.0
      %2759 = vmatprep.subr.mxu0 0.0
      %2760 = vmatpush1.msra.mxu0 0.0
      %2761 = vmatprep.subr.mxu0 0.0
      %2762 = vmatpush1.msra.mxu0 0.0
      %2763 = vmatprep.subr.mxu0 0.0
      %2764 = vmatpush1.msra.mxu0 0.0
      %2765 = vmatprep.subr.mxu0 0.0
      %2766 = vmatpush1.msra.mxu0 0.0
      %2767 = vmatprep.subr.mxu0 0.0
      %2768 = vmatpush1.msra.mxu0 0.0
      %2769 = vmatprep.subr.mxu0 0.0
      %2770 = vmatpush1.msra.mxu0 0.0
      %2771 = vmatprep.subr.mxu0 0.0
      %2772 = vmatpush1.msra.mxu0 %v2723
      %2773 = vmatprep.subr.mxu0 0.0
      %2774 = vmatpush1.msra.mxu0 %v2718
      %2775 = vmatprep.subr.mxu0 0.0
      %2776 = vmatpush2.msra.mxu0 0.0
      %2777 = vmatprep.subr.mxu0 0.0
      %2778 = vmatpush2.msra.mxu0 0.0
      %2779 = vmatprep.subr.mxu0 0.0
      %2780 = vmatpush2.msra.mxu0 0.0
      %2781 = vmatprep.subr.mxu0 0.0
      %2782 = vmatpush2.msra.mxu0 0.0
      %2783 = vmatprep.subr.mxu0 0.0
      %2784 = vmatpush2.msra.mxu0 0.0
      %2785 = vmatprep.subr.mxu0 0.0
      %2786 = vmatpush2.msra.mxu0 0.0
      %2787 = vmatprep.subr.mxu0 0.0
      %2788 = vmatpush2.msra.mxu0 0.0
      %2789 = vmatprep.subr.mxu0 0.0
      %2790 = vmatpush2.msra.mxu0 0.0
      %2791 = vmatprep.subr.mxu0 0.0
      %2792 = vmatpush2.msra.mxu0 0.0
      %2793 = vmatprep.subr.mxu0 0.0
      %2794 = vmatpush2.msra.mxu0 0.0
      %2795 = vmatprep.subr.mxu0 0.0
      %2796 = vmatpush2.msra.mxu0 0.0
      %2797 = vmatprep.subr.mxu0 0.0
      %2798 = vmatpush2.msra.mxu0 0.0
      %2799 = vmatprep.subr.mxu0 0.0
      %2800 = vmatpush2.msra.mxu0 0.0
      %2801 = vmatprep.subr.mxu0 0.0
      %2802 = vmatpush2.msra.mxu0 0.0
      %2803 = vmatprep.subr.mxu0 0.0
      %2804 = vmatpush2.msra.mxu0 0.0
      %2805 = vmatprep.subr.mxu0 0.0
      %2806 = vmatpush2.msra.mxu0 0.0
      %2807 = vmatprep.mubr.f32.mxu0 0.0
      %2808 = vmatmul.mubr.f32.gmra.mxu0 %v2738
      %v2809 = vpop.f32.mrf.mxu0
      %v2810 = vadd.f32 %v2735, %v2809
      %v2811 = vpop.f32.mrf.mxu0
      %2812 = vmatprep.mubr.f32.mxu0 0.0
      %2813 = vmatmul.mubr.f32.gmra.mxu0 %v2741
      %v2814 = vpop.f32.mrf.mxu0
      %v2815 = vadd.f32 %v2735, %v2814
      %v2816 = vpop.f32.mrf.mxu0
      %2817 = vdwg.mxu0
      %s2818 = scalar_lea.vmem %s11, 144
      %v2819 = vld [vmem:[%s2818] sm:$0xff]
      %v2820 = vld [vmem:[%s2818 + $0x8] sm:$0xff]
      %v2821 = vmul.f32 %v2810, %v2819
      %v2822 = vmul.f32 %v2815, %v2820
      %s2823 = scalar_lea.vmem %s12, 144
      %v2824 = vld [vmem:[%s2823] sm:$0xff]
      %v2825 = vld [vmem:[%s2823 + $0x8] sm:$0xff]
      %v2826 = vadd.f32 %v2821, %v2824
      %v2827 = vadd.f32 %v2822, %v2825
      %v2828 = vtanh.pop %v2826
      %v2829 = vtanh.pop %v2827
      %v2830 = vadd.f32 %v2828, %v2448
      %v2831 = vadd.f32 %v2829, %v2449
      %s2832 = scalar_lea.vmem %s8, 320
      %v2833 = vld [vmem:[%s2832] sm:$0xff]
      %v2834 = vld [vmem:[%s2832 + $0x8] sm:$0xff]
      %v2835 = vld [vmem:[%s2832 + $0x10] sm:$0xff]
      %v2836 = vld [vmem:[%s2832 + $0x18] sm:$0xff]
      %v2838 = vsel %vm930, %v2830, 0
      %v2841 = vsel %vm930, %v2831, 0
      %2843 = vmatprep.subr.mxu0 0.0
      %2844 = vmatpush1.msra.mxu0 0.0
      %2845 = vmatprep.subr.mxu0 0.0
      %2846 = vmatpush1.msra.mxu0 0.0
      %2847 = vmatprep.subr.mxu0 0.0
      %2848 = vmatpush1.msra.mxu0 0.0
      %2849 = vmatprep.subr.mxu0 0.0
      %2850 = vmatpush1.msra.mxu0 0.0
      %2851 = vmatprep.subr.mxu0 0.0
      %2852 = vmatpush1.msra.mxu0 0.0
      %2853 = vmatprep.subr.mxu0 0.0
      %2854 = vmatpush1.msra.mxu0 0.0
      %2855 = vmatprep.subr.mxu0 0.0
      %2856 = vmatpush1.msra.mxu0 0.0
      %2857 = vmatprep.subr.mxu0 0.0
      %2858 = vmatpush1.msra.mxu0 0.0
      %2859 = vmatprep.subr.mxu0 0.0
      %2860 = vmatpush1.msra.mxu0 0.0
      %2861 = vmatprep.subr.mxu0 0.0
      %2862 = vmatpush1.msra.mxu0 0.0
      %2863 = vmatprep.subr.mxu0 0.0
      %2864 = vmatpush1.msra.mxu0 0.0
      %2865 = vmatprep.subr.mxu0 0.0
      %2866 = vmatpush1.msra.mxu0 0.0
      %2867 = vmatprep.subr.mxu0 0.0
      %2868 = vmatpush1.msra.mxu0 %v2836
      %2869 = vmatprep.subr.mxu0 0.0
      %2870 = vmatpush1.msra.mxu0 %v2835
      %2871 = vmatprep.subr.mxu0 0.0
      %2872 = vmatpush1.msra.mxu0 %v2834
      %2873 = vmatprep.subr.mxu0 0.0
      %2874 = vmatpush1.msra.mxu0 %v2833
      %2875 = vmatprep.subr.mxu0 0.0
      %2876 = vmatpush2.msra.mxu0 0.0
      %2877 = vmatprep.subr.mxu0 0.0
      %2878 = vmatpush2.msra.mxu0 0.0
      %2879 = vmatprep.subr.mxu0 0.0
      %2880 = vmatpush2.msra.mxu0 0.0
      %2881 = vmatprep.subr.mxu0 0.0
      %2882 = vmatpush2.msra.mxu0 0.0
      %2883 = vmatprep.subr.mxu0 0.0
      %2884 = vmatpush2.msra.mxu0 0.0
      %2885 = vmatprep.subr.mxu0 0.0
      %2886 = vmatpush2.msra.mxu0 0.0
      %2887 = vmatprep.subr.mxu0 0.0
      %2888 = vmatpush2.msra.mxu0 0.0
      %2889 = vmatprep.subr.mxu0 0.0
      %2890 = vmatpush2.msra.mxu0 0.0
      %2891 = vmatprep.subr.mxu0 0.0
      %2892 = vmatpush2.msra.mxu0 0.0
      %2893 = vmatprep.subr.mxu0 0.0
      %2894 = vmatpush2.msra.mxu0 0.0
      %2895 = vmatprep.subr.mxu0 0.0
      %2896 = vmatpush2.msra.mxu0 0.0
      %2897 = vmatprep.subr.mxu0 0.0
      %2898 = vmatpush2.msra.mxu0 0.0
      %2899 = vmatprep.subr.mxu0 0.0
      %2900 = vmatpush2.msra.mxu0 0.0
      %2901 = vmatprep.subr.mxu0 0.0
      %2902 = vmatpush2.msra.mxu0 0.0
      %2903 = vmatprep.subr.mxu0 0.0
      %2904 = vmatpush2.msra.mxu0 0.0
      %2905 = vmatprep.subr.mxu0 0.0
      %2906 = vmatpush2.msra.mxu0 0.0
      %2907 = vmatprep.mubr.f32.mxu0 0.0
      %2908 = vmatmul.mubr.f32.gmra.mxu0 %v2838
      %v2909 = vpop.f32.mrf.mxu0
      %v2910 = vadd.f32 0.0, %v2909
      %v2911 = vpop.f32.mrf.mxu0
      %2912 = vmatprep.mubr.f32.mxu0 0.0
      %2913 = vmatmul.mubr.f32.gmra.mxu0 %v2841
      %v2914 = vpop.f32.mrf.mxu0
      %v2915 = vadd.f32 0.0, %v2914
      %v2916 = vpop.f32.mrf.mxu0
      %2917 = vdwg.mxu0
      %s2918 = scalar_lea.vmem %s9, 160
      %v2919 = vld [vmem:[%s2918] sm:$0xff]
      %v2920 = vld [vmem:[%s2918 + $0x8] sm:$0xff]
      %s2921 = scalar_lea.vmem %s10, 10
      %v2922 = vld [vmem:[%s2921] sm:$0x1]
      %v2924 = vlaneseq
      %v2925 = vshrl.u32 %v2924, 7
      %v2926 = vsub.s32 0, %v2925
      %v2927 = vrot.slane %v2922, %v2926
      %v2930 = vsel %vm834, %v2919, 0
      %v2933 = vsel %vm834, %v2920, 0
      %2935 = vmatprep.subr.mxu0 0.0
      %2936 = vmatpush1.msra.mxu0 0.0
      %2937 = vmatprep.subr.mxu0 0.0
      %2938 = vmatpush1.msra.mxu0 0.0
      %2939 = vmatprep.subr.mxu0 0.0
      %2940 = vmatpush1.msra.mxu0 0.0
      %2941 = vmatprep.subr.mxu0 0.0
      %2942 = vmatpush1.msra.mxu0 0.0
      %2943 = vmatprep.subr.mxu0 0.0
      %2944 = vmatpush1.msra.mxu0 0.0
      %2945 = vmatprep.subr.mxu0 0.0
      %2946 = vmatpush1.msra.mxu0 0.0
      %2947 = vmatprep.subr.mxu0 0.0
      %2948 = vmatpush1.msra.mxu0 0.0
      %2949 = vmatprep.subr.mxu0 0.0
      %2950 = vmatpush1.msra.mxu0 0.0
      %2951 = vmatprep.subr.mxu0 0.0
      %2952 = vmatpush1.msra.mxu0 0.0
      %2953 = vmatprep.subr.mxu0 0.0
      %2954 = vmatpush1.msra.mxu0 0.0
      %2955 = vmatprep.subr.mxu0 0.0
      %2956 = vmatpush1.msra.mxu0 0.0
      %2957 = vmatprep.subr.mxu0 0.0
      %2958 = vmatpush1.msra.mxu0 0.0
      %2959 = vmatprep.subr.mxu0 0.0
      %2960 = vmatpush1.msra.mxu0 0.0
      %2961 = vmatprep.subr.mxu0 0.0
      %2962 = vmatpush1.msra.mxu0 0.0
      %2963 = vmatprep.subr.mxu0 0.0
      %2964 = vmatpush1.msra.mxu0 %v2915
      %2965 = vmatprep.subr.mxu0 0.0
      %2966 = vmatpush1.msra.mxu0 %v2910
      %2967 = vmatprep.subr.mxu0 0.0
      %2968 = vmatpush2.msra.mxu0 0.0
      %2969 = vmatprep.subr.mxu0 0.0
      %2970 = vmatpush2.msra.mxu0 0.0
      %2971 = vmatprep.subr.mxu0 0.0
      %2972 = vmatpush2.msra.mxu0 0.0
      %2973 = vmatprep.subr.mxu0 0.0
      %2974 = vmatpush2.msra.mxu0 0.0
      %2975 = vmatprep.subr.mxu0 0.0
      %2976 = vmatpush2.msra.mxu0 0.0
      %2977 = vmatprep.subr.mxu0 0.0
      %2978 = vmatpush2.msra.mxu0 0.0
      %2979 = vmatprep.subr.mxu0 0.0
      %2980 = vmatpush2.msra.mxu0 0.0
      %2981 = vmatprep.subr.mxu0 0.0
      %2982 = vmatpush2.msra.mxu0 0.0
      %2983 = vmatprep.subr.mxu0 0.0
      %2984 = vmatpush2.msra.mxu0 0.0
      %2985 = vmatprep.subr.mxu0 0.0
      %2986 = vmatpush2.msra.mxu0 0.0
      %2987 = vmatprep.subr.mxu0 0.0
      %2988 = vmatpush2.msra.mxu0 0.0
      %2989 = vmatprep.subr.mxu0 0.0
      %2990 = vmatpush2.msra.mxu0 0.0
      %2991 = vmatprep.subr.mxu0 0.0
      %2992 = vmatpush2.msra.mxu0 0.0
      %2993 = vmatprep.subr.mxu0 0.0
      %2994 = vmatpush2.msra.mxu0 0.0
      %2995 = vmatprep.subr.mxu0 0.0
      %2996 = vmatpush2.msra.mxu0 0.0
      %2997 = vmatprep.subr.mxu0 0.0
      %2998 = vmatpush2.msra.mxu0 0.0
      %2999 = vmatprep.mubr.f32.mxu0 0.0
      %3000 = vmatmul.mubr.f32.gmra.mxu0 %v2930
      %v3001 = vpop.f32.mrf.mxu0
      %v3002 = vadd.f32 %v2927, %v3001
      %v3003 = vpop.f32.mrf.mxu0
      %3004 = vmatprep.mubr.f32.mxu0 0.0
      %3005 = vmatmul.mubr.f32.gmra.mxu0 %v2933
      %v3006 = vpop.f32.mrf.mxu0
      %v3007 = vadd.f32 %v2927, %v3006
      %v3008 = vpop.f32.mrf.mxu0
      %3009 = vdwg.mxu0
      %s3010 = scalar_lea.vmem %s11, 160
      %v3011 = vld [vmem:[%s3010] sm:$0xff]
      %v3012 = vld [vmem:[%s3010 + $0x8] sm:$0xff]
      %v3013 = vmul.f32 %v3002, %v3011
      %v3014 = vmul.f32 %v3007, %v3012
      %s3015 = scalar_lea.vmem %s12, 160
      %v3016 = vld [vmem:[%s3015] sm:$0xff]
      %v3017 = vld [vmem:[%s3015 + $0x8] sm:$0xff]
      %v3018 = vadd.f32 %v3013, %v3016
      %v3019 = vadd.f32 %v3014, %v3017
      %v3020 = vtanh.pop %v3018
      %v3021 = vtanh.pop %v3019
      %s3022 = scalar_lea.vmem %s8, 352
      %v3023 = vld [vmem:[%s3022] sm:$0xff]
      %v3024 = vld [vmem:[%s3022 + $0x8] sm:$0xff]
      %v3025 = vld [vmem:[%s3022 + $0x10] sm:$0xff]
      %v3026 = vld [vmem:[%s3022 + $0x18] sm:$0xff]
      %v3028 = vsel %vm930, %v3020, 0
      %v3031 = vsel %vm930, %v3021, 0
      %3033 = vmatprep.subr.mxu0 0.0
      %3034 = vmatpush1.msra.mxu0 0.0
      %3035 = vmatprep.subr.mxu0 0.0
      %3036 = vmatpush1.msra.mxu0 0.0
      %3037 = vmatprep.subr.mxu0 0.0
      %3038 = vmatpush1.msra.mxu0 0.0
      %3039 = vmatprep.subr.mxu0 0.0
      %3040 = vmatpush1.msra.mxu0 0.0
      %3041 = vmatprep.subr.mxu0 0.0
      %3042 = vmatpush1.msra.mxu0 0.0
      %3043 = vmatprep.subr.mxu0 0.0
      %3044 = vmatpush1.msra.mxu0 0.0
      %3045 = vmatprep.subr.mxu0 0.0
      %3046 = vmatpush1.msra.mxu0 0.0
      %3047 = vmatprep.subr.mxu0 0.0
      %3048 = vmatpush1.msra.mxu0 0.0
      %3049 = vmatprep.subr.mxu0 0.0
      %3050 = vmatpush1.msra.mxu0 0.0
      %3051 = vmatprep.subr.mxu0 0.0
      %3052 = vmatpush1.msra.mxu0 0.0
      %3053 = vmatprep.subr.mxu0 0.0
      %3054 = vmatpush1.msra.mxu0 0.0
      %3055 = vmatprep.subr.mxu0 0.0
      %3056 = vmatpush1.msra.mxu0 0.0
      %3057 = vmatprep.subr.mxu0 0.0
      %3058 = vmatpush1.msra.mxu0 %v3026
      %3059 = vmatprep.subr.mxu0 0.0
      %3060 = vmatpush1.msra.mxu0 %v3025
      %3061 = vmatprep.subr.mxu0 0.0
      %3062 = vmatpush1.msra.mxu0 %v3024
      %3063 = vmatprep.subr.mxu0 0.0
      %3064 = vmatpush1.msra.mxu0 %v3023
      %3065 = vmatprep.subr.mxu0 0.0
      %3066 = vmatpush2.msra.mxu0 0.0
      %3067 = vmatprep.subr.mxu0 0.0
      %3068 = vmatpush2.msra.mxu0 0.0
      %3069 = vmatprep.subr.mxu0 0.0
      %3070 = vmatpush2.msra.mxu0 0.0
      %3071 = vmatprep.subr.mxu0 0.0
      %3072 = vmatpush2.msra.mxu0 0.0
      %3073 = vmatprep.subr.mxu0 0.0
      %3074 = vmatpush2.msra.mxu0 0.0
      %3075 = vmatprep.subr.mxu0 0.0
      %3076 = vmatpush2.msra.mxu0 0.0
      %3077 = vmatprep.subr.mxu0 0.0
      %3078 = vmatpush2.msra.mxu0 0.0
      %3079 = vmatprep.subr.mxu0 0.0
      %3080 = vmatpush2.msra.mxu0 0.0
      %3081 = vmatprep.subr.mxu0 0.0
      %3082 = vmatpush2.msra.mxu0 0.0
      %3083 = vmatprep.subr.mxu0 0.0
      %3084 = vmatpush2.msra.mxu0 0.0
      %3085 = vmatprep.subr.mxu0 0.0
      %3086 = vmatpush2.msra.mxu0 0.0
      %3087 = vmatprep.subr.mxu0 0.0
      %3088 = vmatpush2.msra.mxu0 0.0
      %3089 = vmatprep.subr.mxu0 0.0
      %3090 = vmatpush2.msra.mxu0 0.0
      %3091 = vmatprep.subr.mxu0 0.0
      %3092 = vmatpush2.msra.mxu0 0.0
      %3093 = vmatprep.subr.mxu0 0.0
      %3094 = vmatpush2.msra.mxu0 0.0
      %3095 = vmatprep.subr.mxu0 0.0
      %3096 = vmatpush2.msra.mxu0 0.0
      %3097 = vmatprep.mubr.f32.mxu0 0.0
      %3098 = vmatmul.mubr.f32.gmra.mxu0 %v3028
      %v3099 = vpop.f32.mrf.mxu0
      %v3100 = vadd.f32 0.0, %v3099
      %v3101 = vpop.f32.mrf.mxu0
      %3102 = vmatprep.mubr.f32.mxu0 0.0
      %3103 = vmatmul.mubr.f32.gmra.mxu0 %v3031
      %v3104 = vpop.f32.mrf.mxu0
      %v3105 = vadd.f32 0.0, %v3104
      %v3106 = vpop.f32.mrf.mxu0
      %3107 = vdwg.mxu0
      %s3108 = scalar_lea.vmem %s9, 176
      %v3109 = vld [vmem:[%s3108] sm:$0xff]
      %v3110 = vld [vmem:[%s3108 + $0x8] sm:$0xff]
      %s3111 = scalar_lea.vmem %s10, 11
      %v3112 = vld [vmem:[%s3111] sm:$0x1]
      %v3114 = vlaneseq
      %v3115 = vshrl.u32 %v3114, 7
      %v3116 = vsub.s32 0, %v3115
      %v3117 = vrot.slane %v3112, %v3116
      %v3120 = vsel %vm834, %v3109, 0
      %v3123 = vsel %vm834, %v3110, 0
      %3125 = vmatprep.subr.mxu0 0.0
      %3126 = vmatpush1.msra.mxu0 0.0
      %3127 = vmatprep.subr.mxu0 0.0
      %3128 = vmatpush1.msra.mxu0 0.0
      %3129 = vmatprep.subr.mxu0 0.0
      %3130 = vmatpush1.msra.mxu0 0.0
      %3131 = vmatprep.subr.mxu0 0.0
      %3132 = vmatpush1.msra.mxu0 0.0
      %3133 = vmatprep.subr.mxu0 0.0
      %3134 = vmatpush1.msra.mxu0 0.0
      %3135 = vmatprep.subr.mxu0 0.0
      %3136 = vmatpush1.msra.mxu0 0.0
      %3137 = vmatprep.subr.mxu0 0.0
      %3138 = vmatpush1.msra.mxu0 0.0
      %3139 = vmatprep.subr.mxu0 0.0
      %3140 = vmatpush1.msra.mxu0 0.0
      %3141 = vmatprep.subr.mxu0 0.0
      %3142 = vmatpush1.msra.mxu0 0.0
      %3143 = vmatprep.subr.mxu0 0.0
      %3144 = vmatpush1.msra.mxu0 0.0
      %3145 = vmatprep.subr.mxu0 0.0
      %3146 = vmatpush1.msra.mxu0 0.0
      %3147 = vmatprep.subr.mxu0 0.0
      %3148 = vmatpush1.msra.mxu0 0.0
      %3149 = vmatprep.subr.mxu0 0.0
      %3150 = vmatpush1.msra.mxu0 0.0
      %3151 = vmatprep.subr.mxu0 0.0
      %3152 = vmatpush1.msra.mxu0 0.0
      %3153 = vmatprep.subr.mxu0 0.0
      %3154 = vmatpush1.msra.mxu0 %v3105
      %3155 = vmatprep.subr.mxu0 0.0
      %3156 = vmatpush1.msra.mxu0 %v3100
      %3157 = vmatprep.subr.mxu0 0.0
      %3158 = vmatpush2.msra.mxu0 0.0
      %3159 = vmatprep.subr.mxu0 0.0
      %3160 = vmatpush2.msra.mxu0 0.0
      %3161 = vmatprep.subr.mxu0 0.0
      %3162 = vmatpush2.msra.mxu0 0.0
      %3163 = vmatprep.subr.mxu0 0.0
      %3164 = vmatpush2.msra.mxu0 0.0
      %3165 = vmatprep.subr.mxu0 0.0
      %3166 = vmatpush2.msra.mxu0 0.0
      %3167 = vmatprep.subr.mxu0 0.0
      %3168 = vmatpush2.msra.mxu0 0.0
      %3169 = vmatprep.subr.mxu0 0.0
      %3170 = vmatpush2.msra.mxu0 0.0
      %3171 = vmatprep.subr.mxu0 0.0
      %3172 = vmatpush2.msra.mxu0 0.0
      %3173 = vmatprep.subr.mxu0 0.0
      %3174 = vmatpush2.msra.mxu0 0.0
      %3175 = vmatprep.subr.mxu0 0.0
      %3176 = vmatpush2.msra.mxu0 0.0
      %3177 = vmatprep.subr.mxu0 0.0
      %3178 = vmatpush2.msra.mxu0 0.0
      %3179 = vmatprep.subr.mxu0 0.0
      %3180 = vmatpush2.msra.mxu0 0.0
      %3181 = vmatprep.subr.mxu0 0.0
      %3182 = vmatpush2.msra.mxu0 0.0
      %3183 = vmatprep.subr.mxu0 0.0
      %3184 = vmatpush2.msra.mxu0 0.0
      %3185 = vmatprep.subr.mxu0 0.0
      %3186 = vmatpush2.msra.mxu0 0.0
      %3187 = vmatprep.subr.mxu0 0.0
      %3188 = vmatpush2.msra.mxu0 0.0
      %3189 = vmatprep.mubr.f32.mxu0 0.0
      %3190 = vmatmul.mubr.f32.gmra.mxu0 %v3120
      %v3191 = vpop.f32.mrf.mxu0
      %v3192 = vadd.f32 %v3117, %v3191
      %v3193 = vpop.f32.mrf.mxu0
      %3194 = vmatprep.mubr.f32.mxu0 0.0
      %3195 = vmatmul.mubr.f32.gmra.mxu0 %v3123
      %v3196 = vpop.f32.mrf.mxu0
      %v3197 = vadd.f32 %v3117, %v3196
      %v3198 = vpop.f32.mrf.mxu0
      %3199 = vdwg.mxu0
      %s3200 = scalar_lea.vmem %s11, 176
      %v3201 = vld [vmem:[%s3200] sm:$0xff]
      %v3202 = vld [vmem:[%s3200 + $0x8] sm:$0xff]
      %v3203 = vmul.f32 %v3192, %v3201
      %v3204 = vmul.f32 %v3197, %v3202
      %s3205 = scalar_lea.vmem %s12, 176
      %v3206 = vld [vmem:[%s3205] sm:$0xff]
      %v3207 = vld [vmem:[%s3205 + $0x8] sm:$0xff]
      %v3208 = vadd.f32 %v3203, %v3206
      %v3209 = vadd.f32 %v3204, %v3207
      %v3210 = vtanh.pop %v3208
      %v3211 = vtanh.pop %v3209
      %v3212 = vadd.f32 %v3210, %v2830
      %v3213 = vadd.f32 %v3211, %v2831
      %s3214 = scalar_lea.vmem %s8, 384
      %v3215 = vld [vmem:[%s3214] sm:$0xff]
      %v3216 = vld [vmem:[%s3214 + $0x8] sm:$0xff]
      %v3217 = vld [vmem:[%s3214 + $0x10] sm:$0xff]
      %v3218 = vld [vmem:[%s3214 + $0x18] sm:$0xff]
      %v3220 = vsel %vm930, %v3212, 0
      %v3223 = vsel %vm930, %v3213, 0
      %3225 = vmatprep.subr.mxu0 0.0
      %3226 = vmatpush1.msra.mxu0 0.0
      %3227 = vmatprep.subr.mxu0 0.0
      %3228 = vmatpush1.msra.mxu0 0.0
      %3229 = vmatprep.subr.mxu0 0.0
      %3230 = vmatpush1.msra.mxu0 0.0
      %3231 = vmatprep.subr.mxu0 0.0
      %3232 = vmatpush1.msra.mxu0 0.0
      %3233 = vmatprep.subr.mxu0 0.0
      %3234 = vmatpush1.msra.mxu0 0.0
      %3235 = vmatprep.subr.mxu0 0.0
      %3236 = vmatpush1.msra.mxu0 0.0
      %3237 = vmatprep.subr.mxu0 0.0
      %3238 = vmatpush1.msra.mxu0 0.0
      %3239 = vmatprep.subr.mxu0 0.0
      %3240 = vmatpush1.msra.mxu0 0.0
      %3241 = vmatprep.subr.mxu0 0.0
      %3242 = vmatpush1.msra.mxu0 0.0
      %3243 = vmatprep.subr.mxu0 0.0
      %3244 = vmatpush1.msra.mxu0 0.0
      %3245 = vmatprep.subr.mxu0 0.0
      %3246 = vmatpush1.msra.mxu0 0.0
      %3247 = vmatprep.subr.mxu0 0.0
      %3248 = vmatpush1.msra.mxu0 0.0
      %3249 = vmatprep.subr.mxu0 0.0
      %3250 = vmatpush1.msra.mxu0 %v3218
      %3251 = vmatprep.subr.mxu0 0.0
      %3252 = vmatpush1.msra.mxu0 %v3217
      %3253 = vmatprep.subr.mxu0 0.0
      %3254 = vmatpush1.msra.mxu0 %v3216
      %3255 = vmatprep.subr.mxu0 0.0
      %3256 = vmatpush1.msra.mxu0 %v3215
      %3257 = vmatprep.subr.mxu0 0.0
      %3258 = vmatpush2.msra.mxu0 0.0
      %3259 = vmatprep.subr.mxu0 0.0
      %3260 = vmatpush2.msra.mxu0 0.0
      %3261 = vmatprep.subr.mxu0 0.0
      %3262 = vmatpush2.msra.mxu0 0.0
      %3263 = vmatprep.subr.mxu0 0.0
      %3264 = vmatpush2.msra.mxu0 0.0
      %3265 = vmatprep.subr.mxu0 0.0
      %3266 = vmatpush2.msra.mxu0 0.0
      %3267 = vmatprep.subr.mxu0 0.0
      %3268 = vmatpush2.msra.mxu0 0.0
      %3269 = vmatprep.subr.mxu0 0.0
      %3270 = vmatpush2.msra.mxu0 0.0
      %3271 = vmatprep.subr.mxu0 0.0
      %3272 = vmatpush2.msra.mxu0 0.0
      %3273 = vmatprep.subr.mxu0 0.0
      %3274 = vmatpush2.msra.mxu0 0.0
      %3275 = vmatprep.subr.mxu0 0.0
      %3276 = vmatpush2.msra.mxu0 0.0
      %3277 = vmatprep.subr.mxu0 0.0
      %3278 = vmatpush2.msra.mxu0 0.0
      %3279 = vmatprep.subr.mxu0 0.0
      %3280 = vmatpush2.msra.mxu0 0.0
      %3281 = vmatprep.subr.mxu0 0.0
      %3282 = vmatpush2.msra.mxu0 0.0
      %3283 = vmatprep.subr.mxu0 0.0
      %3284 = vmatpush2.msra.mxu0 0.0
      %3285 = vmatprep.subr.mxu0 0.0
      %3286 = vmatpush2.msra.mxu0 0.0
      %3287 = vmatprep.subr.mxu0 0.0
      %3288 = vmatpush2.msra.mxu0 0.0
      %3289 = vmatprep.mubr.f32.mxu0 0.0
      %3290 = vmatmul.mubr.f32.gmra.mxu0 %v3220
      %v3291 = vpop.f32.mrf.mxu0
      %v3292 = vadd.f32 0.0, %v3291
      %v3293 = vpop.f32.mrf.mxu0
      %3294 = vmatprep.mubr.f32.mxu0 0.0
      %3295 = vmatmul.mubr.f32.gmra.mxu0 %v3223
      %v3296 = vpop.f32.mrf.mxu0
      %v3297 = vadd.f32 0.0, %v3296
      %v3298 = vpop.f32.mrf.mxu0
      %3299 = vdwg.mxu0
      %s3300 = scalar_lea.vmem %s9, 192
      %v3301 = vld [vmem:[%s3300] sm:$0xff]
      %v3302 = vld [vmem:[%s3300 + $0x8] sm:$0xff]
      %s3303 = scalar_lea.vmem %s10, 12
      %v3304 = vld [vmem:[%s3303] sm:$0x1]
      %v3306 = vlaneseq
      %v3307 = vshrl.u32 %v3306, 7
      %v3308 = vsub.s32 0, %v3307
      %v3309 = vrot.slane %v3304, %v3308
      %v3312 = vsel %vm834, %v3301, 0
      %v3315 = vsel %vm834, %v3302, 0
      %3317 = vmatprep.subr.mxu0 0.0
      %3318 = vmatpush1.msra.mxu0 0.0
      %3319 = vmatprep.subr.mxu0 0.0
      %3320 = vmatpush1.msra.mxu0 0.0
      %3321 = vmatprep.subr.mxu0 0.0
      %3322 = vmatpush1.msra.mxu0 0.0
      %3323 = vmatprep.subr.mxu0 0.0
      %3324 = vmatpush1.msra.mxu0 0.0
      %3325 = vmatprep.subr.mxu0 0.0
      %3326 = vmatpush1.msra.mxu0 0.0
      %3327 = vmatprep.subr.mxu0 0.0
      %3328 = vmatpush1.msra.mxu0 0.0
      %3329 = vmatprep.subr.mxu0 0.0
      %3330 = vmatpush1.msra.mxu0 0.0
      %3331 = vmatprep.subr.mxu0 0.0
      %3332 = vmatpush1.msra.mxu0 0.0
      %3333 = vmatprep.subr.mxu0 0.0
      %3334 = vmatpush1.msra.mxu0 0.0
      %3335 = vmatprep.subr.mxu0 0.0
      %3336 = vmatpush1.msra.mxu0 0.0
      %3337 = vmatprep.subr.mxu0 0.0
      %3338 = vmatpush1.msra.mxu0 0.0
      %3339 = vmatprep.subr.mxu0 0.0
      %3340 = vmatpush1.msra.mxu0 0.0
      %3341 = vmatprep.subr.mxu0 0.0
      %3342 = vmatpush1.msra.mxu0 0.0
      %3343 = vmatprep.subr.mxu0 0.0
      %3344 = vmatpush1.msra.mxu0 0.0
      %3345 = vmatprep.subr.mxu0 0.0
      %3346 = vmatpush1.msra.mxu0 %v3297
      %3347 = vmatprep.subr.mxu0 0.0
      %3348 = vmatpush1.msra.mxu0 %v3292
      %3349 = vmatprep.subr.mxu0 0.0
      %3350 = vmatpush2.msra.mxu0 0.0
      %3351 = vmatprep.subr.mxu0 0.0
      %3352 = vmatpush2.msra.mxu0 0.0
      %3353 = vmatprep.subr.mxu0 0.0
      %3354 = vmatpush2.msra.mxu0 0.0
      %3355 = vmatprep.subr.mxu0 0.0
      %3356 = vmatpush2.msra.mxu0 0.0
      %3357 = vmatprep.subr.mxu0 0.0
      %3358 = vmatpush2.msra.mxu0 0.0
      %3359 = vmatprep.subr.mxu0 0.0
      %3360 = vmatpush2.msra.mxu0 0.0
      %3361 = vmatprep.subr.mxu0 0.0
      %3362 = vmatpush2.msra.mxu0 0.0
      %3363 = vmatprep.subr.mxu0 0.0
      %3364 = vmatpush2.msra.mxu0 0.0
      %3365 = vmatprep.subr.mxu0 0.0
      %3366 = vmatpush2.msra.mxu0 0.0
      %3367 = vmatprep.subr.mxu0 0.0
      %3368 = vmatpush2.msra.mxu0 0.0
      %3369 = vmatprep.subr.mxu0 0.0
      %3370 = vmatpush2.msra.mxu0 0.0
      %3371 = vmatprep.subr.mxu0 0.0
      %3372 = vmatpush2.msra.mxu0 0.0
      %3373 = vmatprep.subr.mxu0 0.0
      %3374 = vmatpush2.msra.mxu0 0.0
      %3375 = vmatprep.subr.mxu0 0.0
      %3376 = vmatpush2.msra.mxu0 0.0
      %3377 = vmatprep.subr.mxu0 0.0
      %3378 = vmatpush2.msra.mxu0 0.0
      %3379 = vmatprep.subr.mxu0 0.0
      %3380 = vmatpush2.msra.mxu0 0.0
      %3381 = vmatprep.mubr.f32.mxu0 0.0
      %3382 = vmatmul.mubr.f32.gmra.mxu0 %v3312
      %v3383 = vpop.f32.mrf.mxu0
      %v3384 = vadd.f32 %v3309, %v3383
      %v3385 = vpop.f32.mrf.mxu0
      %3386 = vmatprep.mubr.f32.mxu0 0.0
      %3387 = vmatmul.mubr.f32.gmra.mxu0 %v3315
      %v3388 = vpop.f32.mrf.mxu0
      %v3389 = vadd.f32 %v3309, %v3388
      %v3390 = vpop.f32.mrf.mxu0
      %3391 = vdwg.mxu0
      %s3392 = scalar_lea.vmem %s11, 192
      %v3393 = vld [vmem:[%s3392] sm:$0xff]
      %v3394 = vld [vmem:[%s3392 + $0x8] sm:$0xff]
      %v3395 = vmul.f32 %v3384, %v3393
      %v3396 = vmul.f32 %v3389, %v3394
      %s3397 = scalar_lea.vmem %s12, 192
      %v3398 = vld [vmem:[%s3397] sm:$0xff]
      %v3399 = vld [vmem:[%s3397 + $0x8] sm:$0xff]
      %v3400 = vadd.f32 %v3395, %v3398
      %v3401 = vadd.f32 %v3396, %v3399
      %v3402 = vtanh.pop %v3400
      %v3403 = vtanh.pop %v3401
      %s3404 = scalar_lea.vmem %s8, 416
      %v3405 = vld [vmem:[%s3404] sm:$0xff]
      %v3406 = vld [vmem:[%s3404 + $0x8] sm:$0xff]
      %v3407 = vld [vmem:[%s3404 + $0x10] sm:$0xff]
      %v3408 = vld [vmem:[%s3404 + $0x18] sm:$0xff]
      %v3410 = vsel %vm930, %v3402, 0
      %v3413 = vsel %vm930, %v3403, 0
      %3415 = vmatprep.subr.mxu0 0.0
      %3416 = vmatpush1.msra.mxu0 0.0
      %3417 = vmatprep.subr.mxu0 0.0
      %3418 = vmatpush1.msra.mxu0 0.0
      %3419 = vmatprep.subr.mxu0 0.0
      %3420 = vmatpush1.msra.mxu0 0.0
      %3421 = vmatprep.subr.mxu0 0.0
      %3422 = vmatpush1.msra.mxu0 0.0
      %3423 = vmatprep.subr.mxu0 0.0
      %3424 = vmatpush1.msra.mxu0 0.0
      %3425 = vmatprep.subr.mxu0 0.0
      %3426 = vmatpush1.msra.mxu0 0.0
      %3427 = vmatprep.subr.mxu0 0.0
      %3428 = vmatpush1.msra.mxu0 0.0
      %3429 = vmatprep.subr.mxu0 0.0
      %3430 = vmatpush1.msra.mxu0 0.0
      %3431 = vmatprep.subr.mxu0 0.0
      %3432 = vmatpush1.msra.mxu0 0.0
      %3433 = vmatprep.subr.mxu0 0.0
      %3434 = vmatpush1.msra.mxu0 0.0
      %3435 = vmatprep.subr.mxu0 0.0
      %3436 = vmatpush1.msra.mxu0 0.0
      %3437 = vmatprep.subr.mxu0 0.0
      %3438 = vmatpush1.msra.mxu0 0.0
      %3439 = vmatprep.subr.mxu0 0.0
      %3440 = vmatpush1.msra.mxu0 %v3408
      %3441 = vmatprep.subr.mxu0 0.0
      %3442 = vmatpush1.msra.mxu0 %v3407
      %3443 = vmatprep.subr.mxu0 0.0
      %3444 = vmatpush1.msra.mxu0 %v3406
      %3445 = vmatprep.subr.mxu0 0.0
      %3446 = vmatpush1.msra.mxu0 %v3405
      %3447 = vmatprep.subr.mxu0 0.0
      %3448 = vmatpush2.msra.mxu0 0.0
      %3449 = vmatprep.subr.mxu0 0.0
      %3450 = vmatpush2.msra.mxu0 0.0
      %3451 = vmatprep.subr.mxu0 0.0
      %3452 = vmatpush2.msra.mxu0 0.0
      %3453 = vmatprep.subr.mxu0 0.0
      %3454 = vmatpush2.msra.mxu0 0.0
      %3455 = vmatprep.subr.mxu0 0.0
      %3456 = vmatpush2.msra.mxu0 0.0
      %3457 = vmatprep.subr.mxu0 0.0
      %3458 = vmatpush2.msra.mxu0 0.0
      %3459 = vmatprep.subr.mxu0 0.0
      %3460 = vmatpush2.msra.mxu0 0.0
      %3461 = vmatprep.subr.mxu0 0.0
      %3462 = vmatpush2.msra.mxu0 0.0
      %3463 = vmatprep.subr.mxu0 0.0
      %3464 = vmatpush2.msra.mxu0 0.0
      %3465 = vmatprep.subr.mxu0 0.0
      %3466 = vmatpush2.msra.mxu0 0.0
      %3467 = vmatprep.subr.mxu0 0.0
      %3468 = vmatpush2.msra.mxu0 0.0
      %3469 = vmatprep.subr.mxu0 0.0
      %3470 = vmatpush2.msra.mxu0 0.0
      %3471 = vmatprep.subr.mxu0 0.0
      %3472 = vmatpush2.msra.mxu0 0.0
      %3473 = vmatprep.subr.mxu0 0.0
      %3474 = vmatpush2.msra.mxu0 0.0
      %3475 = vmatprep.subr.mxu0 0.0
      %3476 = vmatpush2.msra.mxu0 0.0
      %3477 = vmatprep.subr.mxu0 0.0
      %3478 = vmatpush2.msra.mxu0 0.0
      %3479 = vmatprep.mubr.f32.mxu0 0.0
      %3480 = vmatmul.mubr.f32.gmra.mxu0 %v3410
      %v3481 = vpop.f32.mrf.mxu0
      %v3482 = vadd.f32 0.0, %v3481
      %v3483 = vpop.f32.mrf.mxu0
      %3484 = vmatprep.mubr.f32.mxu0 0.0
      %3485 = vmatmul.mubr.f32.gmra.mxu0 %v3413
      %v3486 = vpop.f32.mrf.mxu0
      %v3487 = vadd.f32 0.0, %v3486
      %v3488 = vpop.f32.mrf.mxu0
      %3489 = vdwg.mxu0
      %s3490 = scalar_lea.vmem %s9, 208
      %v3491 = vld [vmem:[%s3490] sm:$0xff]
      %v3492 = vld [vmem:[%s3490 + $0x8] sm:$0xff]
      %s3493 = scalar_lea.vmem %s10, 13
      %v3494 = vld [vmem:[%s3493] sm:$0x1]
      %v3496 = vlaneseq
      %v3497 = vshrl.u32 %v3496, 7
      %v3498 = vsub.s32 0, %v3497
      %v3499 = vrot.slane %v3494, %v3498
      %v3502 = vsel %vm834, %v3491, 0
      %v3505 = vsel %vm834, %v3492, 0
      %3507 = vmatprep.subr.mxu0 0.0
      %3508 = vmatpush1.msra.mxu0 0.0
      %3509 = vmatprep.subr.mxu0 0.0
      %3510 = vmatpush1.msra.mxu0 0.0
      %3511 = vmatprep.subr.mxu0 0.0
      %3512 = vmatpush1.msra.mxu0 0.0
      %3513 = vmatprep.subr.mxu0 0.0
      %3514 = vmatpush1.msra.mxu0 0.0
      %3515 = vmatprep.subr.mxu0 0.0
      %3516 = vmatpush1.msra.mxu0 0.0
      %3517 = vmatprep.subr.mxu0 0.0
      %3518 = vmatpush1.msra.mxu0 0.0
      %3519 = vmatprep.subr.mxu0 0.0
      %3520 = vmatpush1.msra.mxu0 0.0
      %3521 = vmatprep.subr.mxu0 0.0
      %3522 = vmatpush1.msra.mxu0 0.0
      %3523 = vmatprep.subr.mxu0 0.0
      %3524 = vmatpush1.msra.mxu0 0.0
      %3525 = vmatprep.subr.mxu0 0.0
      %3526 = vmatpush1.msra.mxu0 0.0
      %3527 = vmatprep.subr.mxu0 0.0
      %3528 = vmatpush1.msra.mxu0 0.0
      %3529 = vmatprep.subr.mxu0 0.0
      %3530 = vmatpush1.msra.mxu0 0.0
      %3531 = vmatprep.subr.mxu0 0.0
      %3532 = vmatpush1.msra.mxu0 0.0
      %3533 = vmatprep.subr.mxu0 0.0
      %3534 = vmatpush1.msra.mxu0 0.0
      %3535 = vmatprep.subr.mxu0 0.0
      %3536 = vmatpush1.msra.mxu0 %v3487
      %3537 = vmatprep.subr.mxu0 0.0
      %3538 = vmatpush1.msra.mxu0 %v3482
      %3539 = vmatprep.subr.mxu0 0.0
      %3540 = vmatpush2.msra.mxu0 0.0
      %3541 = vmatprep.subr.mxu0 0.0
      %3542 = vmatpush2.msra.mxu0 0.0
      %3543 = vmatprep.subr.mxu0 0.0
      %3544 = vmatpush2.msra.mxu0 0.0
      %3545 = vmatprep.subr.mxu0 0.0
      %3546 = vmatpush2.msra.mxu0 0.0
      %3547 = vmatprep.subr.mxu0 0.0
      %3548 = vmatpush2.msra.mxu0 0.0
      %3549 = vmatprep.subr.mxu0 0.0
      %3550 = vmatpush2.msra.mxu0 0.0
      %3551 = vmatprep.subr.mxu0 0.0
      %3552 = vmatpush2.msra.mxu0 0.0
      %3553 = vmatprep.subr.mxu0 0.0
      %3554 = vmatpush2.msra.mxu0 0.0
      %3555 = vmatprep.subr.mxu0 0.0
      %3556 = vmatpush2.msra.mxu0 0.0
      %3557 = vmatprep.subr.mxu0 0.0
      %3558 = vmatpush2.msra.mxu0 0.0
      %3559 = vmatprep.subr.mxu0 0.0
      %3560 = vmatpush2.msra.mxu0 0.0
      %3561 = vmatprep.subr.mxu0 0.0
      %3562 = vmatpush2.msra.mxu0 0.0
      %3563 = vmatprep.subr.mxu0 0.0
      %3564 = vmatpush2.msra.mxu0 0.0
      %3565 = vmatprep.subr.mxu0 0.0
      %3566 = vmatpush2.msra.mxu0 0.0
      %3567 = vmatprep.subr.mxu0 0.0
      %3568 = vmatpush2.msra.mxu0 0.0
      %3569 = vmatprep.subr.mxu0 0.0
      %3570 = vmatpush2.msra.mxu0 0.0
      %3571 = vmatprep.mubr.f32.mxu0 0.0
      %3572 = vmatmul.mubr.f32.gmra.mxu0 %v3502
      %v3573 = vpop.f32.mrf.mxu0
      %v3574 = vadd.f32 %v3499, %v3573
      %v3575 = vpop.f32.mrf.mxu0
      %3576 = vmatprep.mubr.f32.mxu0 0.0
      %3577 = vmatmul.mubr.f32.gmra.mxu0 %v3505
      %v3578 = vpop.f32.mrf.mxu0
      %v3579 = vadd.f32 %v3499, %v3578
      %v3580 = vpop.f32.mrf.mxu0
      %3581 = vdwg.mxu0
      %s3582 = scalar_lea.vmem %s11, 208
      %v3583 = vld [vmem:[%s3582] sm:$0xff]
      %v3584 = vld [vmem:[%s3582 + $0x8] sm:$0xff]
      %v3585 = vmul.f32 %v3574, %v3583
      %v3586 = vmul.f32 %v3579, %v3584
      %s3587 = scalar_lea.vmem %s12, 208
      %v3588 = vld [vmem:[%s3587] sm:$0xff]
      %v3589 = vld [vmem:[%s3587 + $0x8] sm:$0xff]
      %v3590 = vadd.f32 %v3585, %v3588
      %v3591 = vadd.f32 %v3586, %v3589
      %v3592 = vtanh.pop %v3590
      %v3593 = vtanh.pop %v3591
      %v3594 = vadd.f32 %v3592, %v3212
      %v3595 = vadd.f32 %v3593, %v3213
      %s3596 = scalar_lea.vmem %s8, 448
      %v3597 = vld [vmem:[%s3596] sm:$0xff]
      %v3598 = vld [vmem:[%s3596 + $0x8] sm:$0xff]
      %v3599 = vld [vmem:[%s3596 + $0x10] sm:$0xff]
      %v3600 = vld [vmem:[%s3596 + $0x18] sm:$0xff]
      %v3602 = vsel %vm930, %v3594, 0
      %v3605 = vsel %vm930, %v3595, 0
      %3607 = vmatprep.subr.mxu0 0.0
      %3608 = vmatpush1.msra.mxu0 0.0
      %3609 = vmatprep.subr.mxu0 0.0
      %3610 = vmatpush1.msra.mxu0 0.0
      %3611 = vmatprep.subr.mxu0 0.0
      %3612 = vmatpush1.msra.mxu0 0.0
      %3613 = vmatprep.subr.mxu0 0.0
      %3614 = vmatpush1.msra.mxu0 0.0
      %3615 = vmatprep.subr.mxu0 0.0
      %3616 = vmatpush1.msra.mxu0 0.0
      %3617 = vmatprep.subr.mxu0 0.0
      %3618 = vmatpush1.msra.mxu0 0.0
      %3619 = vmatprep.subr.mxu0 0.0
      %3620 = vmatpush1.msra.mxu0 0.0
      %3621 = vmatprep.subr.mxu0 0.0
      %3622 = vmatpush1.msra.mxu0 0.0
      %3623 = vmatprep.subr.mxu0 0.0
      %3624 = vmatpush1.msra.mxu0 0.0
      %3625 = vmatprep.subr.mxu0 0.0
      %3626 = vmatpush1.msra.mxu0 0.0
      %3627 = vmatprep.subr.mxu0 0.0
      %3628 = vmatpush1.msra.mxu0 0.0
      %3629 = vmatprep.subr.mxu0 0.0
      %3630 = vmatpush1.msra.mxu0 0.0
      %3631 = vmatprep.subr.mxu0 0.0
      %3632 = vmatpush1.msra.mxu0 %v3600
      %3633 = vmatprep.subr.mxu0 0.0
      %3634 = vmatpush1.msra.mxu0 %v3599
      %3635 = vmatprep.subr.mxu0 0.0
      %3636 = vmatpush1.msra.mxu0 %v3598
      %3637 = vmatprep.subr.mxu0 0.0
      %3638 = vmatpush1.msra.mxu0 %v3597
      %3639 = vmatprep.subr.mxu0 0.0
      %3640 = vmatpush2.msra.mxu0 0.0
      %3641 = vmatprep.subr.mxu0 0.0
      %3642 = vmatpush2.msra.mxu0 0.0
      %3643 = vmatprep.subr.mxu0 0.0
      %3644 = vmatpush2.msra.mxu0 0.0
      %3645 = vmatprep.subr.mxu0 0.0
      %3646 = vmatpush2.msra.mxu0 0.0
      %3647 = vmatprep.subr.mxu0 0.0
      %3648 = vmatpush2.msra.mxu0 0.0
      %3649 = vmatprep.subr.mxu0 0.0
      %3650 = vmatpush2.msra.mxu0 0.0
      %3651 = vmatprep.subr.mxu0 0.0
      %3652 = vmatpush2.msra.mxu0 0.0
      %3653 = vmatprep.subr.mxu0 0.0
      %3654 = vmatpush2.msra.mxu0 0.0
      %3655 = vmatprep.subr.mxu0 0.0
      %3656 = vmatpush2.msra.mxu0 0.0
      %3657 = vmatprep.subr.mxu0 0.0
      %3658 = vmatpush2.msra.mxu0 0.0
      %3659 = vmatprep.subr.mxu0 0.0
      %3660 = vmatpush2.msra.mxu0 0.0
      %3661 = vmatprep.subr.mxu0 0.0
      %3662 = vmatpush2.msra.mxu0 0.0
      %3663 = vmatprep.subr.mxu0 0.0
      %3664 = vmatpush2.msra.mxu0 0.0
      %3665 = vmatprep.subr.mxu0 0.0
      %3666 = vmatpush2.msra.mxu0 0.0
      %3667 = vmatprep.subr.mxu0 0.0
      %3668 = vmatpush2.msra.mxu0 0.0
      %3669 = vmatprep.subr.mxu0 0.0
      %3670 = vmatpush2.msra.mxu0 0.0
      %3671 = vmatprep.mubr.f32.mxu0 0.0
      %3672 = vmatmul.mubr.f32.gmra.mxu0 %v3602
      %v3673 = vpop.f32.mrf.mxu0
      %v3674 = vadd.f32 0.0, %v3673
      %v3675 = vpop.f32.mrf.mxu0
      %3676 = vmatprep.mubr.f32.mxu0 0.0
      %3677 = vmatmul.mubr.f32.gmra.mxu0 %v3605
      %v3678 = vpop.f32.mrf.mxu0
      %v3679 = vadd.f32 0.0, %v3678
      %v3680 = vpop.f32.mrf.mxu0
      %3681 = vdwg.mxu0
      %s3682 = scalar_lea.vmem %s9, 224
      %v3683 = vld [vmem:[%s3682] sm:$0xff]
      %v3684 = vld [vmem:[%s3682 + $0x8] sm:$0xff]
      %s3685 = scalar_lea.vmem %s10, 14
      %v3686 = vld [vmem:[%s3685] sm:$0x1]
      %v3688 = vlaneseq
      %v3689 = vshrl.u32 %v3688, 7
      %v3690 = vsub.s32 0, %v3689
      %v3691 = vrot.slane %v3686, %v3690
      %v3694 = vsel %vm834, %v3683, 0
      %v3697 = vsel %vm834, %v3684, 0
      %3699 = vmatprep.subr.mxu0 0.0
      %3700 = vmatpush1.msra.mxu0 0.0
      %3701 = vmatprep.subr.mxu0 0.0
      %3702 = vmatpush1.msra.mxu0 0.0
      %3703 = vmatprep.subr.mxu0 0.0
      %3704 = vmatpush1.msra.mxu0 0.0
      %3705 = vmatprep.subr.mxu0 0.0
      %3706 = vmatpush1.msra.mxu0 0.0
      %3707 = vmatprep.subr.mxu0 0.0
      %3708 = vmatpush1.msra.mxu0 0.0
      %3709 = vmatprep.subr.mxu0 0.0
      %3710 = vmatpush1.msra.mxu0 0.0
      %3711 = vmatprep.subr.mxu0 0.0
      %3712 = vmatpush1.msra.mxu0 0.0
      %3713 = vmatprep.subr.mxu0 0.0
      %3714 = vmatpush1.msra.mxu0 0.0
      %3715 = vmatprep.subr.mxu0 0.0
      %3716 = vmatpush1.msra.mxu0 0.0
      %3717 = vmatprep.subr.mxu0 0.0
      %3718 = vmatpush1.msra.mxu0 0.0
      %3719 = vmatprep.subr.mxu0 0.0
      %3720 = vmatpush1.msra.mxu0 0.0
      %3721 = vmatprep.subr.mxu0 0.0
      %3722 = vmatpush1.msra.mxu0 0.0
      %3723 = vmatprep.subr.mxu0 0.0
      %3724 = vmatpush1.msra.mxu0 0.0
      %3725 = vmatprep.subr.mxu0 0.0
      %3726 = vmatpush1.msra.mxu0 0.0
      %3727 = vmatprep.subr.mxu0 0.0
      %3728 = vmatpush1.msra.mxu0 %v3679
      %3729 = vmatprep.subr.mxu0 0.0
      %3730 = vmatpush1.msra.mxu0 %v3674
      %3731 = vmatprep.subr.mxu0 0.0
      %3732 = vmatpush2.msra.mxu0 0.0
      %3733 = vmatprep.subr.mxu0 0.0
      %3734 = vmatpush2.msra.mxu0 0.0
      %3735 = vmatprep.subr.mxu0 0.0
      %3736 = vmatpush2.msra.mxu0 0.0
      %3737 = vmatprep.subr.mxu0 0.0
      %3738 = vmatpush2.msra.mxu0 0.0
      %3739 = vmatprep.subr.mxu0 0.0
      %3740 = vmatpush2.msra.mxu0 0.0
      %3741 = vmatprep.subr.mxu0 0.0
      %3742 = vmatpush2.msra.mxu0 0.0
      %3743 = vmatprep.subr.mxu0 0.0
      %3744 = vmatpush2.msra.mxu0 0.0
      %3745 = vmatprep.subr.mxu0 0.0
      %3746 = vmatpush2.msra.mxu0 0.0
      %3747 = vmatprep.subr.mxu0 0.0
      %3748 = vmatpush2.msra.mxu0 0.0
      %3749 = vmatprep.subr.mxu0 0.0
      %3750 = vmatpush2.msra.mxu0 0.0
      %3751 = vmatprep.subr.mxu0 0.0
      %3752 = vmatpush2.msra.mxu0 0.0
      %3753 = vmatprep.subr.mxu0 0.0
      %3754 = vmatpush2.msra.mxu0 0.0
      %3755 = vmatprep.subr.mxu0 0.0
      %3756 = vmatpush2.msra.mxu0 0.0
      %3757 = vmatprep.subr.mxu0 0.0
      %3758 = vmatpush2.msra.mxu0 0.0
      %3759 = vmatprep.subr.mxu0 0.0
      %3760 = vmatpush2.msra.mxu0 0.0
      %3761 = vmatprep.subr.mxu0 0.0
      %3762 = vmatpush2.msra.mxu0 0.0
      %3763 = vmatprep.mubr.f32.mxu0 0.0
      %3764 = vmatmul.mubr.f32.gmra.mxu0 %v3694
      %v3765 = vpop.f32.mrf.mxu0
      %v3766 = vadd.f32 %v3691, %v3765
      %v3767 = vpop.f32.mrf.mxu0
      %3768 = vmatprep.mubr.f32.mxu0 0.0
      %3769 = vmatmul.mubr.f32.gmra.mxu0 %v3697
      %v3770 = vpop.f32.mrf.mxu0
      %v3771 = vadd.f32 %v3691, %v3770
      %v3772 = vpop.f32.mrf.mxu0
      %3773 = vdwg.mxu0
      %s3774 = scalar_lea.vmem %s11, 224
      %v3775 = vld [vmem:[%s3774] sm:$0xff]
      %v3776 = vld [vmem:[%s3774 + $0x8] sm:$0xff]
      %v3777 = vmul.f32 %v3766, %v3775
      %v3778 = vmul.f32 %v3771, %v3776
      %s3779 = scalar_lea.vmem %s12, 224
      %v3780 = vld [vmem:[%s3779] sm:$0xff]
      %v3781 = vld [vmem:[%s3779 + $0x8] sm:$0xff]
      %v3782 = vadd.f32 %v3777, %v3780
      %v3783 = vadd.f32 %v3778, %v3781
      %v3784 = vtanh.pop %v3782
      %v3785 = vtanh.pop %v3783
      %s3786 = scalar_lea.vmem %s8, 480
      %v3787 = vld [vmem:[%s3786] sm:$0xff]
      %v3788 = vld [vmem:[%s3786 + $0x8] sm:$0xff]
      %v3789 = vld [vmem:[%s3786 + $0x10] sm:$0xff]
      %v3790 = vld [vmem:[%s3786 + $0x18] sm:$0xff]
      %v3792 = vsel %vm930, %v3784, 0
      %v3795 = vsel %vm930, %v3785, 0
      %3797 = vmatprep.subr.mxu0 0.0
      %3798 = vmatpush1.msra.mxu0 0.0
      %3799 = vmatprep.subr.mxu0 0.0
      %3800 = vmatpush1.msra.mxu0 0.0
      %3801 = vmatprep.subr.mxu0 0.0
      %3802 = vmatpush1.msra.mxu0 0.0
      %3803 = vmatprep.subr.mxu0 0.0
      %3804 = vmatpush1.msra.mxu0 0.0
      %3805 = vmatprep.subr.mxu0 0.0
      %3806 = vmatpush1.msra.mxu0 0.0
      %3807 = vmatprep.subr.mxu0 0.0
      %3808 = vmatpush1.msra.mxu0 0.0
      %3809 = vmatprep.subr.mxu0 0.0
      %3810 = vmatpush1.msra.mxu0 0.0
      %3811 = vmatprep.subr.mxu0 0.0
      %3812 = vmatpush1.msra.mxu0 0.0
      %3813 = vmatprep.subr.mxu0 0.0
      %3814 = vmatpush1.msra.mxu0 0.0
      %3815 = vmatprep.subr.mxu0 0.0
      %3816 = vmatpush1.msra.mxu0 0.0
      %3817 = vmatprep.subr.mxu0 0.0
      %3818 = vmatpush1.msra.mxu0 0.0
      %3819 = vmatprep.subr.mxu0 0.0
      %3820 = vmatpush1.msra.mxu0 0.0
      %3821 = vmatprep.subr.mxu0 0.0
      %3822 = vmatpush1.msra.mxu0 %v3790
      %3823 = vmatprep.subr.mxu0 0.0
      %3824 = vmatpush1.msra.mxu0 %v3789
      %3825 = vmatprep.subr.mxu0 0.0
      %3826 = vmatpush1.msra.mxu0 %v3788
      %3827 = vmatprep.subr.mxu0 0.0
      %3828 = vmatpush1.msra.mxu0 %v3787
      %3829 = vmatprep.subr.mxu0 0.0
      %3830 = vmatpush2.msra.mxu0 0.0
      %3831 = vmatprep.subr.mxu0 0.0
      %3832 = vmatpush2.msra.mxu0 0.0
      %3833 = vmatprep.subr.mxu0 0.0
      %3834 = vmatpush2.msra.mxu0 0.0
      %3835 = vmatprep.subr.mxu0 0.0
      %3836 = vmatpush2.msra.mxu0 0.0
      %3837 = vmatprep.subr.mxu0 0.0
      %3838 = vmatpush2.msra.mxu0 0.0
      %3839 = vmatprep.subr.mxu0 0.0
      %3840 = vmatpush2.msra.mxu0 0.0
      %3841 = vmatprep.subr.mxu0 0.0
      %3842 = vmatpush2.msra.mxu0 0.0
      %3843 = vmatprep.subr.mxu0 0.0
      %3844 = vmatpush2.msra.mxu0 0.0
      %3845 = vmatprep.subr.mxu0 0.0
      %3846 = vmatpush2.msra.mxu0 0.0
      %3847 = vmatprep.subr.mxu0 0.0
      %3848 = vmatpush2.msra.mxu0 0.0
      %3849 = vmatprep.subr.mxu0 0.0
      %3850 = vmatpush2.msra.mxu0 0.0
      %3851 = vmatprep.subr.mxu0 0.0
      %3852 = vmatpush2.msra.mxu0 0.0
      %3853 = vmatprep.subr.mxu0 0.0
      %3854 = vmatpush2.msra.mxu0 0.0
      %3855 = vmatprep.subr.mxu0 0.0
      %3856 = vmatpush2.msra.mxu0 0.0
      %3857 = vmatprep.subr.mxu0 0.0
      %3858 = vmatpush2.msra.mxu0 0.0
      %3859 = vmatprep.subr.mxu0 0.0
      %3860 = vmatpush2.msra.mxu0 0.0
      %3861 = vmatprep.mubr.f32.mxu0 0.0
      %3862 = vmatmul.mubr.f32.gmra.mxu0 %v3792
      %v3863 = vpop.f32.mrf.mxu0
      %v3864 = vadd.f32 0.0, %v3863
      %v3865 = vpop.f32.mrf.mxu0
      %3866 = vmatprep.mubr.f32.mxu0 0.0
      %3867 = vmatmul.mubr.f32.gmra.mxu0 %v3795
      %v3868 = vpop.f32.mrf.mxu0
      %v3869 = vadd.f32 0.0, %v3868
      %v3870 = vpop.f32.mrf.mxu0
      %3871 = vdwg.mxu0
      %s3872 = scalar_lea.vmem %s9, 240
      %v3873 = vld [vmem:[%s3872] sm:$0xff]
      %v3874 = vld [vmem:[%s3872 + $0x8] sm:$0xff]
      %s3875 = scalar_lea.vmem %s10, 15
      %v3876 = vld [vmem:[%s3875] sm:$0x1]
      %v3878 = vlaneseq
      %v3879 = vshrl.u32 %v3878, 7
      %v3880 = vsub.s32 0, %v3879
      %v3881 = vrot.slane %v3876, %v3880
      %v3884 = vsel %vm834, %v3873, 0
      %v3887 = vsel %vm834, %v3874, 0
      %3889 = vmatprep.subr.mxu0 0.0
      %3890 = vmatpush1.msra.mxu0 0.0
      %3891 = vmatprep.subr.mxu0 0.0
      %3892 = vmatpush1.msra.mxu0 0.0
      %3893 = vmatprep.subr.mxu0 0.0
      %3894 = vmatpush1.msra.mxu0 0.0
      %3895 = vmatprep.subr.mxu0 0.0
      %3896 = vmatpush1.msra.mxu0 0.0
      %3897 = vmatprep.subr.mxu0 0.0
      %3898 = vmatpush1.msra.mxu0 0.0
      %3899 = vmatprep.subr.mxu0 0.0
      %3900 = vmatpush1.msra.mxu0 0.0
      %3901 = vmatprep.subr.mxu0 0.0
      %3902 = vmatpush1.msra.mxu0 0.0
      %3903 = vmatprep.subr.mxu0 0.0
      %3904 = vmatpush1.msra.mxu0 0.0
      %3905 = vmatprep.subr.mxu0 0.0
      %3906 = vmatpush1.msra.mxu0 0.0
      %3907 = vmatprep.subr.mxu0 0.0
      %3908 = vmatpush1.msra.mxu0 0.0
      %3909 = vmatprep.subr.mxu0 0.0
      %3910 = vmatpush1.msra.mxu0 0.0
      %3911 = vmatprep.subr.mxu0 0.0
      %3912 = vmatpush1.msra.mxu0 0.0
      %3913 = vmatprep.subr.mxu0 0.0
      %3914 = vmatpush1.msra.mxu0 0.0
      %3915 = vmatprep.subr.mxu0 0.0
      %3916 = vmatpush1.msra.mxu0 0.0
      %3917 = vmatprep.subr.mxu0 0.0
      %3918 = vmatpush1.msra.mxu0 %v3869
      %3919 = vmatprep.subr.mxu0 0.0
      %3920 = vmatpush1.msra.mxu0 %v3864
      %3921 = vmatprep.subr.mxu0 0.0
      %3922 = vmatpush2.msra.mxu0 0.0
      %3923 = vmatprep.subr.mxu0 0.0
      %3924 = vmatpush2.msra.mxu0 0.0
      %3925 = vmatprep.subr.mxu0 0.0
      %3926 = vmatpush2.msra.mxu0 0.0
      %3927 = vmatprep.subr.mxu0 0.0
      %3928 = vmatpush2.msra.mxu0 0.0
      %3929 = vmatprep.subr.mxu0 0.0
      %3930 = vmatpush2.msra.mxu0 0.0
      %3931 = vmatprep.subr.mxu0 0.0
      %3932 = vmatpush2.msra.mxu0 0.0
      %3933 = vmatprep.subr.mxu0 0.0
      %3934 = vmatpush2.msra.mxu0 0.0
      %3935 = vmatprep.subr.mxu0 0.0
      %3936 = vmatpush2.msra.mxu0 0.0
      %3937 = vmatprep.subr.mxu0 0.0
      %3938 = vmatpush2.msra.mxu0 0.0
      %3939 = vmatprep.subr.mxu0 0.0
      %3940 = vmatpush2.msra.mxu0 0.0
      %3941 = vmatprep.subr.mxu0 0.0
      %3942 = vmatpush2.msra.mxu0 0.0
      %3943 = vmatprep.subr.mxu0 0.0
      %3944 = vmatpush2.msra.mxu0 0.0
      %3945 = vmatprep.subr.mxu0 0.0
      %3946 = vmatpush2.msra.mxu0 0.0
      %3947 = vmatprep.subr.mxu0 0.0
      %3948 = vmatpush2.msra.mxu0 0.0
      %3949 = vmatprep.subr.mxu0 0.0
      %3950 = vmatpush2.msra.mxu0 0.0
      %3951 = vmatprep.subr.mxu0 0.0
      %3952 = vmatpush2.msra.mxu0 0.0
      %3953 = vmatprep.mubr.f32.mxu0 0.0
      %3954 = vmatmul.mubr.f32.gmra.mxu0 %v3884
      %v3955 = vpop.f32.mrf.mxu0
      %v3956 = vadd.f32 %v3881, %v3955
      %v3957 = vpop.f32.mrf.mxu0
      %3958 = vmatprep.mubr.f32.mxu0 0.0
      %3959 = vmatmul.mubr.f32.gmra.mxu0 %v3887
      %v3960 = vpop.f32.mrf.mxu0
      %v3961 = vadd.f32 %v3881, %v3960
      %v3962 = vpop.f32.mrf.mxu0
      %3963 = vdwg.mxu0
      %s3964 = scalar_lea.vmem %s11, 240
      %v3965 = vld [vmem:[%s3964] sm:$0xff]
      %v3966 = vld [vmem:[%s3964 + $0x8] sm:$0xff]
      %v3967 = vmul.f32 %v3956, %v3965
      %v3968 = vmul.f32 %v3961, %v3966
      %s3969 = scalar_lea.vmem %s12, 240
      %v3970 = vld [vmem:[%s3969] sm:$0xff]
      %v3971 = vld [vmem:[%s3969 + $0x8] sm:$0xff]
      %v3972 = vadd.f32 %v3967, %v3970
      %v3973 = vadd.f32 %v3968, %v3971
      %v3974 = vtanh.pop %v3972
      %v3975 = vtanh.pop %v3973
      %v3976 = vadd.f32 %v3974, %v3594
      %v3977 = vadd.f32 %v3975, %v3595
      %s3978 = scalar_lea.vmem %s8, 512
      %v3979 = vld [vmem:[%s3978] sm:$0xff]
      %v3980 = vld [vmem:[%s3978 + $0x8] sm:$0xff]
      %v3981 = vld [vmem:[%s3978 + $0x10] sm:$0xff]
      %v3982 = vld [vmem:[%s3978 + $0x18] sm:$0xff]
      %v3984 = vsel %vm930, %v3976, 0
      %v3987 = vsel %vm930, %v3977, 0
      %3989 = vmatprep.subr.mxu0 0.0
      %3990 = vmatpush1.msra.mxu0 0.0
      %3991 = vmatprep.subr.mxu0 0.0
      %3992 = vmatpush1.msra.mxu0 0.0
      %3993 = vmatprep.subr.mxu0 0.0
      %3994 = vmatpush1.msra.mxu0 0.0
      %3995 = vmatprep.subr.mxu0 0.0
      %3996 = vmatpush1.msra.mxu0 0.0
      %3997 = vmatprep.subr.mxu0 0.0
      %3998 = vmatpush1.msra.mxu0 0.0
      %3999 = vmatprep.subr.mxu0 0.0
      %4000 = vmatpush1.msra.mxu0 0.0
      %4001 = vmatprep.subr.mxu0 0.0
      %4002 = vmatpush1.msra.mxu0 0.0
      %4003 = vmatprep.subr.mxu0 0.0
      %4004 = vmatpush1.msra.mxu0 0.0
      %4005 = vmatprep.subr.mxu0 0.0
      %4006 = vmatpush1.msra.mxu0 0.0
      %4007 = vmatprep.subr.mxu0 0.0
      %4008 = vmatpush1.msra.mxu0 0.0
      %4009 = vmatprep.subr.mxu0 0.0
      %4010 = vmatpush1.msra.mxu0 0.0
      %4011 = vmatprep.subr.mxu0 0.0
      %4012 = vmatpush1.msra.mxu0 0.0
      %4013 = vmatprep.subr.mxu0 0.0
      %4014 = vmatpush1.msra.mxu0 %v3982
      %4015 = vmatprep.subr.mxu0 0.0
      %4016 = vmatpush1.msra.mxu0 %v3981
      %4017 = vmatprep.subr.mxu0 0.0
      %4018 = vmatpush1.msra.mxu0 %v3980
      %4019 = vmatprep.subr.mxu0 0.0
      %4020 = vmatpush1.msra.mxu0 %v3979
      %4021 = vmatprep.subr.mxu0 0.0
      %4022 = vmatpush2.msra.mxu0 0.0
      %4023 = vmatprep.subr.mxu0 0.0
      %4024 = vmatpush2.msra.mxu0 0.0
      %4025 = vmatprep.subr.mxu0 0.0
      %4026 = vmatpush2.msra.mxu0 0.0
      %4027 = vmatprep.subr.mxu0 0.0
      %4028 = vmatpush2.msra.mxu0 0.0
      %4029 = vmatprep.subr.mxu0 0.0
      %4030 = vmatpush2.msra.mxu0 0.0
      %4031 = vmatprep.subr.mxu0 0.0
      %4032 = vmatpush2.msra.mxu0 0.0
      %4033 = vmatprep.subr.mxu0 0.0
      %4034 = vmatpush2.msra.mxu0 0.0
      %4035 = vmatprep.subr.mxu0 0.0
      %4036 = vmatpush2.msra.mxu0 0.0
      %4037 = vmatprep.subr.mxu0 0.0
      %4038 = vmatpush2.msra.mxu0 0.0
      %4039 = vmatprep.subr.mxu0 0.0
      %4040 = vmatpush2.msra.mxu0 0.0
      %4041 = vmatprep.subr.mxu0 0.0
      %4042 = vmatpush2.msra.mxu0 0.0
      %4043 = vmatprep.subr.mxu0 0.0
      %4044 = vmatpush2.msra.mxu0 0.0
      %4045 = vmatprep.subr.mxu0 0.0
      %4046 = vmatpush2.msra.mxu0 0.0
      %4047 = vmatprep.subr.mxu0 0.0
      %4048 = vmatpush2.msra.mxu0 0.0
      %4049 = vmatprep.subr.mxu0 0.0
      %4050 = vmatpush2.msra.mxu0 0.0
      %4051 = vmatprep.subr.mxu0 0.0
      %4052 = vmatpush2.msra.mxu0 0.0
      %4053 = vmatprep.mubr.f32.mxu0 0.0
      %4054 = vmatmul.mubr.f32.gmra.mxu0 %v3984
      %v4055 = vpop.f32.mrf.mxu0
      %v4056 = vadd.f32 0.0, %v4055
      %v4057 = vpop.f32.mrf.mxu0
      %4058 = vmatprep.mubr.f32.mxu0 0.0
      %4059 = vmatmul.mubr.f32.gmra.mxu0 %v3987
      %v4060 = vpop.f32.mrf.mxu0
      %v4061 = vadd.f32 0.0, %v4060
      %v4062 = vpop.f32.mrf.mxu0
      %4063 = vdwg.mxu0
      %s4064 = scalar_lea.vmem %s9, 256
      %v4065 = vld [vmem:[%s4064] sm:$0xff]
      %v4066 = vld [vmem:[%s4064 + $0x8] sm:$0xff]
      %s4067 = scalar_lea.vmem %s10, 16
      %v4068 = vld [vmem:[%s4067] sm:$0x1]
      %v4070 = vlaneseq
      %v4071 = vshrl.u32 %v4070, 7
      %v4072 = vsub.s32 0, %v4071
      %v4073 = vrot.slane %v4068, %v4072
      %v4076 = vsel %vm834, %v4065, 0
      %v4079 = vsel %vm834, %v4066, 0
      %4081 = vmatprep.subr.mxu0 0.0
      %4082 = vmatpush1.msra.mxu0 0.0
      %4083 = vmatprep.subr.mxu0 0.0
      %4084 = vmatpush1.msra.mxu0 0.0
      %4085 = vmatprep.subr.mxu0 0.0
      %4086 = vmatpush1.msra.mxu0 0.0
      %4087 = vmatprep.subr.mxu0 0.0
      %4088 = vmatpush1.msra.mxu0 0.0
      %4089 = vmatprep.subr.mxu0 0.0
      %4090 = vmatpush1.msra.mxu0 0.0
      %4091 = vmatprep.subr.mxu0 0.0
      %4092 = vmatpush1.msra.mxu0 0.0
      %4093 = vmatprep.subr.mxu0 0.0
      %4094 = vmatpush1.msra.mxu0 0.0
      %4095 = vmatprep.subr.mxu0 0.0
      %4096 = vmatpush1.msra.mxu0 0.0
      %4097 = vmatprep.subr.mxu0 0.0
      %4098 = vmatpush1.msra.mxu0 0.0
      %4099 = vmatprep.subr.mxu0 0.0
      %4100 = vmatpush1.msra.mxu0 0.0
      %4101 = vmatprep.subr.mxu0 0.0
      %4102 = vmatpush1.msra.mxu0 0.0
      %4103 = vmatprep.subr.mxu0 0.0
      %4104 = vmatpush1.msra.mxu0 0.0
      %4105 = vmatprep.subr.mxu0 0.0
      %4106 = vmatpush1.msra.mxu0 0.0
      %4107 = vmatprep.subr.mxu0 0.0
      %4108 = vmatpush1.msra.mxu0 0.0
      %4109 = vmatprep.subr.mxu0 0.0
      %4110 = vmatpush1.msra.mxu0 %v4061
      %4111 = vmatprep.subr.mxu0 0.0
      %4112 = vmatpush1.msra.mxu0 %v4056
      %4113 = vmatprep.subr.mxu0 0.0
      %4114 = vmatpush2.msra.mxu0 0.0
      %4115 = vmatprep.subr.mxu0 0.0
      %4116 = vmatpush2.msra.mxu0 0.0
      %4117 = vmatprep.subr.mxu0 0.0
      %4118 = vmatpush2.msra.mxu0 0.0
      %4119 = vmatprep.subr.mxu0 0.0
      %4120 = vmatpush2.msra.mxu0 0.0
      %4121 = vmatprep.subr.mxu0 0.0
      %4122 = vmatpush2.msra.mxu0 0.0
      %4123 = vmatprep.subr.mxu0 0.0
      %4124 = vmatpush2.msra.mxu0 0.0
      %4125 = vmatprep.subr.mxu0 0.0
      %4126 = vmatpush2.msra.mxu0 0.0
      %4127 = vmatprep.subr.mxu0 0.0
      %4128 = vmatpush2.msra.mxu0 0.0
      %4129 = vmatprep.subr.mxu0 0.0
      %4130 = vmatpush2.msra.mxu0 0.0
      %4131 = vmatprep.subr.mxu0 0.0
      %4132 = vmatpush2.msra.mxu0 0.0
      %4133 = vmatprep.subr.mxu0 0.0
      %4134 = vmatpush2.msra.mxu0 0.0
      %4135 = vmatprep.subr.mxu0 0.0
      %4136 = vmatpush2.msra.mxu0 0.0
      %4137 = vmatprep.subr.mxu0 0.0
      %4138 = vmatpush2.msra.mxu0 0.0
      %4139 = vmatprep.subr.mxu0 0.0
      %4140 = vmatpush2.msra.mxu0 0.0
      %4141 = vmatprep.subr.mxu0 0.0
      %4142 = vmatpush2.msra.mxu0 0.0
      %4143 = vmatprep.subr.mxu0 0.0
      %4144 = vmatpush2.msra.mxu0 0.0
      %4145 = vmatprep.mubr.f32.mxu0 0.0
      %4146 = vmatmul.mubr.f32.gmra.mxu0 %v4076
      %v4147 = vpop.f32.mrf.mxu0
      %v4148 = vadd.f32 %v4073, %v4147
      %v4149 = vpop.f32.mrf.mxu0
      %4150 = vmatprep.mubr.f32.mxu0 0.0
      %4151 = vmatmul.mubr.f32.gmra.mxu0 %v4079
      %v4152 = vpop.f32.mrf.mxu0
      %v4153 = vadd.f32 %v4073, %v4152
      %v4154 = vpop.f32.mrf.mxu0
      %4155 = vdwg.mxu0
      %s4156 = scalar_lea.vmem %s11, 256
      %v4157 = vld [vmem:[%s4156] sm:$0xff]
      %v4158 = vld [vmem:[%s4156 + $0x8] sm:$0xff]
      %v4159 = vmul.f32 %v4148, %v4157
      %v4160 = vmul.f32 %v4153, %v4158
      %s4161 = scalar_lea.vmem %s12, 256
      %v4162 = vld [vmem:[%s4161] sm:$0xff]
      %v4163 = vld [vmem:[%s4161 + $0x8] sm:$0xff]
      %v4164 = vadd.f32 %v4159, %v4162
      %v4165 = vadd.f32 %v4160, %v4163
      %v4166 = vtanh.pop %v4164
      %v4167 = vtanh.pop %v4165
      %s4168 = scalar_lea.vmem %s8, 544
      %v4169 = vld [vmem:[%s4168] sm:$0xff]
      %v4170 = vld [vmem:[%s4168 + $0x8] sm:$0xff]
      %v4171 = vld [vmem:[%s4168 + $0x10] sm:$0xff]
      %v4172 = vld [vmem:[%s4168 + $0x18] sm:$0xff]
      %v4174 = vsel %vm930, %v4166, 0
      %v4177 = vsel %vm930, %v4167, 0
      %4179 = vmatprep.subr.mxu0 0.0
      %4180 = vmatpush1.msra.mxu0 0.0
      %4181 = vmatprep.subr.mxu0 0.0
      %4182 = vmatpush1.msra.mxu0 0.0
      %4183 = vmatprep.subr.mxu0 0.0
      %4184 = vmatpush1.msra.mxu0 0.0
      %4185 = vmatprep.subr.mxu0 0.0
      %4186 = vmatpush1.msra.mxu0 0.0
      %4187 = vmatprep.subr.mxu0 0.0
      %4188 = vmatpush1.msra.mxu0 0.0
      %4189 = vmatprep.subr.mxu0 0.0
      %4190 = vmatpush1.msra.mxu0 0.0
      %4191 = vmatprep.subr.mxu0 0.0
      %4192 = vmatpush1.msra.mxu0 0.0
      %4193 = vmatprep.subr.mxu0 0.0
      %4194 = vmatpush1.msra.mxu0 0.0
      %4195 = vmatprep.subr.mxu0 0.0
      %4196 = vmatpush1.msra.mxu0 0.0
      %4197 = vmatprep.subr.mxu0 0.0
      %4198 = vmatpush1.msra.mxu0 0.0
      %4199 = vmatprep.subr.mxu0 0.0
      %4200 = vmatpush1.msra.mxu0 0.0
      %4201 = vmatprep.subr.mxu0 0.0
      %4202 = vmatpush1.msra.mxu0 0.0
      %4203 = vmatprep.subr.mxu0 0.0
      %4204 = vmatpush1.msra.mxu0 %v4172
      %4205 = vmatprep.subr.mxu0 0.0
      %4206 = vmatpush1.msra.mxu0 %v4171
      %4207 = vmatprep.subr.mxu0 0.0
      %4208 = vmatpush1.msra.mxu0 %v4170
      %4209 = vmatprep.subr.mxu0 0.0
      %4210 = vmatpush1.msra.mxu0 %v4169
      %4211 = vmatprep.subr.mxu0 0.0
      %4212 = vmatpush2.msra.mxu0 0.0
      %4213 = vmatprep.subr.mxu0 0.0
      %4214 = vmatpush2.msra.mxu0 0.0
      %4215 = vmatprep.subr.mxu0 0.0
      %4216 = vmatpush2.msra.mxu0 0.0
      %4217 = vmatprep.subr.mxu0 0.0
      %4218 = vmatpush2.msra.mxu0 0.0
      %4219 = vmatprep.subr.mxu0 0.0
      %4220 = vmatpush2.msra.mxu0 0.0
      %4221 = vmatprep.subr.mxu0 0.0
      %4222 = vmatpush2.msra.mxu0 0.0
      %4223 = vmatprep.subr.mxu0 0.0
      %4224 = vmatpush2.msra.mxu0 0.0
      %4225 = vmatprep.subr.mxu0 0.0
      %4226 = vmatpush2.msra.mxu0 0.0
      %4227 = vmatprep.subr.mxu0 0.0
      %4228 = vmatpush2.msra.mxu0 0.0
      %4229 = vmatprep.subr.mxu0 0.0
      %4230 = vmatpush2.msra.mxu0 0.0
      %4231 = vmatprep.subr.mxu0 0.0
      %4232 = vmatpush2.msra.mxu0 0.0
      %4233 = vmatprep.subr.mxu0 0.0
      %4234 = vmatpush2.msra.mxu0 0.0
      %4235 = vmatprep.subr.mxu0 0.0
      %4236 = vmatpush2.msra.mxu0 0.0
      %4237 = vmatprep.subr.mxu0 0.0
      %4238 = vmatpush2.msra.mxu0 0.0
      %4239 = vmatprep.subr.mxu0 0.0
      %4240 = vmatpush2.msra.mxu0 0.0
      %4241 = vmatprep.subr.mxu0 0.0
      %4242 = vmatpush2.msra.mxu0 0.0
      %4243 = vmatprep.mubr.f32.mxu0 0.0
      %4244 = vmatmul.mubr.f32.gmra.mxu0 %v4174
      %v4245 = vpop.f32.mrf.mxu0
      %v4246 = vadd.f32 0.0, %v4245
      %v4247 = vpop.f32.mrf.mxu0
      %4248 = vmatprep.mubr.f32.mxu0 0.0
      %4249 = vmatmul.mubr.f32.gmra.mxu0 %v4177
      %v4250 = vpop.f32.mrf.mxu0
      %v4251 = vadd.f32 0.0, %v4250
      %v4252 = vpop.f32.mrf.mxu0
      %4253 = vdwg.mxu0
      %s4254 = scalar_lea.vmem %s9, 272
      %v4255 = vld [vmem:[%s4254] sm:$0xff]
      %v4256 = vld [vmem:[%s4254 + $0x8] sm:$0xff]
      %s4257 = scalar_lea.vmem %s10, 17
      %v4258 = vld [vmem:[%s4257] sm:$0x1]
      %v4260 = vlaneseq
      %v4261 = vshrl.u32 %v4260, 7
      %v4262 = vsub.s32 0, %v4261
      %v4263 = vrot.slane %v4258, %v4262
      %v4266 = vsel %vm834, %v4255, 0
      %v4269 = vsel %vm834, %v4256, 0
      %4271 = vmatprep.subr.mxu0 0.0
      %4272 = vmatpush1.msra.mxu0 0.0
      %4273 = vmatprep.subr.mxu0 0.0
      %4274 = vmatpush1.msra.mxu0 0.0
      %4275 = vmatprep.subr.mxu0 0.0
      %4276 = vmatpush1.msra.mxu0 0.0
      %4277 = vmatprep.subr.mxu0 0.0
      %4278 = vmatpush1.msra.mxu0 0.0
      %4279 = vmatprep.subr.mxu0 0.0
      %4280 = vmatpush1.msra.mxu0 0.0
      %4281 = vmatprep.subr.mxu0 0.0
      %4282 = vmatpush1.msra.mxu0 0.0
      %4283 = vmatprep.subr.mxu0 0.0
      %4284 = vmatpush1.msra.mxu0 0.0
      %4285 = vmatprep.subr.mxu0 0.0
      %4286 = vmatpush1.msra.mxu0 0.0
      %4287 = vmatprep.subr.mxu0 0.0
      %4288 = vmatpush1.msra.mxu0 0.0
      %4289 = vmatprep.subr.mxu0 0.0
      %4290 = vmatpush1.msra.mxu0 0.0
      %4291 = vmatprep.subr.mxu0 0.0
      %4292 = vmatpush1.msra.mxu0 0.0
      %4293 = vmatprep.subr.mxu0 0.0
      %4294 = vmatpush1.msra.mxu0 0.0
      %4295 = vmatprep.subr.mxu0 0.0
      %4296 = vmatpush1.msra.mxu0 0.0
      %4297 = vmatprep.subr.mxu0 0.0
      %4298 = vmatpush1.msra.mxu0 0.0
      %4299 = vmatprep.subr.mxu0 0.0
      %4300 = vmatpush1.msra.mxu0 %v4251
      %4301 = vmatprep.subr.mxu0 0.0
      %4302 = vmatpush1.msra.mxu0 %v4246
      %4303 = vmatprep.subr.mxu0 0.0
      %4304 = vmatpush2.msra.mxu0 0.0
      %4305 = vmatprep.subr.mxu0 0.0
      %4306 = vmatpush2.msra.mxu0 0.0
      %4307 = vmatprep.subr.mxu0 0.0
      %4308 = vmatpush2.msra.mxu0 0.0
      %4309 = vmatprep.subr.mxu0 0.0
      %4310 = vmatpush2.msra.mxu0 0.0
      %4311 = vmatprep.subr.mxu0 0.0
      %4312 = vmatpush2.msra.mxu0 0.0
      %4313 = vmatprep.subr.mxu0 0.0
      %4314 = vmatpush2.msra.mxu0 0.0
      %4315 = vmatprep.subr.mxu0 0.0
      %4316 = vmatpush2.msra.mxu0 0.0
      %4317 = vmatprep.subr.mxu0 0.0
      %4318 = vmatpush2.msra.mxu0 0.0
      %4319 = vmatprep.subr.mxu0 0.0
      %4320 = vmatpush2.msra.mxu0 0.0
      %4321 = vmatprep.subr.mxu0 0.0
      %4322 = vmatpush2.msra.mxu0 0.0
      %4323 = vmatprep.subr.mxu0 0.0
      %4324 = vmatpush2.msra.mxu0 0.0
      %4325 = vmatprep.subr.mxu0 0.0
      %4326 = vmatpush2.msra.mxu0 0.0
      %4327 = vmatprep.subr.mxu0 0.0
      %4328 = vmatpush2.msra.mxu0 0.0
      %4329 = vmatprep.subr.mxu0 0.0
      %4330 = vmatpush2.msra.mxu0 0.0
      %4331 = vmatprep.subr.mxu0 0.0
      %4332 = vmatpush2.msra.mxu0 0.0
      %4333 = vmatprep.subr.mxu0 0.0
      %4334 = vmatpush2.msra.mxu0 0.0
      %4335 = vmatprep.mubr.f32.mxu0 0.0
      %4336 = vmatmul.mubr.f32.gmra.mxu0 %v4266
      %v4337 = vpop.f32.mrf.mxu0
      %v4338 = vadd.f32 %v4263, %v4337
      %v4339 = vpop.f32.mrf.mxu0
      %4340 = vmatprep.mubr.f32.mxu0 0.0
      %4341 = vmatmul.mubr.f32.gmra.mxu0 %v4269
      %v4342 = vpop.f32.mrf.mxu0
      %v4343 = vadd.f32 %v4263, %v4342
      %v4344 = vpop.f32.mrf.mxu0
      %4345 = vdwg.mxu0
      %s4346 = scalar_lea.vmem %s11, 272
      %v4347 = vld [vmem:[%s4346] sm:$0xff]
      %v4348 = vld [vmem:[%s4346 + $0x8] sm:$0xff]
      %v4349 = vmul.f32 %v4338, %v4347
      %v4350 = vmul.f32 %v4343, %v4348
      %s4351 = scalar_lea.vmem %s12, 272
      %v4352 = vld [vmem:[%s4351] sm:$0xff]
      %v4353 = vld [vmem:[%s4351 + $0x8] sm:$0xff]
      %v4354 = vadd.f32 %v4349, %v4352
      %v4355 = vadd.f32 %v4350, %v4353
      %v4356 = vtanh.pop %v4354
      %v4357 = vtanh.pop %v4355
      %v4358 = vadd.f32 %v4356, %v3976
      %v4359 = vadd.f32 %v4357, %v3977
      %s4360 = scalar_lea.vmem %s8, 576
      %v4361 = vld [vmem:[%s4360] sm:$0xff]
      %v4362 = vld [vmem:[%s4360 + $0x8] sm:$0xff]
      %v4363 = vld [vmem:[%s4360 + $0x10] sm:$0xff]
      %v4364 = vld [vmem:[%s4360 + $0x18] sm:$0xff]
      %v4366 = vsel %vm930, %v4358, 0
      %v4369 = vsel %vm930, %v4359, 0
      %4371 = vmatprep.subr.mxu0 0.0
      %4372 = vmatpush1.msra.mxu0 0.0
      %4373 = vmatprep.subr.mxu0 0.0
      %4374 = vmatpush1.msra.mxu0 0.0
      %4375 = vmatprep.subr.mxu0 0.0
      %4376 = vmatpush1.msra.mxu0 0.0
      %4377 = vmatprep.subr.mxu0 0.0
      %4378 = vmatpush1.msra.mxu0 0.0
      %4379 = vmatprep.subr.mxu0 0.0
      %4380 = vmatpush1.msra.mxu0 0.0
      %4381 = vmatprep.subr.mxu0 0.0
      %4382 = vmatpush1.msra.mxu0 0.0
      %4383 = vmatprep.subr.mxu0 0.0
      %4384 = vmatpush1.msra.mxu0 0.0
      %4385 = vmatprep.subr.mxu0 0.0
      %4386 = vmatpush1.msra.mxu0 0.0
      %4387 = vmatprep.subr.mxu0 0.0
      %4388 = vmatpush1.msra.mxu0 0.0
      %4389 = vmatprep.subr.mxu0 0.0
      %4390 = vmatpush1.msra.mxu0 0.0
      %4391 = vmatprep.subr.mxu0 0.0
      %4392 = vmatpush1.msra.mxu0 0.0
      %4393 = vmatprep.subr.mxu0 0.0
      %4394 = vmatpush1.msra.mxu0 0.0
      %4395 = vmatprep.subr.mxu0 0.0
      %4396 = vmatpush1.msra.mxu0 %v4364
      %4397 = vmatprep.subr.mxu0 0.0
      %4398 = vmatpush1.msra.mxu0 %v4363
      %4399 = vmatprep.subr.mxu0 0.0
      %4400 = vmatpush1.msra.mxu0 %v4362
      %4401 = vmatprep.subr.mxu0 0.0
      %4402 = vmatpush1.msra.mxu0 %v4361
      %4403 = vmatprep.subr.mxu0 0.0
      %4404 = vmatpush2.msra.mxu0 0.0
      %4405 = vmatprep.subr.mxu0 0.0
      %4406 = vmatpush2.msra.mxu0 0.0
      %4407 = vmatprep.subr.mxu0 0.0
      %4408 = vmatpush2.msra.mxu0 0.0
      %4409 = vmatprep.subr.mxu0 0.0
      %4410 = vmatpush2.msra.mxu0 0.0
      %4411 = vmatprep.subr.mxu0 0.0
      %4412 = vmatpush2.msra.mxu0 0.0
      %4413 = vmatprep.subr.mxu0 0.0
      %4414 = vmatpush2.msra.mxu0 0.0
      %4415 = vmatprep.subr.mxu0 0.0
      %4416 = vmatpush2.msra.mxu0 0.0
      %4417 = vmatprep.subr.mxu0 0.0
      %4418 = vmatpush2.msra.mxu0 0.0
      %4419 = vmatprep.subr.mxu0 0.0
      %4420 = vmatpush2.msra.mxu0 0.0
      %4421 = vmatprep.subr.mxu0 0.0
      %4422 = vmatpush2.msra.mxu0 0.0
      %4423 = vmatprep.subr.mxu0 0.0
      %4424 = vmatpush2.msra.mxu0 0.0
      %4425 = vmatprep.subr.mxu0 0.0
      %4426 = vmatpush2.msra.mxu0 0.0
      %4427 = vmatprep.subr.mxu0 0.0
      %4428 = vmatpush2.msra.mxu0 0.0
      %4429 = vmatprep.subr.mxu0 0.0
      %4430 = vmatpush2.msra.mxu0 0.0
      %4431 = vmatprep.subr.mxu0 0.0
      %4432 = vmatpush2.msra.mxu0 0.0
      %4433 = vmatprep.subr.mxu0 0.0
      %4434 = vmatpush2.msra.mxu0 0.0
      %4435 = vmatprep.mubr.f32.mxu0 0.0
      %4436 = vmatmul.mubr.f32.gmra.mxu0 %v4366
      %v4437 = vpop.f32.mrf.mxu0
      %v4438 = vadd.f32 0.0, %v4437
      %v4439 = vpop.f32.mrf.mxu0
      %4440 = vmatprep.mubr.f32.mxu0 0.0
      %4441 = vmatmul.mubr.f32.gmra.mxu0 %v4369
      %v4442 = vpop.f32.mrf.mxu0
      %v4443 = vadd.f32 0.0, %v4442
      %v4444 = vpop.f32.mrf.mxu0
      %4445 = vdwg.mxu0
      %s4446 = scalar_lea.vmem %s9, 288
      %v4447 = vld [vmem:[%s4446] sm:$0xff]
      %v4448 = vld [vmem:[%s4446 + $0x8] sm:$0xff]
      %s4449 = scalar_lea.vmem %s10, 18
      %v4450 = vld [vmem:[%s4449] sm:$0x1]
      %v4452 = vlaneseq
      %v4453 = vshrl.u32 %v4452, 7
      %v4454 = vsub.s32 0, %v4453
      %v4455 = vrot.slane %v4450, %v4454
      %v4458 = vsel %vm834, %v4447, 0
      %v4461 = vsel %vm834, %v4448, 0
      %4463 = vmatprep.subr.mxu0 0.0
      %4464 = vmatpush1.msra.mxu0 0.0
      %4465 = vmatprep.subr.mxu0 0.0
      %4466 = vmatpush1.msra.mxu0 0.0
      %4467 = vmatprep.subr.mxu0 0.0
      %4468 = vmatpush1.msra.mxu0 0.0
      %4469 = vmatprep.subr.mxu0 0.0
      %4470 = vmatpush1.msra.mxu0 0.0
      %4471 = vmatprep.subr.mxu0 0.0
      %4472 = vmatpush1.msra.mxu0 0.0
      %4473 = vmatprep.subr.mxu0 0.0
      %4474 = vmatpush1.msra.mxu0 0.0
      %4475 = vmatprep.subr.mxu0 0.0
      %4476 = vmatpush1.msra.mxu0 0.0
      %4477 = vmatprep.subr.mxu0 0.0
      %4478 = vmatpush1.msra.mxu0 0.0
      %4479 = vmatprep.subr.mxu0 0.0
      %4480 = vmatpush1.msra.mxu0 0.0
      %4481 = vmatprep.subr.mxu0 0.0
      %4482 = vmatpush1.msra.mxu0 0.0
      %4483 = vmatprep.subr.mxu0 0.0
      %4484 = vmatpush1.msra.mxu0 0.0
      %4485 = vmatprep.subr.mxu0 0.0
      %4486 = vmatpush1.msra.mxu0 0.0
      %4487 = vmatprep.subr.mxu0 0.0
      %4488 = vmatpush1.msra.mxu0 0.0
      %4489 = vmatprep.subr.mxu0 0.0
      %4490 = vmatpush1.msra.mxu0 0.0
      %4491 = vmatprep.subr.mxu0 0.0
      %4492 = vmatpush1.msra.mxu0 %v4443
      %4493 = vmatprep.subr.mxu0 0.0
      %4494 = vmatpush1.msra.mxu0 %v4438
      %4495 = vmatprep.subr.mxu0 0.0
      %4496 = vmatpush2.msra.mxu0 0.0
      %4497 = vmatprep.subr.mxu0 0.0
      %4498 = vmatpush2.msra.mxu0 0.0
      %4499 = vmatprep.subr.mxu0 0.0
      %4500 = vmatpush2.msra.mxu0 0.0
      %4501 = vmatprep.subr.mxu0 0.0
      %4502 = vmatpush2.msra.mxu0 0.0
      %4503 = vmatprep.subr.mxu0 0.0
      %4504 = vmatpush2.msra.mxu0 0.0
      %4505 = vmatprep.subr.mxu0 0.0
      %4506 = vmatpush2.msra.mxu0 0.0
      %4507 = vmatprep.subr.mxu0 0.0
      %4508 = vmatpush2.msra.mxu0 0.0
      %4509 = vmatprep.subr.mxu0 0.0
      %4510 = vmatpush2.msra.mxu0 0.0
      %4511 = vmatprep.subr.mxu0 0.0
      %4512 = vmatpush2.msra.mxu0 0.0
      %4513 = vmatprep.subr.mxu0 0.0
      %4514 = vmatpush2.msra.mxu0 0.0
      %4515 = vmatprep.subr.mxu0 0.0
      %4516 = vmatpush2.msra.mxu0 0.0
      %4517 = vmatprep.subr.mxu0 0.0
      %4518 = vmatpush2.msra.mxu0 0.0
      %4519 = vmatprep.subr.mxu0 0.0
      %4520 = vmatpush2.msra.mxu0 0.0
      %4521 = vmatprep.subr.mxu0 0.0
      %4522 = vmatpush2.msra.mxu0 0.0
      %4523 = vmatprep.subr.mxu0 0.0
      %4524 = vmatpush2.msra.mxu0 0.0
      %4525 = vmatprep.subr.mxu0 0.0
      %4526 = vmatpush2.msra.mxu0 0.0
      %4527 = vmatprep.mubr.f32.mxu0 0.0
      %4528 = vmatmul.mubr.f32.gmra.mxu0 %v4458
      %v4529 = vpop.f32.mrf.mxu0
      %v4530 = vadd.f32 %v4455, %v4529
      %v4531 = vpop.f32.mrf.mxu0
      %4532 = vmatprep.mubr.f32.mxu0 0.0
      %4533 = vmatmul.mubr.f32.gmra.mxu0 %v4461
      %v4534 = vpop.f32.mrf.mxu0
      %v4535 = vadd.f32 %v4455, %v4534
      %v4536 = vpop.f32.mrf.mxu0
      %4537 = vdwg.mxu0
      %s4538 = scalar_lea.vmem %s11, 288
      %v4539 = vld [vmem:[%s4538] sm:$0xff]
      %v4540 = vld [vmem:[%s4538 + $0x8] sm:$0xff]
      %v4541 = vmul.f32 %v4530, %v4539
      %v4542 = vmul.f32 %v4535, %v4540
      %s4543 = scalar_lea.vmem %s12, 288
      %v4544 = vld [vmem:[%s4543] sm:$0xff]
      %v4545 = vld [vmem:[%s4543 + $0x8] sm:$0xff]
      %v4546 = vadd.f32 %v4541, %v4544
      %v4547 = vadd.f32 %v4542, %v4545
      %v4548 = vtanh.pop %v4546
      %v4549 = vtanh.pop %v4547
      %s4550 = scalar_lea.vmem %s8, 608
      %v4551 = vld [vmem:[%s4550] sm:$0xff]
      %v4552 = vld [vmem:[%s4550 + $0x8] sm:$0xff]
      %v4553 = vld [vmem:[%s4550 + $0x10] sm:$0xff]
      %v4554 = vld [vmem:[%s4550 + $0x18] sm:$0xff]
      %v4556 = vsel %vm930, %v4548, 0
      %v4559 = vsel %vm930, %v4549, 0
      %4561 = vmatprep.subr.mxu0 0.0
      %4562 = vmatpush1.msra.mxu0 0.0
      %4563 = vmatprep.subr.mxu0 0.0
      %4564 = vmatpush1.msra.mxu0 0.0
      %4565 = vmatprep.subr.mxu0 0.0
      %4566 = vmatpush1.msra.mxu0 0.0
      %4567 = vmatprep.subr.mxu0 0.0
      %4568 = vmatpush1.msra.mxu0 0.0
      %4569 = vmatprep.subr.mxu0 0.0
      %4570 = vmatpush1.msra.mxu0 0.0
      %4571 = vmatprep.subr.mxu0 0.0
      %4572 = vmatpush1.msra.mxu0 0.0
      %4573 = vmatprep.subr.mxu0 0.0
      %4574 = vmatpush1.msra.mxu0 0.0
      %4575 = vmatprep.subr.mxu0 0.0
      %4576 = vmatpush1.msra.mxu0 0.0
      %4577 = vmatprep.subr.mxu0 0.0
      %4578 = vmatpush1.msra.mxu0 0.0
      %4579 = vmatprep.subr.mxu0 0.0
      %4580 = vmatpush1.msra.mxu0 0.0
      %4581 = vmatprep.subr.mxu0 0.0
      %4582 = vmatpush1.msra.mxu0 0.0
      %4583 = vmatprep.subr.mxu0 0.0
      %4584 = vmatpush1.msra.mxu0 0.0
      %4585 = vmatprep.subr.mxu0 0.0
      %4586 = vmatpush1.msra.mxu0 %v4554
      %4587 = vmatprep.subr.mxu0 0.0
      %4588 = vmatpush1.msra.mxu0 %v4553
      %4589 = vmatprep.subr.mxu0 0.0
      %4590 = vmatpush1.msra.mxu0 %v4552
      %4591 = vmatprep.subr.mxu0 0.0
      %4592 = vmatpush1.msra.mxu0 %v4551
      %4593 = vmatprep.subr.mxu0 0.0
      %4594 = vmatpush2.msra.mxu0 0.0
      %4595 = vmatprep.subr.mxu0 0.0
      %4596 = vmatpush2.msra.mxu0 0.0
      %4597 = vmatprep.subr.mxu0 0.0
      %4598 = vmatpush2.msra.mxu0 0.0
      %4599 = vmatprep.subr.mxu0 0.0
      %4600 = vmatpush2.msra.mxu0 0.0
      %4601 = vmatprep.subr.mxu0 0.0
      %4602 = vmatpush2.msra.mxu0 0.0
      %4603 = vmatprep.subr.mxu0 0.0
      %4604 = vmatpush2.msra.mxu0 0.0
      %4605 = vmatprep.subr.mxu0 0.0
      %4606 = vmatpush2.msra.mxu0 0.0
      %4607 = vmatprep.subr.mxu0 0.0
      %4608 = vmatpush2.msra.mxu0 0.0
      %4609 = vmatprep.subr.mxu0 0.0
      %4610 = vmatpush2.msra.mxu0 0.0
      %4611 = vmatprep.subr.mxu0 0.0
      %4612 = vmatpush2.msra.mxu0 0.0
      %4613 = vmatprep.subr.mxu0 0.0
      %4614 = vmatpush2.msra.mxu0 0.0
      %4615 = vmatprep.subr.mxu0 0.0
      %4616 = vmatpush2.msra.mxu0 0.0
      %4617 = vmatprep.subr.mxu0 0.0
      %4618 = vmatpush2.msra.mxu0 0.0
      %4619 = vmatprep.subr.mxu0 0.0
      %4620 = vmatpush2.msra.mxu0 0.0
      %4621 = vmatprep.subr.mxu0 0.0
      %4622 = vmatpush2.msra.mxu0 0.0
      %4623 = vmatprep.subr.mxu0 0.0
      %4624 = vmatpush2.msra.mxu0 0.0
      %4625 = vmatprep.mubr.f32.mxu0 0.0
      %4626 = vmatmul.mubr.f32.gmra.mxu0 %v4556
      %v4627 = vpop.f32.mrf.mxu0
      %v4628 = vadd.f32 0.0, %v4627
      %v4629 = vpop.f32.mrf.mxu0
      %4630 = vmatprep.mubr.f32.mxu0 0.0
      %4631 = vmatmul.mubr.f32.gmra.mxu0 %v4559
      %v4632 = vpop.f32.mrf.mxu0
      %v4633 = vadd.f32 0.0, %v4632
      %v4634 = vpop.f32.mrf.mxu0
      %4635 = vdwg.mxu0
      %s4636 = scalar_lea.vmem %s9, 304
      %v4637 = vld [vmem:[%s4636] sm:$0xff]
      %v4638 = vld [vmem:[%s4636 + $0x8] sm:$0xff]
      %s4639 = scalar_lea.vmem %s10, 19
      %v4640 = vld [vmem:[%s4639] sm:$0x1]
      %v4642 = vlaneseq
      %v4643 = vshrl.u32 %v4642, 7
      %v4644 = vsub.s32 0, %v4643
      %v4645 = vrot.slane %v4640, %v4644
      %v4648 = vsel %vm834, %v4637, 0
      %v4651 = vsel %vm834, %v4638, 0
      %4653 = vmatprep.subr.mxu0 0.0
      %4654 = vmatpush1.msra.mxu0 0.0
      %4655 = vmatprep.subr.mxu0 0.0
      %4656 = vmatpush1.msra.mxu0 0.0
      %4657 = vmatprep.subr.mxu0 0.0
      %4658 = vmatpush1.msra.mxu0 0.0
      %4659 = vmatprep.subr.mxu0 0.0
      %4660 = vmatpush1.msra.mxu0 0.0
      %4661 = vmatprep.subr.mxu0 0.0
      %4662 = vmatpush1.msra.mxu0 0.0
      %4663 = vmatprep.subr.mxu0 0.0
      %4664 = vmatpush1.msra.mxu0 0.0
      %4665 = vmatprep.subr.mxu0 0.0
      %4666 = vmatpush1.msra.mxu0 0.0
      %4667 = vmatprep.subr.mxu0 0.0
      %4668 = vmatpush1.msra.mxu0 0.0
      %4669 = vmatprep.subr.mxu0 0.0
      %4670 = vmatpush1.msra.mxu0 0.0
      %4671 = vmatprep.subr.mxu0 0.0
      %4672 = vmatpush1.msra.mxu0 0.0
      %4673 = vmatprep.subr.mxu0 0.0
      %4674 = vmatpush1.msra.mxu0 0.0
      %4675 = vmatprep.subr.mxu0 0.0
      %4676 = vmatpush1.msra.mxu0 0.0
      %4677 = vmatprep.subr.mxu0 0.0
      %4678 = vmatpush1.msra.mxu0 0.0
      %4679 = vmatprep.subr.mxu0 0.0
      %4680 = vmatpush1.msra.mxu0 0.0
      %4681 = vmatprep.subr.mxu0 0.0
      %4682 = vmatpush1.msra.mxu0 %v4633
      %4683 = vmatprep.subr.mxu0 0.0
      %4684 = vmatpush1.msra.mxu0 %v4628
      %4685 = vmatprep.subr.mxu0 0.0
      %4686 = vmatpush2.msra.mxu0 0.0
      %4687 = vmatprep.subr.mxu0 0.0
      %4688 = vmatpush2.msra.mxu0 0.0
      %4689 = vmatprep.subr.mxu0 0.0
      %4690 = vmatpush2.msra.mxu0 0.0
      %4691 = vmatprep.subr.mxu0 0.0
      %4692 = vmatpush2.msra.mxu0 0.0
      %4693 = vmatprep.subr.mxu0 0.0
      %4694 = vmatpush2.msra.mxu0 0.0
      %4695 = vmatprep.subr.mxu0 0.0
      %4696 = vmatpush2.msra.mxu0 0.0
      %4697 = vmatprep.subr.mxu0 0.0
      %4698 = vmatpush2.msra.mxu0 0.0
      %4699 = vmatprep.subr.mxu0 0.0
      %4700 = vmatpush2.msra.mxu0 0.0
      %4701 = vmatprep.subr.mxu0 0.0
      %4702 = vmatpush2.msra.mxu0 0.0
      %4703 = vmatprep.subr.mxu0 0.0
      %4704 = vmatpush2.msra.mxu0 0.0
      %4705 = vmatprep.subr.mxu0 0.0
      %4706 = vmatpush2.msra.mxu0 0.0
      %4707 = vmatprep.subr.mxu0 0.0
      %4708 = vmatpush2.msra.mxu0 0.0
      %4709 = vmatprep.subr.mxu0 0.0
      %4710 = vmatpush2.msra.mxu0 0.0
      %4711 = vmatprep.subr.mxu0 0.0
      %4712 = vmatpush2.msra.mxu0 0.0
      %4713 = vmatprep.subr.mxu0 0.0
      %4714 = vmatpush2.msra.mxu0 0.0
      %4715 = vmatprep.subr.mxu0 0.0
      %4716 = vmatpush2.msra.mxu0 0.0
      %4717 = vmatprep.mubr.f32.mxu0 0.0
      %4718 = vmatmul.mubr.f32.gmra.mxu0 %v4648
      %v4719 = vpop.f32.mrf.mxu0
      %v4720 = vadd.f32 %v4645, %v4719
      %v4721 = vpop.f32.mrf.mxu0
      %4722 = vmatprep.mubr.f32.mxu0 0.0
      %4723 = vmatmul.mubr.f32.gmra.mxu0 %v4651
      %v4724 = vpop.f32.mrf.mxu0
      %v4725 = vadd.f32 %v4645, %v4724
      %v4726 = vpop.f32.mrf.mxu0
      %4727 = vdwg.mxu0
      %s4728 = scalar_lea.vmem %s11, 304
      %v4729 = vld [vmem:[%s4728] sm:$0xff]
      %v4730 = vld [vmem:[%s4728 + $0x8] sm:$0xff]
      %v4731 = vmul.f32 %v4720, %v4729
      %v4732 = vmul.f32 %v4725, %v4730
      %s4733 = scalar_lea.vmem %s12, 304
      %v4734 = vld [vmem:[%s4733] sm:$0xff]
      %v4735 = vld [vmem:[%s4733 + $0x8] sm:$0xff]
      %v4736 = vadd.f32 %v4731, %v4734
      %v4737 = vadd.f32 %v4732, %v4735
      %v4738 = vtanh.pop %v4736
      %v4739 = vtanh.pop %v4737
      %v4740 = vadd.f32 %v4738, %v4358
      %v4741 = vadd.f32 %v4739, %v4359
      %s4742 = scalar_lea.vmem %s8, 640
      %v4743 = vld [vmem:[%s4742] sm:$0xff]
      %v4744 = vld [vmem:[%s4742 + $0x8] sm:$0xff]
      %v4745 = vld [vmem:[%s4742 + $0x10] sm:$0xff]
      %v4746 = vld [vmem:[%s4742 + $0x18] sm:$0xff]
      %v4748 = vsel %vm930, %v4740, 0
      %v4751 = vsel %vm930, %v4741, 0
      %4753 = vmatprep.subr.mxu0 0.0
      %4754 = vmatpush1.msra.mxu0 0.0
      %4755 = vmatprep.subr.mxu0 0.0
      %4756 = vmatpush1.msra.mxu0 0.0
      %4757 = vmatprep.subr.mxu0 0.0
      %4758 = vmatpush1.msra.mxu0 0.0
      %4759 = vmatprep.subr.mxu0 0.0
      %4760 = vmatpush1.msra.mxu0 0.0
      %4761 = vmatprep.subr.mxu0 0.0
      %4762 = vmatpush1.msra.mxu0 0.0
      %4763 = vmatprep.subr.mxu0 0.0
      %4764 = vmatpush1.msra.mxu0 0.0
      %4765 = vmatprep.subr.mxu0 0.0
      %4766 = vmatpush1.msra.mxu0 0.0
      %4767 = vmatprep.subr.mxu0 0.0
      %4768 = vmatpush1.msra.mxu0 0.0
      %4769 = vmatprep.subr.mxu0 0.0
      %4770 = vmatpush1.msra.mxu0 0.0
      %4771 = vmatprep.subr.mxu0 0.0
      %4772 = vmatpush1.msra.mxu0 0.0
      %4773 = vmatprep.subr.mxu0 0.0
      %4774 = vmatpush1.msra.mxu0 0.0
      %4775 = vmatprep.subr.mxu0 0.0
      %4776 = vmatpush1.msra.mxu0 0.0
      %4777 = vmatprep.subr.mxu0 0.0
      %4778 = vmatpush1.msra.mxu0 %v4746
      %4779 = vmatprep.subr.mxu0 0.0
      %4780 = vmatpush1.msra.mxu0 %v4745
      %4781 = vmatprep.subr.mxu0 0.0
      %4782 = vmatpush1.msra.mxu0 %v4744
      %4783 = vmatprep.subr.mxu0 0.0
      %4784 = vmatpush1.msra.mxu0 %v4743
      %4785 = vmatprep.subr.mxu0 0.0
      %4786 = vmatpush2.msra.mxu0 0.0
      %4787 = vmatprep.subr.mxu0 0.0
      %4788 = vmatpush2.msra.mxu0 0.0
      %4789 = vmatprep.subr.mxu0 0.0
      %4790 = vmatpush2.msra.mxu0 0.0
      %4791 = vmatprep.subr.mxu0 0.0
      %4792 = vmatpush2.msra.mxu0 0.0
      %4793 = vmatprep.subr.mxu0 0.0
      %4794 = vmatpush2.msra.mxu0 0.0
      %4795 = vmatprep.subr.mxu0 0.0
      %4796 = vmatpush2.msra.mxu0 0.0
      %4797 = vmatprep.subr.mxu0 0.0
      %4798 = vmatpush2.msra.mxu0 0.0
      %4799 = vmatprep.subr.mxu0 0.0
      %4800 = vmatpush2.msra.mxu0 0.0
      %4801 = vmatprep.subr.mxu0 0.0
      %4802 = vmatpush2.msra.mxu0 0.0
      %4803 = vmatprep.subr.mxu0 0.0
      %4804 = vmatpush2.msra.mxu0 0.0
      %4805 = vmatprep.subr.mxu0 0.0
      %4806 = vmatpush2.msra.mxu0 0.0
      %4807 = vmatprep.subr.mxu0 0.0
      %4808 = vmatpush2.msra.mxu0 0.0
      %4809 = vmatprep.subr.mxu0 0.0
      %4810 = vmatpush2.msra.mxu0 0.0
      %4811 = vmatprep.subr.mxu0 0.0
      %4812 = vmatpush2.msra.mxu0 0.0
      %4813 = vmatprep.subr.mxu0 0.0
      %4814 = vmatpush2.msra.mxu0 0.0
      %4815 = vmatprep.subr.mxu0 0.0
      %4816 = vmatpush2.msra.mxu0 0.0
      %4817 = vmatprep.mubr.f32.mxu0 0.0
      %4818 = vmatmul.mubr.f32.gmra.mxu0 %v4748
      %v4819 = vpop.f32.mrf.mxu0
      %v4820 = vadd.f32 0.0, %v4819
      %v4821 = vpop.f32.mrf.mxu0
      %4822 = vmatprep.mubr.f32.mxu0 0.0
      %4823 = vmatmul.mubr.f32.gmra.mxu0 %v4751
      %v4824 = vpop.f32.mrf.mxu0
      %v4825 = vadd.f32 0.0, %v4824
      %v4826 = vpop.f32.mrf.mxu0
      %4827 = vdwg.mxu0
      %s4828 = scalar_lea.vmem %s9, 320
      %v4829 = vld [vmem:[%s4828] sm:$0xff]
      %v4830 = vld [vmem:[%s4828 + $0x8] sm:$0xff]
      %s4831 = scalar_lea.vmem %s10, 20
      %v4832 = vld [vmem:[%s4831] sm:$0x1]
      %v4834 = vlaneseq
      %v4835 = vshrl.u32 %v4834, 7
      %v4836 = vsub.s32 0, %v4835
      %v4837 = vrot.slane %v4832, %v4836
      %v4840 = vsel %vm834, %v4829, 0
      %v4843 = vsel %vm834, %v4830, 0
      %4845 = vmatprep.subr.mxu0 0.0
      %4846 = vmatpush1.msra.mxu0 0.0
      %4847 = vmatprep.subr.mxu0 0.0
      %4848 = vmatpush1.msra.mxu0 0.0
      %4849 = vmatprep.subr.mxu0 0.0
      %4850 = vmatpush1.msra.mxu0 0.0
      %4851 = vmatprep.subr.mxu0 0.0
      %4852 = vmatpush1.msra.mxu0 0.0
      %4853 = vmatprep.subr.mxu0 0.0
      %4854 = vmatpush1.msra.mxu0 0.0
      %4855 = vmatprep.subr.mxu0 0.0
      %4856 = vmatpush1.msra.mxu0 0.0
      %4857 = vmatprep.subr.mxu0 0.0
      %4858 = vmatpush1.msra.mxu0 0.0
      %4859 = vmatprep.subr.mxu0 0.0
      %4860 = vmatpush1.msra.mxu0 0.0
      %4861 = vmatprep.subr.mxu0 0.0
      %4862 = vmatpush1.msra.mxu0 0.0
      %4863 = vmatprep.subr.mxu0 0.0
      %4864 = vmatpush1.msra.mxu0 0.0
      %4865 = vmatprep.subr.mxu0 0.0
      %4866 = vmatpush1.msra.mxu0 0.0
      %4867 = vmatprep.subr.mxu0 0.0
      %4868 = vmatpush1.msra.mxu0 0.0
      %4869 = vmatprep.subr.mxu0 0.0
      %4870 = vmatpush1.msra.mxu0 0.0
      %4871 = vmatprep.subr.mxu0 0.0
      %4872 = vmatpush1.msra.mxu0 0.0
      %4873 = vmatprep.subr.mxu0 0.0
      %4874 = vmatpush1.msra.mxu0 %v4825
      %4875 = vmatprep.subr.mxu0 0.0
      %4876 = vmatpush1.msra.mxu0 %v4820
      %4877 = vmatprep.subr.mxu0 0.0
      %4878 = vmatpush2.msra.mxu0 0.0
      %4879 = vmatprep.subr.mxu0 0.0
      %4880 = vmatpush2.msra.mxu0 0.0
      %4881 = vmatprep.subr.mxu0 0.0
      %4882 = vmatpush2.msra.mxu0 0.0
      %4883 = vmatprep.subr.mxu0 0.0
      %4884 = vmatpush2.msra.mxu0 0.0
      %4885 = vmatprep.subr.mxu0 0.0
      %4886 = vmatpush2.msra.mxu0 0.0
      %4887 = vmatprep.subr.mxu0 0.0
      %4888 = vmatpush2.msra.mxu0 0.0
      %4889 = vmatprep.subr.mxu0 0.0
      %4890 = vmatpush2.msra.mxu0 0.0
      %4891 = vmatprep.subr.mxu0 0.0
      %4892 = vmatpush2.msra.mxu0 0.0
      %4893 = vmatprep.subr.mxu0 0.0
      %4894 = vmatpush2.msra.mxu0 0.0
      %4895 = vmatprep.subr.mxu0 0.0
      %4896 = vmatpush2.msra.mxu0 0.0
      %4897 = vmatprep.subr.mxu0 0.0
      %4898 = vmatpush2.msra.mxu0 0.0
      %4899 = vmatprep.subr.mxu0 0.0
      %4900 = vmatpush2.msra.mxu0 0.0
      %4901 = vmatprep.subr.mxu0 0.0
      %4902 = vmatpush2.msra.mxu0 0.0
      %4903 = vmatprep.subr.mxu0 0.0
      %4904 = vmatpush2.msra.mxu0 0.0
      %4905 = vmatprep.subr.mxu0 0.0
      %4906 = vmatpush2.msra.mxu0 0.0
      %4907 = vmatprep.subr.mxu0 0.0
      %4908 = vmatpush2.msra.mxu0 0.0
      %4909 = vmatprep.mubr.f32.mxu0 0.0
      %4910 = vmatmul.mubr.f32.gmra.mxu0 %v4840
      %v4911 = vpop.f32.mrf.mxu0
      %v4912 = vadd.f32 %v4837, %v4911
      %v4913 = vpop.f32.mrf.mxu0
      %4914 = vmatprep.mubr.f32.mxu0 0.0
      %4915 = vmatmul.mubr.f32.gmra.mxu0 %v4843
      %v4916 = vpop.f32.mrf.mxu0
      %v4917 = vadd.f32 %v4837, %v4916
      %v4918 = vpop.f32.mrf.mxu0
      %4919 = vdwg.mxu0
      %s4920 = scalar_lea.vmem %s11, 320
      %v4921 = vld [vmem:[%s4920] sm:$0xff]
      %v4922 = vld [vmem:[%s4920 + $0x8] sm:$0xff]
      %v4923 = vmul.f32 %v4912, %v4921
      %v4924 = vmul.f32 %v4917, %v4922
      %s4925 = scalar_lea.vmem %s12, 320
      %v4926 = vld [vmem:[%s4925] sm:$0xff]
      %v4927 = vld [vmem:[%s4925 + $0x8] sm:$0xff]
      %v4928 = vadd.f32 %v4923, %v4926
      %v4929 = vadd.f32 %v4924, %v4927
      %v4930 = vtanh.pop %v4928
      %v4931 = vtanh.pop %v4929
      %s4932 = scalar_lea.vmem %s8, 672
      %v4933 = vld [vmem:[%s4932] sm:$0xff]
      %v4934 = vld [vmem:[%s4932 + $0x8] sm:$0xff]
      %v4935 = vld [vmem:[%s4932 + $0x10] sm:$0xff]
      %v4936 = vld [vmem:[%s4932 + $0x18] sm:$0xff]
      %v4938 = vsel %vm930, %v4930, 0
      %v4941 = vsel %vm930, %v4931, 0
      %4943 = vmatprep.subr.mxu0 0.0
      %4944 = vmatpush1.msra.mxu0 0.0
      %4945 = vmatprep.subr.mxu0 0.0
      %4946 = vmatpush1.msra.mxu0 0.0
      %4947 = vmatprep.subr.mxu0 0.0
      %4948 = vmatpush1.msra.mxu0 0.0
      %4949 = vmatprep.subr.mxu0 0.0
      %4950 = vmatpush1.msra.mxu0 0.0
      %4951 = vmatprep.subr.mxu0 0.0
      %4952 = vmatpush1.msra.mxu0 0.0
      %4953 = vmatprep.subr.mxu0 0.0
      %4954 = vmatpush1.msra.mxu0 0.0
      %4955 = vmatprep.subr.mxu0 0.0
      %4956 = vmatpush1.msra.mxu0 0.0
      %4957 = vmatprep.subr.mxu0 0.0
      %4958 = vmatpush1.msra.mxu0 0.0
      %4959 = vmatprep.subr.mxu0 0.0
      %4960 = vmatpush1.msra.mxu0 0.0
      %4961 = vmatprep.subr.mxu0 0.0
      %4962 = vmatpush1.msra.mxu0 0.0
      %4963 = vmatprep.subr.mxu0 0.0
      %4964 = vmatpush1.msra.mxu0 0.0
      %4965 = vmatprep.subr.mxu0 0.0
      %4966 = vmatpush1.msra.mxu0 0.0
      %4967 = vmatprep.subr.mxu0 0.0
      %4968 = vmatpush1.msra.mxu0 %v4936
      %4969 = vmatprep.subr.mxu0 0.0
      %4970 = vmatpush1.msra.mxu0 %v4935
      %4971 = vmatprep.subr.mxu0 0.0
      %4972 = vmatpush1.msra.mxu0 %v4934
      %4973 = vmatprep.subr.mxu0 0.0
      %4974 = vmatpush1.msra.mxu0 %v4933
      %4975 = vmatprep.subr.mxu0 0.0
      %4976 = vmatpush2.msra.mxu0 0.0
      %4977 = vmatprep.subr.mxu0 0.0
      %4978 = vmatpush2.msra.mxu0 0.0
      %4979 = vmatprep.subr.mxu0 0.0
      %4980 = vmatpush2.msra.mxu0 0.0
      %4981 = vmatprep.subr.mxu0 0.0
      %4982 = vmatpush2.msra.mxu0 0.0
      %4983 = vmatprep.subr.mxu0 0.0
      %4984 = vmatpush2.msra.mxu0 0.0
      %4985 = vmatprep.subr.mxu0 0.0
      %4986 = vmatpush2.msra.mxu0 0.0
      %4987 = vmatprep.subr.mxu0 0.0
      %4988 = vmatpush2.msra.mxu0 0.0
      %4989 = vmatprep.subr.mxu0 0.0
      %4990 = vmatpush2.msra.mxu0 0.0
      %4991 = vmatprep.subr.mxu0 0.0
      %4992 = vmatpush2.msra.mxu0 0.0
      %4993 = vmatprep.subr.mxu0 0.0
      %4994 = vmatpush2.msra.mxu0 0.0
      %4995 = vmatprep.subr.mxu0 0.0
      %4996 = vmatpush2.msra.mxu0 0.0
      %4997 = vmatprep.subr.mxu0 0.0
      %4998 = vmatpush2.msra.mxu0 0.0
      %4999 = vmatprep.subr.mxu0 0.0
      %5000 = vmatpush2.msra.mxu0 0.0
      %5001 = vmatprep.subr.mxu0 0.0
      %5002 = vmatpush2.msra.mxu0 0.0
      %5003 = vmatprep.subr.mxu0 0.0
      %5004 = vmatpush2.msra.mxu0 0.0
      %5005 = vmatprep.subr.mxu0 0.0
      %5006 = vmatpush2.msra.mxu0 0.0
      %5007 = vmatprep.mubr.f32.mxu0 0.0
      %5008 = vmatmul.mubr.f32.gmra.mxu0 %v4938
      %v5009 = vpop.f32.mrf.mxu0
      %v5010 = vadd.f32 0.0, %v5009
      %v5011 = vpop.f32.mrf.mxu0
      %5012 = vmatprep.mubr.f32.mxu0 0.0
      %5013 = vmatmul.mubr.f32.gmra.mxu0 %v4941
      %v5014 = vpop.f32.mrf.mxu0
      %v5015 = vadd.f32 0.0, %v5014
      %v5016 = vpop.f32.mrf.mxu0
      %5017 = vdwg.mxu0
      %s5018 = scalar_lea.vmem %s9, 336
      %v5019 = vld [vmem:[%s5018] sm:$0xff]
      %v5020 = vld [vmem:[%s5018 + $0x8] sm:$0xff]
      %s5021 = scalar_lea.vmem %s10, 21
      %v5022 = vld [vmem:[%s5021] sm:$0x1]
      %v5024 = vlaneseq
      %v5025 = vshrl.u32 %v5024, 7
      %v5026 = vsub.s32 0, %v5025
      %v5027 = vrot.slane %v5022, %v5026
      %v5030 = vsel %vm834, %v5019, 0
      %v5033 = vsel %vm834, %v5020, 0
      %5035 = vmatprep.subr.mxu0 0.0
      %5036 = vmatpush1.msra.mxu0 0.0
      %5037 = vmatprep.subr.mxu0 0.0
      %5038 = vmatpush1.msra.mxu0 0.0
      %5039 = vmatprep.subr.mxu0 0.0
      %5040 = vmatpush1.msra.mxu0 0.0
      %5041 = vmatprep.subr.mxu0 0.0
      %5042 = vmatpush1.msra.mxu0 0.0
      %5043 = vmatprep.subr.mxu0 0.0
      %5044 = vmatpush1.msra.mxu0 0.0
      %5045 = vmatprep.subr.mxu0 0.0
      %5046 = vmatpush1.msra.mxu0 0.0
      %5047 = vmatprep.subr.mxu0 0.0
      %5048 = vmatpush1.msra.mxu0 0.0
      %5049 = vmatprep.subr.mxu0 0.0
      %5050 = vmatpush1.msra.mxu0 0.0
      %5051 = vmatprep.subr.mxu0 0.0
      %5052 = vmatpush1.msra.mxu0 0.0
      %5053 = vmatprep.subr.mxu0 0.0
      %5054 = vmatpush1.msra.mxu0 0.0
      %5055 = vmatprep.subr.mxu0 0.0
      %5056 = vmatpush1.msra.mxu0 0.0
      %5057 = vmatprep.subr.mxu0 0.0
      %5058 = vmatpush1.msra.mxu0 0.0
      %5059 = vmatprep.subr.mxu0 0.0
      %5060 = vmatpush1.msra.mxu0 0.0
      %5061 = vmatprep.subr.mxu0 0.0
      %5062 = vmatpush1.msra.mxu0 0.0
      %5063 = vmatprep.subr.mxu0 0.0
      %5064 = vmatpush1.msra.mxu0 %v5015
      %5065 = vmatprep.subr.mxu0 0.0
      %5066 = vmatpush1.msra.mxu0 %v5010
      %5067 = vmatprep.subr.mxu0 0.0
      %5068 = vmatpush2.msra.mxu0 0.0
      %5069 = vmatprep.subr.mxu0 0.0
      %5070 = vmatpush2.msra.mxu0 0.0
      %5071 = vmatprep.subr.mxu0 0.0
      %5072 = vmatpush2.msra.mxu0 0.0
      %5073 = vmatprep.subr.mxu0 0.0
      %5074 = vmatpush2.msra.mxu0 0.0
      %5075 = vmatprep.subr.mxu0 0.0
      %5076 = vmatpush2.msra.mxu0 0.0
      %5077 = vmatprep.subr.mxu0 0.0
      %5078 = vmatpush2.msra.mxu0 0.0
      %5079 = vmatprep.subr.mxu0 0.0
      %5080 = vmatpush2.msra.mxu0 0.0
      %5081 = vmatprep.subr.mxu0 0.0
      %5082 = vmatpush2.msra.mxu0 0.0
      %5083 = vmatprep.subr.mxu0 0.0
      %5084 = vmatpush2.msra.mxu0 0.0
      %5085 = vmatprep.subr.mxu0 0.0
      %5086 = vmatpush2.msra.mxu0 0.0
      %5087 = vmatprep.subr.mxu0 0.0
      %5088 = vmatpush2.msra.mxu0 0.0
      %5089 = vmatprep.subr.mxu0 0.0
      %5090 = vmatpush2.msra.mxu0 0.0
      %5091 = vmatprep.subr.mxu0 0.0
      %5092 = vmatpush2.msra.mxu0 0.0
      %5093 = vmatprep.subr.mxu0 0.0
      %5094 = vmatpush2.msra.mxu0 0.0
      %5095 = vmatprep.subr.mxu0 0.0
      %5096 = vmatpush2.msra.mxu0 0.0
      %5097 = vmatprep.subr.mxu0 0.0
      %5098 = vmatpush2.msra.mxu0 0.0
      %5099 = vmatprep.mubr.f32.mxu0 0.0
      %5100 = vmatmul.mubr.f32.gmra.mxu0 %v5030
      %v5101 = vpop.f32.mrf.mxu0
      %v5102 = vadd.f32 %v5027, %v5101
      %v5103 = vpop.f32.mrf.mxu0
      %5104 = vmatprep.mubr.f32.mxu0 0.0
      %5105 = vmatmul.mubr.f32.gmra.mxu0 %v5033
      %v5106 = vpop.f32.mrf.mxu0
      %v5107 = vadd.f32 %v5027, %v5106
      %v5108 = vpop.f32.mrf.mxu0
      %5109 = vdwg.mxu0
      %s5110 = scalar_lea.vmem %s11, 336
      %v5111 = vld [vmem:[%s5110] sm:$0xff]
      %v5112 = vld [vmem:[%s5110 + $0x8] sm:$0xff]
      %v5113 = vmul.f32 %v5102, %v5111
      %v5114 = vmul.f32 %v5107, %v5112
      %s5115 = scalar_lea.vmem %s12, 336
      %v5116 = vld [vmem:[%s5115] sm:$0xff]
      %v5117 = vld [vmem:[%s5115 + $0x8] sm:$0xff]
      %v5118 = vadd.f32 %v5113, %v5116
      %v5119 = vadd.f32 %v5114, %v5117
      %v5120 = vtanh.pop %v5118
      %v5121 = vtanh.pop %v5119
      %v5122 = vadd.f32 %v5120, %v4740
      %v5123 = vadd.f32 %v5121, %v4741
      %s5124 = scalar_lea.vmem %s8, 704
      %v5125 = vld [vmem:[%s5124] sm:$0xff]
      %v5126 = vld [vmem:[%s5124 + $0x8] sm:$0xff]
      %v5127 = vld [vmem:[%s5124 + $0x10] sm:$0xff]
      %v5128 = vld [vmem:[%s5124 + $0x18] sm:$0xff]
      %v5130 = vsel %vm930, %v5122, 0
      %v5133 = vsel %vm930, %v5123, 0
      %5135 = vmatprep.subr.mxu0 0.0
      %5136 = vmatpush1.msra.mxu0 0.0
      %5137 = vmatprep.subr.mxu0 0.0
      %5138 = vmatpush1.msra.mxu0 0.0
      %5139 = vmatprep.subr.mxu0 0.0
      %5140 = vmatpush1.msra.mxu0 0.0
      %5141 = vmatprep.subr.mxu0 0.0
      %5142 = vmatpush1.msra.mxu0 0.0
      %5143 = vmatprep.subr.mxu0 0.0
      %5144 = vmatpush1.msra.mxu0 0.0
      %5145 = vmatprep.subr.mxu0 0.0
      %5146 = vmatpush1.msra.mxu0 0.0
      %5147 = vmatprep.subr.mxu0 0.0
      %5148 = vmatpush1.msra.mxu0 0.0
      %5149 = vmatprep.subr.mxu0 0.0
      %5150 = vmatpush1.msra.mxu0 0.0
      %5151 = vmatprep.subr.mxu0 0.0
      %5152 = vmatpush1.msra.mxu0 0.0
      %5153 = vmatprep.subr.mxu0 0.0
      %5154 = vmatpush1.msra.mxu0 0.0
      %5155 = vmatprep.subr.mxu0 0.0
      %5156 = vmatpush1.msra.mxu0 0.0
      %5157 = vmatprep.subr.mxu0 0.0
      %5158 = vmatpush1.msra.mxu0 0.0
      %5159 = vmatprep.subr.mxu0 0.0
      %5160 = vmatpush1.msra.mxu0 %v5128
      %5161 = vmatprep.subr.mxu0 0.0
      %5162 = vmatpush1.msra.mxu0 %v5127
      %5163 = vmatprep.subr.mxu0 0.0
      %5164 = vmatpush1.msra.mxu0 %v5126
      %5165 = vmatprep.subr.mxu0 0.0
      %5166 = vmatpush1.msra.mxu0 %v5125
      %5167 = vmatprep.subr.mxu0 0.0
      %5168 = vmatpush2.msra.mxu0 0.0
      %5169 = vmatprep.subr.mxu0 0.0
      %5170 = vmatpush2.msra.mxu0 0.0
      %5171 = vmatprep.subr.mxu0 0.0
      %5172 = vmatpush2.msra.mxu0 0.0
      %5173 = vmatprep.subr.mxu0 0.0
      %5174 = vmatpush2.msra.mxu0 0.0
      %5175 = vmatprep.subr.mxu0 0.0
      %5176 = vmatpush2.msra.mxu0 0.0
      %5177 = vmatprep.subr.mxu0 0.0
      %5178 = vmatpush2.msra.mxu0 0.0
      %5179 = vmatprep.subr.mxu0 0.0
      %5180 = vmatpush2.msra.mxu0 0.0
      %5181 = vmatprep.subr.mxu0 0.0
      %5182 = vmatpush2.msra.mxu0 0.0
      %5183 = vmatprep.subr.mxu0 0.0
      %5184 = vmatpush2.msra.mxu0 0.0
      %5185 = vmatprep.subr.mxu0 0.0
      %5186 = vmatpush2.msra.mxu0 0.0
      %5187 = vmatprep.subr.mxu0 0.0
      %5188 = vmatpush2.msra.mxu0 0.0
      %5189 = vmatprep.subr.mxu0 0.0
      %5190 = vmatpush2.msra.mxu0 0.0
      %5191 = vmatprep.subr.mxu0 0.0
      %5192 = vmatpush2.msra.mxu0 0.0
      %5193 = vmatprep.subr.mxu0 0.0
      %5194 = vmatpush2.msra.mxu0 0.0
      %5195 = vmatprep.subr.mxu0 0.0
      %5196 = vmatpush2.msra.mxu0 0.0
      %5197 = vmatprep.subr.mxu0 0.0
      %5198 = vmatpush2.msra.mxu0 0.0
      %5199 = vmatprep.mubr.f32.mxu0 0.0
      %5200 = vmatmul.mubr.f32.gmra.mxu0 %v5130
      %v5201 = vpop.f32.mrf.mxu0
      %v5202 = vadd.f32 0.0, %v5201
      %v5203 = vpop.f32.mrf.mxu0
      %5204 = vmatprep.mubr.f32.mxu0 0.0
      %5205 = vmatmul.mubr.f32.gmra.mxu0 %v5133
      %v5206 = vpop.f32.mrf.mxu0
      %v5207 = vadd.f32 0.0, %v5206
      %v5208 = vpop.f32.mrf.mxu0
      %5209 = vdwg.mxu0
      %s5210 = scalar_lea.vmem %s9, 352
      %v5211 = vld [vmem:[%s5210] sm:$0xff]
      %v5212 = vld [vmem:[%s5210 + $0x8] sm:$0xff]
      %s5213 = scalar_lea.vmem %s10, 22
      %v5214 = vld [vmem:[%s5213] sm:$0x1]
      %v5216 = vlaneseq
      %v5217 = vshrl.u32 %v5216, 7
      %v5218 = vsub.s32 0, %v5217
      %v5219 = vrot.slane %v5214, %v5218
      %v5222 = vsel %vm834, %v5211, 0
      %v5225 = vsel %vm834, %v5212, 0
      %5227 = vmatprep.subr.mxu0 0.0
      %5228 = vmatpush1.msra.mxu0 0.0
      %5229 = vmatprep.subr.mxu0 0.0
      %5230 = vmatpush1.msra.mxu0 0.0
      %5231 = vmatprep.subr.mxu0 0.0
      %5232 = vmatpush1.msra.mxu0 0.0
      %5233 = vmatprep.subr.mxu0 0.0
      %5234 = vmatpush1.msra.mxu0 0.0
      %5235 = vmatprep.subr.mxu0 0.0
      %5236 = vmatpush1.msra.mxu0 0.0
      %5237 = vmatprep.subr.mxu0 0.0
      %5238 = vmatpush1.msra.mxu0 0.0
      %5239 = vmatprep.subr.mxu0 0.0
      %5240 = vmatpush1.msra.mxu0 0.0
      %5241 = vmatprep.subr.mxu0 0.0
      %5242 = vmatpush1.msra.mxu0 0.0
      %5243 = vmatprep.subr.mxu0 0.0
      %5244 = vmatpush1.msra.mxu0 0.0
      %5245 = vmatprep.subr.mxu0 0.0
      %5246 = vmatpush1.msra.mxu0 0.0
      %5247 = vmatprep.subr.mxu0 0.0
      %5248 = vmatpush1.msra.mxu0 0.0
      %5249 = vmatprep.subr.mxu0 0.0
      %5250 = vmatpush1.msra.mxu0 0.0
      %5251 = vmatprep.subr.mxu0 0.0
      %5252 = vmatpush1.msra.mxu0 0.0
      %5253 = vmatprep.subr.mxu0 0.0
      %5254 = vmatpush1.msra.mxu0 0.0
      %5255 = vmatprep.subr.mxu0 0.0
      %5256 = vmatpush1.msra.mxu0 %v5207
      %5257 = vmatprep.subr.mxu0 0.0
      %5258 = vmatpush1.msra.mxu0 %v5202
      %5259 = vmatprep.subr.mxu0 0.0
      %5260 = vmatpush2.msra.mxu0 0.0
      %5261 = vmatprep.subr.mxu0 0.0
      %5262 = vmatpush2.msra.mxu0 0.0
      %5263 = vmatprep.subr.mxu0 0.0
      %5264 = vmatpush2.msra.mxu0 0.0
      %5265 = vmatprep.subr.mxu0 0.0
      %5266 = vmatpush2.msra.mxu0 0.0
      %5267 = vmatprep.subr.mxu0 0.0
      %5268 = vmatpush2.msra.mxu0 0.0
      %5269 = vmatprep.subr.mxu0 0.0
      %5270 = vmatpush2.msra.mxu0 0.0
      %5271 = vmatprep.subr.mxu0 0.0
      %5272 = vmatpush2.msra.mxu0 0.0
      %5273 = vmatprep.subr.mxu0 0.0
      %5274 = vmatpush2.msra.mxu0 0.0
      %5275 = vmatprep.subr.mxu0 0.0
      %5276 = vmatpush2.msra.mxu0 0.0
      %5277 = vmatprep.subr.mxu0 0.0
      %5278 = vmatpush2.msra.mxu0 0.0
      %5279 = vmatprep.subr.mxu0 0.0
      %5280 = vmatpush2.msra.mxu0 0.0
      %5281 = vmatprep.subr.mxu0 0.0
      %5282 = vmatpush2.msra.mxu0 0.0
      %5283 = vmatprep.subr.mxu0 0.0
      %5284 = vmatpush2.msra.mxu0 0.0
      %5285 = vmatprep.subr.mxu0 0.0
      %5286 = vmatpush2.msra.mxu0 0.0
      %5287 = vmatprep.subr.mxu0 0.0
      %5288 = vmatpush2.msra.mxu0 0.0
      %5289 = vmatprep.subr.mxu0 0.0
      %5290 = vmatpush2.msra.mxu0 0.0
      %5291 = vmatprep.mubr.f32.mxu0 0.0
      %5292 = vmatmul.mubr.f32.gmra.mxu0 %v5222
      %v5293 = vpop.f32.mrf.mxu0
      %v5294 = vadd.f32 %v5219, %v5293
      %v5295 = vpop.f32.mrf.mxu0
      %5296 = vmatprep.mubr.f32.mxu0 0.0
      %5297 = vmatmul.mubr.f32.gmra.mxu0 %v5225
      %v5298 = vpop.f32.mrf.mxu0
      %v5299 = vadd.f32 %v5219, %v5298
      %v5300 = vpop.f32.mrf.mxu0
      %5301 = vdwg.mxu0
      %s5302 = scalar_lea.vmem %s11, 352
      %v5303 = vld [vmem:[%s5302] sm:$0xff]
      %v5304 = vld [vmem:[%s5302 + $0x8] sm:$0xff]
      %v5305 = vmul.f32 %v5294, %v5303
      %v5306 = vmul.f32 %v5299, %v5304
      %s5307 = scalar_lea.vmem %s12, 352
      %v5308 = vld [vmem:[%s5307] sm:$0xff]
      %v5309 = vld [vmem:[%s5307 + $0x8] sm:$0xff]
      %v5310 = vadd.f32 %v5305, %v5308
      %v5311 = vadd.f32 %v5306, %v5309
      %v5312 = vtanh.pop %v5310
      %v5313 = vtanh.pop %v5311
      %s5314 = scalar_lea.vmem %s8, 736
      %v5315 = vld [vmem:[%s5314] sm:$0xff]
      %v5316 = vld [vmem:[%s5314 + $0x8] sm:$0xff]
      %v5317 = vld [vmem:[%s5314 + $0x10] sm:$0xff]
      %v5318 = vld [vmem:[%s5314 + $0x18] sm:$0xff]
      %v5320 = vsel %vm930, %v5312, 0
      %v5323 = vsel %vm930, %v5313, 0
      %5325 = vmatprep.subr.mxu0 0.0
      %5326 = vmatpush1.msra.mxu0 0.0
      %5327 = vmatprep.subr.mxu0 0.0
      %5328 = vmatpush1.msra.mxu0 0.0
      %5329 = vmatprep.subr.mxu0 0.0
      %5330 = vmatpush1.msra.mxu0 0.0
      %5331 = vmatprep.subr.mxu0 0.0
      %5332 = vmatpush1.msra.mxu0 0.0
      %5333 = vmatprep.subr.mxu0 0.0
      %5334 = vmatpush1.msra.mxu0 0.0
      %5335 = vmatprep.subr.mxu0 0.0
      %5336 = vmatpush1.msra.mxu0 0.0
      %5337 = vmatprep.subr.mxu0 0.0
      %5338 = vmatpush1.msra.mxu0 0.0
      %5339 = vmatprep.subr.mxu0 0.0
      %5340 = vmatpush1.msra.mxu0 0.0
      %5341 = vmatprep.subr.mxu0 0.0
      %5342 = vmatpush1.msra.mxu0 0.0
      %5343 = vmatprep.subr.mxu0 0.0
      %5344 = vmatpush1.msra.mxu0 0.0
      %5345 = vmatprep.subr.mxu0 0.0
      %5346 = vmatpush1.msra.mxu0 0.0
      %5347 = vmatprep.subr.mxu0 0.0
      %5348 = vmatpush1.msra.mxu0 0.0
      %5349 = vmatprep.subr.mxu0 0.0
      %5350 = vmatpush1.msra.mxu0 %v5318
      %5351 = vmatprep.subr.mxu0 0.0
      %5352 = vmatpush1.msra.mxu0 %v5317
      %5353 = vmatprep.subr.mxu0 0.0
      %5354 = vmatpush1.msra.mxu0 %v5316
      %5355 = vmatprep.subr.mxu0 0.0
      %5356 = vmatpush1.msra.mxu0 %v5315
      %5357 = vmatprep.subr.mxu0 0.0
      %5358 = vmatpush2.msra.mxu0 0.0
      %5359 = vmatprep.subr.mxu0 0.0
      %5360 = vmatpush2.msra.mxu0 0.0
      %5361 = vmatprep.subr.mxu0 0.0
      %5362 = vmatpush2.msra.mxu0 0.0
      %5363 = vmatprep.subr.mxu0 0.0
      %5364 = vmatpush2.msra.mxu0 0.0
      %5365 = vmatprep.subr.mxu0 0.0
      %5366 = vmatpush2.msra.mxu0 0.0
      %5367 = vmatprep.subr.mxu0 0.0
      %5368 = vmatpush2.msra.mxu0 0.0
      %5369 = vmatprep.subr.mxu0 0.0
      %5370 = vmatpush2.msra.mxu0 0.0
      %5371 = vmatprep.subr.mxu0 0.0
      %5372 = vmatpush2.msra.mxu0 0.0
      %5373 = vmatprep.subr.mxu0 0.0
      %5374 = vmatpush2.msra.mxu0 0.0
      %5375 = vmatprep.subr.mxu0 0.0
      %5376 = vmatpush2.msra.mxu0 0.0
      %5377 = vmatprep.subr.mxu0 0.0
      %5378 = vmatpush2.msra.mxu0 0.0
      %5379 = vmatprep.subr.mxu0 0.0
      %5380 = vmatpush2.msra.mxu0 0.0
      %5381 = vmatprep.subr.mxu0 0.0
      %5382 = vmatpush2.msra.mxu0 0.0
      %5383 = vmatprep.subr.mxu0 0.0
      %5384 = vmatpush2.msra.mxu0 0.0
      %5385 = vmatprep.subr.mxu0 0.0
      %5386 = vmatpush2.msra.mxu0 0.0
      %5387 = vmatprep.subr.mxu0 0.0
      %5388 = vmatpush2.msra.mxu0 0.0
      %5389 = vmatprep.mubr.f32.mxu0 0.0
      %5390 = vmatmul.mubr.f32.gmra.mxu0 %v5320
      %v5391 = vpop.f32.mrf.mxu0
      %v5392 = vadd.f32 0.0, %v5391
      %v5393 = vpop.f32.mrf.mxu0
      %5394 = vmatprep.mubr.f32.mxu0 0.0
      %5395 = vmatmul.mubr.f32.gmra.mxu0 %v5323
      %v5396 = vpop.f32.mrf.mxu0
      %v5397 = vadd.f32 0.0, %v5396
      %v5398 = vpop.f32.mrf.mxu0
      %5399 = vdwg.mxu0
      %s5400 = scalar_lea.vmem %s9, 368
      %v5401 = vld [vmem:[%s5400] sm:$0xff]
      %v5402 = vld [vmem:[%s5400 + $0x8] sm:$0xff]
      %s5403 = scalar_lea.vmem %s10, 23
      %v5404 = vld [vmem:[%s5403] sm:$0x1]
      %v5406 = vlaneseq
      %v5407 = vshrl.u32 %v5406, 7
      %v5408 = vsub.s32 0, %v5407
      %v5409 = vrot.slane %v5404, %v5408
      %v5412 = vsel %vm834, %v5401, 0
      %v5415 = vsel %vm834, %v5402, 0
      %5417 = vmatprep.subr.mxu0 0.0
      %5418 = vmatpush1.msra.mxu0 0.0
      %5419 = vmatprep.subr.mxu0 0.0
      %5420 = vmatpush1.msra.mxu0 0.0
      %5421 = vmatprep.subr.mxu0 0.0
      %5422 = vmatpush1.msra.mxu0 0.0
      %5423 = vmatprep.subr.mxu0 0.0
      %5424 = vmatpush1.msra.mxu0 0.0
      %5425 = vmatprep.subr.mxu0 0.0
      %5426 = vmatpush1.msra.mxu0 0.0
      %5427 = vmatprep.subr.mxu0 0.0
      %5428 = vmatpush1.msra.mxu0 0.0
      %5429 = vmatprep.subr.mxu0 0.0
      %5430 = vmatpush1.msra.mxu0 0.0
      %5431 = vmatprep.subr.mxu0 0.0
      %5432 = vmatpush1.msra.mxu0 0.0
      %5433 = vmatprep.subr.mxu0 0.0
      %5434 = vmatpush1.msra.mxu0 0.0
      %5435 = vmatprep.subr.mxu0 0.0
      %5436 = vmatpush1.msra.mxu0 0.0
      %5437 = vmatprep.subr.mxu0 0.0
      %5438 = vmatpush1.msra.mxu0 0.0
      %5439 = vmatprep.subr.mxu0 0.0
      %5440 = vmatpush1.msra.mxu0 0.0
      %5441 = vmatprep.subr.mxu0 0.0
      %5442 = vmatpush1.msra.mxu0 0.0
      %5443 = vmatprep.subr.mxu0 0.0
      %5444 = vmatpush1.msra.mxu0 0.0
      %5445 = vmatprep.subr.mxu0 0.0
      %5446 = vmatpush1.msra.mxu0 %v5397
      %5447 = vmatprep.subr.mxu0 0.0
      %5448 = vmatpush1.msra.mxu0 %v5392
      %5449 = vmatprep.subr.mxu0 0.0
      %5450 = vmatpush2.msra.mxu0 0.0
      %5451 = vmatprep.subr.mxu0 0.0
      %5452 = vmatpush2.msra.mxu0 0.0
      %5453 = vmatprep.subr.mxu0 0.0
      %5454 = vmatpush2.msra.mxu0 0.0
      %5455 = vmatprep.subr.mxu0 0.0
      %5456 = vmatpush2.msra.mxu0 0.0
      %5457 = vmatprep.subr.mxu0 0.0
      %5458 = vmatpush2.msra.mxu0 0.0
      %5459 = vmatprep.subr.mxu0 0.0
      %5460 = vmatpush2.msra.mxu0 0.0
      %5461 = vmatprep.subr.mxu0 0.0
      %5462 = vmatpush2.msra.mxu0 0.0
      %5463 = vmatprep.subr.mxu0 0.0
      %5464 = vmatpush2.msra.mxu0 0.0
      %5465 = vmatprep.subr.mxu0 0.0
      %5466 = vmatpush2.msra.mxu0 0.0
      %5467 = vmatprep.subr.mxu0 0.0
      %5468 = vmatpush2.msra.mxu0 0.0
      %5469 = vmatprep.subr.mxu0 0.0
      %5470 = vmatpush2.msra.mxu0 0.0
      %5471 = vmatprep.subr.mxu0 0.0
      %5472 = vmatpush2.msra.mxu0 0.0
      %5473 = vmatprep.subr.mxu0 0.0
      %5474 = vmatpush2.msra.mxu0 0.0
      %5475 = vmatprep.subr.mxu0 0.0
      %5476 = vmatpush2.msra.mxu0 0.0
      %5477 = vmatprep.subr.mxu0 0.0
      %5478 = vmatpush2.msra.mxu0 0.0
      %5479 = vmatprep.subr.mxu0 0.0
      %5480 = vmatpush2.msra.mxu0 0.0
      %5481 = vmatprep.mubr.f32.mxu0 0.0
      %5482 = vmatmul.mubr.f32.gmra.mxu0 %v5412
      %v5483 = vpop.f32.mrf.mxu0
      %v5484 = vadd.f32 %v5409, %v5483
      %v5485 = vpop.f32.mrf.mxu0
      %5486 = vmatprep.mubr.f32.mxu0 0.0
      %5487 = vmatmul.mubr.f32.gmra.mxu0 %v5415
      %v5488 = vpop.f32.mrf.mxu0
      %v5489 = vadd.f32 %v5409, %v5488
      %v5490 = vpop.f32.mrf.mxu0
      %5491 = vdwg.mxu0
      %s5492 = scalar_lea.vmem %s11, 368
      %v5493 = vld [vmem:[%s5492] sm:$0xff]
      %v5494 = vld [vmem:[%s5492 + $0x8] sm:$0xff]
      %v5495 = vmul.f32 %v5484, %v5493
      %v5496 = vmul.f32 %v5489, %v5494
      %s5497 = scalar_lea.vmem %s12, 368
      %v5498 = vld [vmem:[%s5497] sm:$0xff]
      %v5499 = vld [vmem:[%s5497 + $0x8] sm:$0xff]
      %v5500 = vadd.f32 %v5495, %v5498
      %v5501 = vadd.f32 %v5496, %v5499
      %v5502 = vtanh.pop %v5500
      %v5503 = vtanh.pop %v5501
      %v5504 = vadd.f32 %v5502, %v5122
      %v5505 = vadd.f32 %v5503, %v5123
      %v5506 = vld [vmem:[%s13] sm:$0xff]
      %v5507 = vld [vmem:[%s13 + $0x8] sm:$0xff]
      %v5508 = vld [vmem:[%s13 + $0x10] sm:$0xff]
      %v5509 = vld [vmem:[%s13 + $0x18] sm:$0xff]
      %v5511 = vsel %vm930, %v5504, 0
      %v5514 = vsel %vm930, %v5505, 0
      %5516 = vmatprep.subr.mxu0 0.0
      %5517 = vmatpush1.msra.mxu0 0.0
      %5518 = vmatprep.subr.mxu0 0.0
      %5519 = vmatpush1.msra.mxu0 0.0
      %5520 = vmatprep.subr.mxu0 0.0
      %5521 = vmatpush1.msra.mxu0 0.0
      %5522 = vmatprep.subr.mxu0 0.0
      %5523 = vmatpush1.msra.mxu0 0.0
      %5524 = vmatprep.subr.mxu0 0.0
      %5525 = vmatpush1.msra.mxu0 0.0
      %5526 = vmatprep.subr.mxu0 0.0
      %5527 = vmatpush1.msra.mxu0 0.0
      %5528 = vmatprep.subr.mxu0 0.0
      %5529 = vmatpush1.msra.mxu0 0.0
      %5530 = vmatprep.subr.mxu0 0.0
      %5531 = vmatpush1.msra.mxu0 0.0
      %5532 = vmatprep.subr.mxu0 0.0
      %5533 = vmatpush1.msra.mxu0 0.0
      %5534 = vmatprep.subr.mxu0 0.0
      %5535 = vmatpush1.msra.mxu0 0.0
      %5536 = vmatprep.subr.mxu0 0.0
      %5537 = vmatpush1.msra.mxu0 0.0
      %5538 = vmatprep.subr.mxu0 0.0
      %5539 = vmatpush1.msra.mxu0 0.0
      %5540 = vmatprep.subr.mxu0 0.0
      %5541 = vmatpush1.msra.mxu0 %v5509
      %5542 = vmatprep.subr.mxu0 0.0
      %5543 = vmatpush1.msra.mxu0 %v5508
      %5544 = vmatprep.subr.mxu0 0.0
      %5545 = vmatpush1.msra.mxu0 %v5507
      %5546 = vmatprep.subr.mxu0 0.0
      %5547 = vmatpush1.msra.mxu0 %v5506
      %5548 = vmatprep.subr.mxu0 0.0
      %5549 = vmatpush2.msra.mxu0 0.0
      %5550 = vmatprep.subr.mxu0 0.0
      %5551 = vmatpush2.msra.mxu0 0.0
      %5552 = vmatprep.subr.mxu0 0.0
      %5553 = vmatpush2.msra.mxu0 0.0
      %5554 = vmatprep.subr.mxu0 0.0
      %5555 = vmatpush2.msra.mxu0 0.0
      %5556 = vmatprep.subr.mxu0 0.0
      %5557 = vmatpush2.msra.mxu0 0.0
      %5558 = vmatprep.subr.mxu0 0.0
      %5559 = vmatpush2.msra.mxu0 0.0
      %5560 = vmatprep.subr.mxu0 0.0
      %5561 = vmatpush2.msra.mxu0 0.0
      %5562 = vmatprep.subr.mxu0 0.0
      %5563 = vmatpush2.msra.mxu0 0.0
      %5564 = vmatprep.subr.mxu0 0.0
      %5565 = vmatpush2.msra.mxu0 0.0
      %5566 = vmatprep.subr.mxu0 0.0
      %5567 = vmatpush2.msra.mxu0 0.0
      %5568 = vmatprep.subr.mxu0 0.0
      %5569 = vmatpush2.msra.mxu0 0.0
      %5570 = vmatprep.subr.mxu0 0.0
      %5571 = vmatpush2.msra.mxu0 0.0
      %5572 = vmatprep.subr.mxu0 0.0
      %5573 = vmatpush2.msra.mxu0 0.0
      %5574 = vmatprep.subr.mxu0 0.0
      %5575 = vmatpush2.msra.mxu0 0.0
      %5576 = vmatprep.subr.mxu0 0.0
      %5577 = vmatpush2.msra.mxu0 0.0
      %5578 = vmatprep.subr.mxu0 0.0
      %5579 = vmatpush2.msra.mxu0 0.0
      %5580 = vmatprep.mubr.f32.mxu0 0.0
      %5581 = vmatmul.mubr.f32.gmra.mxu0 %v5511
      %v5582 = vpop.f32.mrf.mxu0
      %v5583 = vadd.f32 0.0, %v5582
      %v5584 = vpop.f32.mrf.mxu0
      %5585 = vmatprep.mubr.f32.mxu0 0.0
      %5586 = vmatmul.mubr.f32.gmra.mxu0 %v5514
      %v5587 = vpop.f32.mrf.mxu0
      %v5588 = vadd.f32 0.0, %v5587
      %v5589 = vpop.f32.mrf.mxu0
      %5590 = vdwg.mxu0
      %v5591 = vld [vmem:[%s14] sm:$0xff]
      %v5592 = vld [vmem:[%s14 + $0x8] sm:$0xff]
      %v5593 = vld [vmem:[%s15] sm:$0x1]
      %v5595 = vlaneseq
      %v5596 = vshrl.u32 %v5595, 7
      %v5597 = vsub.s32 0, %v5596
      %v5598 = vrot.slane %v5593, %v5597
      %v5601 = vsel %vm834, %v5591, 0
      %v5604 = vsel %vm834, %v5592, 0
      %5606 = vmatprep.subr.mxu0 0.0
      %5607 = vmatpush1.msra.mxu0 0.0
      %5608 = vmatprep.subr.mxu0 0.0
      %5609 = vmatpush1.msra.mxu0 0.0
      %5610 = vmatprep.subr.mxu0 0.0
      %5611 = vmatpush1.msra.mxu0 0.0
      %5612 = vmatprep.subr.mxu0 0.0
      %5613 = vmatpush1.msra.mxu0 0.0
      %5614 = vmatprep.subr.mxu0 0.0
      %5615 = vmatpush1.msra.mxu0 0.0
      %5616 = vmatprep.subr.mxu0 0.0
      %5617 = vmatpush1.msra.mxu0 0.0
      %5618 = vmatprep.subr.mxu0 0.0
      %5619 = vmatpush1.msra.mxu0 0.0
      %5620 = vmatprep.subr.mxu0 0.0
      %5621 = vmatpush1.msra.mxu0 0.0
      %5622 = vmatprep.subr.mxu0 0.0
      %5623 = vmatpush1.msra.mxu0 0.0
      %5624 = vmatprep.subr.mxu0 0.0
      %5625 = vmatpush1.msra.mxu0 0.0
      %5626 = vmatprep.subr.mxu0 0.0
      %5627 = vmatpush1.msra.mxu0 0.0
      %5628 = vmatprep.subr.mxu0 0.0
      %5629 = vmatpush1.msra.mxu0 0.0
      %5630 = vmatprep.subr.mxu0 0.0
      %5631 = vmatpush1.msra.mxu0 0.0
      %5632 = vmatprep.subr.mxu0 0.0
      %5633 = vmatpush1.msra.mxu0 0.0
      %5634 = vmatprep.subr.mxu0 0.0
      %5635 = vmatpush1.msra.mxu0 %v5588
      %5636 = vmatprep.subr.mxu0 0.0
      %5637 = vmatpush1.msra.mxu0 %v5583
      %5638 = vmatprep.subr.mxu0 0.0
      %5639 = vmatpush2.msra.mxu0 0.0
      %5640 = vmatprep.subr.mxu0 0.0
      %5641 = vmatpush2.msra.mxu0 0.0
      %5642 = vmatprep.subr.mxu0 0.0
      %5643 = vmatpush2.msra.mxu0 0.0
      %5644 = vmatprep.subr.mxu0 0.0
      %5645 = vmatpush2.msra.mxu0 0.0
      %5646 = vmatprep.subr.mxu0 0.0
      %5647 = vmatpush2.msra.mxu0 0.0
      %5648 = vmatprep.subr.mxu0 0.0
      %5649 = vmatpush2.msra.mxu0 0.0
      %5650 = vmatprep.subr.mxu0 0.0
      %5651 = vmatpush2.msra.mxu0 0.0
      %5652 = vmatprep.subr.mxu0 0.0
      %5653 = vmatpush2.msra.mxu0 0.0
      %5654 = vmatprep.subr.mxu0 0.0
      %5655 = vmatpush2.msra.mxu0 0.0
      %5656 = vmatprep.subr.mxu0 0.0
      %5657 = vmatpush2.msra.mxu0 0.0
      %5658 = vmatprep.subr.mxu0 0.0
      %5659 = vmatpush2.msra.mxu0 0.0
      %5660 = vmatprep.subr.mxu0 0.0
      %5661 = vmatpush2.msra.mxu0 0.0
      %5662 = vmatprep.subr.mxu0 0.0
      %5663 = vmatpush2.msra.mxu0 0.0
      %5664 = vmatprep.subr.mxu0 0.0
      %5665 = vmatpush2.msra.mxu0 0.0
      %5666 = vmatprep.subr.mxu0 0.0
      %5667 = vmatpush2.msra.mxu0 0.0
      %5668 = vmatprep.subr.mxu0 0.0
      %5669 = vmatpush2.msra.mxu0 0.0
      %5670 = vmatprep.mubr.f32.mxu0 0.0
      %5671 = vmatmul.mubr.f32.gmra.mxu0 %v5601
      %v5672 = vpop.f32.mrf.mxu0
      %v5673 = vadd.f32 %v5598, %v5672
      %v5674 = vpop.f32.mrf.mxu0
      %5675 = vmatprep.mubr.f32.mxu0 0.0
      %5676 = vmatmul.mubr.f32.gmra.mxu0 %v5604
      %v5677 = vpop.f32.mrf.mxu0
      %v5678 = vadd.f32 %v5598, %v5677
      %v5679 = vpop.f32.mrf.mxu0
      %5680 = vdwg.mxu0
      %v5681 = vadd.f32 %v5673, %v539
      %v5682 = vadd.f32 %v5678, %v540
      %5683 = vst.msk [vmem:[%s538] sm:$0xff] %vm743, %v5681
      %5684 = vst.msk [vmem:[%s538 + $0x8] sm:$0xff] %vm743, %v5682
      %p5685 = scmp.lt.s32.totalorder %s27, 1
      %s5686 = scalar_select %p5685, %s27, 1
      %s5687 = smul.addr %s5686, 2
      %s5688 = smul.addr %s5687, 8
      %s5689 = scalar_lea.vmem %s16, %s5688
      // Predicated region
      $region85: #{gcn_h_forward.1} parent=83 // pred_check
        %p5690 = pneg %p391
      $region86: #{gcn_h_forward.1} parent=83 // pred_check_branch
        %5692 = sbr.rel (%p5690) target = $region88
      $region87: #{gcn_h_forward.1} parent=83 // pred_region
        _
      $region88: #{gcn_h_forward.1} parent=83 // pred_fallthru
        _
    $region84: #{gcn_h_forward.1} parent=5 // pred_fallthru
      _
    %p5693 = scmp.le.s32.totalorder 2, %s22
    // Predicated region
    $region89: #{gcn_h_forward.1} parent=5 // pred_check
      %p5694 = pneg %p5693
    $region90: #{gcn_h_forward.1} parent=5 // pred_check_branch
      %5696 = sbr.rel (%p5694) target = $region92
    $region91: #{gcn_h_forward.1} parent=5 // pred_region
      %s5697 = ssub.s32 %s22, 2
      // Predicated region
      $region93: #{gcn_h_forward.1} parent=91 // pred_check
        %p5698 = pneg %p397
      $region94: #{gcn_h_forward.1} parent=91 // pred_check_branch
        %5700 = sbr.rel (%p5698) target = $region96
      $region95: #{gcn_h_forward.1} parent=91 // pred_region
        %p5701 = scmp.lt.s32.totalorder %s28, 1
        %s5702 = scalar_select %p5701, %s28, 1
        %s5703 = smul.addr %s5702, 2
        %s5704 = smul.addr %s5703, 8
        %s5705 = scalar_lea.vmem %s16, %s5704
      $region96: #{gcn_h_forward.1} parent=91 // pred_fallthru
        _
    $region92: #{gcn_h_forward.1} parent=5 // pred_fallthru
      _
  $region6: #{gcn_h_forward.1} parent=0 // loop_footer
    %s26 = sadd.s32 1, %s22
  $region7: #{gcn_h_forward.1} parent=0 // loop_footer_branch
    %21 = sbr.rel target = $region3
  $region8: #{gcn_h_forward.1} parent=0 // loop_exit
    _

</llo_original>
